<compile_context>
chip_gen: v7x
topology: tpu7x:2x2x1
jax: 0.10.0
libtpu: 0.0.40
codegen_flags: <defaults>
</compile_context>

<pallas_src>
import jax
import jax.numpy as jnp
from jax import lax
from jax.experimental import pallas as pl
from jax.experimental.pallas import tpu as pltpu

HIDDEN = 256


def _pick_time_tile(T):
    """Time-tile length: multiple of 8 (or the full T) that divides T."""
    if T <= 32:
        return T
    for tt in (32, 24, 16, 8):
        if T % tt == 0:
            return tt
    return T  # awkward T: fall back to a single whole-sequence tile


# ---------------------------------------------------------------------------
# Kernel 1: fused input projection for both directions.
#   gx[b, t, :] = x[b, t, :] @ [Wih_fwd | Wih_rev] + (b_ih + b_hh)
# ---------------------------------------------------------------------------
def _input_proj_kernel(x_ref, w_ref, b_ref, gxf_ref, gxr_ref):
    # x_ref: (B, tt, D) f32   w_ref: (D, 8H) bf16   b_ref: (1, 8H) f32
    # gxf_ref / gxr_ref: (B, tt, 4H) f32, gate columns already in [i,f,o,g] order.
    B, tt, D = x_ref.shape
    H4 = gxf_ref.shape[-1]
    x2 = x_ref[...].reshape(B * tt, D)           # leading-dim merge (layout no-op)
    g = jnp.dot(x2.astype(jnp.bfloat16), w_ref[...],
                preferred_element_type=jnp.float32) + b_ref[...]   # (B*tt, 8H)
    gxf_ref[...] = g[:, :H4].reshape(B, tt, H4)
    gxr_ref[...] = g[:, H4:].reshape(B, tt, H4)


# ---------------------------------------------------------------------------
# Kernel 2: bidirectional recurrence + MLP head.
# ---------------------------------------------------------------------------
def _bilstm_head_kernel(gxf_ref, gxr_ref, whhf_ref, whhr_ref,
                        w1f_ref, w1r_ref, b1_ref, w2_ref, b2_ref,
                        out_ref, hf_ref, cf_ref, hr_ref, cr_ref):
    k = pl.program_id(0)
    nt = pl.num_programs(0)
    B, tt, _ = gxf_ref.shape
    H = whhf_ref.shape[0]

    @pl.when(k == 0)
    def _init():
        hf_ref[...] = jnp.zeros_like(hf_ref)
        cf_ref[...] = jnp.zeros_like(cf_ref)
        hr_ref[...] = jnp.zeros_like(hr_ref)
        cr_ref[...] = jnp.zeros_like(cr_ref)

    whh_f = whhf_ref[...]          # (H, 4H) bf16, loaded once per grid step
    whh_r = whhr_ref[...]

    def cell(gx, h, c, whh):
        # gx already holds x_t @ W_ih + b; only the recurrent matmul is left.
        gates = gx + jnp.dot(h.astype(jnp.bfloat16), whh,
                             preferred_element_type=jnp.float32)    # (B, 4H) f32
        # gate layout [i, f, o | g]: one sigmoid slab + one tanh slab.
        s = jax.nn.sigmoid(gates[:, :3 * H])
        g = jnp.tanh(gates[:, 3 * H:])
        i, f, o = s[:, :H], s[:, H:2 * H], s[:, 2 * H:]
        c_new = f * c + i * g
        h_new = o * jnp.tanh(c_new)
        return h_new, c_new

    hf, cf = hf_ref[...], cf_ref[...]
    hr, cr = hr_ref[...], cr_ref[...]
    for j in range(tt):            # static -> fully unrolled for the scheduler
        # forward direction processes global time k*tt + j
        hf, cf = cell(gxf_ref[:, j, :], hf, cf, whh_f)
        # reverse direction processes global time T-1-(k*tt+j); its block is
        # delivered in reverse tile order, local index tt-1-j.
        hr, cr = cell(gxr_ref[:, tt - 1 - j, :], hr, cr, whh_r)
    hf_ref[...] = hf
    cf_ref[...] = cf
    hr_ref[...] = hr
    cr_ref[...] = cr

    @pl.when(k == nt - 1)
    def _head():
        # cat(h_fwd, h_rev) @ w1 == h_fwd @ w1f + h_rev @ w1r   (no concatenate)
        z = (jnp.dot(hf, w1f_ref[...], preferred_element_type=jnp.float32)
             + jnp.dot(hr, w1r_ref[...], preferred_element_type=jnp.float32)
             + b1_ref[...])
        z = jnp.maximum(z, 0.0)    # ReLU; Dropout = identity (eval mode)
        out_ref[...] = (jnp.dot(z, w2_ref[...], preferred_element_type=jnp.float32)
                        + b2_ref[...])


# ---------------------------------------------------------------------------
# Wrapper
# ---------------------------------------------------------------------------
@jax.jit
def lstm_mlp_classifier(x, prep):
    """x: (B, T, D) float32 (batch-first). prep: output of prepare_params()."""
    B, T, D = x.shape
    H = HIDDEN
    tt = _pick_time_tile(T)
    nt = T // tt
    vmem_cap = 32 * 1024 * 1024    # fits v5e/v6e/v7x scoped-VMEM defaults

    # ---- Kernel 1: input projection over time tiles -----------------------
    proj_cost = pl.CostEstimate(
        flops=2 * B * T * D * 8 * H,
        transcendentals=0,
        bytes_accessed=B * T * D * 4 + D * 8 * H * 2 + 2 * B * T * 4 * H * 4)
    gxf, gxr = pl.pallas_call(
        _input_proj_kernel,
        out_shape=(jax.ShapeDtypeStruct((B, T, 4 * H), jnp.float32),
                   jax.ShapeDtypeStruct((B, T, 4 * H), jnp.float32)),
        grid=(nt,),
        in_specs=[pl.BlockSpec((B, tt, D), lambda k: (0, k, 0)),
                  pl.BlockSpec((D, 8 * H), lambda k: (0, 0)),
                  pl.BlockSpec((1, 8 * H), lambda k: (0, 0))],
        out_specs=(pl.BlockSpec((B, tt, 4 * H), lambda k: (0, k, 0)),
                   pl.BlockSpec((B, tt, 4 * H), lambda k: (0, k, 0))),
        compiler_params=pltpu.CompilerParams(
            dimension_semantics=("parallel",), vmem_limit_bytes=vmem_cap),
        cost_estimate=proj_cost,
    )(x.astype(jnp.float32), prep["w_ih"], prep["b_ih"])

    # ---- Kernel 2: recurrence + head, gate streams pipelined over T -------
    rec_cost = pl.CostEstimate(
        flops=2 * 2 * T * B * H * 4 * H + 2 * B * 2 * H * H + 2 * B * H,
        transcendentals=2 * T * B * 5 * H,
        bytes_accessed=2 * B * T * 4 * H * 4 + 2 * H * 4 * H * 2
                       + 2 * H * H * 4 + B * 4)
    fwd_map = lambda k: (0, k, 0)
    rev_map = lambda k: (0, nt - 1 - k, 0)
    full2d = lambda k: (0, 0)
    out = pl.pallas_call(
        _bilstm_head_kernel,
        out_shape=jax.ShapeDtypeStruct((B, 1), jnp.float32),
        grid=(nt,),
        in_specs=[pl.BlockSpec((B, tt, 4 * H), fwd_map),
                  pl.BlockSpec((B, tt, 4 * H), rev_map),
                  pl.BlockSpec((H, 4 * H), full2d),
                  pl.BlockSpec((H, 4 * H), full2d),
                  pl.BlockSpec((H, H), full2d),
                  pl.BlockSpec((H, H), full2d),
                  pl.BlockSpec((1, H), full2d),
                  pl.BlockSpec((H, 1), full2d),
                  pl.BlockSpec((1, 1), full2d)],
        out_specs=pl.BlockSpec((B, 1), lambda k: (0, 0)),
        scratch_shapes=[pltpu.VMEM((B, H), jnp.float32)] * 4,
        compiler_params=pltpu.CompilerParams(
            dimension_semantics=("arbitrary",), vmem_limit_bytes=vmem_cap),
        cost_estimate=rec_cost,
    )(gxf, gxr, prep["whh_f"], prep["whh_r"],
      prep["w1f"], prep["w1r"], prep["b1"], prep["w2"], prep["b2"])
    return out


# ---------------------------------------------------------------------------
# Parameters
# ---------------------------------------------------------------------------
def init_params(key, input_dim, hidden=HIDDEN):
    """PyTorch-layout init: weights stored transposed (in, out), gate columns
    in PyTorch order [i, f, g, o]; bias = b_ih + b_hh."""
    ks = jax.random.split(key, 12)
    s_lstm = 1.0 / jnp.sqrt(hidden)
    s_fc1 = 1.0 / jnp.sqrt(2 * hidden)
    s_fc2 = 1.0 / jnp.sqrt(hidden)

    def u(k, shape, s):
        return jax.random.uniform(k, shape, jnp.float32, -s, s)

    return {
        "wih_f": u(ks[0], (input_dim, 4 * hidden), s_lstm),
        "whh_f": u(ks[1], (hidden, 4 * hidden), s_lstm),
        "b_f": u(ks[2], (1, 4 * hidden), s_lstm) + u(ks[3], (1, 4 * hidden), s_lstm),
        "wih_r": u(ks[4], (input_dim, 4 * hidden), s_lstm),
        "whh_r": u(ks[5], (hidden, 4 * hidden), s_lstm),
        "b_r": u(ks[6], (1, 4 * hidden), s_lstm) + u(ks[7], (1, 4 * hidden), s_lstm),
        "w1": u(ks[8], (2 * hidden, hidden), s_fc1),
        "b1": u(ks[9], (1, hidden), s_fc1),
        "w2": u(ks[10], (hidden, 1), s_fc2),
        "b2": u(ks[11], (1, 1), s_fc2),
    }


def prepare_params(params, hidden=HIDDEN):
    """One-time kernel weight prep: permute gate columns [i,f,g,o] -> [i,f,o,g],
    fuse both directions' input projections/biases, split w1 per direction,
    cast MXU operands to bf16 (accumulation stays f32 in-kernel)."""
    H = hidden
    perm = jnp.concatenate([jnp.arange(0, 2 * H),          # i, f
                            jnp.arange(3 * H, 4 * H),      # o
                            jnp.arange(2 * H, 3 * H)])     # g

    def reorder(w):
        return w[..., perm]

    w_ih = jnp.concatenate([reorder(params["wih_f"]), reorder(params["wih_r"])],
                           axis=1).astype(jnp.bfloat16)          # (D, 8H)
    b_ih = jnp.concatenate([reorder(params["b_f"]), reorder(params["b_r"])],
                           axis=1).astype(jnp.float32)           # (1, 8H)
    return {
        "w_ih": w_ih,
        "b_ih": b_ih,
        "whh_f": reorder(params["whh_f"]).astype(jnp.bfloat16),  # (H, 4H)
        "whh_r": reorder(params["whh_r"]).astype(jnp.bfloat16),
        "w1f": params["w1"][:H].astype(jnp.float32),             # (H, H)
        "w1r": params["w1"][H:].astype(jnp.float32),
        "b1": params["b1"].astype(jnp.float32),
        "w2": params["w2"].astype(jnp.float32),
        "b2": params["b2"].astype(jnp.float32),
    }


# ---------------------------------------------------------------------------
# Pure-JAX f32 reference (PyTorch gate layout) for validation
# ---------------------------------------------------------------------------
def _reference_forward(x, params, hidden=HIDDEN):
    H = hidden
    B = x.shape[0]

    def cell(carry, x_t, wih, whh, b):
        h, c = carry
        gates = x_t @ wih + h @ whh + b
        i = jax.nn.sigmoid(gates[:, 0:H])
        f = jax.nn.sigmoid(gates[:, H:2 * H])
        g = jnp.tanh(gates[:, 2 * H:3 * H])
        o = jax.nn.sigmoid(gates[:, 3 * H:4 * H])
        c = f * c + i * g
        h = o * jnp.tanh(c)
        return (h, c)

    x_tm = jnp.transpose(x, (1, 0, 2)).astype(jnp.float32)
    h0 = jnp.zeros((B, H), jnp.float32)
    c0 = jnp.zeros((B, H), jnp.float32)
    (hf, _), _ = lax.scan(
        lambda carry, xt: (cell(carry, xt, params["wih_f"], params["whh_f"], params["b_f"]), None),
        (h0, c0), x_tm)
    (hr, _), _ = lax.scan(
        lambda carry, xt: (cell(carry, xt, params["wih_r"], params["whh_r"], params["b_r"]), None),
        (h0, c0), x_tm[::-1])
    h_cat = jnp.concatenate([hf, hr], axis=-1)
    z = jnp.maximum(h_cat @ params["w1"] + params["b1"], 0.0)
    return z @ params["w2"] + params["b2"]


if __name__ == "__main__":
    B, T, D = 2, 8, 32
    key = jax.random.PRNGKey(0)
    k_x, k_p = jax.random.split(key)
    x = jax.random.normal(k_x, (B, T, D), dtype=jnp.float32)
    params = init_params(k_p, D)
    prep = prepare_params(params)

    out = lstm_mlp_classifier(x, prep)
    out = jax.block_until_ready(out)
    assert out.shape == (B, 1), out.shape
    assert bool(jnp.all(jnp.isfinite(out)))

    ref = _reference_forward(x, params)
    assert jnp.allclose(out, ref, atol=5e-2, rtol=5e-2), (out, ref)

    print("KERNEL_OK")
</pallas_src>

<mosaic_0001>
module attributes {stable_mosaic.version = 11 : i64} {
  func.func @_input_proj_kernel(%arg0: i32, %arg1: memref<2x8x32xf32, #tpu.memory_space<vmem>>, %arg2: memref<32x2048xbf16, #tpu.memory_space<vmem>>, %arg3: memref<1x2048xf32, #tpu.memory_space<vmem>>, %arg4: memref<2x8x1024xf32, #tpu.memory_space<vmem>>, %arg5: memref<2x8x1024xf32, #tpu.memory_space<vmem>>) attributes {dimension_semantics = [#tpu.dimension_semantics<parallel>], iteration_bounds = array<i64: 1>, scalar_prefetch = 0 : i64, scratch_operands = 0 : i64, tpu.core_type = #tpu.core_type<tc>, window_params = [{transform_indices = @transform_0, window_bounds = array<i64: 2, 8, 32>}, {pipeline_mode = #tpu.pipeline_mode<synchronous>, transform_indices = @transform_1, window_bounds = array<i64: 32, 2048>}, {pipeline_mode = #tpu.pipeline_mode<synchronous>, transform_indices = @transform_2, window_bounds = array<i64: 1, 2048>}, {transform_indices = @transform_3, window_bounds = array<i64: 2, 8, 1024>}, {transform_indices = @transform_4, window_bounds = array<i64: 2, 8, 1024>}]} {
    %c0 = arith.constant 0 : index
    %c0_0 = arith.constant 0 : index
    %c0_1 = arith.constant 0 : index
    %0 = vector.load %arg1[%c0, %c0_0, %c0_1] : memref<2x8x32xf32, #tpu.memory_space<vmem>>, vector<2x8x32xf32>
    %1 = vector.shape_cast %0 : vector<2x8x32xf32> to vector<16x32xf32>
    %2 = arith.truncf %1 : vector<16x32xf32> to vector<16x32xbf16>
    %c0_2 = arith.constant 0 : index
    %c0_3 = arith.constant 0 : index
    %3 = vector.load %arg2[%c0_2, %c0_3] : memref<32x2048xbf16, #tpu.memory_space<vmem>>, vector<32x2048xbf16>
    %cst = arith.constant dense<0.000000e+00> : vector<16x2048xf32>
    %4 = tpu.matmul %2, %3, %cst {dimension_numbers = #tpu.dot_dimension_numbers<[1], [0], [0], [1], [0, 0, 1, 1], [], []>} : vector<16x32xbf16>, vector<32x2048xbf16>, vector<16x2048xf32> -> vector<16x2048xf32>
    %c0_4 = arith.constant 0 : index
    %c0_5 = arith.constant 0 : index
    %5 = vector.load %arg3[%c0_4, %c0_5] : memref<1x2048xf32, #tpu.memory_space<vmem>>, vector<1x2048xf32>
    %6 = vector.broadcast %5 : vector<1x2048xf32> to vector<16x2048xf32>
    %7 = arith.addf %4, %6 : vector<16x2048xf32>
    %8 = vector.extract_strided_slice %7 {offsets = [0, 0], sizes = [16, 1024], strides = [1, 1]} : vector<16x2048xf32> to vector<16x1024xf32>
    %9 = vector.shape_cast %8 : vector<16x1024xf32> to vector<2x8x1024xf32>
    %c0_6 = arith.constant 0 : index
    %c0_7 = arith.constant 0 : index
    %c0_8 = arith.constant 0 : index
    %10 = vector.load %arg4[%c0_6, %c0_7, %c0_8] : memref<2x8x1024xf32, #tpu.memory_space<vmem>>, vector<2x8x1024xf32>
    tpu.vector_store %arg4[%c0_6, %c0_7, %c0_8], %9 {strides = array<i32>} : memref<2x8x1024xf32, #tpu.memory_space<vmem>>, vector<2x8x1024xf32>,
    %11 = vector.extract_strided_slice %7 {offsets = [0, 1024], sizes = [16, 1024], strides = [1, 1]} : vector<16x2048xf32> to vector<16x1024xf32>
    %12 = vector.shape_cast %11 : vector<16x1024xf32> to vector<2x8x1024xf32>
    %c0_9 = arith.constant 0 : index
    %c0_10 = arith.constant 0 : index
    %c0_11 = arith.constant 0 : index
    %13 = vector.load %arg5[%c0_9, %c0_10, %c0_11] : memref<2x8x1024xf32, #tpu.memory_space<vmem>>, vector<2x8x1024xf32>
    tpu.vector_store %arg5[%c0_9, %c0_10, %c0_11], %12 {strides = array<i32>} : memref<2x8x1024xf32, #tpu.memory_space<vmem>>, vector<2x8x1024xf32>,
    return
  }
  func.func @transform_0(%arg0: i32) -> (i32, i32, i32) {
    %c0_i32 = arith.constant 0 : i32
    %c0_i32_0 = arith.constant 0 : i32
    %c0_i32_1 = arith.constant 0 : i32
    return %c0_i32, %arg0, %c0_i32_0 : i32, i32, i32
  }
  func.func @transform_1(%arg0: i32) -> (i32, i32) {
    %c0_i32 = arith.constant 0 : i32
    %c0_i32_0 = arith.constant 0 : i32
    %c0_i32_1 = arith.constant 0 : i32
    return %c0_i32, %c0_i32_0 : i32, i32
  }
  func.func @transform_2(%arg0: i32) -> (i32, i32) {
    %c0_i32 = arith.constant 0 : i32
    %c0_i32_0 = arith.constant 0 : i32
    %c0_i32_1 = arith.constant 0 : i32
    return %c0_i32, %c0_i32_0 : i32, i32
  }
  func.func @transform_3(%arg0: i32) -> (i32, i32, i32) {
    %c0_i32 = arith.constant 0 : i32
    %c0_i32_0 = arith.constant 0 : i32
    %c0_i32_1 = arith.constant 0 : i32
    return %c0_i32, %arg0, %c0_i32_0 : i32, i32, i32
  }
  func.func @transform_4(%arg0: i32) -> (i32, i32, i32) {
    %c0_i32 = arith.constant 0 : i32
    %c0_i32_0 = arith.constant 0 : i32
    %c0_i32_1 = arith.constant 0 : i32
    return %c0_i32, %arg0, %c0_i32_0 : i32, i32, i32
  }
}

module attributes {stable_mosaic.version = 11 : i64} {
  func.func @_bilstm_head_kernel(%arg0: i32, %arg1: memref<2x8x1024xf32, #tpu.memory_space<vmem>>, %arg2: memref<2x8x1024xf32, #tpu.memory_space<vmem>>, %arg3: memref<256x1024xbf16, #tpu.memory_space<vmem>>, %arg4: memref<256x1024xbf16, #tpu.memory_space<vmem>>, %arg5: memref<256x256xf32, #tpu.memory_space<vmem>>, %arg6: memref<256x256xf32, #tpu.memory_space<vmem>>, %arg7: memref<1x256xf32, #tpu.memory_space<vmem>>, %arg8: memref<256x1xf32, #tpu.memory_space<vmem>>, %arg9: memref<1x1xf32, #tpu.memory_space<vmem>>, %arg10: memref<2x1xf32, #tpu.memory_space<vmem>>, %arg11: memref<2x256xf32, #tpu.memory_space<vmem>>, %arg12: memref<2x256xf32, #tpu.memory_space<vmem>>, %arg13: memref<2x256xf32, #tpu.memory_space<vmem>>, %arg14: memref<2x256xf32, #tpu.memory_space<vmem>>) attributes {dimension_semantics = [#tpu.dimension_semantics<arbitrary>], iteration_bounds = array<i64: 1>, scalar_prefetch = 0 : i64, scratch_operands = 4 : i64, tpu.core_type = #tpu.core_type<tc>, window_params = [{transform_indices = @transform_0, window_bounds = array<i64: 2, 8, 1024>}, {transform_indices = @transform_1, window_bounds = array<i64: 2, 8, 1024>}, {pipeline_mode = #tpu.pipeline_mode<synchronous>, transform_indices = @transform_2, window_bounds = array<i64: 256, 1024>}, {pipeline_mode = #tpu.pipeline_mode<synchronous>, transform_indices = @transform_3, window_bounds = array<i64: 256, 1024>}, {pipeline_mode = #tpu.pipeline_mode<synchronous>, transform_indices = @transform_4, window_bounds = array<i64: 256, 256>}, {pipeline_mode = #tpu.pipeline_mode<synchronous>, transform_indices = @transform_5, window_bounds = array<i64: 256, 256>}, {pipeline_mode = #tpu.pipeline_mode<synchronous>, transform_indices = @transform_6, window_bounds = array<i64: 1, 256>}, {pipeline_mode = #tpu.pipeline_mode<synchronous>, transform_indices = @transform_7, window_bounds = array<i64: 256, 1>}, {pipeline_mode = #tpu.pipeline_mode<synchronous>, transform_indices = @transform_8, window_bounds = array<i64: 1, 1>}, {pipeline_mode = #tpu.pipeline_mode<synchronous>, transform_indices = @transform_9, window_bounds = array<i64: 2, 1>}]} {
    %c0_i32 = arith.constant 0 : i32
    %0 = arith.cmpi eq, %arg0, %c0_i32 : i32
    %1 = arith.extui %0 : i1 to i32
    %c0_i32_0 = arith.constant 0 : i32
    %2 = arith.cmpi ne, %1, %c0_i32_0 : i32
    scf.if %2 {
      %cst_94 = arith.constant 0.000000e+00 : f32
      %352 = vector.broadcast %cst_94 : f32 to vector<2x256xf32>
      %c0_95 = arith.constant 0 : index
      %c0_96 = arith.constant 0 : index
      %353 = vector.load %arg11[%c0_95, %c0_96] : memref<2x256xf32, #tpu.memory_space<vmem>>, vector<2x256xf32>
      tpu.vector_store %arg11[%c0_95, %c0_96], %352 {strides = array<i32>} : memref<2x256xf32, #tpu.memory_space<vmem>>, vector<2x256xf32>,
      %cst_97 = arith.constant 0.000000e+00 : f32
      %354 = vector.broadcast %cst_97 : f32 to vector<2x256xf32>
      %c0_98 = arith.constant 0 : index
      %c0_99 = arith.constant 0 : index
      %355 = vector.load %arg12[%c0_98, %c0_99] : memref<2x256xf32, #tpu.memory_space<vmem>>, vector<2x256xf32>
      tpu.vector_store %arg12[%c0_98, %c0_99], %354 {strides = array<i32>} : memref<2x256xf32, #tpu.memory_space<vmem>>, vector<2x256xf32>,
      %cst_100 = arith.constant 0.000000e+00 : f32
      %356 = vector.broadcast %cst_100 : f32 to vector<2x256xf32>
      %c0_101 = arith.constant 0 : index
      %c0_102 = arith.constant 0 : index
      %357 = vector.load %arg13[%c0_101, %c0_102] : memref<2x256xf32, #tpu.memory_space<vmem>>, vector<2x256xf32>
      tpu.vector_store %arg13[%c0_101, %c0_102], %356 {strides = array<i32>} : memref<2x256xf32, #tpu.memory_space<vmem>>, vector<2x256xf32>,
      %cst_103 = arith.constant 0.000000e+00 : f32
      %358 = vector.broadcast %cst_103 : f32 to vector<2x256xf32>
      %c0_104 = arith.constant 0 : index
      %c0_105 = arith.constant 0 : index
      %359 = vector.load %arg14[%c0_104, %c0_105] : memref<2x256xf32, #tpu.memory_space<vmem>>, vector<2x256xf32>
      tpu.vector_store %arg14[%c0_104, %c0_105], %358 {strides = array<i32>} : memref<2x256xf32, #tpu.memory_space<vmem>>, vector<2x256xf32>,
    } else {
    }
    %c0 = arith.constant 0 : index
    %c0_1 = arith.constant 0 : index
    %3 = vector.load %arg3[%c0, %c0_1] : memref<256x1024xbf16, #tpu.memory_space<vmem>>, vector<256x1024xbf16>
    %c0_2 = arith.constant 0 : index
    %c0_3 = arith.constant 0 : index
    %4 = vector.load %arg4[%c0_2, %c0_3] : memref<256x1024xbf16, #tpu.memory_space<vmem>>, vector<256x1024xbf16>
    %c0_4 = arith.constant 0 : index
    %c0_5 = arith.constant 0 : index
    %5 = vector.load %arg11[%c0_4, %c0_5] : memref<2x256xf32, #tpu.memory_space<vmem>>, vector<2x256xf32>
    %c0_6 = arith.constant 0 : index
    %c0_7 = arith.constant 0 : index
    %6 = vector.load %arg12[%c0_6, %c0_7] : memref<2x256xf32, #tpu.memory_space<vmem>>, vector<2x256xf32>
    %c0_8 = arith.constant 0 : index
    %c0_9 = arith.constant 0 : index
    %7 = vector.load %arg13[%c0_8, %c0_9] : memref<2x256xf32, #tpu.memory_space<vmem>>, vector<2x256xf32>
    %c0_10 = arith.constant 0 : index
    %c0_11 = arith.constant 0 : index
    %8 = vector.load %arg14[%c0_10, %c0_11] : memref<2x256xf32, #tpu.memory_space<vmem>>, vector<2x256xf32>
    %c0_12 = arith.constant 0 : index
    %c0_13 = arith.constant 0 : index
    %c0_14 = arith.constant 0 : index
    %9 = vector.load %arg1[%c0_12, %c0_13, %c0_14] : memref<2x8x1024xf32, #tpu.memory_space<vmem>>, vector<2x1x1024xf32>
    %10 = vector.shape_cast %9 : vector<2x1x1024xf32> to vector<2x1024xf32>
    %11 = arith.truncf %5 : vector<2x256xf32> to vector<2x256xbf16>
    %cst = arith.constant dense<0.000000e+00> : vector<2x1024xf32>
    %12 = tpu.matmul %11, %3, %cst {dimension_numbers = #tpu.dot_dimension_numbers<[1], [0], [0], [1], [0, 0, 1, 1], [], []>} : vector<2x256xbf16>, vector<256x1024xbf16>, vector<2x1024xf32> -> vector<2x1024xf32>
    %13 = arith.addf %10, %12 : vector<2x1024xf32>
    %14 = vector.extract_strided_slice %13 {offsets = [0, 0], sizes = [2, 768], strides = [1, 1]} : vector<2x1024xf32> to vector<2x768xf32>
    %15 = arith.negf %14 : vector<2x768xf32>
    %16 = math.exp %15 : vector<2x768xf32>
    %cst_15 = arith.constant 1.000000e+00 : f32
    %17 = vector.broadcast %cst_15 : f32 to vector<2x768xf32>
    %18 = arith.addf %17, %16 : vector<2x768xf32>
    %19 = arith.divf %17, %18 : vector<2x768xf32>
    %20 = vector.extract_strided_slice %13 {offsets = [0, 768], sizes = [2, 256], strides = [1, 1]} : vector<2x1024xf32> to vector<2x256xf32>
    %21 = math.tanh %20 : vector<2x256xf32>
    %22 = vector.extract_strided_slice %19 {offsets = [0, 0], sizes = [2, 256], strides = [1, 1]} : vector<2x768xf32> to vector<2x256xf32>
    %23 = vector.extract_strided_slice %19 {offsets = [0, 256], sizes = [2, 256], strides = [1, 1]} : vector<2x768xf32> to vector<2x256xf32>
    %24 = vector.extract_strided_slice %19 {offsets = [0, 512], sizes = [2, 256], strides = [1, 1]} : vector<2x768xf32> to vector<2x256xf32>
    %25 = arith.mulf %23, %6 : vector<2x256xf32>
    %26 = arith.mulf %22, %21 : vector<2x256xf32>
    %27 = arith.addf %25, %26 : vector<2x256xf32>
    %28 = math.tanh %27 : vector<2x256xf32>
    %29 = arith.mulf %24, %28 : vector<2x256xf32>
    %c0_16 = arith.constant 0 : index
    %c7 = arith.constant 7 : index
    %c0_17 = arith.constant 0 : index
    %30 = vector.load %arg2[%c0_16, %c7, %c0_17] : memref<2x8x1024xf32, #tpu.memory_space<vmem>>, vector<2x1x1024xf32>
    %31 = vector.shape_cast %30 : vector<2x1x1024xf32> to vector<2x1024xf32>
    %32 = arith.truncf %7 : vector<2x256xf32> to vector<2x256xbf16>
    %cst_18 = arith.constant dense<0.000000e+00> : vector<2x1024xf32>
    %33 = tpu.matmul %32, %4, %cst_18 {dimension_numbers = #tpu.dot_dimension_numbers<[1], [0], [0], [1], [0, 0, 1, 1], [], []>} : vector<2x256xbf16>, vector<256x1024xbf16>, vector<2x1024xf32> -> vector<2x1024xf32>
    %34 = arith.addf %31, %33 : vector<2x1024xf32>
    %35 = vector.extract_strided_slice %34 {offsets = [0, 0], sizes = [2, 768], strides = [1, 1]} : vector<2x1024xf32> to vector<2x768xf32>
    %36 = arith.negf %35 : vector<2x768xf32>
    %37 = math.exp %36 : vector<2x768xf32>
    %cst_19 = arith.constant 1.000000e+00 : f32
    %38 = vector.broadcast %cst_19 : f32 to vector<2x768xf32>
    %39 = arith.addf %38, %37 : vector<2x768xf32>
    %40 = arith.divf %38, %39 : vector<2x768xf32>
    %41 = vector.extract_strided_slice %34 {offsets = [0, 768], sizes = [2, 256], strides = [1, 1]} : vector<2x1024xf32> to vector<2x256xf32>
    %42 = math.tanh %41 : vector<2x256xf32>
    %43 = vector.extract_strided_slice %40 {offsets = [0, 0], sizes = [2, 256], strides = [1, 1]} : vector<2x768xf32> to vector<2x256xf32>
    %44 = vector.extract_strided_slice %40 {offsets = [0, 256], sizes = [2, 256], strides = [1, 1]} : vector<2x768xf32> to vector<2x256xf32>
    %45 = vector.extract_strided_slice %40 {offsets = [0, 512], sizes = [2, 256], strides = [1, 1]} : vector<2x768xf32> to vector<2x256xf32>
    %46 = arith.mulf %44, %8 : vector<2x256xf32>
    %47 = arith.mulf %43, %42 : vector<2x256xf32>
    %48 = arith.addf %46, %47 : vector<2x256xf32>
    %49 = math.tanh %48 : vector<2x256xf32>
    %50 = arith.mulf %45, %49 : vector<2x256xf32>
    %c0_20 = arith.constant 0 : index
    %c1 = arith.constant 1 : index
    %c0_21 = arith.constant 0 : index
    %51 = vector.load %arg1[%c0_20, %c1, %c0_21] : memref<2x8x1024xf32, #tpu.memory_space<vmem>>, vector<2x1x1024xf32>
    %52 = vector.shape_cast %51 : vector<2x1x1024xf32> to vector<2x1024xf32>
    %53 = arith.truncf %29 : vector<2x256xf32> to vector<2x256xbf16>
    %cst_22 = arith.constant dense<0.000000e+00> : vector<2x1024xf32>
    %54 = tpu.matmul %53, %3, %cst_22 {dimension_numbers = #tpu.dot_dimension_numbers<[1], [0], [0], [1], [0, 0, 1, 1], [], []>} : vector<2x256xbf16>, vector<256x1024xbf16>, vector<2x1024xf32> -> vector<2x1024xf32>
    %55 = arith.addf %52, %54 : vector<2x1024xf32>
    %56 = vector.extract_strided_slice %55 {offsets = [0, 0], sizes = [2, 768], strides = [1, 1]} : vector<2x1024xf32> to vector<2x768xf32>
    %57 = arith.negf %56 : vector<2x768xf32>
    %58 = math.exp %57 : vector<2x768xf32>
    %cst_23 = arith.constant 1.000000e+00 : f32
    %59 = vector.broadcast %cst_23 : f32 to vector<2x768xf32>
    %60 = arith.addf %59, %58 : vector<2x768xf32>
    %61 = arith.divf %59, %60 : vector<2x768xf32>
    %62 = vector.extract_strided_slice %55 {offsets = [0, 768], sizes = [2, 256], strides = [1, 1]} : vector<2x1024xf32> to vector<2x256xf32>
    %63 = math.tanh %62 : vector<2x256xf32>
    %64 = vector.extract_strided_slice %61 {offsets = [0, 0], sizes = [2, 256], strides = [1, 1]} : vector<2x768xf32> to vector<2x256xf32>
    %65 = vector.extract_strided_slice %61 {offsets = [0, 256], sizes = [2, 256], strides = [1, 1]} : vector<2x768xf32> to vector<2x256xf32>
    %66 = vector.extract_strided_slice %61 {offsets = [0, 512], sizes = [2, 256], strides = [1, 1]} : vector<2x768xf32> to vector<2x256xf32>
    %67 = arith.mulf %65, %27 : vector<2x256xf32>
    %68 = arith.mulf %64, %63 : vector<2x256xf32>
    %69 = arith.addf %67, %68 : vector<2x256xf32>
    %70 = math.tanh %69 : vector<2x256xf32>
    %71 = arith.mulf %66, %70 : vector<2x256xf32>
    %c0_24 = arith.constant 0 : index
    %c6 = arith.constant 6 : index
    %c0_25 = arith.constant 0 : index
    %72 = vector.load %arg2[%c0_24, %c6, %c0_25] : memref<2x8x1024xf32, #tpu.memory_space<vmem>>, vector<2x1x1024xf32>
    %73 = vector.shape_cast %72 : vector<2x1x1024xf32> to vector<2x1024xf32>
    %74 = arith.truncf %50 : vector<2x256xf32> to vector<2x256xbf16>
    %cst_26 = arith.constant dense<0.000000e+00> : vector<2x1024xf32>
    %75 = tpu.matmul %74, %4, %cst_26 {dimension_numbers = #tpu.dot_dimension_numbers<[1], [0], [0], [1], [0, 0, 1, 1], [], []>} : vector<2x256xbf16>, vector<256x1024xbf16>, vector<2x1024xf32> -> vector<2x1024xf32>
    %76 = arith.addf %73, %75 : vector<2x1024xf32>
    %77 = vector.extract_strided_slice %76 {offsets = [0, 0], sizes = [2, 768], strides = [1, 1]} : vector<2x1024xf32> to vector<2x768xf32>
    %78 = arith.negf %77 : vector<2x768xf32>
    %79 = math.exp %78 : vector<2x768xf32>
    %cst_27 = arith.constant 1.000000e+00 : f32
    %80 = vector.broadcast %cst_27 : f32 to vector<2x768xf32>
    %81 = arith.addf %80, %79 : vector<2x768xf32>
    %82 = arith.divf %80, %81 : vector<2x768xf32>
    %83 = vector.extract_strided_slice %76 {offsets = [0, 768], sizes = [2, 256], strides = [1, 1]} : vector<2x1024xf32> to vector<2x256xf32>
    %84 = math.tanh %83 : vector<2x256xf32>
    %85 = vector.extract_strided_slice %82 {offsets = [0, 0], sizes = [2, 256], strides = [1, 1]} : vector<2x768xf32> to vector<2x256xf32>
    %86 = vector.extract_strided_slice %82 {offsets = [0, 256], sizes = [2, 256], strides = [1, 1]} : vector<2x768xf32> to vector<2x256xf32>
    %87 = vector.extract_strided_slice %82 {offsets = [0, 512], sizes = [2, 256], strides = [1, 1]} : vector<2x768xf32> to vector<2x256xf32>
    %88 = arith.mulf %86, %48 : vector<2x256xf32>
    %89 = arith.mulf %85, %84 : vector<2x256xf32>
    %90 = arith.addf %88, %89 : vector<2x256xf32>
    %91 = math.tanh %90 : vector<2x256xf32>
    %92 = arith.mulf %87, %91 : vector<2x256xf32>
    %c0_28 = arith.constant 0 : index
    %c2 = arith.constant 2 : index
    %c0_29 = arith.constant 0 : index
    %93 = vector.load %arg1[%c0_28, %c2, %c0_29] : memref<2x8x1024xf32, #tpu.memory_space<vmem>>, vector<2x1x1024xf32>
    %94 = vector.shape_cast %93 : vector<2x1x1024xf32> to vector<2x1024xf32>
    %95 = arith.truncf %71 : vector<2x256xf32> to vector<2x256xbf16>
    %cst_30 = arith.constant dense<0.000000e+00> : vector<2x1024xf32>
    %96 = tpu.matmul %95, %3, %cst_30 {dimension_numbers = #tpu.dot_dimension_numbers<[1], [0], [0], [1], [0, 0, 1, 1], [], []>} : vector<2x256xbf16>, vector<256x1024xbf16>, vector<2x1024xf32> -> vector<2x1024xf32>
    %97 = arith.addf %94, %96 : vector<2x1024xf32>
    %98 = vector.extract_strided_slice %97 {offsets = [0, 0], sizes = [2, 768], strides = [1, 1]} : vector<2x1024xf32> to vector<2x768xf32>
    %99 = arith.negf %98 : vector<2x768xf32>
    %100 = math.exp %99 : vector<2x768xf32>
    %cst_31 = arith.constant 1.000000e+00 : f32
    %101 = vector.broadcast %cst_31 : f32 to vector<2x768xf32>
    %102 = arith.addf %101, %100 : vector<2x768xf32>
    %103 = arith.divf %101, %102 : vector<2x768xf32>
    %104 = vector.extract_strided_slice %97 {offsets = [0, 768], sizes = [2, 256], strides = [1, 1]} : vector<2x1024xf32> to vector<2x256xf32>
    %105 = math.tanh %104 : vector<2x256xf32>
    %106 = vector.extract_strided_slice %103 {offsets = [0, 0], sizes = [2, 256], strides = [1, 1]} : vector<2x768xf32> to vector<2x256xf32>
    %107 = vector.extract_strided_slice %103 {offsets = [0, 256], sizes = [2, 256], strides = [1, 1]} : vector<2x768xf32> to vector<2x256xf32>
    %108 = vector.extract_strided_slice %103 {offsets = [0, 512], sizes = [2, 256], strides = [1, 1]} : vector<2x768xf32> to vector<2x256xf32>
    %109 = arith.mulf %107, %69 : vector<2x256xf32>
    %110 = arith.mulf %106, %105 : vector<2x256xf32>
    %111 = arith.addf %109, %110 : vector<2x256xf32>
    %112 = math.tanh %111 : vector<2x256xf32>
    %113 = arith.mulf %108, %112 : vector<2x256xf32>
    %c0_32 = arith.constant 0 : index
    %c5 = arith.constant 5 : index
    %c0_33 = arith.constant 0 : index
    %114 = vector.load %arg2[%c0_32, %c5, %c0_33] : memref<2x8x1024xf32, #tpu.memory_space<vmem>>, vector<2x1x1024xf32>
    %115 = vector.shape_cast %114 : vector<2x1x1024xf32> to vector<2x1024xf32>
    %116 = arith.truncf %92 : vector<2x256xf32> to vector<2x256xbf16>
    %cst_34 = arith.constant dense<0.000000e+00> : vector<2x1024xf32>
    %117 = tpu.matmul %116, %4, %cst_34 {dimension_numbers = #tpu.dot_dimension_numbers<[1], [0], [0], [1], [0, 0, 1, 1], [], []>} : vector<2x256xbf16>, vector<256x1024xbf16>, vector<2x1024xf32> -> vector<2x1024xf32>
    %118 = arith.addf %115, %117 : vector<2x1024xf32>
    %119 = vector.extract_strided_slice %118 {offsets = [0, 0], sizes = [2, 768], strides = [1, 1]} : vector<2x1024xf32> to vector<2x768xf32>
    %120 = arith.negf %119 : vector<2x768xf32>
    %121 = math.exp %120 : vector<2x768xf32>
    %cst_35 = arith.constant 1.000000e+00 : f32
    %122 = vector.broadcast %cst_35 : f32 to vector<2x768xf32>
    %123 = arith.addf %122, %121 : vector<2x768xf32>
    %124 = arith.divf %122, %123 : vector<2x768xf32>
    %125 = vector.extract_strided_slice %118 {offsets = [0, 768], sizes = [2, 256], strides = [1, 1]} : vector<2x1024xf32> to vector<2x256xf32>
    %126 = math.tanh %125 : vector<2x256xf32>
    %127 = vector.extract_strided_slice %124 {offsets = [0, 0], sizes = [2, 256], strides = [1, 1]} : vector<2x768xf32> to vector<2x256xf32>
    %128 = vector.extract_strided_slice %124 {offsets = [0, 256], sizes = [2, 256], strides = [1, 1]} : vector<2x768xf32> to vector<2x256xf32>
    %129 = vector.extract_strided_slice %124 {offsets = [0, 512], sizes = [2, 256], strides = [1, 1]} : vector<2x768xf32> to vector<2x256xf32>
    %130 = arith.mulf %128, %90 : vector<2x256xf32>
    %131 = arith.mulf %127, %126 : vector<2x256xf32>
    %132 = arith.addf %130, %131 : vector<2x256xf32>
    %133 = math.tanh %132 : vector<2x256xf32>
    %134 = arith.mulf %129, %133 : vector<2x256xf32>
    %c0_36 = arith.constant 0 : index
    %c3 = arith.constant 3 : index
    %c0_37 = arith.constant 0 : index
    %135 = vector.load %arg1[%c0_36, %c3, %c0_37] : memref<2x8x1024xf32, #tpu.memory_space<vmem>>, vector<2x1x1024xf32>
    %136 = vector.shape_cast %135 : vector<2x1x1024xf32> to vector<2x1024xf32>
    %137 = arith.truncf %113 : vector<2x256xf32> to vector<2x256xbf16>
    %cst_38 = arith.constant dense<0.000000e+00> : vector<2x1024xf32>
    %138 = tpu.matmul %137, %3, %cst_38 {dimension_numbers = #tpu.dot_dimension_numbers<[1], [0], [0], [1], [0, 0, 1, 1], [], []>} : vector<2x256xbf16>, vector<256x1024xbf16>, vector<2x1024xf32> -> vector<2x1024xf32>
    %139 = arith.addf %136, %138 : vector<2x1024xf32>
    %140 = vector.extract_strided_slice %139 {offsets = [0, 0], sizes = [2, 768], strides = [1, 1]} : vector<2x1024xf32> to vector<2x768xf32>
    %141 = arith.negf %140 : vector<2x768xf32>
    %142 = math.exp %141 : vector<2x768xf32>
    %cst_39 = arith.constant 1.000000e+00 : f32
    %143 = vector.broadcast %cst_39 : f32 to vector<2x768xf32>
    %144 = arith.addf %143, %142 : vector<2x768xf32>
    %145 = arith.divf %143, %144 : vector<2x768xf32>
    %146 = vector.extract_strided_slice %139 {offsets = [0, 768], sizes = [2, 256], strides = [1, 1]} : vector<2x1024xf32> to vector<2x256xf32>
    %147 = math.tanh %146 : vector<2x256xf32>
    %148 = vector.extract_strided_slice %145 {offsets = [0, 0], sizes = [2, 256], strides = [1, 1]} : vector<2x768xf32> to vector<2x256xf32>
    %149 = vector.extract_strided_slice %145 {offsets = [0, 256], sizes = [2, 256], strides = [1, 1]} : vector<2x768xf32> to vector<2x256xf32>
    %150 = vector.extract_strided_slice %145 {offsets = [0, 512], sizes = [2, 256], strides = [1, 1]} : vector<2x768xf32> to vector<2x256xf32>
    %151 = arith.mulf %149, %111 : vector<2x256xf32>
    %152 = arith.mulf %148, %147 : vector<2x256xf32>
    %153 = arith.addf %151, %152 : vector<2x256xf32>
    %154 = math.tanh %153 : vector<2x256xf32>
    %155 = arith.mulf %150, %154 : vector<2x256xf32>
    %c0_40 = arith.constant 0 : index
    %c4 = arith.constant 4 : index
    %c0_41 = arith.constant 0 : index
    %156 = vector.load %arg2[%c0_40, %c4, %c0_41] : memref<2x8x1024xf32, #tpu.memory_space<vmem>>, vector<2x1x1024xf32>
    %157 = vector.shape_cast %156 : vector<2x1x1024xf32> to vector<2x1024xf32>
    %158 = arith.truncf %134 : vector<2x256xf32> to vector<2x256xbf16>
    %cst_42 = arith.constant dense<0.000000e+00> : vector<2x1024xf32>
    %159 = tpu.matmul %158, %4, %cst_42 {dimension_numbers = #tpu.dot_dimension_numbers<[1], [0], [0], [1], [0, 0, 1, 1], [], []>} : vector<2x256xbf16>, vector<256x1024xbf16>, vector<2x1024xf32> -> vector<2x1024xf32>
    %160 = arith.addf %157, %159 : vector<2x1024xf32>
    %161 = vector.extract_strided_slice %160 {offsets = [0, 0], sizes = [2, 768], strides = [1, 1]} : vector<2x1024xf32> to vector<2x768xf32>
    %162 = arith.negf %161 : vector<2x768xf32>
    %163 = math.exp %162 : vector<2x768xf32>
    %cst_43 = arith.constant 1.000000e+00 : f32
    %164 = vector.broadcast %cst_43 : f32 to vector<2x768xf32>
    %165 = arith.addf %164, %163 : vector<2x768xf32>
    %166 = arith.divf %164, %165 : vector<2x768xf32>
    %167 = vector.extract_strided_slice %160 {offsets = [0, 768], sizes = [2, 256], strides = [1, 1]} : vector<2x1024xf32> to vector<2x256xf32>
    %168 = math.tanh %167 : vector<2x256xf32>
    %169 = vector.extract_strided_slice %166 {offsets = [0, 0], sizes = [2, 256], strides = [1, 1]} : vector<2x768xf32> to vector<2x256xf32>
    %170 = vector.extract_strided_slice %166 {offsets = [0, 256], sizes = [2, 256], strides = [1, 1]} : vector<2x768xf32> to vector<2x256xf32>
    %171 = vector.extract_strided_slice %166 {offsets = [0, 512], sizes = [2, 256], strides = [1, 1]} : vector<2x768xf32> to vector<2x256xf32>
    %172 = arith.mulf %170, %132 : vector<2x256xf32>
    %173 = arith.mulf %169, %168 : vector<2x256xf32>
    %174 = arith.addf %172, %173 : vector<2x256xf32>
    %175 = math.tanh %174 : vector<2x256xf32>
    %176 = arith.mulf %171, %175 : vector<2x256xf32>
    %c0_44 = arith.constant 0 : index
    %c4_45 = arith.constant 4 : index
    %c0_46 = arith.constant 0 : index
    %177 = vector.load %arg1[%c0_44, %c4_45, %c0_46] : memref<2x8x1024xf32, #tpu.memory_space<vmem>>, vector<2x1x1024xf32>
    %178 = vector.shape_cast %177 : vector<2x1x1024xf32> to vector<2x1024xf32>
    %179 = arith.truncf %155 : vector<2x256xf32> to vector<2x256xbf16>
    %cst_47 = arith.constant dense<0.000000e+00> : vector<2x1024xf32>
    %180 = tpu.matmul %179, %3, %cst_47 {dimension_numbers = #tpu.dot_dimension_numbers<[1], [0], [0], [1], [0, 0, 1, 1], [], []>} : vector<2x256xbf16>, vector<256x1024xbf16>, vector<2x1024xf32> -> vector<2x1024xf32>
    %181 = arith.addf %178, %180 : vector<2x1024xf32>
    %182 = vector.extract_strided_slice %181 {offsets = [0, 0], sizes = [2, 768], strides = [1, 1]} : vector<2x1024xf32> to vector<2x768xf32>
    %183 = arith.negf %182 : vector<2x768xf32>
    %184 = math.exp %183 : vector<2x768xf32>
    %cst_48 = arith.constant 1.000000e+00 : f32
    %185 = vector.broadcast %cst_48 : f32 to vector<2x768xf32>
    %186 = arith.addf %185, %184 : vector<2x768xf32>
    %187 = arith.divf %185, %186 : vector<2x768xf32>
    %188 = vector.extract_strided_slice %181 {offsets = [0, 768], sizes = [2, 256], strides = [1, 1]} : vector<2x1024xf32> to vector<2x256xf32>
    %189 = math.tanh %188 : vector<2x256xf32>
    %190 = vector.extract_strided_slice %187 {offsets = [0, 0], sizes = [2, 256], strides = [1, 1]} : vector<2x768xf32> to vector<2x256xf32>
    %191 = vector.extract_strided_slice %187 {offsets = [0, 256], sizes = [2, 256], strides = [1, 1]} : vector<2x768xf32> to vector<2x256xf32>
    %192 = vector.extract_strided_slice %187 {offsets = [0, 512], sizes = [2, 256], strides = [1, 1]} : vector<2x768xf32> to vector<2x256xf32>
    %193 = arith.mulf %191, %153 : vector<2x256xf32>
    %194 = arith.mulf %190, %189 : vector<2x256xf32>
    %195 = arith.addf %193, %194 : vector<2x256xf32>
    %196 = math.tanh %195 : vector<2x256xf32>
    %197 = arith.mulf %192, %196 : vector<2x256xf32>
    %c0_49 = arith.constant 0 : index
    %c3_50 = arith.constant 3 : index
    %c0_51 = arith.constant 0 : index
    %198 = vector.load %arg2[%c0_49, %c3_50, %c0_51] : memref<2x8x1024xf32, #tpu.memory_space<vmem>>, vector<2x1x1024xf32>
    %199 = vector.shape_cast %198 : vector<2x1x1024xf32> to vector<2x1024xf32>
    %200 = arith.truncf %176 : vector<2x256xf32> to vector<2x256xbf16>
    %cst_52 = arith.constant dense<0.000000e+00> : vector<2x1024xf32>
    %201 = tpu.matmul %200, %4, %cst_52 {dimension_numbers = #tpu.dot_dimension_numbers<[1], [0], [0], [1], [0, 0, 1, 1], [], []>} : vector<2x256xbf16>, vector<256x1024xbf16>, vector<2x1024xf32> -> vector<2x1024xf32>
    %202 = arith.addf %199, %201 : vector<2x1024xf32>
    %203 = vector.extract_strided_slice %202 {offsets = [0, 0], sizes = [2, 768], strides = [1, 1]} : vector<2x1024xf32> to vector<2x768xf32>
    %204 = arith.negf %203 : vector<2x768xf32>
    %205 = math.exp %204 : vector<2x768xf32>
    %cst_53 = arith.constant 1.000000e+00 : f32
    %206 = vector.broadcast %cst_53 : f32 to vector<2x768xf32>
    %207 = arith.addf %206, %205 : vector<2x768xf32>
    %208 = arith.divf %206, %207 : vector<2x768xf32>
    %209 = vector.extract_strided_slice %202 {offsets = [0, 768], sizes = [2, 256], strides = [1, 1]} : vector<2x1024xf32> to vector<2x256xf32>
    %210 = math.tanh %209 : vector<2x256xf32>
    %211 = vector.extract_strided_slice %208 {offsets = [0, 0], sizes = [2, 256], strides = [1, 1]} : vector<2x768xf32> to vector<2x256xf32>
    %212 = vector.extract_strided_slice %208 {offsets = [0, 256], sizes = [2, 256], strides = [1, 1]} : vector<2x768xf32> to vector<2x256xf32>
    %213 = vector.extract_strided_slice %208 {offsets = [0, 512], sizes = [2, 256], strides = [1, 1]} : vector<2x768xf32> to vector<2x256xf32>
    %214 = arith.mulf %212, %174 : vector<2x256xf32>
    %215 = arith.mulf %211, %210 : vector<2x256xf32>
    %216 = arith.addf %214, %215 : vector<2x256xf32>
    %217 = math.tanh %216 : vector<2x256xf32>
    %218 = arith.mulf %213, %217 : vector<2x256xf32>
    %c0_54 = arith.constant 0 : index
    %c5_55 = arith.constant 5 : index
    %c0_56 = arith.constant 0 : index
    %219 = vector.load %arg1[%c0_54, %c5_55, %c0_56] : memref<2x8x1024xf32, #tpu.memory_space<vmem>>, vector<2x1x1024xf32>
    %220 = vector.shape_cast %219 : vector<2x1x1024xf32> to vector<2x1024xf32>
    %221 = arith.truncf %197 : vector<2x256xf32> to vector<2x256xbf16>
    %cst_57 = arith.constant dense<0.000000e+00> : vector<2x1024xf32>
    %222 = tpu.matmul %221, %3, %cst_57 {dimension_numbers = #tpu.dot_dimension_numbers<[1], [0], [0], [1], [0, 0, 1, 1], [], []>} : vector<2x256xbf16>, vector<256x1024xbf16>, vector<2x1024xf32> -> vector<2x1024xf32>
    %223 = arith.addf %220, %222 : vector<2x1024xf32>
    %224 = vector.extract_strided_slice %223 {offsets = [0, 0], sizes = [2, 768], strides = [1, 1]} : vector<2x1024xf32> to vector<2x768xf32>
    %225 = arith.negf %224 : vector<2x768xf32>
    %226 = math.exp %225 : vector<2x768xf32>
    %cst_58 = arith.constant 1.000000e+00 : f32
    %227 = vector.broadcast %cst_58 : f32 to vector<2x768xf32>
    %228 = arith.addf %227, %226 : vector<2x768xf32>
    %229 = arith.divf %227, %228 : vector<2x768xf32>
    %230 = vector.extract_strided_slice %223 {offsets = [0, 768], sizes = [2, 256], strides = [1, 1]} : vector<2x1024xf32> to vector<2x256xf32>
    %231 = math.tanh %230 : vector<2x256xf32>
    %232 = vector.extract_strided_slice %229 {offsets = [0, 0], sizes = [2, 256], strides = [1, 1]} : vector<2x768xf32> to vector<2x256xf32>
    %233 = vector.extract_strided_slice %229 {offsets = [0, 256], sizes = [2, 256], strides = [1, 1]} : vector<2x768xf32> to vector<2x256xf32>
    %234 = vector.extract_strided_slice %229 {offsets = [0, 512], sizes = [2, 256], strides = [1, 1]} : vector<2x768xf32> to vector<2x256xf32>
    %235 = arith.mulf %233, %195 : vector<2x256xf32>
    %236 = arith.mulf %232, %231 : vector<2x256xf32>
    %237 = arith.addf %235, %236 : vector<2x256xf32>
    %238 = math.tanh %237 : vector<2x256xf32>
    %239 = arith.mulf %234, %238 : vector<2x256xf32>
    %c0_59 = arith.constant 0 : index
    %c2_60 = arith.constant 2 : index
    %c0_61 = arith.constant 0 : index
    %240 = vector.load %arg2[%c0_59, %c2_60, %c0_61] : memref<2x8x1024xf32, #tpu.memory_space<vmem>>, vector<2x1x1024xf32>
    %241 = vector.shape_cast %240 : vector<2x1x1024xf32> to vector<2x1024xf32>
    %242 = arith.truncf %218 : vector<2x256xf32> to vector<2x256xbf16>
    %cst_62 = arith.constant dense<0.000000e+00> : vector<2x1024xf32>
    %243 = tpu.matmul %242, %4, %cst_62 {dimension_numbers = #tpu.dot_dimension_numbers<[1], [0], [0], [1], [0, 0, 1, 1], [], []>} : vector<2x256xbf16>, vector<256x1024xbf16>, vector<2x1024xf32> -> vector<2x1024xf32>
    %244 = arith.addf %241, %243 : vector<2x1024xf32>
    %245 = vector.extract_strided_slice %244 {offsets = [0, 0], sizes = [2, 768], strides = [1, 1]} : vector<2x1024xf32> to vector<2x768xf32>
    %246 = arith.negf %245 : vector<2x768xf32>
    %247 = math.exp %246 : vector<2x768xf32>
    %cst_63 = arith.constant 1.000000e+00 : f32
    %248 = vector.broadcast %cst_63 : f32 to vector<2x768xf32>
    %249 = arith.addf %248, %247 : vector<2x768xf32>
    %250 = arith.divf %248, %249 : vector<2x768xf32>
    %251 = vector.extract_strided_slice %244 {offsets = [0, 768], sizes = [2, 256], strides = [1, 1]} : vector<2x1024xf32> to vector<2x256xf32>
    %252 = math.tanh %251 : vector<2x256xf32>
    %253 = vector.extract_strided_slice %250 {offsets = [0, 0], sizes = [2, 256], strides = [1, 1]} : vector<2x768xf32> to vector<2x256xf32>
    %254 = vector.extract_strided_slice %250 {offsets = [0, 256], sizes = [2, 256], strides = [1, 1]} : vector<2x768xf32> to vector<2x256xf32>
    %255 = vector.extract_strided_slice %250 {offsets = [0, 512], sizes = [2, 256], strides = [1, 1]} : vector<2x768xf32> to vector<2x256xf32>
    %256 = arith.mulf %254, %216 : vector<2x256xf32>
    %257 = arith.mulf %253, %252 : vector<2x256xf32>
    %258 = arith.addf %256, %257 : vector<2x256xf32>
    %259 = math.tanh %258 : vector<2x256xf32>
    %260 = arith.mulf %255, %259 : vector<2x256xf32>
    %c0_64 = arith.constant 0 : index
    %c6_65 = arith.constant 6 : index
    %c0_66 = arith.constant 0 : index
    %261 = vector.load %arg1[%c0_64, %c6_65, %c0_66] : memref<2x8x1024xf32, #tpu.memory_space<vmem>>, vector<2x1x1024xf32>
    %262 = vector.shape_cast %261 : vector<2x1x1024xf32> to vector<2x1024xf32>
    %263 = arith.truncf %239 : vector<2x256xf32> to vector<2x256xbf16>
    %cst_67 = arith.constant dense<0.000000e+00> : vector<2x1024xf32>
    %264 = tpu.matmul %263, %3, %cst_67 {dimension_numbers = #tpu.dot_dimension_numbers<[1], [0], [0], [1], [0, 0, 1, 1], [], []>} : vector<2x256xbf16>, vector<256x1024xbf16>, vector<2x1024xf32> -> vector<2x1024xf32>
    %265 = arith.addf %262, %264 : vector<2x1024xf32>
    %266 = vector.extract_strided_slice %265 {offsets = [0, 0], sizes = [2, 768], strides = [1, 1]} : vector<2x1024xf32> to vector<2x768xf32>
    %267 = arith.negf %266 : vector<2x768xf32>
    %268 = math.exp %267 : vector<2x768xf32>
    %cst_68 = arith.constant 1.000000e+00 : f32
    %269 = vector.broadcast %cst_68 : f32 to vector<2x768xf32>
    %270 = arith.addf %269, %268 : vector<2x768xf32>
    %271 = arith.divf %269, %270 : vector<2x768xf32>
    %272 = vector.extract_strided_slice %265 {offsets = [0, 768], sizes = [2, 256], strides = [1, 1]} : vector<2x1024xf32> to vector<2x256xf32>
    %273 = math.tanh %272 : vector<2x256xf32>
    %274 = vector.extract_strided_slice %271 {offsets = [0, 0], sizes = [2, 256], strides = [1, 1]} : vector<2x768xf32> to vector<2x256xf32>
    %275 = vector.extract_strided_slice %271 {offsets = [0, 256], sizes = [2, 256], strides = [1, 1]} : vector<2x768xf32> to vector<2x256xf32>
    %276 = vector.extract_strided_slice %271 {offsets = [0, 512], sizes = [2, 256], strides = [1, 1]} : vector<2x768xf32> to vector<2x256xf32>
    %277 = arith.mulf %275, %237 : vector<2x256xf32>
    %278 = arith.mulf %274, %273 : vector<2x256xf32>
    %279 = arith.addf %277, %278 : vector<2x256xf32>
    %280 = math.tanh %279 : vector<2x256xf32>
    %281 = arith.mulf %276, %280 : vector<2x256xf32>
    %c0_69 = arith.constant 0 : index
    %c1_70 = arith.constant 1 : index
    %c0_71 = arith.constant 0 : index
    %282 = vector.load %arg2[%c0_69, %c1_70, %c0_71] : memref<2x8x1024xf32, #tpu.memory_space<vmem>>, vector<2x1x1024xf32>
    %283 = vector.shape_cast %282 : vector<2x1x1024xf32> to vector<2x1024xf32>
    %284 = arith.truncf %260 : vector<2x256xf32> to vector<2x256xbf16>
    %cst_72 = arith.constant dense<0.000000e+00> : vector<2x1024xf32>
    %285 = tpu.matmul %284, %4, %cst_72 {dimension_numbers = #tpu.dot_dimension_numbers<[1], [0], [0], [1], [0, 0, 1, 1], [], []>} : vector<2x256xbf16>, vector<256x1024xbf16>, vector<2x1024xf32> -> vector<2x1024xf32>
    %286 = arith.addf %283, %285 : vector<2x1024xf32>
    %287 = vector.extract_strided_slice %286 {offsets = [0, 0], sizes = [2, 768], strides = [1, 1]} : vector<2x1024xf32> to vector<2x768xf32>
    %288 = arith.negf %287 : vector<2x768xf32>
    %289 = math.exp %288 : vector<2x768xf32>
    %cst_73 = arith.constant 1.000000e+00 : f32
    %290 = vector.broadcast %cst_73 : f32 to vector<2x768xf32>
    %291 = arith.addf %290, %289 : vector<2x768xf32>
    %292 = arith.divf %290, %291 : vector<2x768xf32>
    %293 = vector.extract_strided_slice %286 {offsets = [0, 768], sizes = [2, 256], strides = [1, 1]} : vector<2x1024xf32> to vector<2x256xf32>
    %294 = math.tanh %293 : vector<2x256xf32>
    %295 = vector.extract_strided_slice %292 {offsets = [0, 0], sizes = [2, 256], strides = [1, 1]} : vector<2x768xf32> to vector<2x256xf32>
    %296 = vector.extract_strided_slice %292 {offsets = [0, 256], sizes = [2, 256], strides = [1, 1]} : vector<2x768xf32> to vector<2x256xf32>
    %297 = vector.extract_strided_slice %292 {offsets = [0, 512], sizes = [2, 256], strides = [1, 1]} : vector<2x768xf32> to vector<2x256xf32>
    %298 = arith.mulf %296, %258 : vector<2x256xf32>
    %299 = arith.mulf %295, %294 : vector<2x256xf32>
    %300 = arith.addf %298, %299 : vector<2x256xf32>
    %301 = math.tanh %300 : vector<2x256xf32>
    %302 = arith.mulf %297, %301 : vector<2x256xf32>
    %c0_74 = arith.constant 0 : index
    %c7_75 = arith.constant 7 : index
    %c0_76 = arith.constant 0 : index
    %303 = vector.load %arg1[%c0_74, %c7_75, %c0_76] : memref<2x8x1024xf32, #tpu.memory_space<vmem>>, vector<2x1x1024xf32>
    %304 = vector.shape_cast %303 : vector<2x1x1024xf32> to vector<2x1024xf32>
    %305 = arith.truncf %281 : vector<2x256xf32> to vector<2x256xbf16>
    %cst_77 = arith.constant dense<0.000000e+00> : vector<2x1024xf32>
    %306 = tpu.matmul %305, %3, %cst_77 {dimension_numbers = #tpu.dot_dimension_numbers<[1], [0], [0], [1], [0, 0, 1, 1], [], []>} : vector<2x256xbf16>, vector<256x1024xbf16>, vector<2x1024xf32> -> vector<2x1024xf32>
    %307 = arith.addf %304, %306 : vector<2x1024xf32>
    %308 = vector.extract_strided_slice %307 {offsets = [0, 0], sizes = [2, 768], strides = [1, 1]} : vector<2x1024xf32> to vector<2x768xf32>
    %309 = arith.negf %308 : vector<2x768xf32>
    %310 = math.exp %309 : vector<2x768xf32>
    %cst_78 = arith.constant 1.000000e+00 : f32
    %311 = vector.broadcast %cst_78 : f32 to vector<2x768xf32>
    %312 = arith.addf %311, %310 : vector<2x768xf32>
    %313 = arith.divf %311, %312 : vector<2x768xf32>
    %314 = vector.extract_strided_slice %307 {offsets = [0, 768], sizes = [2, 256], strides = [1, 1]} : vector<2x1024xf32> to vector<2x256xf32>
    %315 = math.tanh %314 : vector<2x256xf32>
    %316 = vector.extract_strided_slice %313 {offsets = [0, 0], sizes = [2, 256], strides = [1, 1]} : vector<2x768xf32> to vector<2x256xf32>
    %317 = vector.extract_strided_slice %313 {offsets = [0, 256], sizes = [2, 256], strides = [1, 1]} : vector<2x768xf32> to vector<2x256xf32>
    %318 = vector.extract_strided_slice %313 {offsets = [0, 512], sizes = [2, 256], strides = [1, 1]} : vector<2x768xf32> to vector<2x256xf32>
    %319 = arith.mulf %317, %279 : vector<2x256xf32>
    %320 = arith.mulf %316, %315 : vector<2x256xf32>
    %321 = arith.addf %319, %320 : vector<2x256xf32>
    %322 = math.tanh %321 : vector<2x256xf32>
    %323 = arith.mulf %318, %322 : vector<2x256xf32>
    %c0_79 = arith.constant 0 : index
    %c0_80 = arith.constant 0 : index
    %c0_81 = arith.constant 0 : index
    %324 = vector.load %arg2[%c0_79, %c0_80, %c0_81] : memref<2x8x1024xf32, #tpu.memory_space<vmem>>, vector<2x1x1024xf32>
    %325 = vector.shape_cast %324 : vector<2x1x1024xf32> to vector<2x1024xf32>
    %326 = arith.truncf %302 : vector<2x256xf32> to vector<2x256xbf16>
    %cst_82 = arith.constant dense<0.000000e+00> : vector<2x1024xf32>
    %327 = tpu.matmul %326, %4, %cst_82 {dimension_numbers = #tpu.dot_dimension_numbers<[1], [0], [0], [1], [0, 0, 1, 1], [], []>} : vector<2x256xbf16>, vector<256x1024xbf16>, vector<2x1024xf32> -> vector<2x1024xf32>
    %328 = arith.addf %325, %327 : vector<2x1024xf32>
    %329 = vector.extract_strided_slice %328 {offsets = [0, 0], sizes = [2, 768], strides = [1, 1]} : vector<2x1024xf32> to vector<2x768xf32>
    %330 = arith.negf %329 : vector<2x768xf32>
    %331 = math.exp %330 : vector<2x768xf32>
    %cst_83 = arith.constant 1.000000e+00 : f32
    %332 = vector.broadcast %cst_83 : f32 to vector<2x768xf32>
    %333 = arith.addf %332, %331 : vector<2x768xf32>
    %334 = arith.divf %332, %333 : vector<2x768xf32>
    %335 = vector.extract_strided_slice %328 {offsets = [0, 768], sizes = [2, 256], strides = [1, 1]} : vector<2x1024xf32> to vector<2x256xf32>
    %336 = math.tanh %335 : vector<2x256xf32>
    %337 = vector.extract_strided_slice %334 {offsets = [0, 0], sizes = [2, 256], strides = [1, 1]} : vector<2x768xf32> to vector<2x256xf32>
    %338 = vector.extract_strided_slice %334 {offsets = [0, 256], sizes = [2, 256], strides = [1, 1]} : vector<2x768xf32> to vector<2x256xf32>
    %339 = vector.extract_strided_slice %334 {offsets = [0, 512], sizes = [2, 256], strides = [1, 1]} : vector<2x768xf32> to vector<2x256xf32>
    %340 = arith.mulf %338, %300 : vector<2x256xf32>
    %341 = arith.mulf %337, %336 : vector<2x256xf32>
    %342 = arith.addf %340, %341 : vector<2x256xf32>
    %343 = math.tanh %342 : vector<2x256xf32>
    %344 = arith.mulf %339, %343 : vector<2x256xf32>
    %c0_84 = arith.constant 0 : index
    %c0_85 = arith.constant 0 : index
    %345 = vector.load %arg11[%c0_84, %c0_85] : memref<2x256xf32, #tpu.memory_space<vmem>>, vector<2x256xf32>
    tpu.vector_store %arg11[%c0_84, %c0_85], %323 {strides = array<i32>} : memref<2x256xf32, #tpu.memory_space<vmem>>, vector<2x256xf32>,
    %c0_86 = arith.constant 0 : index
    %c0_87 = arith.constant 0 : index
    %346 = vector.load %arg12[%c0_86, %c0_87] : memref<2x256xf32, #tpu.memory_space<vmem>>, vector<2x256xf32>
    tpu.vector_store %arg12[%c0_86, %c0_87], %321 {strides = array<i32>} : memref<2x256xf32, #tpu.memory_space<vmem>>, vector<2x256xf32>,
    %c0_88 = arith.constant 0 : index
    %c0_89 = arith.constant 0 : index
    %347 = vector.load %arg13[%c0_88, %c0_89] : memref<2x256xf32, #tpu.memory_space<vmem>>, vector<2x256xf32>
    tpu.vector_store %arg13[%c0_88, %c0_89], %344 {strides = array<i32>} : memref<2x256xf32, #tpu.memory_space<vmem>>, vector<2x256xf32>,
    %c0_90 = arith.constant 0 : index
    %c0_91 = arith.constant 0 : index
    %348 = vector.load %arg14[%c0_90, %c0_91] : memref<2x256xf32, #tpu.memory_space<vmem>>, vector<2x256xf32>
    tpu.vector_store %arg14[%c0_90, %c0_91], %342 {strides = array<i32>} : memref<2x256xf32, #tpu.memory_space<vmem>>, vector<2x256xf32>,
    %c0_i32_92 = arith.constant 0 : i32
    %349 = arith.cmpi eq, %arg0, %c0_i32_92 : i32
    %350 = arith.extui %349 : i1 to i32
    %c0_i32_93 = arith.constant 0 : i32
    %351 = arith.cmpi ne, %350, %c0_i32_93 : i32
    scf.if %351 {
      %c0_94 = arith.constant 0 : index
      %c0_95 = arith.constant 0 : index
      %352 = vector.load %arg5[%c0_94, %c0_95] : memref<256x256xf32, #tpu.memory_space<vmem>>, vector<256x256xf32>
      %cst_96 = arith.constant dense<0.000000e+00> : vector<2x256xf32>
      %353 = tpu.matmul %323, %352, %cst_96 {dimension_numbers = #tpu.dot_dimension_numbers<[1], [0], [0], [1], [0, 0, 1, 1], [], []>} : vector<2x256xf32>, vector<256x256xf32>, vector<2x256xf32> -> vector<2x256xf32>
      %c0_97 = arith.constant 0 : index
      %c0_98 = arith.constant 0 : index
      %354 = vector.load %arg6[%c0_97, %c0_98] : memref<256x256xf32, #tpu.memory_space<vmem>>, vector<256x256xf32>
      %cst_99 = arith.constant dense<0.000000e+00> : vector<2x256xf32>
      %355 = tpu.matmul %344, %354, %cst_99 {dimension_numbers = #tpu.dot_dimension_numbers<[1], [0], [0], [1], [0, 0, 1, 1], [], []>} : vector<2x256xf32>, vector<256x256xf32>, vector<2x256xf32> -> vector<2x256xf32>
      %356 = arith.addf %353, %355 : vector<2x256xf32>
      %c0_100 = arith.constant 0 : index
      %c0_101 = arith.constant 0 : index
      %357 = vector.load %arg7[%c0_100, %c0_101] : memref<1x256xf32, #tpu.memory_space<vmem>>, vector<1x256xf32>
      %358 = vector.broadcast %357 : vector<1x256xf32> to vector<2x256xf32>
      %359 = arith.addf %356, %358 : vector<2x256xf32>
      %cst_102 = arith.constant 0.000000e+00 : f32
      %360 = vector.broadcast %cst_102 : f32 to vector<2x256xf32>
      %361 = arith.maximumf %359, %360 : vector<2x256xf32>
      %c0_103 = arith.constant 0 : index
      %c0_104 = arith.constant 0 : index
      %362 = vector.load %arg8[%c0_103, %c0_104] : memref<256x1xf32, #tpu.memory_space<vmem>>, vector<256x1xf32>
      %cst_105 = arith.constant dense<0.000000e+00> : vector<2x1xf32>
      %363 = tpu.matmul %361, %362, %cst_105 {dimension_numbers = #tpu.dot_dimension_numbers<[1], [0], [0], [1], [0, 0, 1, 1], [], []>} : vector<2x256xf32>, vector<256x1xf32>, vector<2x1xf32> -> vector<2x1xf32>
      %c0_106 = arith.constant 0 : index
      %c0_107 = arith.constant 0 : index
      %364 = vector.load %arg9[%c0_106, %c0_107] : memref<1x1xf32, #tpu.memory_space<vmem>>, vector<1x1xf32>
      %365 = vector.broadcast %364 : vector<1x1xf32> to vector<2x1xf32>
      %366 = arith.addf %363, %365 : vector<2x1xf32>
      %c0_108 = arith.constant 0 : index
      %c0_109 = arith.constant 0 : index
      %367 = vector.load %arg10[%c0_108, %c0_109] : memref<2x1xf32, #tpu.memory_space<vmem>>, vector<2x1xf32>
      tpu.vector_store %arg10[%c0_108, %c0_109], %366 {strides = array<i32>} : memref<2x1xf32, #tpu.memory_space<vmem>>, vector<2x1xf32>,
    } else {
    }
    return
  }
  func.func @transform_0(%arg0: i32) -> (i32, i32, i32) {
    %c0_i32 = arith.constant 0 : i32
    %c0_i32_0 = arith.constant 0 : i32
    %c0_i32_1 = arith.constant 0 : i32
    return %c0_i32, %arg0, %c0_i32_0 : i32, i32, i32
  }
  func.func @transform_1(%arg0: i32) -> (i32, i32, i32) {
    %c0_i32 = arith.constant 0 : i32
    %0 = arith.subi %c0_i32, %arg0 : i32
    %c0_i32_0 = arith.constant 0 : i32
    %c0_i32_1 = arith.constant 0 : i32
    %c0_i32_2 = arith.constant 0 : i32
    return %c0_i32_0, %0, %c0_i32_1 : i32, i32, i32
  }
  func.func @transform_2(%arg0: i32) -> (i32, i32) {
    %c0_i32 = arith.constant 0 : i32
    %c0_i32_0 = arith.constant 0 : i32
    %c0_i32_1 = arith.constant 0 : i32
    return %c0_i32, %c0_i32_0 : i32, i32
  }
  func.func @transform_3(%arg0: i32) -> (i32, i32) {
    %c0_i32 = arith.constant 0 : i32
    %c0_i32_0 = arith.constant 0 : i32
    %c0_i32_1 = arith.constant 0 : i32
    return %c0_i32, %c0_i32_0 : i32, i32
  }
  func.func @transform_4(%arg0: i32) -> (i32, i32) {
    %c0_i32 = arith.constant 0 : i32
    %c0_i32_0 = arith.constant 0 : i32
    %c0_i32_1 = arith.constant 0 : i32
    return %c0_i32, %c0_i32_0 : i32, i32
  }
  func.func @transform_5(%arg0: i32) -> (i32, i32) {
    %c0_i32 = arith.constant 0 : i32
    %c0_i32_0 = arith.constant 0 : i32
    %c0_i32_1 = arith.constant 0 : i32
    return %c0_i32, %c0_i32_0 : i32, i32
  }
  func.func @transform_6(%arg0: i32) -> (i32, i32) {
    %c0_i32 = arith.constant 0 : i32
    %c0_i32_0 = arith.constant 0 : i32
    %c0_i32_1 = arith.constant 0 : i32
    return %c0_i32, %c0_i32_0 : i32, i32
  }
  func.func @transform_7(%arg0: i32) -> (i32, i32) {
    %c0_i32 = arith.constant 0 : i32
    %c0_i32_0 = arith.constant 0 : i32
    %c0_i32_1 = arith.constant 0 : i32
    return %c0_i32, %c0_i32_0 : i32, i32
  }
  func.func @transform_8(%arg0: i32) -> (i32, i32) {
    %c0_i32 = arith.constant 0 : i32
    %c0_i32_0 = arith.constant 0 : i32
    %c0_i32_1 = arith.constant 0 : i32
    return %c0_i32, %c0_i32_0 : i32, i32
  }
  func.func @transform_9(%arg0: i32) -> (i32, i32) {
    %c0_i32 = arith.constant 0 : i32
    %c0_i32_0 = arith.constant 0 : i32
    %c0_i32_1 = arith.constant 0 : i32
    return %c0_i32, %c0_i32_0 : i32, i32
  }
}

</mosaic_0001>

<llo_original>
// kernel: lstm_mlp_classifier.2
$region0: #{lstm_mlp_classifier.2}
  #allocation0 [shape = 'u32[]', space=smem, size = 0x4, offset = 0x4, fixed_abs, tag = 'smem constant byte address 0x4 - core index']
  #allocation1 [shape = 'u32[144,128]{1,0:T(1,128)}', space=vmem, size = 0x12000, scoped, tag = 'internal scratch']
  %s0 = inlined_call_operand.hbm [shape: f32[2,8,32], index: 0, kind: input, shape index: {}]
  %s1 = inlined_call_operand.hbm [shape: bf16[32,2048], index: 1, kind: input, shape index: {}]
  %s2 = inlined_call_operand.hbm [shape: f32[1,2048], index: 2, kind: input, shape index: {}]
  %s3 = inlined_call_operand.vmem [shape: f32[2,8,1024], index: 3, kind: output, shape index: {0}]
  %s4 = inlined_call_operand.vmem [shape: f32[2,8,1024], index: 4, kind: output, shape index: {1}]
  %5 = xla_tuple %s3, %s4
  %s6 = sld [smem:[#allocation0]]
  $region42: #{lstm_mlp_classifier.2} parent=0
    _
  %s8 = ssub.s32 1, %s6
  %s9 = scalar_select 0, %s8, %s6
  $region1: #{lstm_mlp_classifier.2} parent=0
    #allocation2 [shape = 'u8[8192]{0}', space=vmem, size = 0x2000, scoped, tag = 'input window, operand 0, single buffered']
    #allocation3 [shape = 's32[1]{0}', space=sflag, size = 0x4, scoped, tag = 'scoped memory for lstm_mlp_classifier.2']
    #allocation4 [shape = 'u8[131072]{0}', space=vmem, size = 0x20000, scoped, tag = 'input window, operand 1, single buffered']
    #allocation5 [shape = 's32[1]{0}', space=sflag, size = 0x4, scoped, tag = 'scoped memory for lstm_mlp_classifier.2']
    #allocation6 [shape = 'u8[8192]{0}', space=vmem, size = 0x2000, scoped, tag = 'input window, operand 2, single buffered']
    %10 = vsyncpa [#allocation3], 0
    %11 = vsyncpa [#allocation5], 0
    // Predicated region
    $region2: #{lstm_mlp_classifier.2} parent=1 // pred_check
      _
    $region3: #{lstm_mlp_classifier.2} parent=1 // pred_check_branch
      %13 = sbr.rel (0) target = $region5
    $region4: #{lstm_mlp_classifier.2} parent=1 // pred_region
      %s15 = ssub.s32 256, 256
      %16 = vsyncadd [#allocation3], %s15
      %s17 = sshll.u32 [#allocation2], 4
      %s18 = int_to_ptr.vmem [resolvable:$true] %s17
      %23 = dma.hbm_to_vmem [thread:$0]  %s0, 256, %s18, [#allocation3], 128, 128, 8
    $region5: #{lstm_mlp_classifier.2} parent=1 // pred_fallthru
      _
    // Predicated region
    $region6: #{lstm_mlp_classifier.2} parent=1 // pred_check
      _
    $region7: #{lstm_mlp_classifier.2} parent=1 // pred_check_branch
      %25 = sbr.rel (0) target = $region9
    $region8: #{lstm_mlp_classifier.2} parent=1 // pred_region
      %s27 = ssub.s32 4096, 4096
      %28 = vsyncadd [#allocation5], %s27
      %s29 = sshll.u32 [#allocation4], 4
      %s30 = int_to_ptr.vmem [resolvable:$true] %s29
      %35 = dma.hbm_to_vmem [thread:$0]  %s1, 4096, %s30, [#allocation5], 1024, 1024, 64
    $region9: #{lstm_mlp_classifier.2} parent=1 // pred_fallthru
      _
    // Predicated region
    $region10: #{lstm_mlp_classifier.2} parent=1 // pred_check
      _
    $region11: #{lstm_mlp_classifier.2} parent=1 // pred_check_branch
      %37 = sbr.rel (0) target = $region13
    $region12: #{lstm_mlp_classifier.2} parent=1 // pred_region
      %s39 = ssub.s32 256, 256
      %40 = vsyncadd [#allocation5], %s39
      %s42 = sshll.u32 [#allocation6], 4
      %s43 = int_to_ptr.vmem [resolvable:$true] %s42
      %45 = dma.hbm_to_vmem [thread:$0]  %s2, 256, %s43, [#allocation5]
    $region13: #{lstm_mlp_classifier.2} parent=1 // pred_fallthru
      _
    // Predicated region
    $region14: #{lstm_mlp_classifier.2} parent=1 // pred_check
      _
    $region15: #{lstm_mlp_classifier.2} parent=1 // pred_check_branch
      %47 = sbr.rel (0) target = $region17
    $region16: #{lstm_mlp_classifier.2} parent=1 // pred_region
      %48 = dma.done [#allocation3], 256
    $region17: #{lstm_mlp_classifier.2} parent=1 // pred_fallthru
      _
    // Predicated region
    $region18: #{lstm_mlp_classifier.2} parent=1 // pred_check
      _
    $region19: #{lstm_mlp_classifier.2} parent=1 // pred_check_branch
      %50 = sbr.rel (0) target = $region21
    $region20: #{lstm_mlp_classifier.2} parent=1 // pred_region
      %51 = dma.done [#allocation5], 4096
    $region21: #{lstm_mlp_classifier.2} parent=1 // pred_fallthru
      _
    // Predicated region
    $region22: #{lstm_mlp_classifier.2} parent=1 // pred_check
      _
    $region23: #{lstm_mlp_classifier.2} parent=1 // pred_check_branch
      %53 = sbr.rel (0) target = $region25
    $region24: #{lstm_mlp_classifier.2} parent=1 // pred_region
      %54 = dma.done [#allocation5], 256
    $region25: #{lstm_mlp_classifier.2} parent=1 // pred_fallthru
      _
    %v56 = vld [vmem:[#allocation2] sm:$0xff]
    %v57 = vld [vmem:[#allocation2 + $0x8] sm:$0xff]
    %v58 = vpack.c.bf16 %v57, %v56
    %v59 = vld [vmem:[#allocation4] sm:$0xff]
    %v60 = vld [vmem:[#allocation4 + $0x8] sm:$0xff]
    %v61 = vld [vmem:[#allocation4 + $0x10] sm:$0xff]
    %v62 = vld [vmem:[#allocation4 + $0x18] sm:$0xff]
    %v63 = vld [vmem:[#allocation4 + $0x20] sm:$0xff]
    %v64 = vld [vmem:[#allocation4 + $0x28] sm:$0xff]
    %v65 = vld [vmem:[#allocation4 + $0x30] sm:$0xff]
    %v66 = vld [vmem:[#allocation4 + $0x38] sm:$0xff]
    %v67 = vld [vmem:[#allocation4 + $0x40] sm:$0xff]
    %v68 = vld [vmem:[#allocation4 + $0x48] sm:$0xff]
    %v69 = vld [vmem:[#allocation4 + $0x50] sm:$0xff]
    %v70 = vld [vmem:[#allocation4 + $0x58] sm:$0xff]
    %v71 = vld [vmem:[#allocation4 + $0x60] sm:$0xff]
    %v72 = vld [vmem:[#allocation4 + $0x68] sm:$0xff]
    %v73 = vld [vmem:[#allocation4 + $0x70] sm:$0xff]
    %v74 = vld [vmem:[#allocation4 + $0x78] sm:$0xff]
    %v75 = vld [vmem:[#allocation4 + $0x80] sm:$0xff]
    %v76 = vld [vmem:[#allocation4 + $0x88] sm:$0xff]
    %v77 = vld [vmem:[#allocation4 + $0x90] sm:$0xff]
    %v78 = vld [vmem:[#allocation4 + $0x98] sm:$0xff]
    %v79 = vld [vmem:[#allocation4 + $0xa0] sm:$0xff]
    %v80 = vld [vmem:[#allocation4 + $0xa8] sm:$0xff]
    %v81 = vld [vmem:[#allocation4 + $0xb0] sm:$0xff]
    %v82 = vld [vmem:[#allocation4 + $0xb8] sm:$0xff]
    %v83 = vld [vmem:[#allocation4 + $0xc0] sm:$0xff]
    %v84 = vld [vmem:[#allocation4 + $0xc8] sm:$0xff]
    %v85 = vld [vmem:[#allocation4 + $0xd0] sm:$0xff]
    %v86 = vld [vmem:[#allocation4 + $0xd8] sm:$0xff]
    %v87 = vld [vmem:[#allocation4 + $0xe0] sm:$0xff]
    %v88 = vld [vmem:[#allocation4 + $0xe8] sm:$0xff]
    %v89 = vld [vmem:[#allocation4 + $0xf0] sm:$0xff]
    %v90 = vld [vmem:[#allocation4 + $0xf8] sm:$0xff]
    %v91 = vld [vmem:[#allocation6] sm:$0xff]
    %v92 = vld [vmem:[#allocation6 + $0x8] sm:$0xff]
    %v95 = vlaneseq
    %v96 = vshrl.u32 %v95, 7
    %v97 = vsub.s32 0, %v96
    %v98 = vrot.slane %v91, %v97
    %v99 = vlaneseq
    %v100 = vshrl.u32 %v99, 7
    %v101 = vsub.s32 1, %v100
    %v102 = vrot.slane %v91, %v101
    %v103 = vlaneseq
    %v104 = vshrl.u32 %v103, 7
    %v105 = vsub.s32 2, %v104
    %v106 = vrot.slane %v91, %v105
    %v107 = vlaneseq
    %v108 = vshrl.u32 %v107, 7
    %v109 = vsub.s32 3, %v108
    %v110 = vrot.slane %v91, %v109
    %v111 = vlaneseq
    %v112 = vshrl.u32 %v111, 7
    %v113 = vsub.s32 4, %v112
    %v114 = vrot.slane %v91, %v113
    %v115 = vlaneseq
    %v116 = vshrl.u32 %v115, 7
    %v117 = vsub.s32 5, %v116
    %v118 = vrot.slane %v91, %v117
    %v119 = vlaneseq
    %v120 = vshrl.u32 %v119, 7
    %v121 = vsub.s32 6, %v120
    %v122 = vrot.slane %v91, %v121
    %v123 = vlaneseq
    %v124 = vshrl.u32 %v123, 7
    %v125 = vsub.s32 7, %v124
    %v126 = vrot.slane %v91, %v125
    %v127 = vlaneseq
    %v128 = vshrl.u32 %v127, 7
    %v129 = vsub.s32 0, %v128
    %v130 = vrot.slane %v92, %v129
    %v131 = vlaneseq
    %v132 = vshrl.u32 %v131, 7
    %v133 = vsub.s32 1, %v132
    %v134 = vrot.slane %v92, %v133
    %v135 = vlaneseq
    %v136 = vshrl.u32 %v135, 7
    %v137 = vsub.s32 2, %v136
    %v138 = vrot.slane %v92, %v137
    %v139 = vlaneseq
    %v140 = vshrl.u32 %v139, 7
    %v141 = vsub.s32 3, %v140
    %v142 = vrot.slane %v92, %v141
    %v143 = vlaneseq
    %v144 = vshrl.u32 %v143, 7
    %v145 = vsub.s32 4, %v144
    %v146 = vrot.slane %v92, %v145
    %v147 = vlaneseq
    %v148 = vshrl.u32 %v147, 7
    %v149 = vsub.s32 5, %v148
    %v150 = vrot.slane %v92, %v149
    %v151 = vlaneseq
    %v152 = vshrl.u32 %v151, 7
    %v153 = vsub.s32 6, %v152
    %v154 = vrot.slane %v92, %v153
    %v155 = vlaneseq
    %v156 = vshrl.u32 %v155, 7
    %v157 = vsub.s32 7, %v156
    %v158 = vrot.slane %v92, %v157
    %v207 = vunpack.c.l.b16 %v59
    %v208 = vunpack.c.h.b16 %v59
    %v209 = vunpack.c.l.b16 %v60
    %v210 = vunpack.c.h.b16 %v60
    %v211 = vunpack.c.l.b16 %v61
    %v212 = vunpack.c.h.b16 %v61
    %v213 = vunpack.c.l.b16 %v62
    %v214 = vunpack.c.h.b16 %v62
    %v215 = vunpack.c.l.b16 %v63
    %v216 = vunpack.c.h.b16 %v63
    %v217 = vunpack.c.l.b16 %v64
    %v218 = vunpack.c.h.b16 %v64
    %v219 = vunpack.c.l.b16 %v65
    %v220 = vunpack.c.h.b16 %v65
    %v221 = vunpack.c.l.b16 %v66
    %v222 = vunpack.c.h.b16 %v66
    %v223 = vunpack.c.l.b16 %v67
    %v224 = vunpack.c.h.b16 %v67
    %v225 = vunpack.c.l.b16 %v68
    %v226 = vunpack.c.h.b16 %v68
    %v227 = vunpack.c.l.b16 %v69
    %v228 = vunpack.c.h.b16 %v69
    %v229 = vunpack.c.l.b16 %v70
    %v230 = vunpack.c.h.b16 %v70
    %v231 = vunpack.c.l.b16 %v71
    %v232 = vunpack.c.h.b16 %v71
    %v233 = vunpack.c.l.b16 %v72
    %v234 = vunpack.c.h.b16 %v72
    %v235 = vunpack.c.l.b16 %v73
    %v236 = vunpack.c.h.b16 %v73
    %v237 = vunpack.c.l.b16 %v74
    %v238 = vunpack.c.h.b16 %v74
    %v239 = vunpack.c.l.b16 %v75
    %v240 = vunpack.c.h.b16 %v75
    %v241 = vunpack.c.l.b16 %v76
    %v242 = vunpack.c.h.b16 %v76
    %v243 = vunpack.c.l.b16 %v77
    %v244 = vunpack.c.h.b16 %v77
    %v245 = vunpack.c.l.b16 %v78
    %v246 = vunpack.c.h.b16 %v78
    %v247 = vunpack.c.l.b16 %v79
    %v248 = vunpack.c.h.b16 %v79
    %v249 = vunpack.c.l.b16 %v80
    %v250 = vunpack.c.h.b16 %v80
    %v251 = vunpack.c.l.b16 %v81
    %v252 = vunpack.c.h.b16 %v81
    %v253 = vunpack.c.l.b16 %v82
    %v254 = vunpack.c.h.b16 %v82
    %v255 = vunpack.c.l.b16 %v83
    %v256 = vunpack.c.h.b16 %v83
    %v257 = vunpack.c.l.b16 %v84
    %v258 = vunpack.c.h.b16 %v84
    %v259 = vunpack.c.l.b16 %v85
    %v260 = vunpack.c.h.b16 %v85
    %v261 = vunpack.c.l.b16 %v86
    %v262 = vunpack.c.h.b16 %v86
    %v263 = vunpack.c.l.b16 %v87
    %v264 = vunpack.c.h.b16 %v87
    %v265 = vunpack.c.l.b16 %v88
    %v266 = vunpack.c.h.b16 %v88
    %v267 = vunpack.c.l.b16 %v89
    %v268 = vunpack.c.h.b16 %v89
    %v269 = vunpack.c.l.b16 %v90
    %v270 = vunpack.c.h.b16 %v90
    %v271 = vpack.c.b16 %v223, %v207
    %v272 = vpack.c.b16 %v224, %v208
    %v273 = vpack.c.b16 %v225, %v209
    %v274 = vpack.c.b16 %v226, %v210
    %v275 = vpack.c.b16 %v227, %v211
    %v276 = vpack.c.b16 %v228, %v212
    %v277 = vpack.c.b16 %v229, %v213
    %v278 = vpack.c.b16 %v230, %v214
    %v279 = vpack.c.b16 %v231, %v215
    %v280 = vpack.c.b16 %v232, %v216
    %v281 = vpack.c.b16 %v233, %v217
    %v282 = vpack.c.b16 %v234, %v218
    %v283 = vpack.c.b16 %v235, %v219
    %v284 = vpack.c.b16 %v236, %v220
    %v285 = vpack.c.b16 %v237, %v221
    %v286 = vpack.c.b16 %v238, %v222
    %v287 = vpack.c.b16 %v255, %v239
    %v288 = vpack.c.b16 %v256, %v240
    %v289 = vpack.c.b16 %v257, %v241
    %v290 = vpack.c.b16 %v258, %v242
    %v291 = vpack.c.b16 %v259, %v243
    %v292 = vpack.c.b16 %v260, %v244
    %v293 = vpack.c.b16 %v261, %v245
    %v294 = vpack.c.b16 %v262, %v246
    %v295 = vpack.c.b16 %v263, %v247
    %v296 = vpack.c.b16 %v264, %v248
    %v297 = vpack.c.b16 %v265, %v249
    %v298 = vpack.c.b16 %v266, %v250
    %v299 = vpack.c.b16 %v267, %v251
    %v300 = vpack.c.b16 %v268, %v252
    %v301 = vpack.c.b16 %v269, %v253
    %v302 = vpack.c.b16 %v270, %v254
    %vm335 = vcmask 261120
    %v337 = vsel %vm335, %v58, 0
    %339 = vmatprep.subr.bf16.mxu0 %v272
    %340 = vmatpush1.bf16.msra.mxu0 %v271
    %341 = vmatprep.subr.bf16.mxu0 %v288
    %342 = vmatpush1.bf16.msra.mxu0 %v287
    %343 = vmatprep.subr.bf16.mxu0 0
    %344 = vmatpush1.bf16.msra.mxu0 0
    %345 = vmatprep.subr.bf16.mxu0 0
    %346 = vmatpush1.bf16.msra.mxu0 0
    %347 = vmatprep.subr.bf16.mxu0 0
    %348 = vmatpush1.bf16.msra.mxu0 0
    %349 = vmatprep.subr.bf16.mxu0 0
    %350 = vmatpush1.bf16.msra.mxu0 0
    %351 = vmatprep.subr.bf16.mxu0 0
    %352 = vmatpush1.bf16.msra.mxu0 0
    %353 = vmatprep.subr.bf16.mxu0 0
    %354 = vmatpush1.bf16.msra.mxu0 0
    %355 = vmatprep.subr.bf16.mxu0 0
    %356 = vmatpush1.bf16.msra.mxu0 0
    %357 = vmatprep.subr.bf16.mxu0 0
    %358 = vmatpush1.bf16.msra.mxu0 0
    %359 = vmatprep.subr.bf16.mxu0 0
    %360 = vmatpush1.bf16.msra.mxu0 0
    %361 = vmatprep.subr.bf16.mxu0 0
    %362 = vmatpush1.bf16.msra.mxu0 0
    %363 = vmatprep.subr.bf16.mxu0 0
    %364 = vmatpush1.bf16.msra.mxu0 0
    %365 = vmatprep.subr.bf16.mxu0 0
    %366 = vmatpush1.bf16.msra.mxu0 0
    %367 = vmatprep.subr.bf16.mxu0 0
    %368 = vmatpush1.bf16.msra.mxu0 0
    %369 = vmatprep.subr.bf16.mxu0 0
    %370 = vmatpush1.bf16.msra.mxu0 0
    %371 = vmatprep.mubr.bf16.mxu0 0
    %372 = vmatmul.mubr.bf16.gmra.mrb[0].mxu0 %v337
    %v373 = vpop.f32.mrb[0].mxu0
    %v374 = vadd.f32 %v98, %v373
    %v375 = vpop.f32.mrb[0].mxu0
    %v376 = vadd.f32 %v102, %v375
    %v377 = vpop.f32.mrb[0].mxu0
    %v378 = vadd.f32 %v98, %v377
    %v379 = vpop.f32.mrb[0].mxu0
    %v380 = vadd.f32 %v102, %v379
    %381 = vdwg.mxu0
    %382 = vmatprep.subr.bf16.mxu0 %v274
    %383 = vmatpush1.bf16.msra.mxu0 %v273
    %384 = vmatprep.subr.bf16.mxu0 %v290
    %385 = vmatpush1.bf16.msra.mxu0 %v289
    %386 = vmatprep.subr.bf16.mxu0 0
    %387 = vmatpush1.bf16.msra.mxu0 0
    %388 = vmatprep.subr.bf16.mxu0 0
    %389 = vmatpush1.bf16.msra.mxu0 0
    %390 = vmatprep.subr.bf16.mxu0 0
    %391 = vmatpush1.bf16.msra.mxu0 0
    %392 = vmatprep.subr.bf16.mxu0 0
    %393 = vmatpush1.bf16.msra.mxu0 0
    %394 = vmatprep.subr.bf16.mxu0 0
    %395 = vmatpush1.bf16.msra.mxu0 0
    %396 = vmatprep.subr.bf16.mxu0 0
    %397 = vmatpush1.bf16.msra.mxu0 0
    %398 = vmatprep.subr.bf16.mxu0 0
    %399 = vmatpush1.bf16.msra.mxu0 0
    %400 = vmatprep.subr.bf16.mxu0 0
    %401 = vmatpush1.bf16.msra.mxu0 0
    %402 = vmatprep.subr.bf16.mxu0 0
    %403 = vmatpush1.bf16.msra.mxu0 0
    %404 = vmatprep.subr.bf16.mxu0 0
    %405 = vmatpush1.bf16.msra.mxu0 0
    %406 = vmatprep.subr.bf16.mxu0 0
    %407 = vmatpush1.bf16.msra.mxu0 0
    %408 = vmatprep.subr.bf16.mxu0 0
    %409 = vmatpush1.bf16.msra.mxu0 0
    %410 = vmatprep.subr.bf16.mxu0 0
    %411 = vmatpush1.bf16.msra.mxu0 0
    %412 = vmatprep.subr.bf16.mxu0 0
    %413 = vmatpush1.bf16.msra.mxu0 0
    %414 = vmatprep.mubr.bf16.mxu0 0
    %415 = vmatmul.mubr.bf16.gmra.mrb[0].mxu0 %v337
    %v416 = vpop.f32.mrb[0].mxu0
    %v417 = vadd.f32 %v106, %v416
    %v418 = vpop.f32.mrb[0].mxu0
    %v419 = vadd.f32 %v110, %v418
    %v420 = vpop.f32.mrb[0].mxu0
    %v421 = vadd.f32 %v106, %v420
    %v422 = vpop.f32.mrb[0].mxu0
    %v423 = vadd.f32 %v110, %v422
    %424 = vdwg.mxu0
    %425 = vmatprep.subr.bf16.mxu0 %v276
    %426 = vmatpush1.bf16.msra.mxu0 %v275
    %427 = vmatprep.subr.bf16.mxu0 %v292
    %428 = vmatpush1.bf16.msra.mxu0 %v291
    %429 = vmatprep.subr.bf16.mxu0 0
    %430 = vmatpush1.bf16.msra.mxu0 0
    %431 = vmatprep.subr.bf16.mxu0 0
    %432 = vmatpush1.bf16.msra.mxu0 0
    %433 = vmatprep.subr.bf16.mxu0 0
    %434 = vmatpush1.bf16.msra.mxu0 0
    %435 = vmatprep.subr.bf16.mxu0 0
    %436 = vmatpush1.bf16.msra.mxu0 0
    %437 = vmatprep.subr.bf16.mxu0 0
    %438 = vmatpush1.bf16.msra.mxu0 0
    %439 = vmatprep.subr.bf16.mxu0 0
    %440 = vmatpush1.bf16.msra.mxu0 0
    %441 = vmatprep.subr.bf16.mxu0 0
    %442 = vmatpush1.bf16.msra.mxu0 0
    %443 = vmatprep.subr.bf16.mxu0 0
    %444 = vmatpush1.bf16.msra.mxu0 0
    %445 = vmatprep.subr.bf16.mxu0 0
    %446 = vmatpush1.bf16.msra.mxu0 0
    %447 = vmatprep.subr.bf16.mxu0 0
    %448 = vmatpush1.bf16.msra.mxu0 0
    %449 = vmatprep.subr.bf16.mxu0 0
    %450 = vmatpush1.bf16.msra.mxu0 0
    %451 = vmatprep.subr.bf16.mxu0 0
    %452 = vmatpush1.bf16.msra.mxu0 0
    %453 = vmatprep.subr.bf16.mxu0 0
    %454 = vmatpush1.bf16.msra.mxu0 0
    %455 = vmatprep.subr.bf16.mxu0 0
    %456 = vmatpush1.bf16.msra.mxu0 0
    %457 = vmatprep.mubr.bf16.mxu0 0
    %458 = vmatmul.mubr.bf16.gmra.mrb[0].mxu0 %v337
    %v459 = vpop.f32.mrb[0].mxu0
    %v460 = vadd.f32 %v114, %v459
    %v461 = vpop.f32.mrb[0].mxu0
    %v462 = vadd.f32 %v118, %v461
    %v463 = vpop.f32.mrb[0].mxu0
    %v464 = vadd.f32 %v114, %v463
    %v465 = vpop.f32.mrb[0].mxu0
    %v466 = vadd.f32 %v118, %v465
    %467 = vdwg.mxu0
    %468 = vmatprep.subr.bf16.mxu0 %v278
    %469 = vmatpush1.bf16.msra.mxu0 %v277
    %470 = vmatprep.subr.bf16.mxu0 %v294
    %471 = vmatpush1.bf16.msra.mxu0 %v293
    %472 = vmatprep.subr.bf16.mxu0 0
    %473 = vmatpush1.bf16.msra.mxu0 0
    %474 = vmatprep.subr.bf16.mxu0 0
    %475 = vmatpush1.bf16.msra.mxu0 0
    %476 = vmatprep.subr.bf16.mxu0 0
    %477 = vmatpush1.bf16.msra.mxu0 0
    %478 = vmatprep.subr.bf16.mxu0 0
    %479 = vmatpush1.bf16.msra.mxu0 0
    %480 = vmatprep.subr.bf16.mxu0 0
    %481 = vmatpush1.bf16.msra.mxu0 0
    %482 = vmatprep.subr.bf16.mxu0 0
    %483 = vmatpush1.bf16.msra.mxu0 0
    %484 = vmatprep.subr.bf16.mxu0 0
    %485 = vmatpush1.bf16.msra.mxu0 0
    %486 = vmatprep.subr.bf16.mxu0 0
    %487 = vmatpush1.bf16.msra.mxu0 0
    %488 = vmatprep.subr.bf16.mxu0 0
    %489 = vmatpush1.bf16.msra.mxu0 0
    %490 = vmatprep.subr.bf16.mxu0 0
    %491 = vmatpush1.bf16.msra.mxu0 0
    %492 = vmatprep.subr.bf16.mxu0 0
    %493 = vmatpush1.bf16.msra.mxu0 0
    %494 = vmatprep.subr.bf16.mxu0 0
    %495 = vmatpush1.bf16.msra.mxu0 0
    %496 = vmatprep.subr.bf16.mxu0 0
    %497 = vmatpush1.bf16.msra.mxu0 0
    %498 = vmatprep.subr.bf16.mxu0 0
    %499 = vmatpush1.bf16.msra.mxu0 0
    %500 = vmatprep.mubr.bf16.mxu0 0
    %501 = vmatmul.mubr.bf16.gmra.mrb[0].mxu0 %v337
    %v502 = vpop.f32.mrb[0].mxu0
    %v503 = vadd.f32 %v122, %v502
    %v504 = vpop.f32.mrb[0].mxu0
    %v505 = vadd.f32 %v126, %v504
    %v506 = vpop.f32.mrb[0].mxu0
    %v507 = vadd.f32 %v122, %v506
    %v508 = vpop.f32.mrb[0].mxu0
    %v509 = vadd.f32 %v126, %v508
    %510 = vdwg.mxu0
    %511 = vmatprep.subr.bf16.mxu0 %v280
    %512 = vmatpush1.bf16.msra.mxu0 %v279
    %513 = vmatprep.subr.bf16.mxu0 %v296
    %514 = vmatpush1.bf16.msra.mxu0 %v295
    %515 = vmatprep.subr.bf16.mxu0 0
    %516 = vmatpush1.bf16.msra.mxu0 0
    %517 = vmatprep.subr.bf16.mxu0 0
    %518 = vmatpush1.bf16.msra.mxu0 0
    %519 = vmatprep.subr.bf16.mxu0 0
    %520 = vmatpush1.bf16.msra.mxu0 0
    %521 = vmatprep.subr.bf16.mxu0 0
    %522 = vmatpush1.bf16.msra.mxu0 0
    %523 = vmatprep.subr.bf16.mxu0 0
    %524 = vmatpush1.bf16.msra.mxu0 0
    %525 = vmatprep.subr.bf16.mxu0 0
    %526 = vmatpush1.bf16.msra.mxu0 0
    %527 = vmatprep.subr.bf16.mxu0 0
    %528 = vmatpush1.bf16.msra.mxu0 0
    %529 = vmatprep.subr.bf16.mxu0 0
    %530 = vmatpush1.bf16.msra.mxu0 0
    %531 = vmatprep.subr.bf16.mxu0 0
    %532 = vmatpush1.bf16.msra.mxu0 0
    %533 = vmatprep.subr.bf16.mxu0 0
    %534 = vmatpush1.bf16.msra.mxu0 0
    %535 = vmatprep.subr.bf16.mxu0 0
    %536 = vmatpush1.bf16.msra.mxu0 0
    %537 = vmatprep.subr.bf16.mxu0 0
    %538 = vmatpush1.bf16.msra.mxu0 0
    %539 = vmatprep.subr.bf16.mxu0 0
    %540 = vmatpush1.bf16.msra.mxu0 0
    %541 = vmatprep.subr.bf16.mxu0 0
    %542 = vmatpush1.bf16.msra.mxu0 0
    %543 = vmatprep.mubr.bf16.mxu0 0
    %544 = vmatmul.mubr.bf16.gmra.mrb[0].mxu0 %v337
    %v545 = vpop.f32.mrb[0].mxu0
    %v546 = vadd.f32 %v130, %v545
    %v547 = vpop.f32.mrb[0].mxu0
    %v548 = vadd.f32 %v134, %v547
    %v549 = vpop.f32.mrb[0].mxu0
    %v550 = vadd.f32 %v130, %v549
    %v551 = vpop.f32.mrb[0].mxu0
    %v552 = vadd.f32 %v134, %v551
    %553 = vdwg.mxu0
    %554 = vmatprep.subr.bf16.mxu0 %v282
    %555 = vmatpush1.bf16.msra.mxu0 %v281
    %556 = vmatprep.subr.bf16.mxu0 %v298
    %557 = vmatpush1.bf16.msra.mxu0 %v297
    %558 = vmatprep.subr.bf16.mxu0 0
    %559 = vmatpush1.bf16.msra.mxu0 0
    %560 = vmatprep.subr.bf16.mxu0 0
    %561 = vmatpush1.bf16.msra.mxu0 0
    %562 = vmatprep.subr.bf16.mxu0 0
    %563 = vmatpush1.bf16.msra.mxu0 0
    %564 = vmatprep.subr.bf16.mxu0 0
    %565 = vmatpush1.bf16.msra.mxu0 0
    %566 = vmatprep.subr.bf16.mxu0 0
    %567 = vmatpush1.bf16.msra.mxu0 0
    %568 = vmatprep.subr.bf16.mxu0 0
    %569 = vmatpush1.bf16.msra.mxu0 0
    %570 = vmatprep.subr.bf16.mxu0 0
    %571 = vmatpush1.bf16.msra.mxu0 0
    %572 = vmatprep.subr.bf16.mxu0 0
    %573 = vmatpush1.bf16.msra.mxu0 0
    %574 = vmatprep.subr.bf16.mxu0 0
    %575 = vmatpush1.bf16.msra.mxu0 0
    %576 = vmatprep.subr.bf16.mxu0 0
    %577 = vmatpush1.bf16.msra.mxu0 0
    %578 = vmatprep.subr.bf16.mxu0 0
    %579 = vmatpush1.bf16.msra.mxu0 0
    %580 = vmatprep.subr.bf16.mxu0 0
    %581 = vmatpush1.bf16.msra.mxu0 0
    %582 = vmatprep.subr.bf16.mxu0 0
    %583 = vmatpush1.bf16.msra.mxu0 0
    %584 = vmatprep.subr.bf16.mxu0 0
    %585 = vmatpush1.bf16.msra.mxu0 0
    %586 = vmatprep.mubr.bf16.mxu0 0
    %587 = vmatmul.mubr.bf16.gmra.mrb[0].mxu0 %v337
    %v588 = vpop.f32.mrb[0].mxu0
    %v589 = vadd.f32 %v138, %v588
    %v590 = vpop.f32.mrb[0].mxu0
    %v591 = vadd.f32 %v142, %v590
    %v592 = vpop.f32.mrb[0].mxu0
    %v593 = vadd.f32 %v138, %v592
    %v594 = vpop.f32.mrb[0].mxu0
    %v595 = vadd.f32 %v142, %v594
    %596 = vdwg.mxu0
    %597 = vmatprep.subr.bf16.mxu0 %v284
    %598 = vmatpush1.bf16.msra.mxu0 %v283
    %599 = vmatprep.subr.bf16.mxu0 %v300
    %600 = vmatpush1.bf16.msra.mxu0 %v299
    %601 = vmatprep.subr.bf16.mxu0 0
    %602 = vmatpush1.bf16.msra.mxu0 0
    %603 = vmatprep.subr.bf16.mxu0 0
    %604 = vmatpush1.bf16.msra.mxu0 0
    %605 = vmatprep.subr.bf16.mxu0 0
    %606 = vmatpush1.bf16.msra.mxu0 0
    %607 = vmatprep.subr.bf16.mxu0 0
    %608 = vmatpush1.bf16.msra.mxu0 0
    %609 = vmatprep.subr.bf16.mxu0 0
    %610 = vmatpush1.bf16.msra.mxu0 0
    %611 = vmatprep.subr.bf16.mxu0 0
    %612 = vmatpush1.bf16.msra.mxu0 0
    %613 = vmatprep.subr.bf16.mxu0 0
    %614 = vmatpush1.bf16.msra.mxu0 0
    %615 = vmatprep.subr.bf16.mxu0 0
    %616 = vmatpush1.bf16.msra.mxu0 0
    %617 = vmatprep.subr.bf16.mxu0 0
    %618 = vmatpush1.bf16.msra.mxu0 0
    %619 = vmatprep.subr.bf16.mxu0 0
    %620 = vmatpush1.bf16.msra.mxu0 0
    %621 = vmatprep.subr.bf16.mxu0 0
    %622 = vmatpush1.bf16.msra.mxu0 0
    %623 = vmatprep.subr.bf16.mxu0 0
    %624 = vmatpush1.bf16.msra.mxu0 0
    %625 = vmatprep.subr.bf16.mxu0 0
    %626 = vmatpush1.bf16.msra.mxu0 0
    %627 = vmatprep.subr.bf16.mxu0 0
    %628 = vmatpush1.bf16.msra.mxu0 0
    %629 = vmatprep.mubr.bf16.mxu0 0
    %630 = vmatmul.mubr.bf16.gmra.mrb[0].mxu0 %v337
    %v631 = vpop.f32.mrb[0].mxu0
    %v632 = vadd.f32 %v146, %v631
    %v633 = vpop.f32.mrb[0].mxu0
    %v634 = vadd.f32 %v150, %v633
    %v635 = vpop.f32.mrb[0].mxu0
    %v636 = vadd.f32 %v146, %v635
    %v637 = vpop.f32.mrb[0].mxu0
    %v638 = vadd.f32 %v150, %v637
    %639 = vdwg.mxu0
    %640 = vmatprep.subr.bf16.mxu0 %v286
    %641 = vmatpush1.bf16.msra.mxu0 %v285
    %642 = vmatprep.subr.bf16.mxu0 %v302
    %643 = vmatpush1.bf16.msra.mxu0 %v301
    %644 = vmatprep.subr.bf16.mxu0 0
    %645 = vmatpush1.bf16.msra.mxu0 0
    %646 = vmatprep.subr.bf16.mxu0 0
    %647 = vmatpush1.bf16.msra.mxu0 0
    %648 = vmatprep.subr.bf16.mxu0 0
    %649 = vmatpush1.bf16.msra.mxu0 0
    %650 = vmatprep.subr.bf16.mxu0 0
    %651 = vmatpush1.bf16.msra.mxu0 0
    %652 = vmatprep.subr.bf16.mxu0 0
    %653 = vmatpush1.bf16.msra.mxu0 0
    %654 = vmatprep.subr.bf16.mxu0 0
    %655 = vmatpush1.bf16.msra.mxu0 0
    %656 = vmatprep.subr.bf16.mxu0 0
    %657 = vmatpush1.bf16.msra.mxu0 0
    %658 = vmatprep.subr.bf16.mxu0 0
    %659 = vmatpush1.bf16.msra.mxu0 0
    %660 = vmatprep.subr.bf16.mxu0 0
    %661 = vmatpush1.bf16.msra.mxu0 0
    %662 = vmatprep.subr.bf16.mxu0 0
    %663 = vmatpush1.bf16.msra.mxu0 0
    %664 = vmatprep.subr.bf16.mxu0 0
    %665 = vmatpush1.bf16.msra.mxu0 0
    %666 = vmatprep.subr.bf16.mxu0 0
    %667 = vmatpush1.bf16.msra.mxu0 0
    %668 = vmatprep.subr.bf16.mxu0 0
    %669 = vmatpush1.bf16.msra.mxu0 0
    %670 = vmatprep.subr.bf16.mxu0 0
    %671 = vmatpush1.bf16.msra.mxu0 0
    %672 = vmatprep.mubr.bf16.mxu0 0
    %673 = vmatmul.mubr.bf16.gmra.mrb[0].mxu0 %v337
    %v674 = vpop.f32.mrb[0].mxu0
    %v675 = vadd.f32 %v154, %v674
    %v676 = vpop.f32.mrb[0].mxu0
    %v677 = vadd.f32 %v158, %v676
    %v678 = vpop.f32.mrb[0].mxu0
    %v679 = vadd.f32 %v154, %v678
    %v680 = vpop.f32.mrb[0].mxu0
    %v681 = vadd.f32 %v158, %v680
    %682 = vdwg.mxu0
    %683 = vst [vmem:[%s3] sm:$0xff] %v374
    %684 = vst [vmem:[%s3 + $0x8] sm:$0xff] %v376
    %685 = vst [vmem:[%s3 + $0x10] sm:$0xff] %v417
    %686 = vst [vmem:[%s3 + $0x18] sm:$0xff] %v419
    %687 = vst [vmem:[%s3 + $0x20] sm:$0xff] %v460
    %688 = vst [vmem:[%s3 + $0x28] sm:$0xff] %v462
    %689 = vst [vmem:[%s3 + $0x30] sm:$0xff] %v503
    %690 = vst [vmem:[%s3 + $0x38] sm:$0xff] %v505
    %691 = vst [vmem:[%s3 + $0x40] sm:$0xff] %v378
    %692 = vst [vmem:[%s3 + $0x48] sm:$0xff] %v380
    %693 = vst [vmem:[%s3 + $0x50] sm:$0xff] %v421
    %694 = vst [vmem:[%s3 + $0x58] sm:$0xff] %v423
    %695 = vst [vmem:[%s3 + $0x60] sm:$0xff] %v464
    %696 = vst [vmem:[%s3 + $0x68] sm:$0xff] %v466
    %697 = vst [vmem:[%s3 + $0x70] sm:$0xff] %v507
    %698 = vst [vmem:[%s3 + $0x78] sm:$0xff] %v509
    %699 = vst [vmem:[%s4] sm:$0xff] %v546
    %700 = vst [vmem:[%s4 + $0x8] sm:$0xff] %v548
    %701 = vst [vmem:[%s4 + $0x10] sm:$0xff] %v589
    %702 = vst [vmem:[%s4 + $0x18] sm:$0xff] %v591
    %703 = vst [vmem:[%s4 + $0x20] sm:$0xff] %v632
    %704 = vst [vmem:[%s4 + $0x28] sm:$0xff] %v634
    %705 = vst [vmem:[%s4 + $0x30] sm:$0xff] %v675
    %706 = vst [vmem:[%s4 + $0x38] sm:$0xff] %v677
    %707 = vst [vmem:[%s4 + $0x40] sm:$0xff] %v550
    %708 = vst [vmem:[%s4 + $0x48] sm:$0xff] %v552
    %709 = vst [vmem:[%s4 + $0x50] sm:$0xff] %v593
    %710 = vst [vmem:[%s4 + $0x58] sm:$0xff] %v595
    %711 = vst [vmem:[%s4 + $0x60] sm:$0xff] %v636
    %712 = vst [vmem:[%s4 + $0x68] sm:$0xff] %v638
    %713 = vst [vmem:[%s4 + $0x70] sm:$0xff] %v679
    %714 = vst [vmem:[%s4 + $0x78] sm:$0xff] %v681
    // Predicated region
    $region26: #{lstm_mlp_classifier.2} parent=1 // pred_check
      _
    $region27: #{lstm_mlp_classifier.2} parent=1 // pred_check_branch
      %716 = sbr.rel (0) target = $region29
    $region28: #{lstm_mlp_classifier.2} parent=1 // pred_region
      _
    $region29: #{lstm_mlp_classifier.2} parent=1 // pred_fallthru
      _
    // Predicated region
    $region30: #{lstm_mlp_classifier.2} parent=1 // pred_check
      _
    $region31: #{lstm_mlp_classifier.2} parent=1 // pred_check_branch
      %718 = sbr.rel (0) target = $region33
    $region32: #{lstm_mlp_classifier.2} parent=1 // pred_region
      _
    $region33: #{lstm_mlp_classifier.2} parent=1 // pred_fallthru
      _
    // Predicated region
    $region34: #{lstm_mlp_classifier.2} parent=1 // pred_check
      _
    $region35: #{lstm_mlp_classifier.2} parent=1 // pred_check_branch
      %720 = sbr.rel (0) target = $region37
    $region36: #{lstm_mlp_classifier.2} parent=1 // pred_region
      _
    $region37: #{lstm_mlp_classifier.2} parent=1 // pred_fallthru
      _
    // Predicated region
    $region38: #{lstm_mlp_classifier.2} parent=1 // pred_check
      _
    $region39: #{lstm_mlp_classifier.2} parent=1 // pred_check_branch
      %722 = sbr.rel (0) target = $region41
    $region40: #{lstm_mlp_classifier.2} parent=1 // pred_region
      _
    $region41: #{lstm_mlp_classifier.2} parent=1 // pred_fallthru
      _
    %723 = vsyncpa [#allocation3], 1
    %724 = vsyncpa [#allocation5], 1

// kernel: lstm_mlp_classifier.3
$region0: #{lstm_mlp_classifier.3}
  #allocation0 [shape = 'u32[]', space=smem, size = 0x4, offset = 0x4, fixed_abs, tag = 'smem constant byte address 0x4 - core index']
  #allocation1 [shape = 'u32[144,128]{1,0:T(1,128)}', space=vmem, size = 0x12000, scoped, tag = 'internal scratch']
  #allocation2 [shape = 'f32[2,256]{1,0:T(2,128)}', space=vmem, size = 0x800, scoped, tag = 'scratch operand']
  #allocation3 [shape = 'f32[2,256]{1,0:T(2,128)}', space=vmem, size = 0x800, scoped, tag = 'scratch operand']
  #allocation4 [shape = 'f32[2,256]{1,0:T(2,128)}', space=vmem, size = 0x800, scoped, tag = 'scratch operand']
  #allocation5 [shape = 'f32[2,256]{1,0:T(2,128)}', space=vmem, size = 0x800, scoped, tag = 'scratch operand']
  #allocation6 [shape = 'f32[1,1]{1,0:T(1,128)S(1)}', space=vmem, size = 0x200, scoped, tag = 'scoped memory for lstm_mlp_classifier.3']
  %s0 = inlined_call_operand.vmem [shape: f32[2,8,1024], index: 0, kind: input, shape index: {}]
  %s1 = inlined_call_operand.vmem [shape: f32[2,8,1024], index: 1, kind: input, shape index: {}]
  %s2 = inlined_call_operand.hbm [shape: bf16[256,1024], index: 2, kind: input, shape index: {}]
  %s3 = inlined_call_operand.hbm [shape: bf16[256,1024], index: 3, kind: input, shape index: {}]
  %s4 = inlined_call_operand.vmem [shape: f32[256,256], index: 4, kind: input, shape index: {}]
  %s5 = inlined_call_operand.hbm [shape: f32[256,256], index: 5, kind: input, shape index: {}]
  %s6 = inlined_call_operand.vmem [shape: f32[1,256], index: 6, kind: input, shape index: {}]
  %s7 = inlined_call_operand.vmem [shape: f32[256,1], index: 7, kind: input, shape index: {}]
  %s8 = inlined_call_operand.<no memory space> [shape: f32[1,1], index: 8, kind: input, shape index: {}]
  %s9 = inlined_call_operand.vmem [shape: f32[2,1], index: 9, kind: output, shape index: {}]
  %s10 = sld [smem:[#allocation0]]
  $region66: #{lstm_mlp_classifier.3} parent=0
    _
  %s12 = ssub.s32 1, %s10
  %s13 = scalar_select 0, %s12, %s10
  %v14 = vstv %s8
  %15 = vst [vmem:[#allocation6] sm:$0x1] %v14
  $region1: #{lstm_mlp_classifier.3} parent=0
    #allocation7 [shape = 'u8[524288]{0}', space=vmem, size = 0x80000, scoped, tag = 'input window, operand 2, single buffered']
    #allocation8 [shape = 's32[1]{0}', space=sflag, size = 0x4, scoped, tag = 'scoped memory for lstm_mlp_classifier.3']
    #allocation9 [shape = 'u8[524288]{0}', space=vmem, size = 0x80000, scoped, tag = 'input window, operand 3, single buffered']
    #allocation10 [shape = 's32[1]{0}', space=sflag, size = 0x4, scoped, tag = 'scoped memory for lstm_mlp_classifier.3']
    #allocation11 [shape = 'u8[262144]{0}', space=vmem, size = 0x40000, scoped, tag = 'input window, operand 5, single buffered']
    %16 = vsyncpa [#allocation8], 0
    %17 = vsyncpa [#allocation10], 0
    // Predicated region
    $region2: #{lstm_mlp_classifier.3} parent=1 // pred_check
      _
    $region3: #{lstm_mlp_classifier.3} parent=1 // pred_check_branch
      %19 = sbr.rel (0) target = $region5
    $region4: #{lstm_mlp_classifier.3} parent=1 // pred_region
      _
    $region5: #{lstm_mlp_classifier.3} parent=1 // pred_fallthru
      _
    // Predicated region
    $region6: #{lstm_mlp_classifier.3} parent=1 // pred_check
      _
    $region7: #{lstm_mlp_classifier.3} parent=1 // pred_check_branch
      %21 = sbr.rel (0) target = $region9
    $region8: #{lstm_mlp_classifier.3} parent=1 // pred_region
      %s22 = ssub.s32 0, 0
      %p23 = scmp.lt.s32.totalorder %s22, 0
      %s24 = scalar_select %p23, %s22, 0
      %s25 = smul.addr %s24, 8
      %s26 = smul.addr %s25, 8
      %s27 = scalar_lea.vmem %s1, %s26
      %s28 = ssub.s32 0, 0
    $region9: #{lstm_mlp_classifier.3} parent=1 // pred_fallthru
      _
    // Predicated region
    $region10: #{lstm_mlp_classifier.3} parent=1 // pred_check
      _
    $region11: #{lstm_mlp_classifier.3} parent=1 // pred_check_branch
      %30 = sbr.rel (0) target = $region13
    $region12: #{lstm_mlp_classifier.3} parent=1 // pred_region
      %s32 = ssub.s32 16384, 16384
      %33 = vsyncadd [#allocation8], %s32
      %s34 = sshll.u32 [#allocation7], 4
      %s35 = int_to_ptr.vmem [resolvable:$true] %s34
      %40 = dma.hbm_to_vmem [thread:$0]  %s2, 16384, %s35, [#allocation8], 512, 512, 32
    $region13: #{lstm_mlp_classifier.3} parent=1 // pred_fallthru
      _
    // Predicated region
    $region14: #{lstm_mlp_classifier.3} parent=1 // pred_check
      _
    $region15: #{lstm_mlp_classifier.3} parent=1 // pred_check_branch
      %42 = sbr.rel (0) target = $region17
    $region16: #{lstm_mlp_classifier.3} parent=1 // pred_region
      %s44 = ssub.s32 16384, 16384
      %45 = vsyncadd [#allocation10], %s44
      %s46 = sshll.u32 [#allocation9], 4
      %s47 = int_to_ptr.vmem [resolvable:$true] %s46
      %52 = dma.hbm_to_vmem [thread:$0]  %s3, 16384, %s47, [#allocation10], 512, 512, 32
    $region17: #{lstm_mlp_classifier.3} parent=1 // pred_fallthru
      _
    // Predicated region
    $region18: #{lstm_mlp_classifier.3} parent=1 // pred_check
      _
    $region19: #{lstm_mlp_classifier.3} parent=1 // pred_check_branch
      %54 = sbr.rel (0) target = $region21
    $region20: #{lstm_mlp_classifier.3} parent=1 // pred_region
      _
    $region21: #{lstm_mlp_classifier.3} parent=1 // pred_fallthru
      _
    // Predicated region
    $region22: #{lstm_mlp_classifier.3} parent=1 // pred_check
      _
    $region23: #{lstm_mlp_classifier.3} parent=1 // pred_check_branch
      %56 = sbr.rel (0) target = $region25
    $region24: #{lstm_mlp_classifier.3} parent=1 // pred_region
      %s58 = ssub.s32 8192, 8192
      %59 = vsyncadd [#allocation10], %s58
      %s60 = sshll.u32 [#allocation11], 4
      %s61 = int_to_ptr.vmem [resolvable:$true] %s60
      %66 = dma.hbm_to_vmem [thread:$0]  %s5, 8192, %s61, [#allocation10], 256, 256, 16
    $region25: #{lstm_mlp_classifier.3} parent=1 // pred_fallthru
      _
    // Predicated region
    $region26: #{lstm_mlp_classifier.3} parent=1 // pred_check
      _
    $region27: #{lstm_mlp_classifier.3} parent=1 // pred_check_branch
      %68 = sbr.rel (0) target = $region29
    $region28: #{lstm_mlp_classifier.3} parent=1 // pred_region
      _
    $region29: #{lstm_mlp_classifier.3} parent=1 // pred_fallthru
      _
    // Predicated region
    $region30: #{lstm_mlp_classifier.3} parent=1 // pred_check
      _
    $region31: #{lstm_mlp_classifier.3} parent=1 // pred_check_branch
      %70 = sbr.rel (0) target = $region33
    $region32: #{lstm_mlp_classifier.3} parent=1 // pred_region
      _
    $region33: #{lstm_mlp_classifier.3} parent=1 // pred_fallthru
      _
    // Predicated region
    $region34: #{lstm_mlp_classifier.3} parent=1 // pred_check
      _
    $region35: #{lstm_mlp_classifier.3} parent=1 // pred_check_branch
      %72 = sbr.rel (0) target = $region37
    $region36: #{lstm_mlp_classifier.3} parent=1 // pred_region
      _
    $region37: #{lstm_mlp_classifier.3} parent=1 // pred_fallthru
      _
    // Predicated region
    $region38: #{lstm_mlp_classifier.3} parent=1 // pred_check
      _
    $region39: #{lstm_mlp_classifier.3} parent=1 // pred_check_branch
      %74 = sbr.rel (0) target = $region41
    $region40: #{lstm_mlp_classifier.3} parent=1 // pred_region
      %75 = dma.done [#allocation8], 16384
    $region41: #{lstm_mlp_classifier.3} parent=1 // pred_fallthru
      _
    // Predicated region
    $region42: #{lstm_mlp_classifier.3} parent=1 // pred_check
      _
    $region43: #{lstm_mlp_classifier.3} parent=1 // pred_check_branch
      %77 = sbr.rel (0) target = $region45
    $region44: #{lstm_mlp_classifier.3} parent=1 // pred_region
      %78 = dma.done [#allocation10], 16384
    $region45: #{lstm_mlp_classifier.3} parent=1 // pred_fallthru
      _
    // Predicated region
    $region46: #{lstm_mlp_classifier.3} parent=1 // pred_check
      _
    $region47: #{lstm_mlp_classifier.3} parent=1 // pred_check_branch
      %80 = sbr.rel (0) target = $region49
    $region48: #{lstm_mlp_classifier.3} parent=1 // pred_region
      %81 = dma.done [#allocation10], 8192
    $region49: #{lstm_mlp_classifier.3} parent=1 // pred_fallthru
      _
    %s82 = ssub.s32 0, 0
    %p83 = scmp.lt.s32.totalorder %s82, 0
    %s84 = scalar_select %p83, %s82, 0
    %s85 = smul.addr %s84, 8
    %s86 = smul.addr %s85, 8
    %s87 = scalar_lea.vmem %s1, %s86
    %s88 = ssub.s32 0, 0
    %p89 = scmp.lt.s32.totalorder %s88, 0
    %s90 = scalar_select %p89, %s88, 0
    %s91 = smul.addr %s90, 8
    %s92 = smul.addr %s91, 8
    %s93 = scalar_lea.vmem %s1, %s92
    %s94 = ssub.s32 0, 0
    %p95 = scmp.eq.s32.totalorder 0, 0
    // Predicated region
    $region50: #{lstm_mlp_classifier.3} parent=1 // pred_check
      %p96 = pneg %p95
    $region51: #{lstm_mlp_classifier.3} parent=1 // pred_check_branch
      %98 = sbr.rel (%p96) target = $region53
    $region52: #{lstm_mlp_classifier.3} parent=1 // pred_region
      %99 = vst [vmem:[#allocation2] sm:$0xf] 0.0
      %100 = vst [vmem:[#allocation3] sm:$0xf] 0.0
      %101 = vst [vmem:[#allocation4] sm:$0xf] 0.0
      %102 = vst [vmem:[#allocation5] sm:$0xf] 0.0
    $region53: #{lstm_mlp_classifier.3} parent=1 // pred_fallthru
      _
    %v103 = vld [vmem:[#allocation7] sm:$0xff]
    %v104 = vld [vmem:[#allocation7 + $0x8] sm:$0xff]
    %v105 = vld [vmem:[#allocation7 + $0x10] sm:$0xff]
    %v106 = vld [vmem:[#allocation7 + $0x18] sm:$0xff]
    %v107 = vld [vmem:[#allocation7 + $0x20] sm:$0xff]
    %v108 = vld [vmem:[#allocation7 + $0x28] sm:$0xff]
    %v109 = vld [vmem:[#allocation7 + $0x30] sm:$0xff]
    %v110 = vld [vmem:[#allocation7 + $0x38] sm:$0xff]
    %v111 = vld [vmem:[#allocation7 + $0x40] sm:$0xff]
    %v112 = vld [vmem:[#allocation7 + $0x48] sm:$0xff]
    %v113 = vld [vmem:[#allocation7 + $0x50] sm:$0xff]
    %v114 = vld [vmem:[#allocation7 + $0x58] sm:$0xff]
    %v115 = vld [vmem:[#allocation7 + $0x60] sm:$0xff]
    %v116 = vld [vmem:[#allocation7 + $0x68] sm:$0xff]
    %v117 = vld [vmem:[#allocation7 + $0x70] sm:$0xff]
    %v118 = vld [vmem:[#allocation7 + $0x78] sm:$0xff]
    %v119 = vld [vmem:[#allocation7 + $0x80] sm:$0xff]
    %v120 = vld [vmem:[#allocation7 + $0x88] sm:$0xff]
    %v121 = vld [vmem:[#allocation7 + $0x90] sm:$0xff]
    %v122 = vld [vmem:[#allocation7 + $0x98] sm:$0xff]
    %v123 = vld [vmem:[#allocation7 + $0xa0] sm:$0xff]
    %v124 = vld [vmem:[#allocation7 + $0xa8] sm:$0xff]
    %v125 = vld [vmem:[#allocation7 + $0xb0] sm:$0xff]
    %v126 = vld [vmem:[#allocation7 + $0xb8] sm:$0xff]
    %v127 = vld [vmem:[#allocation7 + $0xc0] sm:$0xff]
    %v128 = vld [vmem:[#allocation7 + $0xc8] sm:$0xff]
    %v129 = vld [vmem:[#allocation7 + $0xd0] sm:$0xff]
    %v130 = vld [vmem:[#allocation7 + $0xd8] sm:$0xff]
    %v131 = vld [vmem:[#allocation7 + $0xe0] sm:$0xff]
    %v132 = vld [vmem:[#allocation7 + $0xe8] sm:$0xff]
    %v133 = vld [vmem:[#allocation7 + $0xf0] sm:$0xff]
    %v134 = vld [vmem:[#allocation7 + $0xf8] sm:$0xff]
    %v135 = vld [vmem:[#allocation7 + $0x100] sm:$0xff]
    %v136 = vld [vmem:[#allocation7 + $0x108] sm:$0xff]
    %v137 = vld [vmem:[#allocation7 + $0x110] sm:$0xff]
    %v138 = vld [vmem:[#allocation7 + $0x118] sm:$0xff]
    %v139 = vld [vmem:[#allocation7 + $0x120] sm:$0xff]
    %v140 = vld [vmem:[#allocation7 + $0x128] sm:$0xff]
    %v141 = vld [vmem:[#allocation7 + $0x130] sm:$0xff]
    %v142 = vld [vmem:[#allocation7 + $0x138] sm:$0xff]
    %v143 = vld [vmem:[#allocation7 + $0x140] sm:$0xff]
    %v144 = vld [vmem:[#allocation7 + $0x148] sm:$0xff]
    %v145 = vld [vmem:[#allocation7 + $0x150] sm:$0xff]
    %v146 = vld [vmem:[#allocation7 + $0x158] sm:$0xff]
    %v147 = vld [vmem:[#allocation7 + $0x160] sm:$0xff]
    %v148 = vld [vmem:[#allocation7 + $0x168] sm:$0xff]
    %v149 = vld [vmem:[#allocation7 + $0x170] sm:$0xff]
    %v150 = vld [vmem:[#allocation7 + $0x178] sm:$0xff]
    %v151 = vld [vmem:[#allocation7 + $0x180] sm:$0xff]
    %v152 = vld [vmem:[#allocation7 + $0x188] sm:$0xff]
    %v153 = vld [vmem:[#allocation7 + $0x190] sm:$0xff]
    %v154 = vld [vmem:[#allocation7 + $0x198] sm:$0xff]
    %v155 = vld [vmem:[#allocation7 + $0x1a0] sm:$0xff]
    %v156 = vld [vmem:[#allocation7 + $0x1a8] sm:$0xff]
    %v157 = vld [vmem:[#allocation7 + $0x1b0] sm:$0xff]
    %v158 = vld [vmem:[#allocation7 + $0x1b8] sm:$0xff]
    %v159 = vld [vmem:[#allocation7 + $0x1c0] sm:$0xff]
    %v160 = vld [vmem:[#allocation7 + $0x1c8] sm:$0xff]
    %v161 = vld [vmem:[#allocation7 + $0x1d0] sm:$0xff]
    %v162 = vld [vmem:[#allocation7 + $0x1d8] sm:$0xff]
    %v163 = vld [vmem:[#allocation7 + $0x1e0] sm:$0xff]
    %v164 = vld [vmem:[#allocation7 + $0x1e8] sm:$0xff]
    %v165 = vld [vmem:[#allocation7 + $0x1f0] sm:$0xff]
    %v166 = vld [vmem:[#allocation7 + $0x1f8] sm:$0xff]
    %v167 = vld [vmem:[#allocation7 + $0x200] sm:$0xff]
    %v168 = vld [vmem:[#allocation7 + $0x208] sm:$0xff]
    %v169 = vld [vmem:[#allocation7 + $0x210] sm:$0xff]
    %v170 = vld [vmem:[#allocation7 + $0x218] sm:$0xff]
    %v171 = vld [vmem:[#allocation7 + $0x220] sm:$0xff]
    %v172 = vld [vmem:[#allocation7 + $0x228] sm:$0xff]
    %v173 = vld [vmem:[#allocation7 + $0x230] sm:$0xff]
    %v174 = vld [vmem:[#allocation7 + $0x238] sm:$0xff]
    %v175 = vld [vmem:[#allocation7 + $0x240] sm:$0xff]
    %v176 = vld [vmem:[#allocation7 + $0x248] sm:$0xff]
    %v177 = vld [vmem:[#allocation7 + $0x250] sm:$0xff]
    %v178 = vld [vmem:[#allocation7 + $0x258] sm:$0xff]
    %v179 = vld [vmem:[#allocation7 + $0x260] sm:$0xff]
    %v180 = vld [vmem:[#allocation7 + $0x268] sm:$0xff]
    %v181 = vld [vmem:[#allocation7 + $0x270] sm:$0xff]
    %v182 = vld [vmem:[#allocation7 + $0x278] sm:$0xff]
    %v183 = vld [vmem:[#allocation7 + $0x280] sm:$0xff]
    %v184 = vld [vmem:[#allocation7 + $0x288] sm:$0xff]
    %v185 = vld [vmem:[#allocation7 + $0x290] sm:$0xff]
    %v186 = vld [vmem:[#allocation7 + $0x298] sm:$0xff]
    %v187 = vld [vmem:[#allocation7 + $0x2a0] sm:$0xff]
    %v188 = vld [vmem:[#allocation7 + $0x2a8] sm:$0xff]
    %v189 = vld [vmem:[#allocation7 + $0x2b0] sm:$0xff]
    %v190 = vld [vmem:[#allocation7 + $0x2b8] sm:$0xff]
    %v191 = vld [vmem:[#allocation7 + $0x2c0] sm:$0xff]
    %v192 = vld [vmem:[#allocation7 + $0x2c8] sm:$0xff]
    %v193 = vld [vmem:[#allocation7 + $0x2d0] sm:$0xff]
    %v194 = vld [vmem:[#allocation7 + $0x2d8] sm:$0xff]
    %v195 = vld [vmem:[#allocation7 + $0x2e0] sm:$0xff]
    %v196 = vld [vmem:[#allocation7 + $0x2e8] sm:$0xff]
    %v197 = vld [vmem:[#allocation7 + $0x2f0] sm:$0xff]
    %v198 = vld [vmem:[#allocation7 + $0x2f8] sm:$0xff]
    %v199 = vld [vmem:[#allocation7 + $0x300] sm:$0xff]
    %v200 = vld [vmem:[#allocation7 + $0x308] sm:$0xff]
    %v201 = vld [vmem:[#allocation7 + $0x310] sm:$0xff]
    %v202 = vld [vmem:[#allocation7 + $0x318] sm:$0xff]
    %v203 = vld [vmem:[#allocation7 + $0x320] sm:$0xff]
    %v204 = vld [vmem:[#allocation7 + $0x328] sm:$0xff]
    %v205 = vld [vmem:[#allocation7 + $0x330] sm:$0xff]
    %v206 = vld [vmem:[#allocation7 + $0x338] sm:$0xff]
    %v207 = vld [vmem:[#allocation7 + $0x340] sm:$0xff]
    %v208 = vld [vmem:[#allocation7 + $0x348] sm:$0xff]
    %v209 = vld [vmem:[#allocation7 + $0x350] sm:$0xff]
    %v210 = vld [vmem:[#allocation7 + $0x358] sm:$0xff]
    %v211 = vld [vmem:[#allocation7 + $0x360] sm:$0xff]
    %v212 = vld [vmem:[#allocation7 + $0x368] sm:$0xff]
    %v213 = vld [vmem:[#allocation7 + $0x370] sm:$0xff]
    %v214 = vld [vmem:[#allocation7 + $0x378] sm:$0xff]
    %v215 = vld [vmem:[#allocation7 + $0x380] sm:$0xff]
    %v216 = vld [vmem:[#allocation7 + $0x388] sm:$0xff]
    %v217 = vld [vmem:[#allocation7 + $0x390] sm:$0xff]
    %v218 = vld [vmem:[#allocation7 + $0x398] sm:$0xff]
    %v219 = vld [vmem:[#allocation7 + $0x3a0] sm:$0xff]
    %v220 = vld [vmem:[#allocation7 + $0x3a8] sm:$0xff]
    %v221 = vld [vmem:[#allocation7 + $0x3b0] sm:$0xff]
    %v222 = vld [vmem:[#allocation7 + $0x3b8] sm:$0xff]
    %v223 = vld [vmem:[#allocation7 + $0x3c0] sm:$0xff]
    %v224 = vld [vmem:[#allocation7 + $0x3c8] sm:$0xff]
    %v225 = vld [vmem:[#allocation7 + $0x3d0] sm:$0xff]
    %v226 = vld [vmem:[#allocation7 + $0x3d8] sm:$0xff]
    %v227 = vld [vmem:[#allocation7 + $0x3e0] sm:$0xff]
    %v228 = vld [vmem:[#allocation7 + $0x3e8] sm:$0xff]
    %v229 = vld [vmem:[#allocation7 + $0x3f0] sm:$0xff]
    %v230 = vld [vmem:[#allocation7 + $0x3f8] sm:$0xff]
    %v231 = vld [vmem:[#allocation9] sm:$0xff]
    %v232 = vld [vmem:[#allocation9 + $0x8] sm:$0xff]
    %v233 = vld [vmem:[#allocation9 + $0x10] sm:$0xff]
    %v234 = vld [vmem:[#allocation9 + $0x18] sm:$0xff]
    %v235 = vld [vmem:[#allocation9 + $0x20] sm:$0xff]
    %v236 = vld [vmem:[#allocation9 + $0x28] sm:$0xff]
    %v237 = vld [vmem:[#allocation9 + $0x30] sm:$0xff]
    %v238 = vld [vmem:[#allocation9 + $0x38] sm:$0xff]
    %v239 = vld [vmem:[#allocation9 + $0x40] sm:$0xff]
    %v240 = vld [vmem:[#allocation9 + $0x48] sm:$0xff]
    %v241 = vld [vmem:[#allocation9 + $0x50] sm:$0xff]
    %v242 = vld [vmem:[#allocation9 + $0x58] sm:$0xff]
    %v243 = vld [vmem:[#allocation9 + $0x60] sm:$0xff]
    %v244 = vld [vmem:[#allocation9 + $0x68] sm:$0xff]
    %v245 = vld [vmem:[#allocation9 + $0x70] sm:$0xff]
    %v246 = vld [vmem:[#allocation9 + $0x78] sm:$0xff]
    %v247 = vld [vmem:[#allocation9 + $0x80] sm:$0xff]
    %v248 = vld [vmem:[#allocation9 + $0x88] sm:$0xff]
    %v249 = vld [vmem:[#allocation9 + $0x90] sm:$0xff]
    %v250 = vld [vmem:[#allocation9 + $0x98] sm:$0xff]
    %v251 = vld [vmem:[#allocation9 + $0xa0] sm:$0xff]
    %v252 = vld [vmem:[#allocation9 + $0xa8] sm:$0xff]
    %v253 = vld [vmem:[#allocation9 + $0xb0] sm:$0xff]
    %v254 = vld [vmem:[#allocation9 + $0xb8] sm:$0xff]
    %v255 = vld [vmem:[#allocation9 + $0xc0] sm:$0xff]
    %v256 = vld [vmem:[#allocation9 + $0xc8] sm:$0xff]
    %v257 = vld [vmem:[#allocation9 + $0xd0] sm:$0xff]
    %v258 = vld [vmem:[#allocation9 + $0xd8] sm:$0xff]
    %v259 = vld [vmem:[#allocation9 + $0xe0] sm:$0xff]
    %v260 = vld [vmem:[#allocation9 + $0xe8] sm:$0xff]
    %v261 = vld [vmem:[#allocation9 + $0xf0] sm:$0xff]
    %v262 = vld [vmem:[#allocation9 + $0xf8] sm:$0xff]
    %v263 = vld [vmem:[#allocation9 + $0x100] sm:$0xff]
    %v264 = vld [vmem:[#allocation9 + $0x108] sm:$0xff]
    %v265 = vld [vmem:[#allocation9 + $0x110] sm:$0xff]
    %v266 = vld [vmem:[#allocation9 + $0x118] sm:$0xff]
    %v267 = vld [vmem:[#allocation9 + $0x120] sm:$0xff]
    %v268 = vld [vmem:[#allocation9 + $0x128] sm:$0xff]
    %v269 = vld [vmem:[#allocation9 + $0x130] sm:$0xff]
    %v270 = vld [vmem:[#allocation9 + $0x138] sm:$0xff]
    %v271 = vld [vmem:[#allocation9 + $0x140] sm:$0xff]
    %v272 = vld [vmem:[#allocation9 + $0x148] sm:$0xff]
    %v273 = vld [vmem:[#allocation9 + $0x150] sm:$0xff]
    %v274 = vld [vmem:[#allocation9 + $0x158] sm:$0xff]
    %v275 = vld [vmem:[#allocation9 + $0x160] sm:$0xff]
    %v276 = vld [vmem:[#allocation9 + $0x168] sm:$0xff]
    %v277 = vld [vmem:[#allocation9 + $0x170] sm:$0xff]
    %v278 = vld [vmem:[#allocation9 + $0x178] sm:$0xff]
    %v279 = vld [vmem:[#allocation9 + $0x180] sm:$0xff]
    %v280 = vld [vmem:[#allocation9 + $0x188] sm:$0xff]
    %v281 = vld [vmem:[#allocation9 + $0x190] sm:$0xff]
    %v282 = vld [vmem:[#allocation9 + $0x198] sm:$0xff]
    %v283 = vld [vmem:[#allocation9 + $0x1a0] sm:$0xff]
    %v284 = vld [vmem:[#allocation9 + $0x1a8] sm:$0xff]
    %v285 = vld [vmem:[#allocation9 + $0x1b0] sm:$0xff]
    %v286 = vld [vmem:[#allocation9 + $0x1b8] sm:$0xff]
    %v287 = vld [vmem:[#allocation9 + $0x1c0] sm:$0xff]
    %v288 = vld [vmem:[#allocation9 + $0x1c8] sm:$0xff]
    %v289 = vld [vmem:[#allocation9 + $0x1d0] sm:$0xff]
    %v290 = vld [vmem:[#allocation9 + $0x1d8] sm:$0xff]
    %v291 = vld [vmem:[#allocation9 + $0x1e0] sm:$0xff]
    %v292 = vld [vmem:[#allocation9 + $0x1e8] sm:$0xff]
    %v293 = vld [vmem:[#allocation9 + $0x1f0] sm:$0xff]
    %v294 = vld [vmem:[#allocation9 + $0x1f8] sm:$0xff]
    %v295 = vld [vmem:[#allocation9 + $0x200] sm:$0xff]
    %v296 = vld [vmem:[#allocation9 + $0x208] sm:$0xff]
    %v297 = vld [vmem:[#allocation9 + $0x210] sm:$0xff]
    %v298 = vld [vmem:[#allocation9 + $0x218] sm:$0xff]
    %v299 = vld [vmem:[#allocation9 + $0x220] sm:$0xff]
    %v300 = vld [vmem:[#allocation9 + $0x228] sm:$0xff]
    %v301 = vld [vmem:[#allocation9 + $0x230] sm:$0xff]
    %v302 = vld [vmem:[#allocation9 + $0x238] sm:$0xff]
    %v303 = vld [vmem:[#allocation9 + $0x240] sm:$0xff]
    %v304 = vld [vmem:[#allocation9 + $0x248] sm:$0xff]
    %v305 = vld [vmem:[#allocation9 + $0x250] sm:$0xff]
    %v306 = vld [vmem:[#allocation9 + $0x258] sm:$0xff]
    %v307 = vld [vmem:[#allocation9 + $0x260] sm:$0xff]
    %v308 = vld [vmem:[#allocation9 + $0x268] sm:$0xff]
    %v309 = vld [vmem:[#allocation9 + $0x270] sm:$0xff]
    %v310 = vld [vmem:[#allocation9 + $0x278] sm:$0xff]
    %v311 = vld [vmem:[#allocation9 + $0x280] sm:$0xff]
    %v312 = vld [vmem:[#allocation9 + $0x288] sm:$0xff]
    %v313 = vld [vmem:[#allocation9 + $0x290] sm:$0xff]
    %v314 = vld [vmem:[#allocation9 + $0x298] sm:$0xff]
    %v315 = vld [vmem:[#allocation9 + $0x2a0] sm:$0xff]
    %v316 = vld [vmem:[#allocation9 + $0x2a8] sm:$0xff]
    %v317 = vld [vmem:[#allocation9 + $0x2b0] sm:$0xff]
    %v318 = vld [vmem:[#allocation9 + $0x2b8] sm:$0xff]
    %v319 = vld [vmem:[#allocation9 + $0x2c0] sm:$0xff]
    %v320 = vld [vmem:[#allocation9 + $0x2c8] sm:$0xff]
    %v321 = vld [vmem:[#allocation9 + $0x2d0] sm:$0xff]
    %v322 = vld [vmem:[#allocation9 + $0x2d8] sm:$0xff]
    %v323 = vld [vmem:[#allocation9 + $0x2e0] sm:$0xff]
    %v324 = vld [vmem:[#allocation9 + $0x2e8] sm:$0xff]
    %v325 = vld [vmem:[#allocation9 + $0x2f0] sm:$0xff]
    %v326 = vld [vmem:[#allocation9 + $0x2f8] sm:$0xff]
    %v327 = vld [vmem:[#allocation9 + $0x300] sm:$0xff]
    %v328 = vld [vmem:[#allocation9 + $0x308] sm:$0xff]
    %v329 = vld [vmem:[#allocation9 + $0x310] sm:$0xff]
    %v330 = vld [vmem:[#allocation9 + $0x318] sm:$0xff]
    %v331 = vld [vmem:[#allocation9 + $0x320] sm:$0xff]
    %v332 = vld [vmem:[#allocation9 + $0x328] sm:$0xff]
    %v333 = vld [vmem:[#allocation9 + $0x330] sm:$0xff]
    %v334 = vld [vmem:[#allocation9 + $0x338] sm:$0xff]
    %v335 = vld [vmem:[#allocation9 + $0x340] sm:$0xff]
    %v336 = vld [vmem:[#allocation9 + $0x348] sm:$0xff]
    %v337 = vld [vmem:[#allocation9 + $0x350] sm:$0xff]
    %v338 = vld [vmem:[#allocation9 + $0x358] sm:$0xff]
    %v339 = vld [vmem:[#allocation9 + $0x360] sm:$0xff]
    %v340 = vld [vmem:[#allocation9 + $0x368] sm:$0xff]
    %v341 = vld [vmem:[#allocation9 + $0x370] sm:$0xff]
    %v342 = vld [vmem:[#allocation9 + $0x378] sm:$0xff]
    %v343 = vld [vmem:[#allocation9 + $0x380] sm:$0xff]
    %v344 = vld [vmem:[#allocation9 + $0x388] sm:$0xff]
    %v345 = vld [vmem:[#allocation9 + $0x390] sm:$0xff]
    %v346 = vld [vmem:[#allocation9 + $0x398] sm:$0xff]
    %v347 = vld [vmem:[#allocation9 + $0x3a0] sm:$0xff]
    %v348 = vld [vmem:[#allocation9 + $0x3a8] sm:$0xff]
    %v349 = vld [vmem:[#allocation9 + $0x3b0] sm:$0xff]
    %v350 = vld [vmem:[#allocation9 + $0x3b8] sm:$0xff]
    %v351 = vld [vmem:[#allocation9 + $0x3c0] sm:$0xff]
    %v352 = vld [vmem:[#allocation9 + $0x3c8] sm:$0xff]
    %v353 = vld [vmem:[#allocation9 + $0x3d0] sm:$0xff]
    %v354 = vld [vmem:[#allocation9 + $0x3d8] sm:$0xff]
    %v355 = vld [vmem:[#allocation9 + $0x3e0] sm:$0xff]
    %v356 = vld [vmem:[#allocation9 + $0x3e8] sm:$0xff]
    %v357 = vld [vmem:[#allocation9 + $0x3f0] sm:$0xff]
    %v358 = vld [vmem:[#allocation9 + $0x3f8] sm:$0xff]
    %v359 = vld [vmem:[#allocation2] sm:$0xf]
    %v360 = vld [vmem:[#allocation3] sm:$0xf]
    %v361 = vld [vmem:[#allocation4] sm:$0xf]
    %v362 = vld [vmem:[#allocation5] sm:$0xf]
    %v363 = vld [vmem:[%s0] ss:$8 sm:$0xf]
    %v364 = vld [vmem:[%s0] ss:$8 sm:$0xf0]
    %v365 = vor.u32 %v363, %v364
    %s366 = scalar_lea.vmem %s0, 64
    %v367 = vld [vmem:[%s366] ss:$8 sm:$0xf]
    %v368 = vld [vmem:[%s366] ss:$8 sm:$0xf0]
    %v369 = vor.u32 %v367, %v368
    %v372 = vunpack.c.l.s4 1983009808
    %v373 = vunpack.c.0.s8 %v372
    %v374 = vlaneseq
    %v375 = vshrl.u32 %v374, 7
    %v376 = vsub.s32 %v373, %v375
    %v377 = vrot.slane %v359, %v376
    %v378 = vcombine.high %v377, %v377
    %v381 = vpack.c.bf16 %v377, %v377
    %v382 = vpack.c.bf16 %v378, %v378
    %v511 = vunpack.c.l.b16 %v103
    %v512 = vunpack.c.h.b16 %v103
    %v513 = vunpack.c.l.b16 %v104
    %v514 = vunpack.c.h.b16 %v104
    %v515 = vunpack.c.l.b16 %v105
    %v516 = vunpack.c.h.b16 %v105
    %v517 = vunpack.c.l.b16 %v106
    %v518 = vunpack.c.h.b16 %v106
    %v519 = vunpack.c.l.b16 %v107
    %v520 = vunpack.c.h.b16 %v107
    %v521 = vunpack.c.l.b16 %v108
    %v522 = vunpack.c.h.b16 %v108
    %v523 = vunpack.c.l.b16 %v109
    %v524 = vunpack.c.h.b16 %v109
    %v525 = vunpack.c.l.b16 %v110
    %v526 = vunpack.c.h.b16 %v110
    %v527 = vunpack.c.l.b16 %v111
    %v528 = vunpack.c.h.b16 %v111
    %v529 = vunpack.c.l.b16 %v112
    %v530 = vunpack.c.h.b16 %v112
    %v531 = vunpack.c.l.b16 %v113
    %v532 = vunpack.c.h.b16 %v113
    %v533 = vunpack.c.l.b16 %v114
    %v534 = vunpack.c.h.b16 %v114
    %v535 = vunpack.c.l.b16 %v115
    %v536 = vunpack.c.h.b16 %v115
    %v537 = vunpack.c.l.b16 %v116
    %v538 = vunpack.c.h.b16 %v116
    %v539 = vunpack.c.l.b16 %v117
    %v540 = vunpack.c.h.b16 %v117
    %v541 = vunpack.c.l.b16 %v118
    %v542 = vunpack.c.h.b16 %v118
    %v543 = vunpack.c.l.b16 %v119
    %v544 = vunpack.c.h.b16 %v119
    %v545 = vunpack.c.l.b16 %v120
    %v546 = vunpack.c.h.b16 %v120
    %v547 = vunpack.c.l.b16 %v121
    %v548 = vunpack.c.h.b16 %v121
    %v549 = vunpack.c.l.b16 %v122
    %v550 = vunpack.c.h.b16 %v122
    %v551 = vunpack.c.l.b16 %v123
    %v552 = vunpack.c.h.b16 %v123
    %v553 = vunpack.c.l.b16 %v124
    %v554 = vunpack.c.h.b16 %v124
    %v555 = vunpack.c.l.b16 %v125
    %v556 = vunpack.c.h.b16 %v125
    %v557 = vunpack.c.l.b16 %v126
    %v558 = vunpack.c.h.b16 %v126
    %v559 = vunpack.c.l.b16 %v127
    %v560 = vunpack.c.h.b16 %v127
    %v561 = vunpack.c.l.b16 %v128
    %v562 = vunpack.c.h.b16 %v128
    %v563 = vunpack.c.l.b16 %v129
    %v564 = vunpack.c.h.b16 %v129
    %v565 = vunpack.c.l.b16 %v130
    %v566 = vunpack.c.h.b16 %v130
    %v567 = vunpack.c.l.b16 %v131
    %v568 = vunpack.c.h.b16 %v131
    %v569 = vunpack.c.l.b16 %v132
    %v570 = vunpack.c.h.b16 %v132
    %v571 = vunpack.c.l.b16 %v133
    %v572 = vunpack.c.h.b16 %v133
    %v573 = vunpack.c.l.b16 %v134
    %v574 = vunpack.c.h.b16 %v134
    %v575 = vunpack.c.l.b16 %v135
    %v576 = vunpack.c.h.b16 %v135
    %v577 = vunpack.c.l.b16 %v136
    %v578 = vunpack.c.h.b16 %v136
    %v579 = vunpack.c.l.b16 %v137
    %v580 = vunpack.c.h.b16 %v137
    %v581 = vunpack.c.l.b16 %v138
    %v582 = vunpack.c.h.b16 %v138
    %v583 = vunpack.c.l.b16 %v139
    %v584 = vunpack.c.h.b16 %v139
    %v585 = vunpack.c.l.b16 %v140
    %v586 = vunpack.c.h.b16 %v140
    %v587 = vunpack.c.l.b16 %v141
    %v588 = vunpack.c.h.b16 %v141
    %v589 = vunpack.c.l.b16 %v142
    %v590 = vunpack.c.h.b16 %v142
    %v591 = vunpack.c.l.b16 %v143
    %v592 = vunpack.c.h.b16 %v143
    %v593 = vunpack.c.l.b16 %v144
    %v594 = vunpack.c.h.b16 %v144
    %v595 = vunpack.c.l.b16 %v145
    %v596 = vunpack.c.h.b16 %v145
    %v597 = vunpack.c.l.b16 %v146
    %v598 = vunpack.c.h.b16 %v146
    %v599 = vunpack.c.l.b16 %v147
    %v600 = vunpack.c.h.b16 %v147
    %v601 = vunpack.c.l.b16 %v148
    %v602 = vunpack.c.h.b16 %v148
    %v603 = vunpack.c.l.b16 %v149
    %v604 = vunpack.c.h.b16 %v149
    %v605 = vunpack.c.l.b16 %v150
    %v606 = vunpack.c.h.b16 %v150
    %v607 = vunpack.c.l.b16 %v151
    %v608 = vunpack.c.h.b16 %v151
    %v609 = vunpack.c.l.b16 %v152
    %v610 = vunpack.c.h.b16 %v152
    %v611 = vunpack.c.l.b16 %v153
    %v612 = vunpack.c.h.b16 %v153
    %v613 = vunpack.c.l.b16 %v154
    %v614 = vunpack.c.h.b16 %v154
    %v615 = vunpack.c.l.b16 %v155
    %v616 = vunpack.c.h.b16 %v155
    %v617 = vunpack.c.l.b16 %v156
    %v618 = vunpack.c.h.b16 %v156
    %v619 = vunpack.c.l.b16 %v157
    %v620 = vunpack.c.h.b16 %v157
    %v621 = vunpack.c.l.b16 %v158
    %v622 = vunpack.c.h.b16 %v158
    %v623 = vunpack.c.l.b16 %v159
    %v624 = vunpack.c.h.b16 %v159
    %v625 = vunpack.c.l.b16 %v160
    %v626 = vunpack.c.h.b16 %v160
    %v627 = vunpack.c.l.b16 %v161
    %v628 = vunpack.c.h.b16 %v161
    %v629 = vunpack.c.l.b16 %v162
    %v630 = vunpack.c.h.b16 %v162
    %v631 = vunpack.c.l.b16 %v163
    %v632 = vunpack.c.h.b16 %v163
    %v633 = vunpack.c.l.b16 %v164
    %v634 = vunpack.c.h.b16 %v164
    %v635 = vunpack.c.l.b16 %v165
    %v636 = vunpack.c.h.b16 %v165
    %v637 = vunpack.c.l.b16 %v166
    %v638 = vunpack.c.h.b16 %v166
    %v639 = vunpack.c.l.b16 %v167
    %v640 = vunpack.c.h.b16 %v167
    %v641 = vunpack.c.l.b16 %v168
    %v642 = vunpack.c.h.b16 %v168
    %v643 = vunpack.c.l.b16 %v169
    %v644 = vunpack.c.h.b16 %v169
    %v645 = vunpack.c.l.b16 %v170
    %v646 = vunpack.c.h.b16 %v170
    %v647 = vunpack.c.l.b16 %v171
    %v648 = vunpack.c.h.b16 %v171
    %v649 = vunpack.c.l.b16 %v172
    %v650 = vunpack.c.h.b16 %v172
    %v651 = vunpack.c.l.b16 %v173
    %v652 = vunpack.c.h.b16 %v173
    %v653 = vunpack.c.l.b16 %v174
    %v654 = vunpack.c.h.b16 %v174
    %v655 = vunpack.c.l.b16 %v175
    %v656 = vunpack.c.h.b16 %v175
    %v657 = vunpack.c.l.b16 %v176
    %v658 = vunpack.c.h.b16 %v176
    %v659 = vunpack.c.l.b16 %v177
    %v660 = vunpack.c.h.b16 %v177
    %v661 = vunpack.c.l.b16 %v178
    %v662 = vunpack.c.h.b16 %v178
    %v663 = vunpack.c.l.b16 %v179
    %v664 = vunpack.c.h.b16 %v179
    %v665 = vunpack.c.l.b16 %v180
    %v666 = vunpack.c.h.b16 %v180
    %v667 = vunpack.c.l.b16 %v181
    %v668 = vunpack.c.h.b16 %v181
    %v669 = vunpack.c.l.b16 %v182
    %v670 = vunpack.c.h.b16 %v182
    %v671 = vunpack.c.l.b16 %v183
    %v672 = vunpack.c.h.b16 %v183
    %v673 = vunpack.c.l.b16 %v184
    %v674 = vunpack.c.h.b16 %v184
    %v675 = vunpack.c.l.b16 %v185
    %v676 = vunpack.c.h.b16 %v185
    %v677 = vunpack.c.l.b16 %v186
    %v678 = vunpack.c.h.b16 %v186
    %v679 = vunpack.c.l.b16 %v187
    %v680 = vunpack.c.h.b16 %v187
    %v681 = vunpack.c.l.b16 %v188
    %v682 = vunpack.c.h.b16 %v188
    %v683 = vunpack.c.l.b16 %v189
    %v684 = vunpack.c.h.b16 %v189
    %v685 = vunpack.c.l.b16 %v190
    %v686 = vunpack.c.h.b16 %v190
    %v687 = vunpack.c.l.b16 %v191
    %v688 = vunpack.c.h.b16 %v191
    %v689 = vunpack.c.l.b16 %v192
    %v690 = vunpack.c.h.b16 %v192
    %v691 = vunpack.c.l.b16 %v193
    %v692 = vunpack.c.h.b16 %v193
    %v693 = vunpack.c.l.b16 %v194
    %v694 = vunpack.c.h.b16 %v194
    %v695 = vunpack.c.l.b16 %v195
    %v696 = vunpack.c.h.b16 %v195
    %v697 = vunpack.c.l.b16 %v196
    %v698 = vunpack.c.h.b16 %v196
    %v699 = vunpack.c.l.b16 %v197
    %v700 = vunpack.c.h.b16 %v197
    %v701 = vunpack.c.l.b16 %v198
    %v702 = vunpack.c.h.b16 %v198
    %v703 = vunpack.c.l.b16 %v199
    %v704 = vunpack.c.h.b16 %v199
    %v705 = vunpack.c.l.b16 %v200
    %v706 = vunpack.c.h.b16 %v200
    %v707 = vunpack.c.l.b16 %v201
    %v708 = vunpack.c.h.b16 %v201
    %v709 = vunpack.c.l.b16 %v202
    %v710 = vunpack.c.h.b16 %v202
    %v711 = vunpack.c.l.b16 %v203
    %v712 = vunpack.c.h.b16 %v203
    %v713 = vunpack.c.l.b16 %v204
    %v714 = vunpack.c.h.b16 %v204
    %v715 = vunpack.c.l.b16 %v205
    %v716 = vunpack.c.h.b16 %v205
    %v717 = vunpack.c.l.b16 %v206
    %v718 = vunpack.c.h.b16 %v206
    %v719 = vunpack.c.l.b16 %v207
    %v720 = vunpack.c.h.b16 %v207
    %v721 = vunpack.c.l.b16 %v208
    %v722 = vunpack.c.h.b16 %v208
    %v723 = vunpack.c.l.b16 %v209
    %v724 = vunpack.c.h.b16 %v209
    %v725 = vunpack.c.l.b16 %v210
    %v726 = vunpack.c.h.b16 %v210
    %v727 = vunpack.c.l.b16 %v211
    %v728 = vunpack.c.h.b16 %v211
    %v729 = vunpack.c.l.b16 %v212
    %v730 = vunpack.c.h.b16 %v212
    %v731 = vunpack.c.l.b16 %v213
    %v732 = vunpack.c.h.b16 %v213
    %v733 = vunpack.c.l.b16 %v214
    %v734 = vunpack.c.h.b16 %v214
    %v735 = vunpack.c.l.b16 %v215
    %v736 = vunpack.c.h.b16 %v215
    %v737 = vunpack.c.l.b16 %v216
    %v738 = vunpack.c.h.b16 %v216
    %v739 = vunpack.c.l.b16 %v217
    %v740 = vunpack.c.h.b16 %v217
    %v741 = vunpack.c.l.b16 %v218
    %v742 = vunpack.c.h.b16 %v218
    %v743 = vunpack.c.l.b16 %v219
    %v744 = vunpack.c.h.b16 %v219
    %v745 = vunpack.c.l.b16 %v220
    %v746 = vunpack.c.h.b16 %v220
    %v747 = vunpack.c.l.b16 %v221
    %v748 = vunpack.c.h.b16 %v221
    %v749 = vunpack.c.l.b16 %v222
    %v750 = vunpack.c.h.b16 %v222
    %v751 = vunpack.c.l.b16 %v223
    %v752 = vunpack.c.h.b16 %v223
    %v753 = vunpack.c.l.b16 %v224
    %v754 = vunpack.c.h.b16 %v224
    %v755 = vunpack.c.l.b16 %v225
    %v756 = vunpack.c.h.b16 %v225
    %v757 = vunpack.c.l.b16 %v226
    %v758 = vunpack.c.h.b16 %v226
    %v759 = vunpack.c.l.b16 %v227
    %v760 = vunpack.c.h.b16 %v227
    %v761 = vunpack.c.l.b16 %v228
    %v762 = vunpack.c.h.b16 %v228
    %v763 = vunpack.c.l.b16 %v229
    %v764 = vunpack.c.h.b16 %v229
    %v765 = vunpack.c.l.b16 %v230
    %v766 = vunpack.c.h.b16 %v230
    %v767 = vpack.c.b16 %v519, %v511
    %v768 = vpack.c.b16 %v520, %v512
    %v769 = vpack.c.b16 %v521, %v513
    %v770 = vpack.c.b16 %v522, %v514
    %v771 = vpack.c.b16 %v523, %v515
    %v772 = vpack.c.b16 %v524, %v516
    %v773 = vpack.c.b16 %v525, %v517
    %v774 = vpack.c.b16 %v526, %v518
    %v775 = vpack.c.b16 %v535, %v527
    %v776 = vpack.c.b16 %v536, %v528
    %v777 = vpack.c.b16 %v537, %v529
    %v778 = vpack.c.b16 %v538, %v530
    %v779 = vpack.c.b16 %v539, %v531
    %v780 = vpack.c.b16 %v540, %v532
    %v781 = vpack.c.b16 %v541, %v533
    %v782 = vpack.c.b16 %v542, %v534
    %v783 = vpack.c.b16 %v551, %v543
    %v784 = vpack.c.b16 %v552, %v544
    %v785 = vpack.c.b16 %v553, %v545
    %v786 = vpack.c.b16 %v554, %v546
    %v787 = vpack.c.b16 %v555, %v547
    %v788 = vpack.c.b16 %v556, %v548
    %v789 = vpack.c.b16 %v557, %v549
    %v790 = vpack.c.b16 %v558, %v550
    %v791 = vpack.c.b16 %v567, %v559
    %v792 = vpack.c.b16 %v568, %v560
    %v793 = vpack.c.b16 %v569, %v561
    %v794 = vpack.c.b16 %v570, %v562
    %v795 = vpack.c.b16 %v571, %v563
    %v796 = vpack.c.b16 %v572, %v564
    %v797 = vpack.c.b16 %v573, %v565
    %v798 = vpack.c.b16 %v574, %v566
    %v799 = vpack.c.b16 %v583, %v575
    %v800 = vpack.c.b16 %v584, %v576
    %v801 = vpack.c.b16 %v585, %v577
    %v802 = vpack.c.b16 %v586, %v578
    %v803 = vpack.c.b16 %v587, %v579
    %v804 = vpack.c.b16 %v588, %v580
    %v805 = vpack.c.b16 %v589, %v581
    %v806 = vpack.c.b16 %v590, %v582
    %v807 = vpack.c.b16 %v599, %v591
    %v808 = vpack.c.b16 %v600, %v592
    %v809 = vpack.c.b16 %v601, %v593
    %v810 = vpack.c.b16 %v602, %v594
    %v811 = vpack.c.b16 %v603, %v595
    %v812 = vpack.c.b16 %v604, %v596
    %v813 = vpack.c.b16 %v605, %v597
    %v814 = vpack.c.b16 %v606, %v598
    %v815 = vpack.c.b16 %v615, %v607
    %v816 = vpack.c.b16 %v616, %v608
    %v817 = vpack.c.b16 %v617, %v609
    %v818 = vpack.c.b16 %v618, %v610
    %v819 = vpack.c.b16 %v619, %v611
    %v820 = vpack.c.b16 %v620, %v612
    %v821 = vpack.c.b16 %v621, %v613
    %v822 = vpack.c.b16 %v622, %v614
    %v823 = vpack.c.b16 %v631, %v623
    %v824 = vpack.c.b16 %v632, %v624
    %v825 = vpack.c.b16 %v633, %v625
    %v826 = vpack.c.b16 %v634, %v626
    %v827 = vpack.c.b16 %v635, %v627
    %v828 = vpack.c.b16 %v636, %v628
    %v829 = vpack.c.b16 %v637, %v629
    %v830 = vpack.c.b16 %v638, %v630
    %v831 = vpack.c.b16 %v647, %v639
    %v832 = vpack.c.b16 %v648, %v640
    %v833 = vpack.c.b16 %v649, %v641
    %v834 = vpack.c.b16 %v650, %v642
    %v835 = vpack.c.b16 %v651, %v643
    %v836 = vpack.c.b16 %v652, %v644
    %v837 = vpack.c.b16 %v653, %v645
    %v838 = vpack.c.b16 %v654, %v646
    %v839 = vpack.c.b16 %v663, %v655
    %v840 = vpack.c.b16 %v664, %v656
    %v841 = vpack.c.b16 %v665, %v657
    %v842 = vpack.c.b16 %v666, %v658
    %v843 = vpack.c.b16 %v667, %v659
    %v844 = vpack.c.b16 %v668, %v660
    %v845 = vpack.c.b16 %v669, %v661
    %v846 = vpack.c.b16 %v670, %v662
    %v847 = vpack.c.b16 %v679, %v671
    %v848 = vpack.c.b16 %v680, %v672
    %v849 = vpack.c.b16 %v681, %v673
    %v850 = vpack.c.b16 %v682, %v674
    %v851 = vpack.c.b16 %v683, %v675
    %v852 = vpack.c.b16 %v684, %v676
    %v853 = vpack.c.b16 %v685, %v677
    %v854 = vpack.c.b16 %v686, %v678
    %v855 = vpack.c.b16 %v695, %v687
    %v856 = vpack.c.b16 %v696, %v688
    %v857 = vpack.c.b16 %v697, %v689
    %v858 = vpack.c.b16 %v698, %v690
    %v859 = vpack.c.b16 %v699, %v691
    %v860 = vpack.c.b16 %v700, %v692
    %v861 = vpack.c.b16 %v701, %v693
    %v862 = vpack.c.b16 %v702, %v694
    %v863 = vpack.c.b16 %v711, %v703
    %v864 = vpack.c.b16 %v712, %v704
    %v865 = vpack.c.b16 %v713, %v705
    %v866 = vpack.c.b16 %v714, %v706
    %v867 = vpack.c.b16 %v715, %v707
    %v868 = vpack.c.b16 %v716, %v708
    %v869 = vpack.c.b16 %v717, %v709
    %v870 = vpack.c.b16 %v718, %v710
    %v871 = vpack.c.b16 %v727, %v719
    %v872 = vpack.c.b16 %v728, %v720
    %v873 = vpack.c.b16 %v729, %v721
    %v874 = vpack.c.b16 %v730, %v722
    %v875 = vpack.c.b16 %v731, %v723
    %v876 = vpack.c.b16 %v732, %v724
    %v877 = vpack.c.b16 %v733, %v725
    %v878 = vpack.c.b16 %v734, %v726
    %v879 = vpack.c.b16 %v743, %v735
    %v880 = vpack.c.b16 %v744, %v736
    %v881 = vpack.c.b16 %v745, %v737
    %v882 = vpack.c.b16 %v746, %v738
    %v883 = vpack.c.b16 %v747, %v739
    %v884 = vpack.c.b16 %v748, %v740
    %v885 = vpack.c.b16 %v749, %v741
    %v886 = vpack.c.b16 %v750, %v742
    %v887 = vpack.c.b16 %v759, %v751
    %v888 = vpack.c.b16 %v760, %v752
    %v889 = vpack.c.b16 %v761, %v753
    %v890 = vpack.c.b16 %v762, %v754
    %v891 = vpack.c.b16 %v763, %v755
    %v892 = vpack.c.b16 %v764, %v756
    %v893 = vpack.c.b16 %v765, %v757
    %v894 = vpack.c.b16 %v766, %v758
    %1023 = vmatprep.subr.bf16.mxu0 %v768
    %1024 = vmatpush1.bf16.msra.mxu0 %v767
    %1025 = vmatprep.subr.bf16.mxu0 %v776
    %1026 = vmatpush1.bf16.msra.mxu0 %v775
    %1027 = vmatprep.subr.bf16.mxu0 %v784
    %1028 = vmatpush1.bf16.msra.mxu0 %v783
    %1029 = vmatprep.subr.bf16.mxu0 %v792
    %1030 = vmatpush1.bf16.msra.mxu0 %v791
    %1031 = vmatprep.subr.bf16.mxu0 %v800
    %1032 = vmatpush1.bf16.msra.mxu0 %v799
    %1033 = vmatprep.subr.bf16.mxu0 %v808
    %1034 = vmatpush1.bf16.msra.mxu0 %v807
    %1035 = vmatprep.subr.bf16.mxu0 %v816
    %1036 = vmatpush1.bf16.msra.mxu0 %v815
    %1037 = vmatprep.subr.bf16.mxu0 %v824
    %1038 = vmatpush1.bf16.msra.mxu0 %v823
    %1039 = vmatprep.subr.bf16.mxu0 %v832
    %1040 = vmatpush1.bf16.msra.mxu0 %v831
    %1041 = vmatprep.subr.bf16.mxu0 %v840
    %1042 = vmatpush1.bf16.msra.mxu0 %v839
    %1043 = vmatprep.subr.bf16.mxu0 %v848
    %1044 = vmatpush1.bf16.msra.mxu0 %v847
    %1045 = vmatprep.subr.bf16.mxu0 %v856
    %1046 = vmatpush1.bf16.msra.mxu0 %v855
    %1047 = vmatprep.subr.bf16.mxu0 %v864
    %1048 = vmatpush1.bf16.msra.mxu0 %v863
    %1049 = vmatprep.subr.bf16.mxu0 %v872
    %1050 = vmatpush1.bf16.msra.mxu0 %v871
    %1051 = vmatprep.subr.bf16.mxu0 %v880
    %1052 = vmatpush1.bf16.msra.mxu0 %v879
    %1053 = vmatprep.subr.bf16.mxu0 %v888
    %1054 = vmatpush1.bf16.msra.mxu0 %v887
    %1055 = vmatprep.mubr.bf16.mxu0 %v382
    %1056 = vmatmul.mubr.bf16.gmra.mrb[0].mxu0 %v381
    %v1057 = vpop.f32.mrb[0].mxu0
    %v1058 = vadd.f32 0.0, %v1057
    %v1059 = vpop.f32.mrb[0].mxu0
    %v1060 = vadd.f32 0.0, %v1059
    %v1061 = vpop.f32.mrb[0].mxu0
    %v1062 = vpop.f32.mrb[0].mxu0
    %1063 = vdwg.mxu0
    %1064 = vmatprep.subr.bf16.mxu0 %v770
    %1065 = vmatpush1.bf16.msra.mxu0 %v769
    %1066 = vmatprep.subr.bf16.mxu0 %v778
    %1067 = vmatpush1.bf16.msra.mxu0 %v777
    %1068 = vmatprep.subr.bf16.mxu0 %v786
    %1069 = vmatpush1.bf16.msra.mxu0 %v785
    %1070 = vmatprep.subr.bf16.mxu0 %v794
    %1071 = vmatpush1.bf16.msra.mxu0 %v793
    %1072 = vmatprep.subr.bf16.mxu0 %v802
    %1073 = vmatpush1.bf16.msra.mxu0 %v801
    %1074 = vmatprep.subr.bf16.mxu0 %v810
    %1075 = vmatpush1.bf16.msra.mxu0 %v809
    %1076 = vmatprep.subr.bf16.mxu0 %v818
    %1077 = vmatpush1.bf16.msra.mxu0 %v817
    %1078 = vmatprep.subr.bf16.mxu0 %v826
    %1079 = vmatpush1.bf16.msra.mxu0 %v825
    %1080 = vmatprep.subr.bf16.mxu0 %v834
    %1081 = vmatpush1.bf16.msra.mxu0 %v833
    %1082 = vmatprep.subr.bf16.mxu0 %v842
    %1083 = vmatpush1.bf16.msra.mxu0 %v841
    %1084 = vmatprep.subr.bf16.mxu0 %v850
    %1085 = vmatpush1.bf16.msra.mxu0 %v849
    %1086 = vmatprep.subr.bf16.mxu0 %v858
    %1087 = vmatpush1.bf16.msra.mxu0 %v857
    %1088 = vmatprep.subr.bf16.mxu0 %v866
    %1089 = vmatpush1.bf16.msra.mxu0 %v865
    %1090 = vmatprep.subr.bf16.mxu0 %v874
    %1091 = vmatpush1.bf16.msra.mxu0 %v873
    %1092 = vmatprep.subr.bf16.mxu0 %v882
    %1093 = vmatpush1.bf16.msra.mxu0 %v881
    %1094 = vmatprep.subr.bf16.mxu0 %v890
    %1095 = vmatpush1.bf16.msra.mxu0 %v889
    %1096 = vmatprep.mubr.bf16.mxu0 %v382
    %1097 = vmatmul.mubr.bf16.gmra.mrb[0].mxu0 %v381
    %v1098 = vpop.f32.mrb[0].mxu0
    %v1099 = vadd.f32 0.0, %v1098
    %v1100 = vpop.f32.mrb[0].mxu0
    %v1101 = vadd.f32 0.0, %v1100
    %v1102 = vpop.f32.mrb[0].mxu0
    %v1103 = vpop.f32.mrb[0].mxu0
    %1104 = vdwg.mxu0
    %1105 = vmatprep.subr.bf16.mxu0 %v772
    %1106 = vmatpush1.bf16.msra.mxu0 %v771
    %1107 = vmatprep.subr.bf16.mxu0 %v780
    %1108 = vmatpush1.bf16.msra.mxu0 %v779
    %1109 = vmatprep.subr.bf16.mxu0 %v788
    %1110 = vmatpush1.bf16.msra.mxu0 %v787
    %1111 = vmatprep.subr.bf16.mxu0 %v796
    %1112 = vmatpush1.bf16.msra.mxu0 %v795
    %1113 = vmatprep.subr.bf16.mxu0 %v804
    %1114 = vmatpush1.bf16.msra.mxu0 %v803
    %1115 = vmatprep.subr.bf16.mxu0 %v812
    %1116 = vmatpush1.bf16.msra.mxu0 %v811
    %1117 = vmatprep.subr.bf16.mxu0 %v820
    %1118 = vmatpush1.bf16.msra.mxu0 %v819
    %1119 = vmatprep.subr.bf16.mxu0 %v828
    %1120 = vmatpush1.bf16.msra.mxu0 %v827
    %1121 = vmatprep.subr.bf16.mxu0 %v836
    %1122 = vmatpush1.bf16.msra.mxu0 %v835
    %1123 = vmatprep.subr.bf16.mxu0 %v844
    %1124 = vmatpush1.bf16.msra.mxu0 %v843
    %1125 = vmatprep.subr.bf16.mxu0 %v852
    %1126 = vmatpush1.bf16.msra.mxu0 %v851
    %1127 = vmatprep.subr.bf16.mxu0 %v860
    %1128 = vmatpush1.bf16.msra.mxu0 %v859
    %1129 = vmatprep.subr.bf16.mxu0 %v868
    %1130 = vmatpush1.bf16.msra.mxu0 %v867
    %1131 = vmatprep.subr.bf16.mxu0 %v876
    %1132 = vmatpush1.bf16.msra.mxu0 %v875
    %1133 = vmatprep.subr.bf16.mxu0 %v884
    %1134 = vmatpush1.bf16.msra.mxu0 %v883
    %1135 = vmatprep.subr.bf16.mxu0 %v892
    %1136 = vmatpush1.bf16.msra.mxu0 %v891
    %1137 = vmatprep.mubr.bf16.mxu0 %v382
    %1138 = vmatmul.mubr.bf16.gmra.mrb[0].mxu0 %v381
    %v1139 = vpop.f32.mrb[0].mxu0
    %v1140 = vadd.f32 0.0, %v1139
    %v1141 = vpop.f32.mrb[0].mxu0
    %v1142 = vadd.f32 0.0, %v1141
    %v1143 = vpop.f32.mrb[0].mxu0
    %v1144 = vpop.f32.mrb[0].mxu0
    %1145 = vdwg.mxu0
    %1146 = vmatprep.subr.bf16.mxu0 %v774
    %1147 = vmatpush1.bf16.msra.mxu0 %v773
    %1148 = vmatprep.subr.bf16.mxu0 %v782
    %1149 = vmatpush1.bf16.msra.mxu0 %v781
    %1150 = vmatprep.subr.bf16.mxu0 %v790
    %1151 = vmatpush1.bf16.msra.mxu0 %v789
    %1152 = vmatprep.subr.bf16.mxu0 %v798
    %1153 = vmatpush1.bf16.msra.mxu0 %v797
    %1154 = vmatprep.subr.bf16.mxu0 %v806
    %1155 = vmatpush1.bf16.msra.mxu0 %v805
    %1156 = vmatprep.subr.bf16.mxu0 %v814
    %1157 = vmatpush1.bf16.msra.mxu0 %v813
    %1158 = vmatprep.subr.bf16.mxu0 %v822
    %1159 = vmatpush1.bf16.msra.mxu0 %v821
    %1160 = vmatprep.subr.bf16.mxu0 %v830
    %1161 = vmatpush1.bf16.msra.mxu0 %v829
    %1162 = vmatprep.subr.bf16.mxu0 %v838
    %1163 = vmatpush1.bf16.msra.mxu0 %v837
    %1164 = vmatprep.subr.bf16.mxu0 %v846
    %1165 = vmatpush1.bf16.msra.mxu0 %v845
    %1166 = vmatprep.subr.bf16.mxu0 %v854
    %1167 = vmatpush1.bf16.msra.mxu0 %v853
    %1168 = vmatprep.subr.bf16.mxu0 %v862
    %1169 = vmatpush1.bf16.msra.mxu0 %v861
    %1170 = vmatprep.subr.bf16.mxu0 %v870
    %1171 = vmatpush1.bf16.msra.mxu0 %v869
    %1172 = vmatprep.subr.bf16.mxu0 %v878
    %1173 = vmatpush1.bf16.msra.mxu0 %v877
    %1174 = vmatprep.subr.bf16.mxu0 %v886
    %1175 = vmatpush1.bf16.msra.mxu0 %v885
    %1176 = vmatprep.subr.bf16.mxu0 %v894
    %1177 = vmatpush1.bf16.msra.mxu0 %v893
    %1178 = vmatprep.mubr.bf16.mxu0 %v382
    %1179 = vmatmul.mubr.bf16.gmra.mrb[0].mxu0 %v381
    %v1180 = vpop.f32.mrb[0].mxu0
    %v1181 = vadd.f32 0.0, %v1180
    %v1182 = vpop.f32.mrb[0].mxu0
    %v1183 = vadd.f32 0.0, %v1182
    %v1184 = vpop.f32.mrb[0].mxu0
    %v1185 = vpop.f32.mrb[0].mxu0
    %1186 = vdwg.mxu0
    %v1195 = vcombine.low %v1058, %v1060
    %v1196 = vcombine.low %v1099, %v1101
    %v1197 = vcombine.low %v1140, %v1142
    %v1198 = vcombine.low %v1181, %v1183
    %v1200 = vunpack.c.l.s4 1966171168
    %v1201 = vunpack.c.0.s8 %v1200
    %v1202 = vlaneseq
    %v1203 = vshrl.u32 %v1202, 7
    %v1204 = vsub.s32 %v1201, %v1203
    %v1205 = vrot.slane %v1195, %v1204
    %v1207 = vunpack.c.l.s4 1966171168
    %v1208 = vunpack.c.0.s8 %v1207
    %v1209 = vlaneseq
    %v1210 = vshrl.u32 %v1209, 7
    %v1211 = vsub.s32 %v1208, %v1210
    %v1212 = vrot.slane %v1196, %v1211
    %v1214 = vunpack.c.l.s4 1966171168
    %v1215 = vunpack.c.0.s8 %v1214
    %v1216 = vlaneseq
    %v1217 = vshrl.u32 %v1216, 7
    %v1218 = vsub.s32 %v1215, %v1217
    %v1219 = vrot.slane %v1197, %v1218
    %v1221 = vunpack.c.l.s4 1966171168
    %v1222 = vunpack.c.0.s8 %v1221
    %v1223 = vlaneseq
    %v1224 = vshrl.u32 %v1223, 7
    %v1225 = vsub.s32 %v1222, %v1224
    %v1226 = vrot.slane %v1198, %v1225
    %v1227 = vcombine.low %v1205, %v1212
    %v1228 = vcombine.high %v1205, %v1212
    %v1229 = vcombine.low %v1219, %v1226
    %v1230 = vcombine.high %v1219, %v1226
    %v1232 = vunpack.c.l.s4 1966171168
    %v1233 = vunpack.c.0.s8 %v1232
    %v1234 = vlaneseq
    %v1235 = vshrl.u32 %v1234, 7
    %v1236 = vsub.s32 %v1233, %v1235
    %v1237 = vrot.slane %v1227, %v1236
    %v1239 = vunpack.c.l.s4 1966171168
    %v1240 = vunpack.c.0.s8 %v1239
    %v1241 = vlaneseq
    %v1242 = vshrl.u32 %v1241, 7
    %v1243 = vsub.s32 %v1240, %v1242
    %v1244 = vrot.slane %v1228, %v1243
    %v1246 = vunpack.c.l.s4 1966171168
    %v1247 = vunpack.c.0.s8 %v1246
    %v1248 = vlaneseq
    %v1249 = vshrl.u32 %v1248, 7
    %v1250 = vsub.s32 %v1247, %v1249
    %v1251 = vrot.slane %v1229, %v1250
    %v1253 = vunpack.c.l.s4 1966171168
    %v1254 = vunpack.c.0.s8 %v1253
    %v1255 = vlaneseq
    %v1256 = vshrl.u32 %v1255, 7
    %v1257 = vsub.s32 %v1254, %v1256
    %v1258 = vrot.slane %v1230, %v1257
    %v1259 = vcombine.low %v1237, %v1251
    %v1260 = vcombine.low %v1244, %v1258
    %v1263 = vadd.f32 %v365, %v1259
    %v1264 = vadd.f32 %v369, %v1260
    %v1265 = vxor.u32 %v1263, 2147483648
    %v1266 = vxor.u32 %v1264, 2147483648
    %v1267 = vmul.f32 %v1265, 1.442695
    %v1268 = vpow.pop %v1267
    %v1269 = vmul.f32 %v1266, 1.442695
    %v1270 = vpow.pop %v1269
    %v1271 = vadd.f32 %v1268, 1.0
    %v1272 = vadd.f32 %v1270, 1.0
    %v1273 = vrcp.pop %v1271
    %v1274 = vmul.f32 1.0, %v1273
    %v1275 = vrcp.pop %v1272
    %v1276 = vmul.f32 1.0, %v1275
    %v1279 = vrot.slane %v1263, 6
    %v1280 = vrot.slane %v1264, 6
    %v1283 = vtanh.pop %v1279
    %v1284 = vtanh.pop %v1280
    %v1287 = vrot.slane %v1274, 2
    %v1288 = vrot.slane %v1276, 2
    %v1293 = vunpack.c.l.s4 1966171168
    %v1294 = vunpack.c.0.s8 %v1293
    %v1295 = vlaneseq
    %v1296 = vshrl.u32 %v1295, 7
    %v1297 = vsub.s32 %v1294, %v1296
    %v1298 = vrot.slane %v360, %v1297
    %v1299 = vcombine.high %v1298, %v1298
    %v1302 = vmul.f32 %v1287, %v1298
    %v1303 = vmul.f32 %v1288, %v1299
    %v1304 = vmul.f32 %v1274, %v1283
    %v1305 = vmul.f32 %v1276, %v1284
    %v1306 = vadd.f32 %v1302, %v1304
    %v1307 = vadd.f32 %v1303, %v1305
    %v1308 = vtanh.pop %v1306
    %v1309 = vtanh.pop %v1307
    %v1310 = vrot.slane %v1274, 4
    %v1311 = vrot.slane %v1276, 4
    %v1314 = vmul.f32 %v1310, %v1308
    %v1315 = vmul.f32 %v1311, %v1309
    %s1316 = scalar_lea.vmem %s93, 7
    %v1317 = vld [vmem:[%s1316] ss:$8 sm:$0xf]
    %v1318 = vld [vmem:[%s1316] ss:$8 sm:$0xf0]
    %v1319 = vor.u32 %v1317, %v1318
    %s1320 = scalar_lea.vmem %s93, 71
    %v1321 = vld [vmem:[%s1320] ss:$8 sm:$0xf]
    %v1322 = vld [vmem:[%s1320] ss:$8 sm:$0xf0]
    %v1323 = vor.u32 %v1321, %v1322
    %v1326 = vunpack.c.l.s4 1983009808
    %v1327 = vunpack.c.0.s8 %v1326
    %v1328 = vlaneseq
    %v1329 = vshrl.u32 %v1328, 7
    %v1330 = vsub.s32 %v1327, %v1329
    %v1331 = vrot.slane %v361, %v1330
    %v1332 = vcombine.high %v1331, %v1331
    %v1335 = vpack.c.bf16 %v1331, %v1331
    %v1336 = vpack.c.bf16 %v1332, %v1332
    %v1465 = vunpack.c.l.b16 %v231
    %v1466 = vunpack.c.h.b16 %v231
    %v1467 = vunpack.c.l.b16 %v232
    %v1468 = vunpack.c.h.b16 %v232
    %v1469 = vunpack.c.l.b16 %v233
    %v1470 = vunpack.c.h.b16 %v233
    %v1471 = vunpack.c.l.b16 %v234
    %v1472 = vunpack.c.h.b16 %v234
    %v1473 = vunpack.c.l.b16 %v235
    %v1474 = vunpack.c.h.b16 %v235
    %v1475 = vunpack.c.l.b16 %v236
    %v1476 = vunpack.c.h.b16 %v236
    %v1477 = vunpack.c.l.b16 %v237
    %v1478 = vunpack.c.h.b16 %v237
    %v1479 = vunpack.c.l.b16 %v238
    %v1480 = vunpack.c.h.b16 %v238
    %v1481 = vunpack.c.l.b16 %v239
    %v1482 = vunpack.c.h.b16 %v239
    %v1483 = vunpack.c.l.b16 %v240
    %v1484 = vunpack.c.h.b16 %v240
    %v1485 = vunpack.c.l.b16 %v241
    %v1486 = vunpack.c.h.b16 %v241
    %v1487 = vunpack.c.l.b16 %v242
    %v1488 = vunpack.c.h.b16 %v242
    %v1489 = vunpack.c.l.b16 %v243
    %v1490 = vunpack.c.h.b16 %v243
    %v1491 = vunpack.c.l.b16 %v244
    %v1492 = vunpack.c.h.b16 %v244
    %v1493 = vunpack.c.l.b16 %v245
    %v1494 = vunpack.c.h.b16 %v245
    %v1495 = vunpack.c.l.b16 %v246
    %v1496 = vunpack.c.h.b16 %v246
    %v1497 = vunpack.c.l.b16 %v247
    %v1498 = vunpack.c.h.b16 %v247
    %v1499 = vunpack.c.l.b16 %v248
    %v1500 = vunpack.c.h.b16 %v248
    %v1501 = vunpack.c.l.b16 %v249
    %v1502 = vunpack.c.h.b16 %v249
    %v1503 = vunpack.c.l.b16 %v250
    %v1504 = vunpack.c.h.b16 %v250
    %v1505 = vunpack.c.l.b16 %v251
    %v1506 = vunpack.c.h.b16 %v251
    %v1507 = vunpack.c.l.b16 %v252
    %v1508 = vunpack.c.h.b16 %v252
    %v1509 = vunpack.c.l.b16 %v253
    %v1510 = vunpack.c.h.b16 %v253
    %v1511 = vunpack.c.l.b16 %v254
    %v1512 = vunpack.c.h.b16 %v254
    %v1513 = vunpack.c.l.b16 %v255
    %v1514 = vunpack.c.h.b16 %v255
    %v1515 = vunpack.c.l.b16 %v256
    %v1516 = vunpack.c.h.b16 %v256
    %v1517 = vunpack.c.l.b16 %v257
    %v1518 = vunpack.c.h.b16 %v257
    %v1519 = vunpack.c.l.b16 %v258
    %v1520 = vunpack.c.h.b16 %v258
    %v1521 = vunpack.c.l.b16 %v259
    %v1522 = vunpack.c.h.b16 %v259
    %v1523 = vunpack.c.l.b16 %v260
    %v1524 = vunpack.c.h.b16 %v260
    %v1525 = vunpack.c.l.b16 %v261
    %v1526 = vunpack.c.h.b16 %v261
    %v1527 = vunpack.c.l.b16 %v262
    %v1528 = vunpack.c.h.b16 %v262
    %v1529 = vunpack.c.l.b16 %v263
    %v1530 = vunpack.c.h.b16 %v263
    %v1531 = vunpack.c.l.b16 %v264
    %v1532 = vunpack.c.h.b16 %v264
    %v1533 = vunpack.c.l.b16 %v265
    %v1534 = vunpack.c.h.b16 %v265
    %v1535 = vunpack.c.l.b16 %v266
    %v1536 = vunpack.c.h.b16 %v266
    %v1537 = vunpack.c.l.b16 %v267
    %v1538 = vunpack.c.h.b16 %v267
    %v1539 = vunpack.c.l.b16 %v268
    %v1540 = vunpack.c.h.b16 %v268
    %v1541 = vunpack.c.l.b16 %v269
    %v1542 = vunpack.c.h.b16 %v269
    %v1543 = vunpack.c.l.b16 %v270
    %v1544 = vunpack.c.h.b16 %v270
    %v1545 = vunpack.c.l.b16 %v271
    %v1546 = vunpack.c.h.b16 %v271
    %v1547 = vunpack.c.l.b16 %v272
    %v1548 = vunpack.c.h.b16 %v272
    %v1549 = vunpack.c.l.b16 %v273
    %v1550 = vunpack.c.h.b16 %v273
    %v1551 = vunpack.c.l.b16 %v274
    %v1552 = vunpack.c.h.b16 %v274
    %v1553 = vunpack.c.l.b16 %v275
    %v1554 = vunpack.c.h.b16 %v275
    %v1555 = vunpack.c.l.b16 %v276
    %v1556 = vunpack.c.h.b16 %v276
    %v1557 = vunpack.c.l.b16 %v277
    %v1558 = vunpack.c.h.b16 %v277
    %v1559 = vunpack.c.l.b16 %v278
    %v1560 = vunpack.c.h.b16 %v278
    %v1561 = vunpack.c.l.b16 %v279
    %v1562 = vunpack.c.h.b16 %v279
    %v1563 = vunpack.c.l.b16 %v280
    %v1564 = vunpack.c.h.b16 %v280
    %v1565 = vunpack.c.l.b16 %v281
    %v1566 = vunpack.c.h.b16 %v281
    %v1567 = vunpack.c.l.b16 %v282
    %v1568 = vunpack.c.h.b16 %v282
    %v1569 = vunpack.c.l.b16 %v283
    %v1570 = vunpack.c.h.b16 %v283
    %v1571 = vunpack.c.l.b16 %v284
    %v1572 = vunpack.c.h.b16 %v284
    %v1573 = vunpack.c.l.b16 %v285
    %v1574 = vunpack.c.h.b16 %v285
    %v1575 = vunpack.c.l.b16 %v286
    %v1576 = vunpack.c.h.b16 %v286
    %v1577 = vunpack.c.l.b16 %v287
    %v1578 = vunpack.c.h.b16 %v287
    %v1579 = vunpack.c.l.b16 %v288
    %v1580 = vunpack.c.h.b16 %v288
    %v1581 = vunpack.c.l.b16 %v289
    %v1582 = vunpack.c.h.b16 %v289
    %v1583 = vunpack.c.l.b16 %v290
    %v1584 = vunpack.c.h.b16 %v290
    %v1585 = vunpack.c.l.b16 %v291
    %v1586 = vunpack.c.h.b16 %v291
    %v1587 = vunpack.c.l.b16 %v292
    %v1588 = vunpack.c.h.b16 %v292
    %v1589 = vunpack.c.l.b16 %v293
    %v1590 = vunpack.c.h.b16 %v293
    %v1591 = vunpack.c.l.b16 %v294
    %v1592 = vunpack.c.h.b16 %v294
    %v1593 = vunpack.c.l.b16 %v295
    %v1594 = vunpack.c.h.b16 %v295
    %v1595 = vunpack.c.l.b16 %v296
    %v1596 = vunpack.c.h.b16 %v296
    %v1597 = vunpack.c.l.b16 %v297
    %v1598 = vunpack.c.h.b16 %v297
    %v1599 = vunpack.c.l.b16 %v298
    %v1600 = vunpack.c.h.b16 %v298
    %v1601 = vunpack.c.l.b16 %v299
    %v1602 = vunpack.c.h.b16 %v299
    %v1603 = vunpack.c.l.b16 %v300
    %v1604 = vunpack.c.h.b16 %v300
    %v1605 = vunpack.c.l.b16 %v301
    %v1606 = vunpack.c.h.b16 %v301
    %v1607 = vunpack.c.l.b16 %v302
    %v1608 = vunpack.c.h.b16 %v302
    %v1609 = vunpack.c.l.b16 %v303
    %v1610 = vunpack.c.h.b16 %v303
    %v1611 = vunpack.c.l.b16 %v304
    %v1612 = vunpack.c.h.b16 %v304
    %v1613 = vunpack.c.l.b16 %v305
    %v1614 = vunpack.c.h.b16 %v305
    %v1615 = vunpack.c.l.b16 %v306
    %v1616 = vunpack.c.h.b16 %v306
    %v1617 = vunpack.c.l.b16 %v307
    %v1618 = vunpack.c.h.b16 %v307
    %v1619 = vunpack.c.l.b16 %v308
    %v1620 = vunpack.c.h.b16 %v308
    %v1621 = vunpack.c.l.b16 %v309
    %v1622 = vunpack.c.h.b16 %v309
    %v1623 = vunpack.c.l.b16 %v310
    %v1624 = vunpack.c.h.b16 %v310
    %v1625 = vunpack.c.l.b16 %v311
    %v1626 = vunpack.c.h.b16 %v311
    %v1627 = vunpack.c.l.b16 %v312
    %v1628 = vunpack.c.h.b16 %v312
    %v1629 = vunpack.c.l.b16 %v313
    %v1630 = vunpack.c.h.b16 %v313
    %v1631 = vunpack.c.l.b16 %v314
    %v1632 = vunpack.c.h.b16 %v314
    %v1633 = vunpack.c.l.b16 %v315
    %v1634 = vunpack.c.h.b16 %v315
    %v1635 = vunpack.c.l.b16 %v316
    %v1636 = vunpack.c.h.b16 %v316
    %v1637 = vunpack.c.l.b16 %v317
    %v1638 = vunpack.c.h.b16 %v317
    %v1639 = vunpack.c.l.b16 %v318
    %v1640 = vunpack.c.h.b16 %v318
    %v1641 = vunpack.c.l.b16 %v319
    %v1642 = vunpack.c.h.b16 %v319
    %v1643 = vunpack.c.l.b16 %v320
    %v1644 = vunpack.c.h.b16 %v320
    %v1645 = vunpack.c.l.b16 %v321
    %v1646 = vunpack.c.h.b16 %v321
    %v1647 = vunpack.c.l.b16 %v322
    %v1648 = vunpack.c.h.b16 %v322
    %v1649 = vunpack.c.l.b16 %v323
    %v1650 = vunpack.c.h.b16 %v323
    %v1651 = vunpack.c.l.b16 %v324
    %v1652 = vunpack.c.h.b16 %v324
    %v1653 = vunpack.c.l.b16 %v325
    %v1654 = vunpack.c.h.b16 %v325
    %v1655 = vunpack.c.l.b16 %v326
    %v1656 = vunpack.c.h.b16 %v326
    %v1657 = vunpack.c.l.b16 %v327
    %v1658 = vunpack.c.h.b16 %v327
    %v1659 = vunpack.c.l.b16 %v328
    %v1660 = vunpack.c.h.b16 %v328
    %v1661 = vunpack.c.l.b16 %v329
    %v1662 = vunpack.c.h.b16 %v329
    %v1663 = vunpack.c.l.b16 %v330
    %v1664 = vunpack.c.h.b16 %v330
    %v1665 = vunpack.c.l.b16 %v331
    %v1666 = vunpack.c.h.b16 %v331
    %v1667 = vunpack.c.l.b16 %v332
    %v1668 = vunpack.c.h.b16 %v332
    %v1669 = vunpack.c.l.b16 %v333
    %v1670 = vunpack.c.h.b16 %v333
    %v1671 = vunpack.c.l.b16 %v334
    %v1672 = vunpack.c.h.b16 %v334
    %v1673 = vunpack.c.l.b16 %v335
    %v1674 = vunpack.c.h.b16 %v335
    %v1675 = vunpack.c.l.b16 %v336
    %v1676 = vunpack.c.h.b16 %v336
    %v1677 = vunpack.c.l.b16 %v337
    %v1678 = vunpack.c.h.b16 %v337
    %v1679 = vunpack.c.l.b16 %v338
    %v1680 = vunpack.c.h.b16 %v338
    %v1681 = vunpack.c.l.b16 %v339
    %v1682 = vunpack.c.h.b16 %v339
    %v1683 = vunpack.c.l.b16 %v340
    %v1684 = vunpack.c.h.b16 %v340
    %v1685 = vunpack.c.l.b16 %v341
    %v1686 = vunpack.c.h.b16 %v341
    %v1687 = vunpack.c.l.b16 %v342
    %v1688 = vunpack.c.h.b16 %v342
    %v1689 = vunpack.c.l.b16 %v343
    %v1690 = vunpack.c.h.b16 %v343
    %v1691 = vunpack.c.l.b16 %v344
    %v1692 = vunpack.c.h.b16 %v344
    %v1693 = vunpack.c.l.b16 %v345
    %v1694 = vunpack.c.h.b16 %v345
    %v1695 = vunpack.c.l.b16 %v346
    %v1696 = vunpack.c.h.b16 %v346
    %v1697 = vunpack.c.l.b16 %v347
    %v1698 = vunpack.c.h.b16 %v347
    %v1699 = vunpack.c.l.b16 %v348
    %v1700 = vunpack.c.h.b16 %v348
    %v1701 = vunpack.c.l.b16 %v349
    %v1702 = vunpack.c.h.b16 %v349
    %v1703 = vunpack.c.l.b16 %v350
    %v1704 = vunpack.c.h.b16 %v350
    %v1705 = vunpack.c.l.b16 %v351
    %v1706 = vunpack.c.h.b16 %v351
    %v1707 = vunpack.c.l.b16 %v352
    %v1708 = vunpack.c.h.b16 %v352
    %v1709 = vunpack.c.l.b16 %v353
    %v1710 = vunpack.c.h.b16 %v353
    %v1711 = vunpack.c.l.b16 %v354
    %v1712 = vunpack.c.h.b16 %v354
    %v1713 = vunpack.c.l.b16 %v355
    %v1714 = vunpack.c.h.b16 %v355
    %v1715 = vunpack.c.l.b16 %v356
    %v1716 = vunpack.c.h.b16 %v356
    %v1717 = vunpack.c.l.b16 %v357
    %v1718 = vunpack.c.h.b16 %v357
    %v1719 = vunpack.c.l.b16 %v358
    %v1720 = vunpack.c.h.b16 %v358
    %v1721 = vpack.c.b16 %v1473, %v1465
    %v1722 = vpack.c.b16 %v1474, %v1466
    %v1723 = vpack.c.b16 %v1475, %v1467
    %v1724 = vpack.c.b16 %v1476, %v1468
    %v1725 = vpack.c.b16 %v1477, %v1469
    %v1726 = vpack.c.b16 %v1478, %v1470
    %v1727 = vpack.c.b16 %v1479, %v1471
    %v1728 = vpack.c.b16 %v1480, %v1472
    %v1729 = vpack.c.b16 %v1489, %v1481
    %v1730 = vpack.c.b16 %v1490, %v1482
    %v1731 = vpack.c.b16 %v1491, %v1483
    %v1732 = vpack.c.b16 %v1492, %v1484
    %v1733 = vpack.c.b16 %v1493, %v1485
    %v1734 = vpack.c.b16 %v1494, %v1486
    %v1735 = vpack.c.b16 %v1495, %v1487
    %v1736 = vpack.c.b16 %v1496, %v1488
    %v1737 = vpack.c.b16 %v1505, %v1497
    %v1738 = vpack.c.b16 %v1506, %v1498
    %v1739 = vpack.c.b16 %v1507, %v1499
    %v1740 = vpack.c.b16 %v1508, %v1500
    %v1741 = vpack.c.b16 %v1509, %v1501
    %v1742 = vpack.c.b16 %v1510, %v1502
    %v1743 = vpack.c.b16 %v1511, %v1503
    %v1744 = vpack.c.b16 %v1512, %v1504
    %v1745 = vpack.c.b16 %v1521, %v1513
    %v1746 = vpack.c.b16 %v1522, %v1514
    %v1747 = vpack.c.b16 %v1523, %v1515
    %v1748 = vpack.c.b16 %v1524, %v1516
    %v1749 = vpack.c.b16 %v1525, %v1517
    %v1750 = vpack.c.b16 %v1526, %v1518
    %v1751 = vpack.c.b16 %v1527, %v1519
    %v1752 = vpack.c.b16 %v1528, %v1520
    %v1753 = vpack.c.b16 %v1537, %v1529
    %v1754 = vpack.c.b16 %v1538, %v1530
    %v1755 = vpack.c.b16 %v1539, %v1531
    %v1756 = vpack.c.b16 %v1540, %v1532
    %v1757 = vpack.c.b16 %v1541, %v1533
    %v1758 = vpack.c.b16 %v1542, %v1534
    %v1759 = vpack.c.b16 %v1543, %v1535
    %v1760 = vpack.c.b16 %v1544, %v1536
    %v1761 = vpack.c.b16 %v1553, %v1545
    %v1762 = vpack.c.b16 %v1554, %v1546
    %v1763 = vpack.c.b16 %v1555, %v1547
    %v1764 = vpack.c.b16 %v1556, %v1548
    %v1765 = vpack.c.b16 %v1557, %v1549
    %v1766 = vpack.c.b16 %v1558, %v1550
    %v1767 = vpack.c.b16 %v1559, %v1551
    %v1768 = vpack.c.b16 %v1560, %v1552
    %v1769 = vpack.c.b16 %v1569, %v1561
    %v1770 = vpack.c.b16 %v1570, %v1562
    %v1771 = vpack.c.b16 %v1571, %v1563
    %v1772 = vpack.c.b16 %v1572, %v1564
    %v1773 = vpack.c.b16 %v1573, %v1565
    %v1774 = vpack.c.b16 %v1574, %v1566
    %v1775 = vpack.c.b16 %v1575, %v1567
    %v1776 = vpack.c.b16 %v1576, %v1568
    %v1777 = vpack.c.b16 %v1585, %v1577
    %v1778 = vpack.c.b16 %v1586, %v1578
    %v1779 = vpack.c.b16 %v1587, %v1579
    %v1780 = vpack.c.b16 %v1588, %v1580
    %v1781 = vpack.c.b16 %v1589, %v1581
    %v1782 = vpack.c.b16 %v1590, %v1582
    %v1783 = vpack.c.b16 %v1591, %v1583
    %v1784 = vpack.c.b16 %v1592, %v1584
    %v1785 = vpack.c.b16 %v1601, %v1593
    %v1786 = vpack.c.b16 %v1602, %v1594
    %v1787 = vpack.c.b16 %v1603, %v1595
    %v1788 = vpack.c.b16 %v1604, %v1596
    %v1789 = vpack.c.b16 %v1605, %v1597
    %v1790 = vpack.c.b16 %v1606, %v1598
    %v1791 = vpack.c.b16 %v1607, %v1599
    %v1792 = vpack.c.b16 %v1608, %v1600
    %v1793 = vpack.c.b16 %v1617, %v1609
    %v1794 = vpack.c.b16 %v1618, %v1610
    %v1795 = vpack.c.b16 %v1619, %v1611
    %v1796 = vpack.c.b16 %v1620, %v1612
    %v1797 = vpack.c.b16 %v1621, %v1613
    %v1798 = vpack.c.b16 %v1622, %v1614
    %v1799 = vpack.c.b16 %v1623, %v1615
    %v1800 = vpack.c.b16 %v1624, %v1616
    %v1801 = vpack.c.b16 %v1633, %v1625
    %v1802 = vpack.c.b16 %v1634, %v1626
    %v1803 = vpack.c.b16 %v1635, %v1627
    %v1804 = vpack.c.b16 %v1636, %v1628
    %v1805 = vpack.c.b16 %v1637, %v1629
    %v1806 = vpack.c.b16 %v1638, %v1630
    %v1807 = vpack.c.b16 %v1639, %v1631
    %v1808 = vpack.c.b16 %v1640, %v1632
    %v1809 = vpack.c.b16 %v1649, %v1641
    %v1810 = vpack.c.b16 %v1650, %v1642
    %v1811 = vpack.c.b16 %v1651, %v1643
    %v1812 = vpack.c.b16 %v1652, %v1644
    %v1813 = vpack.c.b16 %v1653, %v1645
    %v1814 = vpack.c.b16 %v1654, %v1646
    %v1815 = vpack.c.b16 %v1655, %v1647
    %v1816 = vpack.c.b16 %v1656, %v1648
    %v1817 = vpack.c.b16 %v1665, %v1657
    %v1818 = vpack.c.b16 %v1666, %v1658
    %v1819 = vpack.c.b16 %v1667, %v1659
    %v1820 = vpack.c.b16 %v1668, %v1660
    %v1821 = vpack.c.b16 %v1669, %v1661
    %v1822 = vpack.c.b16 %v1670, %v1662
    %v1823 = vpack.c.b16 %v1671, %v1663
    %v1824 = vpack.c.b16 %v1672, %v1664
    %v1825 = vpack.c.b16 %v1681, %v1673
    %v1826 = vpack.c.b16 %v1682, %v1674
    %v1827 = vpack.c.b16 %v1683, %v1675
    %v1828 = vpack.c.b16 %v1684, %v1676
    %v1829 = vpack.c.b16 %v1685, %v1677
    %v1830 = vpack.c.b16 %v1686, %v1678
    %v1831 = vpack.c.b16 %v1687, %v1679
    %v1832 = vpack.c.b16 %v1688, %v1680
    %v1833 = vpack.c.b16 %v1697, %v1689
    %v1834 = vpack.c.b16 %v1698, %v1690
    %v1835 = vpack.c.b16 %v1699, %v1691
    %v1836 = vpack.c.b16 %v1700, %v1692
    %v1837 = vpack.c.b16 %v1701, %v1693
    %v1838 = vpack.c.b16 %v1702, %v1694
    %v1839 = vpack.c.b16 %v1703, %v1695
    %v1840 = vpack.c.b16 %v1704, %v1696
    %v1841 = vpack.c.b16 %v1713, %v1705
    %v1842 = vpack.c.b16 %v1714, %v1706
    %v1843 = vpack.c.b16 %v1715, %v1707
    %v1844 = vpack.c.b16 %v1716, %v1708
    %v1845 = vpack.c.b16 %v1717, %v1709
    %v1846 = vpack.c.b16 %v1718, %v1710
    %v1847 = vpack.c.b16 %v1719, %v1711
    %v1848 = vpack.c.b16 %v1720, %v1712
    %1977 = vmatprep.subr.bf16.mxu0 %v1722
    %1978 = vmatpush1.bf16.msra.mxu0 %v1721
    %1979 = vmatprep.subr.bf16.mxu0 %v1730
    %1980 = vmatpush1.bf16.msra.mxu0 %v1729
    %1981 = vmatprep.subr.bf16.mxu0 %v1738
    %1982 = vmatpush1.bf16.msra.mxu0 %v1737
    %1983 = vmatprep.subr.bf16.mxu0 %v1746
    %1984 = vmatpush1.bf16.msra.mxu0 %v1745
    %1985 = vmatprep.subr.bf16.mxu0 %v1754
    %1986 = vmatpush1.bf16.msra.mxu0 %v1753
    %1987 = vmatprep.subr.bf16.mxu0 %v1762
    %1988 = vmatpush1.bf16.msra.mxu0 %v1761
    %1989 = vmatprep.subr.bf16.mxu0 %v1770
    %1990 = vmatpush1.bf16.msra.mxu0 %v1769
    %1991 = vmatprep.subr.bf16.mxu0 %v1778
    %1992 = vmatpush1.bf16.msra.mxu0 %v1777
    %1993 = vmatprep.subr.bf16.mxu0 %v1786
    %1994 = vmatpush1.bf16.msra.mxu0 %v1785
    %1995 = vmatprep.subr.bf16.mxu0 %v1794
    %1996 = vmatpush1.bf16.msra.mxu0 %v1793
    %1997 = vmatprep.subr.bf16.mxu0 %v1802
    %1998 = vmatpush1.bf16.msra.mxu0 %v1801
    %1999 = vmatprep.subr.bf16.mxu0 %v1810
    %2000 = vmatpush1.bf16.msra.mxu0 %v1809
    %2001 = vmatprep.subr.bf16.mxu0 %v1818
    %2002 = vmatpush1.bf16.msra.mxu0 %v1817
    %2003 = vmatprep.subr.bf16.mxu0 %v1826
    %2004 = vmatpush1.bf16.msra.mxu0 %v1825
    %2005 = vmatprep.subr.bf16.mxu0 %v1834
    %2006 = vmatpush1.bf16.msra.mxu0 %v1833
    %2007 = vmatprep.subr.bf16.mxu0 %v1842
    %2008 = vmatpush1.bf16.msra.mxu0 %v1841
    %2009 = vmatprep.mubr.bf16.mxu0 %v1336
    %2010 = vmatmul.mubr.bf16.gmra.mrb[0].mxu0 %v1335
    %v2011 = vpop.f32.mrb[0].mxu0
    %v2012 = vadd.f32 0.0, %v2011
    %v2013 = vpop.f32.mrb[0].mxu0
    %v2014 = vadd.f32 0.0, %v2013
    %v2015 = vpop.f32.mrb[0].mxu0
    %v2016 = vpop.f32.mrb[0].mxu0
    %2017 = vdwg.mxu0
    %2018 = vmatprep.subr.bf16.mxu0 %v1724
    %2019 = vmatpush1.bf16.msra.mxu0 %v1723
    %2020 = vmatprep.subr.bf16.mxu0 %v1732
    %2021 = vmatpush1.bf16.msra.mxu0 %v1731
    %2022 = vmatprep.subr.bf16.mxu0 %v1740
    %2023 = vmatpush1.bf16.msra.mxu0 %v1739
    %2024 = vmatprep.subr.bf16.mxu0 %v1748
    %2025 = vmatpush1.bf16.msra.mxu0 %v1747
    %2026 = vmatprep.subr.bf16.mxu0 %v1756
    %2027 = vmatpush1.bf16.msra.mxu0 %v1755
    %2028 = vmatprep.subr.bf16.mxu0 %v1764
    %2029 = vmatpush1.bf16.msra.mxu0 %v1763
    %2030 = vmatprep.subr.bf16.mxu0 %v1772
    %2031 = vmatpush1.bf16.msra.mxu0 %v1771
    %2032 = vmatprep.subr.bf16.mxu0 %v1780
    %2033 = vmatpush1.bf16.msra.mxu0 %v1779
    %2034 = vmatprep.subr.bf16.mxu0 %v1788
    %2035 = vmatpush1.bf16.msra.mxu0 %v1787
    %2036 = vmatprep.subr.bf16.mxu0 %v1796
    %2037 = vmatpush1.bf16.msra.mxu0 %v1795
    %2038 = vmatprep.subr.bf16.mxu0 %v1804
    %2039 = vmatpush1.bf16.msra.mxu0 %v1803
    %2040 = vmatprep.subr.bf16.mxu0 %v1812
    %2041 = vmatpush1.bf16.msra.mxu0 %v1811
    %2042 = vmatprep.subr.bf16.mxu0 %v1820
    %2043 = vmatpush1.bf16.msra.mxu0 %v1819
    %2044 = vmatprep.subr.bf16.mxu0 %v1828
    %2045 = vmatpush1.bf16.msra.mxu0 %v1827
    %2046 = vmatprep.subr.bf16.mxu0 %v1836
    %2047 = vmatpush1.bf16.msra.mxu0 %v1835
    %2048 = vmatprep.subr.bf16.mxu0 %v1844
    %2049 = vmatpush1.bf16.msra.mxu0 %v1843
    %2050 = vmatprep.mubr.bf16.mxu0 %v1336
    %2051 = vmatmul.mubr.bf16.gmra.mrb[0].mxu0 %v1335
    %v2052 = vpop.f32.mrb[0].mxu0
    %v2053 = vadd.f32 0.0, %v2052
    %v2054 = vpop.f32.mrb[0].mxu0
    %v2055 = vadd.f32 0.0, %v2054
    %v2056 = vpop.f32.mrb[0].mxu0
    %v2057 = vpop.f32.mrb[0].mxu0
    %2058 = vdwg.mxu0
    %2059 = vmatprep.subr.bf16.mxu0 %v1726
    %2060 = vmatpush1.bf16.msra.mxu0 %v1725
    %2061 = vmatprep.subr.bf16.mxu0 %v1734
    %2062 = vmatpush1.bf16.msra.mxu0 %v1733
    %2063 = vmatprep.subr.bf16.mxu0 %v1742
    %2064 = vmatpush1.bf16.msra.mxu0 %v1741
    %2065 = vmatprep.subr.bf16.mxu0 %v1750
    %2066 = vmatpush1.bf16.msra.mxu0 %v1749
    %2067 = vmatprep.subr.bf16.mxu0 %v1758
    %2068 = vmatpush1.bf16.msra.mxu0 %v1757
    %2069 = vmatprep.subr.bf16.mxu0 %v1766
    %2070 = vmatpush1.bf16.msra.mxu0 %v1765
    %2071 = vmatprep.subr.bf16.mxu0 %v1774
    %2072 = vmatpush1.bf16.msra.mxu0 %v1773
    %2073 = vmatprep.subr.bf16.mxu0 %v1782
    %2074 = vmatpush1.bf16.msra.mxu0 %v1781
    %2075 = vmatprep.subr.bf16.mxu0 %v1790
    %2076 = vmatpush1.bf16.msra.mxu0 %v1789
    %2077 = vmatprep.subr.bf16.mxu0 %v1798
    %2078 = vmatpush1.bf16.msra.mxu0 %v1797
    %2079 = vmatprep.subr.bf16.mxu0 %v1806
    %2080 = vmatpush1.bf16.msra.mxu0 %v1805
    %2081 = vmatprep.subr.bf16.mxu0 %v1814
    %2082 = vmatpush1.bf16.msra.mxu0 %v1813
    %2083 = vmatprep.subr.bf16.mxu0 %v1822
    %2084 = vmatpush1.bf16.msra.mxu0 %v1821
    %2085 = vmatprep.subr.bf16.mxu0 %v1830
    %2086 = vmatpush1.bf16.msra.mxu0 %v1829
    %2087 = vmatprep.subr.bf16.mxu0 %v1838
    %2088 = vmatpush1.bf16.msra.mxu0 %v1837
    %2089 = vmatprep.subr.bf16.mxu0 %v1846
    %2090 = vmatpush1.bf16.msra.mxu0 %v1845
    %2091 = vmatprep.mubr.bf16.mxu0 %v1336
    %2092 = vmatmul.mubr.bf16.gmra.mrb[0].mxu0 %v1335
    %v2093 = vpop.f32.mrb[0].mxu0
    %v2094 = vadd.f32 0.0, %v2093
    %v2095 = vpop.f32.mrb[0].mxu0
    %v2096 = vadd.f32 0.0, %v2095
    %v2097 = vpop.f32.mrb[0].mxu0
    %v2098 = vpop.f32.mrb[0].mxu0
    %2099 = vdwg.mxu0
    %2100 = vmatprep.subr.bf16.mxu0 %v1728
    %2101 = vmatpush1.bf16.msra.mxu0 %v1727
    %2102 = vmatprep.subr.bf16.mxu0 %v1736
    %2103 = vmatpush1.bf16.msra.mxu0 %v1735
    %2104 = vmatprep.subr.bf16.mxu0 %v1744
    %2105 = vmatpush1.bf16.msra.mxu0 %v1743
    %2106 = vmatprep.subr.bf16.mxu0 %v1752
    %2107 = vmatpush1.bf16.msra.mxu0 %v1751
    %2108 = vmatprep.subr.bf16.mxu0 %v1760
    %2109 = vmatpush1.bf16.msra.mxu0 %v1759
    %2110 = vmatprep.subr.bf16.mxu0 %v1768
    %2111 = vmatpush1.bf16.msra.mxu0 %v1767
    %2112 = vmatprep.subr.bf16.mxu0 %v1776
    %2113 = vmatpush1.bf16.msra.mxu0 %v1775
    %2114 = vmatprep.subr.bf16.mxu0 %v1784
    %2115 = vmatpush1.bf16.msra.mxu0 %v1783
    %2116 = vmatprep.subr.bf16.mxu0 %v1792
    %2117 = vmatpush1.bf16.msra.mxu0 %v1791
    %2118 = vmatprep.subr.bf16.mxu0 %v1800
    %2119 = vmatpush1.bf16.msra.mxu0 %v1799
    %2120 = vmatprep.subr.bf16.mxu0 %v1808
    %2121 = vmatpush1.bf16.msra.mxu0 %v1807
    %2122 = vmatprep.subr.bf16.mxu0 %v1816
    %2123 = vmatpush1.bf16.msra.mxu0 %v1815
    %2124 = vmatprep.subr.bf16.mxu0 %v1824
    %2125 = vmatpush1.bf16.msra.mxu0 %v1823
    %2126 = vmatprep.subr.bf16.mxu0 %v1832
    %2127 = vmatpush1.bf16.msra.mxu0 %v1831
    %2128 = vmatprep.subr.bf16.mxu0 %v1840
    %2129 = vmatpush1.bf16.msra.mxu0 %v1839
    %2130 = vmatprep.subr.bf16.mxu0 %v1848
    %2131 = vmatpush1.bf16.msra.mxu0 %v1847
    %2132 = vmatprep.mubr.bf16.mxu0 %v1336
    %2133 = vmatmul.mubr.bf16.gmra.mrb[0].mxu0 %v1335
    %v2134 = vpop.f32.mrb[0].mxu0
    %v2135 = vadd.f32 0.0, %v2134
    %v2136 = vpop.f32.mrb[0].mxu0
    %v2137 = vadd.f32 0.0, %v2136
    %v2138 = vpop.f32.mrb[0].mxu0
    %v2139 = vpop.f32.mrb[0].mxu0
    %2140 = vdwg.mxu0
    %v2149 = vcombine.low %v2012, %v2014
    %v2150 = vcombine.low %v2053, %v2055
    %v2151 = vcombine.low %v2094, %v2096
    %v2152 = vcombine.low %v2135, %v2137
    %v2154 = vunpack.c.l.s4 1966171168
    %v2155 = vunpack.c.0.s8 %v2154
    %v2156 = vlaneseq
    %v2157 = vshrl.u32 %v2156, 7
    %v2158 = vsub.s32 %v2155, %v2157
    %v2159 = vrot.slane %v2149, %v2158
    %v2161 = vunpack.c.l.s4 1966171168
    %v2162 = vunpack.c.0.s8 %v2161
    %v2163 = vlaneseq
    %v2164 = vshrl.u32 %v2163, 7
    %v2165 = vsub.s32 %v2162, %v2164
    %v2166 = vrot.slane %v2150, %v2165
    %v2168 = vunpack.c.l.s4 1966171168
    %v2169 = vunpack.c.0.s8 %v2168
    %v2170 = vlaneseq
    %v2171 = vshrl.u32 %v2170, 7
    %v2172 = vsub.s32 %v2169, %v2171
    %v2173 = vrot.slane %v2151, %v2172
    %v2175 = vunpack.c.l.s4 1966171168
    %v2176 = vunpack.c.0.s8 %v2175
    %v2177 = vlaneseq
    %v2178 = vshrl.u32 %v2177, 7
    %v2179 = vsub.s32 %v2176, %v2178
    %v2180 = vrot.slane %v2152, %v2179
    %v2181 = vcombine.low %v2159, %v2166
    %v2182 = vcombine.high %v2159, %v2166
    %v2183 = vcombine.low %v2173, %v2180
    %v2184 = vcombine.high %v2173, %v2180
    %v2186 = vunpack.c.l.s4 1966171168
    %v2187 = vunpack.c.0.s8 %v2186
    %v2188 = vlaneseq
    %v2189 = vshrl.u32 %v2188, 7
    %v2190 = vsub.s32 %v2187, %v2189
    %v2191 = vrot.slane %v2181, %v2190
    %v2193 = vunpack.c.l.s4 1966171168
    %v2194 = vunpack.c.0.s8 %v2193
    %v2195 = vlaneseq
    %v2196 = vshrl.u32 %v2195, 7
    %v2197 = vsub.s32 %v2194, %v2196
    %v2198 = vrot.slane %v2182, %v2197
    %v2200 = vunpack.c.l.s4 1966171168
    %v2201 = vunpack.c.0.s8 %v2200
    %v2202 = vlaneseq
    %v2203 = vshrl.u32 %v2202, 7
    %v2204 = vsub.s32 %v2201, %v2203
    %v2205 = vrot.slane %v2183, %v2204
    %v2207 = vunpack.c.l.s4 1966171168
    %v2208 = vunpack.c.0.s8 %v2207
    %v2209 = vlaneseq
    %v2210 = vshrl.u32 %v2209, 7
    %v2211 = vsub.s32 %v2208, %v2210
    %v2212 = vrot.slane %v2184, %v2211
    %v2213 = vcombine.low %v2191, %v2205
    %v2214 = vcombine.low %v2198, %v2212
    %v2217 = vadd.f32 %v1319, %v2213
    %v2218 = vadd.f32 %v1323, %v2214
    %v2219 = vxor.u32 %v2217, 2147483648
    %v2220 = vxor.u32 %v2218, 2147483648
    %v2221 = vmul.f32 %v2219, 1.442695
    %v2222 = vpow.pop %v2221
    %v2223 = vmul.f32 %v2220, 1.442695
    %v2224 = vpow.pop %v2223
    %v2225 = vadd.f32 %v2222, 1.0
    %v2226 = vadd.f32 %v2224, 1.0
    %v2227 = vrcp.pop %v2225
    %v2228 = vmul.f32 1.0, %v2227
    %v2229 = vrcp.pop %v2226
    %v2230 = vmul.f32 1.0, %v2229
    %v2233 = vrot.slane %v2217, 6
    %v2234 = vrot.slane %v2218, 6
    %v2237 = vtanh.pop %v2233
    %v2238 = vtanh.pop %v2234
    %v2241 = vrot.slane %v2228, 2
    %v2242 = vrot.slane %v2230, 2
    %v2247 = vunpack.c.l.s4 1966171168
    %v2248 = vunpack.c.0.s8 %v2247
    %v2249 = vlaneseq
    %v2250 = vshrl.u32 %v2249, 7
    %v2251 = vsub.s32 %v2248, %v2250
    %v2252 = vrot.slane %v362, %v2251
    %v2253 = vcombine.high %v2252, %v2252
    %v2256 = vmul.f32 %v2241, %v2252
    %v2257 = vmul.f32 %v2242, %v2253
    %v2258 = vmul.f32 %v2228, %v2237
    %v2259 = vmul.f32 %v2230, %v2238
    %v2260 = vadd.f32 %v2256, %v2258
    %v2261 = vadd.f32 %v2257, %v2259
    %v2262 = vtanh.pop %v2260
    %v2263 = vtanh.pop %v2261
    %v2264 = vrot.slane %v2228, 4
    %v2265 = vrot.slane %v2230, 4
    %v2268 = vmul.f32 %v2264, %v2262
    %v2269 = vmul.f32 %v2265, %v2263
    %s2270 = scalar_lea.vmem %s0, 1
    %v2271 = vld [vmem:[%s2270] ss:$8 sm:$0xf]
    %v2272 = vld [vmem:[%s2270] ss:$8 sm:$0xf0]
    %v2273 = vor.u32 %v2271, %v2272
    %s2274 = scalar_lea.vmem %s0, 65
    %v2275 = vld [vmem:[%s2274] ss:$8 sm:$0xf]
    %v2276 = vld [vmem:[%s2274] ss:$8 sm:$0xf0]
    %v2277 = vor.u32 %v2275, %v2276
    %v2280 = vlaneseq
    %v2281 = vshrl.u32 %v2280, 7
    %v2282 = vsub.s32 0, %v2281
    %v2283 = vrot.slane %v1314, %v2282
    %v2284 = vlaneseq
    %v2285 = vshrl.u32 %v2284, 7
    %v2286 = vsub.s32 1, %v2285
    %v2287 = vrot.slane %v1314, %v2286
    %v2288 = vlaneseq
    %v2289 = vshrl.u32 %v2288, 7
    %v2290 = vsub.s32 0, %v2289
    %v2291 = vrot.slane %v1315, %v2290
    %v2292 = vlaneseq
    %v2293 = vshrl.u32 %v2292, 7
    %v2294 = vsub.s32 1, %v2293
    %v2295 = vrot.slane %v1315, %v2294
    %v2300 = vpack.c.bf16 %v2283, %v2283
    %v2301 = vpack.c.bf16 %v2287, %v2287
    %v2302 = vpack.c.bf16 %v2291, %v2291
    %v2303 = vpack.c.bf16 %v2295, %v2295
    %v2308 = vunpack.c.l.b16 %v2300
    %v2309 = vunpack.c.l.b16 %v2301
    %v2310 = vunpack.c.l.b16 %v2302
    %v2311 = vunpack.c.l.b16 %v2303
    %v2312 = vrot.slane %v2310, 7
    %vm2313 = vcmask 1041409
    %v2314 = vsel %vm2313, %v2312, %v2308
    %v2315 = vrot.slane %v2311, 7
    %v2316 = vsel %vm2313, %v2315, %v2309
    %v2317 = vpack.c.b16 %v2314, %v2314
    %v2318 = vpack.c.b16 %v2316, %v2316
    %2321 = vmatprep.subr.bf16.mxu0 %v768
    %2322 = vmatpush1.bf16.msra.mxu0 %v767
    %2323 = vmatprep.subr.bf16.mxu0 %v776
    %2324 = vmatpush1.bf16.msra.mxu0 %v775
    %2325 = vmatprep.subr.bf16.mxu0 %v784
    %2326 = vmatpush1.bf16.msra.mxu0 %v783
    %2327 = vmatprep.subr.bf16.mxu0 %v792
    %2328 = vmatpush1.bf16.msra.mxu0 %v791
    %2329 = vmatprep.subr.bf16.mxu0 %v800
    %2330 = vmatpush1.bf16.msra.mxu0 %v799
    %2331 = vmatprep.subr.bf16.mxu0 %v808
    %2332 = vmatpush1.bf16.msra.mxu0 %v807
    %2333 = vmatprep.subr.bf16.mxu0 %v816
    %2334 = vmatpush1.bf16.msra.mxu0 %v815
    %2335 = vmatprep.subr.bf16.mxu0 %v824
    %2336 = vmatpush1.bf16.msra.mxu0 %v823
    %2337 = vmatprep.subr.bf16.mxu0 %v832
    %2338 = vmatpush1.bf16.msra.mxu0 %v831
    %2339 = vmatprep.subr.bf16.mxu0 %v840
    %2340 = vmatpush1.bf16.msra.mxu0 %v839
    %2341 = vmatprep.subr.bf16.mxu0 %v848
    %2342 = vmatpush1.bf16.msra.mxu0 %v847
    %2343 = vmatprep.subr.bf16.mxu0 %v856
    %2344 = vmatpush1.bf16.msra.mxu0 %v855
    %2345 = vmatprep.subr.bf16.mxu0 %v864
    %2346 = vmatpush1.bf16.msra.mxu0 %v863
    %2347 = vmatprep.subr.bf16.mxu0 %v872
    %2348 = vmatpush1.bf16.msra.mxu0 %v871
    %2349 = vmatprep.subr.bf16.mxu0 %v880
    %2350 = vmatpush1.bf16.msra.mxu0 %v879
    %2351 = vmatprep.subr.bf16.mxu0 %v888
    %2352 = vmatpush1.bf16.msra.mxu0 %v887
    %2353 = vmatprep.mubr.bf16.mxu0 %v2318
    %2354 = vmatmul.mubr.bf16.gmra.mrb[0].mxu0 %v2317
    %v2355 = vpop.f32.mrb[0].mxu0
    %v2356 = vadd.f32 0.0, %v2355
    %v2357 = vpop.f32.mrb[0].mxu0
    %v2358 = vadd.f32 0.0, %v2357
    %v2359 = vpop.f32.mrb[0].mxu0
    %v2360 = vpop.f32.mrb[0].mxu0
    %2361 = vdwg.mxu0
    %2362 = vmatprep.subr.bf16.mxu0 %v770
    %2363 = vmatpush1.bf16.msra.mxu0 %v769
    %2364 = vmatprep.subr.bf16.mxu0 %v778
    %2365 = vmatpush1.bf16.msra.mxu0 %v777
    %2366 = vmatprep.subr.bf16.mxu0 %v786
    %2367 = vmatpush1.bf16.msra.mxu0 %v785
    %2368 = vmatprep.subr.bf16.mxu0 %v794
    %2369 = vmatpush1.bf16.msra.mxu0 %v793
    %2370 = vmatprep.subr.bf16.mxu0 %v802
    %2371 = vmatpush1.bf16.msra.mxu0 %v801
    %2372 = vmatprep.subr.bf16.mxu0 %v810
    %2373 = vmatpush1.bf16.msra.mxu0 %v809
    %2374 = vmatprep.subr.bf16.mxu0 %v818
    %2375 = vmatpush1.bf16.msra.mxu0 %v817
    %2376 = vmatprep.subr.bf16.mxu0 %v826
    %2377 = vmatpush1.bf16.msra.mxu0 %v825
    %2378 = vmatprep.subr.bf16.mxu0 %v834
    %2379 = vmatpush1.bf16.msra.mxu0 %v833
    %2380 = vmatprep.subr.bf16.mxu0 %v842
    %2381 = vmatpush1.bf16.msra.mxu0 %v841
    %2382 = vmatprep.subr.bf16.mxu0 %v850
    %2383 = vmatpush1.bf16.msra.mxu0 %v849
    %2384 = vmatprep.subr.bf16.mxu0 %v858
    %2385 = vmatpush1.bf16.msra.mxu0 %v857
    %2386 = vmatprep.subr.bf16.mxu0 %v866
    %2387 = vmatpush1.bf16.msra.mxu0 %v865
    %2388 = vmatprep.subr.bf16.mxu0 %v874
    %2389 = vmatpush1.bf16.msra.mxu0 %v873
    %2390 = vmatprep.subr.bf16.mxu0 %v882
    %2391 = vmatpush1.bf16.msra.mxu0 %v881
    %2392 = vmatprep.subr.bf16.mxu0 %v890
    %2393 = vmatpush1.bf16.msra.mxu0 %v889
    %2394 = vmatprep.mubr.bf16.mxu0 %v2318
    %2395 = vmatmul.mubr.bf16.gmra.mrb[0].mxu0 %v2317
    %v2396 = vpop.f32.mrb[0].mxu0
    %v2397 = vadd.f32 0.0, %v2396
    %v2398 = vpop.f32.mrb[0].mxu0
    %v2399 = vadd.f32 0.0, %v2398
    %v2400 = vpop.f32.mrb[0].mxu0
    %v2401 = vpop.f32.mrb[0].mxu0
    %2402 = vdwg.mxu0
    %2403 = vmatprep.subr.bf16.mxu0 %v772
    %2404 = vmatpush1.bf16.msra.mxu0 %v771
    %2405 = vmatprep.subr.bf16.mxu0 %v780
    %2406 = vmatpush1.bf16.msra.mxu0 %v779
    %2407 = vmatprep.subr.bf16.mxu0 %v788
    %2408 = vmatpush1.bf16.msra.mxu0 %v787
    %2409 = vmatprep.subr.bf16.mxu0 %v796
    %2410 = vmatpush1.bf16.msra.mxu0 %v795
    %2411 = vmatprep.subr.bf16.mxu0 %v804
    %2412 = vmatpush1.bf16.msra.mxu0 %v803
    %2413 = vmatprep.subr.bf16.mxu0 %v812
    %2414 = vmatpush1.bf16.msra.mxu0 %v811
    %2415 = vmatprep.subr.bf16.mxu0 %v820
    %2416 = vmatpush1.bf16.msra.mxu0 %v819
    %2417 = vmatprep.subr.bf16.mxu0 %v828
    %2418 = vmatpush1.bf16.msra.mxu0 %v827
    %2419 = vmatprep.subr.bf16.mxu0 %v836
    %2420 = vmatpush1.bf16.msra.mxu0 %v835
    %2421 = vmatprep.subr.bf16.mxu0 %v844
    %2422 = vmatpush1.bf16.msra.mxu0 %v843
    %2423 = vmatprep.subr.bf16.mxu0 %v852
    %2424 = vmatpush1.bf16.msra.mxu0 %v851
    %2425 = vmatprep.subr.bf16.mxu0 %v860
    %2426 = vmatpush1.bf16.msra.mxu0 %v859
    %2427 = vmatprep.subr.bf16.mxu0 %v868
    %2428 = vmatpush1.bf16.msra.mxu0 %v867
    %2429 = vmatprep.subr.bf16.mxu0 %v876
    %2430 = vmatpush1.bf16.msra.mxu0 %v875
    %2431 = vmatprep.subr.bf16.mxu0 %v884
    %2432 = vmatpush1.bf16.msra.mxu0 %v883
    %2433 = vmatprep.subr.bf16.mxu0 %v892
    %2434 = vmatpush1.bf16.msra.mxu0 %v891
    %2435 = vmatprep.mubr.bf16.mxu0 %v2318
    %2436 = vmatmul.mubr.bf16.gmra.mrb[0].mxu0 %v2317
    %v2437 = vpop.f32.mrb[0].mxu0
    %v2438 = vadd.f32 0.0, %v2437
    %v2439 = vpop.f32.mrb[0].mxu0
    %v2440 = vadd.f32 0.0, %v2439
    %v2441 = vpop.f32.mrb[0].mxu0
    %v2442 = vpop.f32.mrb[0].mxu0
    %2443 = vdwg.mxu0
    %2444 = vmatprep.subr.bf16.mxu0 %v774
    %2445 = vmatpush1.bf16.msra.mxu0 %v773
    %2446 = vmatprep.subr.bf16.mxu0 %v782
    %2447 = vmatpush1.bf16.msra.mxu0 %v781
    %2448 = vmatprep.subr.bf16.mxu0 %v790
    %2449 = vmatpush1.bf16.msra.mxu0 %v789
    %2450 = vmatprep.subr.bf16.mxu0 %v798
    %2451 = vmatpush1.bf16.msra.mxu0 %v797
    %2452 = vmatprep.subr.bf16.mxu0 %v806
    %2453 = vmatpush1.bf16.msra.mxu0 %v805
    %2454 = vmatprep.subr.bf16.mxu0 %v814
    %2455 = vmatpush1.bf16.msra.mxu0 %v813
    %2456 = vmatprep.subr.bf16.mxu0 %v822
    %2457 = vmatpush1.bf16.msra.mxu0 %v821
    %2458 = vmatprep.subr.bf16.mxu0 %v830
    %2459 = vmatpush1.bf16.msra.mxu0 %v829
    %2460 = vmatprep.subr.bf16.mxu0 %v838
    %2461 = vmatpush1.bf16.msra.mxu0 %v837
    %2462 = vmatprep.subr.bf16.mxu0 %v846
    %2463 = vmatpush1.bf16.msra.mxu0 %v845
    %2464 = vmatprep.subr.bf16.mxu0 %v854
    %2465 = vmatpush1.bf16.msra.mxu0 %v853
    %2466 = vmatprep.subr.bf16.mxu0 %v862
    %2467 = vmatpush1.bf16.msra.mxu0 %v861
    %2468 = vmatprep.subr.bf16.mxu0 %v870
    %2469 = vmatpush1.bf16.msra.mxu0 %v869
    %2470 = vmatprep.subr.bf16.mxu0 %v878
    %2471 = vmatpush1.bf16.msra.mxu0 %v877
    %2472 = vmatprep.subr.bf16.mxu0 %v886
    %2473 = vmatpush1.bf16.msra.mxu0 %v885
    %2474 = vmatprep.subr.bf16.mxu0 %v894
    %2475 = vmatpush1.bf16.msra.mxu0 %v893
    %2476 = vmatprep.mubr.bf16.mxu0 %v2318
    %2477 = vmatmul.mubr.bf16.gmra.mrb[0].mxu0 %v2317
    %v2478 = vpop.f32.mrb[0].mxu0
    %v2479 = vadd.f32 0.0, %v2478
    %v2480 = vpop.f32.mrb[0].mxu0
    %v2481 = vadd.f32 0.0, %v2480
    %v2482 = vpop.f32.mrb[0].mxu0
    %v2483 = vpop.f32.mrb[0].mxu0
    %2484 = vdwg.mxu0
    %v2493 = vcombine.low %v2356, %v2358
    %v2494 = vcombine.low %v2397, %v2399
    %v2495 = vcombine.low %v2438, %v2440
    %v2496 = vcombine.low %v2479, %v2481
    %v2498 = vunpack.c.l.s4 1966171168
    %v2499 = vunpack.c.0.s8 %v2498
    %v2500 = vlaneseq
    %v2501 = vshrl.u32 %v2500, 7
    %v2502 = vsub.s32 %v2499, %v2501
    %v2503 = vrot.slane %v2493, %v2502
    %v2505 = vunpack.c.l.s4 1966171168
    %v2506 = vunpack.c.0.s8 %v2505
    %v2507 = vlaneseq
    %v2508 = vshrl.u32 %v2507, 7
    %v2509 = vsub.s32 %v2506, %v2508
    %v2510 = vrot.slane %v2494, %v2509
    %v2512 = vunpack.c.l.s4 1966171168
    %v2513 = vunpack.c.0.s8 %v2512
    %v2514 = vlaneseq
    %v2515 = vshrl.u32 %v2514, 7
    %v2516 = vsub.s32 %v2513, %v2515
    %v2517 = vrot.slane %v2495, %v2516
    %v2519 = vunpack.c.l.s4 1966171168
    %v2520 = vunpack.c.0.s8 %v2519
    %v2521 = vlaneseq
    %v2522 = vshrl.u32 %v2521, 7
    %v2523 = vsub.s32 %v2520, %v2522
    %v2524 = vrot.slane %v2496, %v2523
    %v2525 = vcombine.low %v2503, %v2510
    %v2526 = vcombine.high %v2503, %v2510
    %v2527 = vcombine.low %v2517, %v2524
    %v2528 = vcombine.high %v2517, %v2524
    %v2530 = vunpack.c.l.s4 1966171168
    %v2531 = vunpack.c.0.s8 %v2530
    %v2532 = vlaneseq
    %v2533 = vshrl.u32 %v2532, 7
    %v2534 = vsub.s32 %v2531, %v2533
    %v2535 = vrot.slane %v2525, %v2534
    %v2537 = vunpack.c.l.s4 1966171168
    %v2538 = vunpack.c.0.s8 %v2537
    %v2539 = vlaneseq
    %v2540 = vshrl.u32 %v2539, 7
    %v2541 = vsub.s32 %v2538, %v2540
    %v2542 = vrot.slane %v2526, %v2541
    %v2544 = vunpack.c.l.s4 1966171168
    %v2545 = vunpack.c.0.s8 %v2544
    %v2546 = vlaneseq
    %v2547 = vshrl.u32 %v2546, 7
    %v2548 = vsub.s32 %v2545, %v2547
    %v2549 = vrot.slane %v2527, %v2548
    %v2551 = vunpack.c.l.s4 1966171168
    %v2552 = vunpack.c.0.s8 %v2551
    %v2553 = vlaneseq
    %v2554 = vshrl.u32 %v2553, 7
    %v2555 = vsub.s32 %v2552, %v2554
    %v2556 = vrot.slane %v2528, %v2555
    %v2557 = vcombine.low %v2535, %v2549
    %v2558 = vcombine.low %v2542, %v2556
    %v2561 = vadd.f32 %v2273, %v2557
    %v2562 = vadd.f32 %v2277, %v2558
    %v2563 = vxor.u32 %v2561, 2147483648
    %v2564 = vxor.u32 %v2562, 2147483648
    %v2565 = vmul.f32 %v2563, 1.442695
    %v2566 = vpow.pop %v2565
    %v2567 = vmul.f32 %v2564, 1.442695
    %v2568 = vpow.pop %v2567
    %v2569 = vadd.f32 %v2566, 1.0
    %v2570 = vadd.f32 %v2568, 1.0
    %v2571 = vrcp.pop %v2569
    %v2572 = vmul.f32 1.0, %v2571
    %v2573 = vrcp.pop %v2570
    %v2574 = vmul.f32 1.0, %v2573
    %v2577 = vrot.slane %v2561, 6
    %v2578 = vrot.slane %v2562, 6
    %v2581 = vtanh.pop %v2577
    %v2582 = vtanh.pop %v2578
    %v2585 = vrot.slane %v2572, 2
    %v2586 = vrot.slane %v2574, 2
    %v2589 = vmul.f32 %v2585, %v1306
    %v2590 = vmul.f32 %v2586, %v1307
    %v2591 = vmul.f32 %v2572, %v2581
    %v2592 = vmul.f32 %v2574, %v2582
    %v2593 = vadd.f32 %v2589, %v2591
    %v2594 = vadd.f32 %v2590, %v2592
    %v2595 = vtanh.pop %v2593
    %v2596 = vtanh.pop %v2594
    %v2597 = vrot.slane %v2572, 4
    %v2598 = vrot.slane %v2574, 4
    %v2601 = vmul.f32 %v2597, %v2595
    %v2602 = vmul.f32 %v2598, %v2596
    %s2603 = scalar_lea.vmem %s93, 6
    %v2604 = vld [vmem:[%s2603] ss:$8 sm:$0xf]
    %v2605 = vld [vmem:[%s2603] ss:$8 sm:$0xf0]
    %v2606 = vor.u32 %v2604, %v2605
    %s2607 = scalar_lea.vmem %s93, 70
    %v2608 = vld [vmem:[%s2607] ss:$8 sm:$0xf]
    %v2609 = vld [vmem:[%s2607] ss:$8 sm:$0xf0]
    %v2610 = vor.u32 %v2608, %v2609
    %v2613 = vlaneseq
    %v2614 = vshrl.u32 %v2613, 7
    %v2615 = vsub.s32 0, %v2614
    %v2616 = vrot.slane %v2268, %v2615
    %v2617 = vlaneseq
    %v2618 = vshrl.u32 %v2617, 7
    %v2619 = vsub.s32 1, %v2618
    %v2620 = vrot.slane %v2268, %v2619
    %v2621 = vlaneseq
    %v2622 = vshrl.u32 %v2621, 7
    %v2623 = vsub.s32 0, %v2622
    %v2624 = vrot.slane %v2269, %v2623
    %v2625 = vlaneseq
    %v2626 = vshrl.u32 %v2625, 7
    %v2627 = vsub.s32 1, %v2626
    %v2628 = vrot.slane %v2269, %v2627
    %v2633 = vpack.c.bf16 %v2616, %v2616
    %v2634 = vpack.c.bf16 %v2620, %v2620
    %v2635 = vpack.c.bf16 %v2624, %v2624
    %v2636 = vpack.c.bf16 %v2628, %v2628
    %v2641 = vunpack.c.l.b16 %v2633
    %v2642 = vunpack.c.l.b16 %v2634
    %v2643 = vunpack.c.l.b16 %v2635
    %v2644 = vunpack.c.l.b16 %v2636
    %v2645 = vrot.slane %v2643, 7
    %v2646 = vsel %vm2313, %v2645, %v2641
    %v2647 = vrot.slane %v2644, 7
    %v2648 = vsel %vm2313, %v2647, %v2642
    %v2649 = vpack.c.b16 %v2646, %v2646
    %v2650 = vpack.c.b16 %v2648, %v2648
    %2653 = vmatprep.subr.bf16.mxu0 %v1722
    %2654 = vmatpush1.bf16.msra.mxu0 %v1721
    %2655 = vmatprep.subr.bf16.mxu0 %v1730
    %2656 = vmatpush1.bf16.msra.mxu0 %v1729
    %2657 = vmatprep.subr.bf16.mxu0 %v1738
    %2658 = vmatpush1.bf16.msra.mxu0 %v1737
    %2659 = vmatprep.subr.bf16.mxu0 %v1746
    %2660 = vmatpush1.bf16.msra.mxu0 %v1745
    %2661 = vmatprep.subr.bf16.mxu0 %v1754
    %2662 = vmatpush1.bf16.msra.mxu0 %v1753
    %2663 = vmatprep.subr.bf16.mxu0 %v1762
    %2664 = vmatpush1.bf16.msra.mxu0 %v1761
    %2665 = vmatprep.subr.bf16.mxu0 %v1770
    %2666 = vmatpush1.bf16.msra.mxu0 %v1769
    %2667 = vmatprep.subr.bf16.mxu0 %v1778
    %2668 = vmatpush1.bf16.msra.mxu0 %v1777
    %2669 = vmatprep.subr.bf16.mxu0 %v1786
    %2670 = vmatpush1.bf16.msra.mxu0 %v1785
    %2671 = vmatprep.subr.bf16.mxu0 %v1794
    %2672 = vmatpush1.bf16.msra.mxu0 %v1793
    %2673 = vmatprep.subr.bf16.mxu0 %v1802
    %2674 = vmatpush1.bf16.msra.mxu0 %v1801
    %2675 = vmatprep.subr.bf16.mxu0 %v1810
    %2676 = vmatpush1.bf16.msra.mxu0 %v1809
    %2677 = vmatprep.subr.bf16.mxu0 %v1818
    %2678 = vmatpush1.bf16.msra.mxu0 %v1817
    %2679 = vmatprep.subr.bf16.mxu0 %v1826
    %2680 = vmatpush1.bf16.msra.mxu0 %v1825
    %2681 = vmatprep.subr.bf16.mxu0 %v1834
    %2682 = vmatpush1.bf16.msra.mxu0 %v1833
    %2683 = vmatprep.subr.bf16.mxu0 %v1842
    %2684 = vmatpush1.bf16.msra.mxu0 %v1841
    %2685 = vmatprep.mubr.bf16.mxu0 %v2650
    %2686 = vmatmul.mubr.bf16.gmra.mrb[0].mxu0 %v2649
    %v2687 = vpop.f32.mrb[0].mxu0
    %v2688 = vadd.f32 0.0, %v2687
    %v2689 = vpop.f32.mrb[0].mxu0
    %v2690 = vadd.f32 0.0, %v2689
    %v2691 = vpop.f32.mrb[0].mxu0
    %v2692 = vpop.f32.mrb[0].mxu0
    %2693 = vdwg.mxu0
    %2694 = vmatprep.subr.bf16.mxu0 %v1724
    %2695 = vmatpush1.bf16.msra.mxu0 %v1723
    %2696 = vmatprep.subr.bf16.mxu0 %v1732
    %2697 = vmatpush1.bf16.msra.mxu0 %v1731
    %2698 = vmatprep.subr.bf16.mxu0 %v1740
    %2699 = vmatpush1.bf16.msra.mxu0 %v1739
    %2700 = vmatprep.subr.bf16.mxu0 %v1748
    %2701 = vmatpush1.bf16.msra.mxu0 %v1747
    %2702 = vmatprep.subr.bf16.mxu0 %v1756
    %2703 = vmatpush1.bf16.msra.mxu0 %v1755
    %2704 = vmatprep.subr.bf16.mxu0 %v1764
    %2705 = vmatpush1.bf16.msra.mxu0 %v1763
    %2706 = vmatprep.subr.bf16.mxu0 %v1772
    %2707 = vmatpush1.bf16.msra.mxu0 %v1771
    %2708 = vmatprep.subr.bf16.mxu0 %v1780
    %2709 = vmatpush1.bf16.msra.mxu0 %v1779
    %2710 = vmatprep.subr.bf16.mxu0 %v1788
    %2711 = vmatpush1.bf16.msra.mxu0 %v1787
    %2712 = vmatprep.subr.bf16.mxu0 %v1796
    %2713 = vmatpush1.bf16.msra.mxu0 %v1795
    %2714 = vmatprep.subr.bf16.mxu0 %v1804
    %2715 = vmatpush1.bf16.msra.mxu0 %v1803
    %2716 = vmatprep.subr.bf16.mxu0 %v1812
    %2717 = vmatpush1.bf16.msra.mxu0 %v1811
    %2718 = vmatprep.subr.bf16.mxu0 %v1820
    %2719 = vmatpush1.bf16.msra.mxu0 %v1819
    %2720 = vmatprep.subr.bf16.mxu0 %v1828
    %2721 = vmatpush1.bf16.msra.mxu0 %v1827
    %2722 = vmatprep.subr.bf16.mxu0 %v1836
    %2723 = vmatpush1.bf16.msra.mxu0 %v1835
    %2724 = vmatprep.subr.bf16.mxu0 %v1844
    %2725 = vmatpush1.bf16.msra.mxu0 %v1843
    %2726 = vmatprep.mubr.bf16.mxu0 %v2650
    %2727 = vmatmul.mubr.bf16.gmra.mrb[0].mxu0 %v2649
    %v2728 = vpop.f32.mrb[0].mxu0
    %v2729 = vadd.f32 0.0, %v2728
    %v2730 = vpop.f32.mrb[0].mxu0
    %v2731 = vadd.f32 0.0, %v2730
    %v2732 = vpop.f32.mrb[0].mxu0
    %v2733 = vpop.f32.mrb[0].mxu0
    %2734 = vdwg.mxu0
    %2735 = vmatprep.subr.bf16.mxu0 %v1726
    %2736 = vmatpush1.bf16.msra.mxu0 %v1725
    %2737 = vmatprep.subr.bf16.mxu0 %v1734
    %2738 = vmatpush1.bf16.msra.mxu0 %v1733
    %2739 = vmatprep.subr.bf16.mxu0 %v1742
    %2740 = vmatpush1.bf16.msra.mxu0 %v1741
    %2741 = vmatprep.subr.bf16.mxu0 %v1750
    %2742 = vmatpush1.bf16.msra.mxu0 %v1749
    %2743 = vmatprep.subr.bf16.mxu0 %v1758
    %2744 = vmatpush1.bf16.msra.mxu0 %v1757
    %2745 = vmatprep.subr.bf16.mxu0 %v1766
    %2746 = vmatpush1.bf16.msra.mxu0 %v1765
    %2747 = vmatprep.subr.bf16.mxu0 %v1774
    %2748 = vmatpush1.bf16.msra.mxu0 %v1773
    %2749 = vmatprep.subr.bf16.mxu0 %v1782
    %2750 = vmatpush1.bf16.msra.mxu0 %v1781
    %2751 = vmatprep.subr.bf16.mxu0 %v1790
    %2752 = vmatpush1.bf16.msra.mxu0 %v1789
    %2753 = vmatprep.subr.bf16.mxu0 %v1798
    %2754 = vmatpush1.bf16.msra.mxu0 %v1797
    %2755 = vmatprep.subr.bf16.mxu0 %v1806
    %2756 = vmatpush1.bf16.msra.mxu0 %v1805
    %2757 = vmatprep.subr.bf16.mxu0 %v1814
    %2758 = vmatpush1.bf16.msra.mxu0 %v1813
    %2759 = vmatprep.subr.bf16.mxu0 %v1822
    %2760 = vmatpush1.bf16.msra.mxu0 %v1821
    %2761 = vmatprep.subr.bf16.mxu0 %v1830
    %2762 = vmatpush1.bf16.msra.mxu0 %v1829
    %2763 = vmatprep.subr.bf16.mxu0 %v1838
    %2764 = vmatpush1.bf16.msra.mxu0 %v1837
    %2765 = vmatprep.subr.bf16.mxu0 %v1846
    %2766 = vmatpush1.bf16.msra.mxu0 %v1845
    %2767 = vmatprep.mubr.bf16.mxu0 %v2650
    %2768 = vmatmul.mubr.bf16.gmra.mrb[0].mxu0 %v2649
    %v2769 = vpop.f32.mrb[0].mxu0
    %v2770 = vadd.f32 0.0, %v2769
    %v2771 = vpop.f32.mrb[0].mxu0
    %v2772 = vadd.f32 0.0, %v2771
    %v2773 = vpop.f32.mrb[0].mxu0
    %v2774 = vpop.f32.mrb[0].mxu0
    %2775 = vdwg.mxu0
    %2776 = vmatprep.subr.bf16.mxu0 %v1728
    %2777 = vmatpush1.bf16.msra.mxu0 %v1727
    %2778 = vmatprep.subr.bf16.mxu0 %v1736
    %2779 = vmatpush1.bf16.msra.mxu0 %v1735
    %2780 = vmatprep.subr.bf16.mxu0 %v1744
    %2781 = vmatpush1.bf16.msra.mxu0 %v1743
    %2782 = vmatprep.subr.bf16.mxu0 %v1752
    %2783 = vmatpush1.bf16.msra.mxu0 %v1751
    %2784 = vmatprep.subr.bf16.mxu0 %v1760
    %2785 = vmatpush1.bf16.msra.mxu0 %v1759
    %2786 = vmatprep.subr.bf16.mxu0 %v1768
    %2787 = vmatpush1.bf16.msra.mxu0 %v1767
    %2788 = vmatprep.subr.bf16.mxu0 %v1776
    %2789 = vmatpush1.bf16.msra.mxu0 %v1775
    %2790 = vmatprep.subr.bf16.mxu0 %v1784
    %2791 = vmatpush1.bf16.msra.mxu0 %v1783
    %2792 = vmatprep.subr.bf16.mxu0 %v1792
    %2793 = vmatpush1.bf16.msra.mxu0 %v1791
    %2794 = vmatprep.subr.bf16.mxu0 %v1800
    %2795 = vmatpush1.bf16.msra.mxu0 %v1799
    %2796 = vmatprep.subr.bf16.mxu0 %v1808
    %2797 = vmatpush1.bf16.msra.mxu0 %v1807
    %2798 = vmatprep.subr.bf16.mxu0 %v1816
    %2799 = vmatpush1.bf16.msra.mxu0 %v1815
    %2800 = vmatprep.subr.bf16.mxu0 %v1824
    %2801 = vmatpush1.bf16.msra.mxu0 %v1823
    %2802 = vmatprep.subr.bf16.mxu0 %v1832
    %2803 = vmatpush1.bf16.msra.mxu0 %v1831
    %2804 = vmatprep.subr.bf16.mxu0 %v1840
    %2805 = vmatpush1.bf16.msra.mxu0 %v1839
    %2806 = vmatprep.subr.bf16.mxu0 %v1848
    %2807 = vmatpush1.bf16.msra.mxu0 %v1847
    %2808 = vmatprep.mubr.bf16.mxu0 %v2650
    %2809 = vmatmul.mubr.bf16.gmra.mrb[0].mxu0 %v2649
    %v2810 = vpop.f32.mrb[0].mxu0
    %v2811 = vadd.f32 0.0, %v2810
    %v2812 = vpop.f32.mrb[0].mxu0
    %v2813 = vadd.f32 0.0, %v2812
    %v2814 = vpop.f32.mrb[0].mxu0
    %v2815 = vpop.f32.mrb[0].mxu0
    %2816 = vdwg.mxu0
    %v2825 = vcombine.low %v2688, %v2690
    %v2826 = vcombine.low %v2729, %v2731
    %v2827 = vcombine.low %v2770, %v2772
    %v2828 = vcombine.low %v2811, %v2813
    %v2830 = vunpack.c.l.s4 1966171168
    %v2831 = vunpack.c.0.s8 %v2830
    %v2832 = vlaneseq
    %v2833 = vshrl.u32 %v2832, 7
    %v2834 = vsub.s32 %v2831, %v2833
    %v2835 = vrot.slane %v2825, %v2834
    %v2837 = vunpack.c.l.s4 1966171168
    %v2838 = vunpack.c.0.s8 %v2837
    %v2839 = vlaneseq
    %v2840 = vshrl.u32 %v2839, 7
    %v2841 = vsub.s32 %v2838, %v2840
    %v2842 = vrot.slane %v2826, %v2841
    %v2844 = vunpack.c.l.s4 1966171168
    %v2845 = vunpack.c.0.s8 %v2844
    %v2846 = vlaneseq
    %v2847 = vshrl.u32 %v2846, 7
    %v2848 = vsub.s32 %v2845, %v2847
    %v2849 = vrot.slane %v2827, %v2848
    %v2851 = vunpack.c.l.s4 1966171168
    %v2852 = vunpack.c.0.s8 %v2851
    %v2853 = vlaneseq
    %v2854 = vshrl.u32 %v2853, 7
    %v2855 = vsub.s32 %v2852, %v2854
    %v2856 = vrot.slane %v2828, %v2855
    %v2857 = vcombine.low %v2835, %v2842
    %v2858 = vcombine.high %v2835, %v2842
    %v2859 = vcombine.low %v2849, %v2856
    %v2860 = vcombine.high %v2849, %v2856
    %v2862 = vunpack.c.l.s4 1966171168
    %v2863 = vunpack.c.0.s8 %v2862
    %v2864 = vlaneseq
    %v2865 = vshrl.u32 %v2864, 7
    %v2866 = vsub.s32 %v2863, %v2865
    %v2867 = vrot.slane %v2857, %v2866
    %v2869 = vunpack.c.l.s4 1966171168
    %v2870 = vunpack.c.0.s8 %v2869
    %v2871 = vlaneseq
    %v2872 = vshrl.u32 %v2871, 7
    %v2873 = vsub.s32 %v2870, %v2872
    %v2874 = vrot.slane %v2858, %v2873
    %v2876 = vunpack.c.l.s4 1966171168
    %v2877 = vunpack.c.0.s8 %v2876
    %v2878 = vlaneseq
    %v2879 = vshrl.u32 %v2878, 7
    %v2880 = vsub.s32 %v2877, %v2879
    %v2881 = vrot.slane %v2859, %v2880
    %v2883 = vunpack.c.l.s4 1966171168
    %v2884 = vunpack.c.0.s8 %v2883
    %v2885 = vlaneseq
    %v2886 = vshrl.u32 %v2885, 7
    %v2887 = vsub.s32 %v2884, %v2886
    %v2888 = vrot.slane %v2860, %v2887
    %v2889 = vcombine.low %v2867, %v2881
    %v2890 = vcombine.low %v2874, %v2888
    %v2893 = vadd.f32 %v2606, %v2889
    %v2894 = vadd.f32 %v2610, %v2890
    %v2895 = vxor.u32 %v2893, 2147483648
    %v2896 = vxor.u32 %v2894, 2147483648
    %v2897 = vmul.f32 %v2895, 1.442695
    %v2898 = vpow.pop %v2897
    %v2899 = vmul.f32 %v2896, 1.442695
    %v2900 = vpow.pop %v2899
    %v2901 = vadd.f32 %v2898, 1.0
    %v2902 = vadd.f32 %v2900, 1.0
    %v2903 = vrcp.pop %v2901
    %v2904 = vmul.f32 1.0, %v2903
    %v2905 = vrcp.pop %v2902
    %v2906 = vmul.f32 1.0, %v2905
    %v2909 = vrot.slane %v2893, 6
    %v2910 = vrot.slane %v2894, 6
    %v2913 = vtanh.pop %v2909
    %v2914 = vtanh.pop %v2910
    %v2917 = vrot.slane %v2904, 2
    %v2918 = vrot.slane %v2906, 2
    %v2921 = vmul.f32 %v2917, %v2260
    %v2922 = vmul.f32 %v2918, %v2261
    %v2923 = vmul.f32 %v2904, %v2913
    %v2924 = vmul.f32 %v2906, %v2914
    %v2925 = vadd.f32 %v2921, %v2923
    %v2926 = vadd.f32 %v2922, %v2924
    %v2927 = vtanh.pop %v2925
    %v2928 = vtanh.pop %v2926
    %v2929 = vrot.slane %v2904, 4
    %v2930 = vrot.slane %v2906, 4
    %v2933 = vmul.f32 %v2929, %v2927
    %v2934 = vmul.f32 %v2930, %v2928
    %s2935 = scalar_lea.vmem %s0, 2
    %v2936 = vld [vmem:[%s2935] ss:$8 sm:$0xf]
    %v2937 = vld [vmem:[%s2935] ss:$8 sm:$0xf0]
    %v2938 = vor.u32 %v2936, %v2937
    %s2939 = scalar_lea.vmem %s0, 66
    %v2940 = vld [vmem:[%s2939] ss:$8 sm:$0xf]
    %v2941 = vld [vmem:[%s2939] ss:$8 sm:$0xf0]
    %v2942 = vor.u32 %v2940, %v2941
    %v2945 = vlaneseq
    %v2946 = vshrl.u32 %v2945, 7
    %v2947 = vsub.s32 0, %v2946
    %v2948 = vrot.slane %v2601, %v2947
    %v2949 = vlaneseq
    %v2950 = vshrl.u32 %v2949, 7
    %v2951 = vsub.s32 1, %v2950
    %v2952 = vrot.slane %v2601, %v2951
    %v2953 = vlaneseq
    %v2954 = vshrl.u32 %v2953, 7
    %v2955 = vsub.s32 0, %v2954
    %v2956 = vrot.slane %v2602, %v2955
    %v2957 = vlaneseq
    %v2958 = vshrl.u32 %v2957, 7
    %v2959 = vsub.s32 1, %v2958
    %v2960 = vrot.slane %v2602, %v2959
    %v2965 = vpack.c.bf16 %v2948, %v2948
    %v2966 = vpack.c.bf16 %v2952, %v2952
    %v2967 = vpack.c.bf16 %v2956, %v2956
    %v2968 = vpack.c.bf16 %v2960, %v2960
    %v2973 = vunpack.c.l.b16 %v2965
    %v2974 = vunpack.c.l.b16 %v2966
    %v2975 = vunpack.c.l.b16 %v2967
    %v2976 = vunpack.c.l.b16 %v2968
    %v2977 = vrot.slane %v2975, 7
    %v2978 = vsel %vm2313, %v2977, %v2973
    %v2979 = vrot.slane %v2976, 7
    %v2980 = vsel %vm2313, %v2979, %v2974
    %v2981 = vpack.c.b16 %v2978, %v2978
    %v2982 = vpack.c.b16 %v2980, %v2980
    %2985 = vmatprep.subr.bf16.mxu0 %v768
    %2986 = vmatpush1.bf16.msra.mxu0 %v767
    %2987 = vmatprep.subr.bf16.mxu0 %v776
    %2988 = vmatpush1.bf16.msra.mxu0 %v775
    %2989 = vmatprep.subr.bf16.mxu0 %v784
    %2990 = vmatpush1.bf16.msra.mxu0 %v783
    %2991 = vmatprep.subr.bf16.mxu0 %v792
    %2992 = vmatpush1.bf16.msra.mxu0 %v791
    %2993 = vmatprep.subr.bf16.mxu0 %v800
    %2994 = vmatpush1.bf16.msra.mxu0 %v799
    %2995 = vmatprep.subr.bf16.mxu0 %v808
    %2996 = vmatpush1.bf16.msra.mxu0 %v807
    %2997 = vmatprep.subr.bf16.mxu0 %v816
    %2998 = vmatpush1.bf16.msra.mxu0 %v815
    %2999 = vmatprep.subr.bf16.mxu0 %v824
    %3000 = vmatpush1.bf16.msra.mxu0 %v823
    %3001 = vmatprep.subr.bf16.mxu0 %v832
    %3002 = vmatpush1.bf16.msra.mxu0 %v831
    %3003 = vmatprep.subr.bf16.mxu0 %v840
    %3004 = vmatpush1.bf16.msra.mxu0 %v839
    %3005 = vmatprep.subr.bf16.mxu0 %v848
    %3006 = vmatpush1.bf16.msra.mxu0 %v847
    %3007 = vmatprep.subr.bf16.mxu0 %v856
    %3008 = vmatpush1.bf16.msra.mxu0 %v855
    %3009 = vmatprep.subr.bf16.mxu0 %v864
    %3010 = vmatpush1.bf16.msra.mxu0 %v863
    %3011 = vmatprep.subr.bf16.mxu0 %v872
    %3012 = vmatpush1.bf16.msra.mxu0 %v871
    %3013 = vmatprep.subr.bf16.mxu0 %v880
    %3014 = vmatpush1.bf16.msra.mxu0 %v879
    %3015 = vmatprep.subr.bf16.mxu0 %v888
    %3016 = vmatpush1.bf16.msra.mxu0 %v887
    %3017 = vmatprep.mubr.bf16.mxu0 %v2982
    %3018 = vmatmul.mubr.bf16.gmra.mrb[0].mxu0 %v2981
    %v3019 = vpop.f32.mrb[0].mxu0
    %v3020 = vadd.f32 0.0, %v3019
    %v3021 = vpop.f32.mrb[0].mxu0
    %v3022 = vadd.f32 0.0, %v3021
    %v3023 = vpop.f32.mrb[0].mxu0
    %v3024 = vpop.f32.mrb[0].mxu0
    %3025 = vdwg.mxu0
    %3026 = vmatprep.subr.bf16.mxu0 %v770
    %3027 = vmatpush1.bf16.msra.mxu0 %v769
    %3028 = vmatprep.subr.bf16.mxu0 %v778
    %3029 = vmatpush1.bf16.msra.mxu0 %v777
    %3030 = vmatprep.subr.bf16.mxu0 %v786
    %3031 = vmatpush1.bf16.msra.mxu0 %v785
    %3032 = vmatprep.subr.bf16.mxu0 %v794
    %3033 = vmatpush1.bf16.msra.mxu0 %v793
    %3034 = vmatprep.subr.bf16.mxu0 %v802
    %3035 = vmatpush1.bf16.msra.mxu0 %v801
    %3036 = vmatprep.subr.bf16.mxu0 %v810
    %3037 = vmatpush1.bf16.msra.mxu0 %v809
    %3038 = vmatprep.subr.bf16.mxu0 %v818
    %3039 = vmatpush1.bf16.msra.mxu0 %v817
    %3040 = vmatprep.subr.bf16.mxu0 %v826
    %3041 = vmatpush1.bf16.msra.mxu0 %v825
    %3042 = vmatprep.subr.bf16.mxu0 %v834
    %3043 = vmatpush1.bf16.msra.mxu0 %v833
    %3044 = vmatprep.subr.bf16.mxu0 %v842
    %3045 = vmatpush1.bf16.msra.mxu0 %v841
    %3046 = vmatprep.subr.bf16.mxu0 %v850
    %3047 = vmatpush1.bf16.msra.mxu0 %v849
    %3048 = vmatprep.subr.bf16.mxu0 %v858
    %3049 = vmatpush1.bf16.msra.mxu0 %v857
    %3050 = vmatprep.subr.bf16.mxu0 %v866
    %3051 = vmatpush1.bf16.msra.mxu0 %v865
    %3052 = vmatprep.subr.bf16.mxu0 %v874
    %3053 = vmatpush1.bf16.msra.mxu0 %v873
    %3054 = vmatprep.subr.bf16.mxu0 %v882
    %3055 = vmatpush1.bf16.msra.mxu0 %v881
    %3056 = vmatprep.subr.bf16.mxu0 %v890
    %3057 = vmatpush1.bf16.msra.mxu0 %v889
    %3058 = vmatprep.mubr.bf16.mxu0 %v2982
    %3059 = vmatmul.mubr.bf16.gmra.mrb[0].mxu0 %v2981
    %v3060 = vpop.f32.mrb[0].mxu0
    %v3061 = vadd.f32 0.0, %v3060
    %v3062 = vpop.f32.mrb[0].mxu0
    %v3063 = vadd.f32 0.0, %v3062
    %v3064 = vpop.f32.mrb[0].mxu0
    %v3065 = vpop.f32.mrb[0].mxu0
    %3066 = vdwg.mxu0
    %3067 = vmatprep.subr.bf16.mxu0 %v772
    %3068 = vmatpush1.bf16.msra.mxu0 %v771
    %3069 = vmatprep.subr.bf16.mxu0 %v780
    %3070 = vmatpush1.bf16.msra.mxu0 %v779
    %3071 = vmatprep.subr.bf16.mxu0 %v788
    %3072 = vmatpush1.bf16.msra.mxu0 %v787
    %3073 = vmatprep.subr.bf16.mxu0 %v796
    %3074 = vmatpush1.bf16.msra.mxu0 %v795
    %3075 = vmatprep.subr.bf16.mxu0 %v804
    %3076 = vmatpush1.bf16.msra.mxu0 %v803
    %3077 = vmatprep.subr.bf16.mxu0 %v812
    %3078 = vmatpush1.bf16.msra.mxu0 %v811
    %3079 = vmatprep.subr.bf16.mxu0 %v820
    %3080 = vmatpush1.bf16.msra.mxu0 %v819
    %3081 = vmatprep.subr.bf16.mxu0 %v828
    %3082 = vmatpush1.bf16.msra.mxu0 %v827
    %3083 = vmatprep.subr.bf16.mxu0 %v836
    %3084 = vmatpush1.bf16.msra.mxu0 %v835
    %3085 = vmatprep.subr.bf16.mxu0 %v844
    %3086 = vmatpush1.bf16.msra.mxu0 %v843
    %3087 = vmatprep.subr.bf16.mxu0 %v852
    %3088 = vmatpush1.bf16.msra.mxu0 %v851
    %3089 = vmatprep.subr.bf16.mxu0 %v860
    %3090 = vmatpush1.bf16.msra.mxu0 %v859
    %3091 = vmatprep.subr.bf16.mxu0 %v868
    %3092 = vmatpush1.bf16.msra.mxu0 %v867
    %3093 = vmatprep.subr.bf16.mxu0 %v876
    %3094 = vmatpush1.bf16.msra.mxu0 %v875
    %3095 = vmatprep.subr.bf16.mxu0 %v884
    %3096 = vmatpush1.bf16.msra.mxu0 %v883
    %3097 = vmatprep.subr.bf16.mxu0 %v892
    %3098 = vmatpush1.bf16.msra.mxu0 %v891
    %3099 = vmatprep.mubr.bf16.mxu0 %v2982
    %3100 = vmatmul.mubr.bf16.gmra.mrb[0].mxu0 %v2981
    %v3101 = vpop.f32.mrb[0].mxu0
    %v3102 = vadd.f32 0.0, %v3101
    %v3103 = vpop.f32.mrb[0].mxu0
    %v3104 = vadd.f32 0.0, %v3103
    %v3105 = vpop.f32.mrb[0].mxu0
    %v3106 = vpop.f32.mrb[0].mxu0
    %3107 = vdwg.mxu0
    %3108 = vmatprep.subr.bf16.mxu0 %v774
    %3109 = vmatpush1.bf16.msra.mxu0 %v773
    %3110 = vmatprep.subr.bf16.mxu0 %v782
    %3111 = vmatpush1.bf16.msra.mxu0 %v781
    %3112 = vmatprep.subr.bf16.mxu0 %v790
    %3113 = vmatpush1.bf16.msra.mxu0 %v789
    %3114 = vmatprep.subr.bf16.mxu0 %v798
    %3115 = vmatpush1.bf16.msra.mxu0 %v797
    %3116 = vmatprep.subr.bf16.mxu0 %v806
    %3117 = vmatpush1.bf16.msra.mxu0 %v805
    %3118 = vmatprep.subr.bf16.mxu0 %v814
    %3119 = vmatpush1.bf16.msra.mxu0 %v813
    %3120 = vmatprep.subr.bf16.mxu0 %v822
    %3121 = vmatpush1.bf16.msra.mxu0 %v821
    %3122 = vmatprep.subr.bf16.mxu0 %v830
    %3123 = vmatpush1.bf16.msra.mxu0 %v829
    %3124 = vmatprep.subr.bf16.mxu0 %v838
    %3125 = vmatpush1.bf16.msra.mxu0 %v837
    %3126 = vmatprep.subr.bf16.mxu0 %v846
    %3127 = vmatpush1.bf16.msra.mxu0 %v845
    %3128 = vmatprep.subr.bf16.mxu0 %v854
    %3129 = vmatpush1.bf16.msra.mxu0 %v853
    %3130 = vmatprep.subr.bf16.mxu0 %v862
    %3131 = vmatpush1.bf16.msra.mxu0 %v861
    %3132 = vmatprep.subr.bf16.mxu0 %v870
    %3133 = vmatpush1.bf16.msra.mxu0 %v869
    %3134 = vmatprep.subr.bf16.mxu0 %v878
    %3135 = vmatpush1.bf16.msra.mxu0 %v877
    %3136 = vmatprep.subr.bf16.mxu0 %v886
    %3137 = vmatpush1.bf16.msra.mxu0 %v885
    %3138 = vmatprep.subr.bf16.mxu0 %v894
    %3139 = vmatpush1.bf16.msra.mxu0 %v893
    %3140 = vmatprep.mubr.bf16.mxu0 %v2982
    %3141 = vmatmul.mubr.bf16.gmra.mrb[0].mxu0 %v2981
    %v3142 = vpop.f32.mrb[0].mxu0
    %v3143 = vadd.f32 0.0, %v3142
    %v3144 = vpop.f32.mrb[0].mxu0
    %v3145 = vadd.f32 0.0, %v3144
    %v3146 = vpop.f32.mrb[0].mxu0
    %v3147 = vpop.f32.mrb[0].mxu0
    %3148 = vdwg.mxu0
    %v3157 = vcombine.low %v3020, %v3022
    %v3158 = vcombine.low %v3061, %v3063
    %v3159 = vcombine.low %v3102, %v3104
    %v3160 = vcombine.low %v3143, %v3145
    %v3162 = vunpack.c.l.s4 1966171168
    %v3163 = vunpack.c.0.s8 %v3162
    %v3164 = vlaneseq
    %v3165 = vshrl.u32 %v3164, 7
    %v3166 = vsub.s32 %v3163, %v3165
    %v3167 = vrot.slane %v3157, %v3166
    %v3169 = vunpack.c.l.s4 1966171168
    %v3170 = vunpack.c.0.s8 %v3169
    %v3171 = vlaneseq
    %v3172 = vshrl.u32 %v3171, 7
    %v3173 = vsub.s32 %v3170, %v3172
    %v3174 = vrot.slane %v3158, %v3173
    %v3176 = vunpack.c.l.s4 1966171168
    %v3177 = vunpack.c.0.s8 %v3176
    %v3178 = vlaneseq
    %v3179 = vshrl.u32 %v3178, 7
    %v3180 = vsub.s32 %v3177, %v3179
    %v3181 = vrot.slane %v3159, %v3180
    %v3183 = vunpack.c.l.s4 1966171168
    %v3184 = vunpack.c.0.s8 %v3183
    %v3185 = vlaneseq
    %v3186 = vshrl.u32 %v3185, 7
    %v3187 = vsub.s32 %v3184, %v3186
    %v3188 = vrot.slane %v3160, %v3187
    %v3189 = vcombine.low %v3167, %v3174
    %v3190 = vcombine.high %v3167, %v3174
    %v3191 = vcombine.low %v3181, %v3188
    %v3192 = vcombine.high %v3181, %v3188
    %v3194 = vunpack.c.l.s4 1966171168
    %v3195 = vunpack.c.0.s8 %v3194
    %v3196 = vlaneseq
    %v3197 = vshrl.u32 %v3196, 7
    %v3198 = vsub.s32 %v3195, %v3197
    %v3199 = vrot.slane %v3189, %v3198
    %v3201 = vunpack.c.l.s4 1966171168
    %v3202 = vunpack.c.0.s8 %v3201
    %v3203 = vlaneseq
    %v3204 = vshrl.u32 %v3203, 7
    %v3205 = vsub.s32 %v3202, %v3204
    %v3206 = vrot.slane %v3190, %v3205
    %v3208 = vunpack.c.l.s4 1966171168
    %v3209 = vunpack.c.0.s8 %v3208
    %v3210 = vlaneseq
    %v3211 = vshrl.u32 %v3210, 7
    %v3212 = vsub.s32 %v3209, %v3211
    %v3213 = vrot.slane %v3191, %v3212
    %v3215 = vunpack.c.l.s4 1966171168
    %v3216 = vunpack.c.0.s8 %v3215
    %v3217 = vlaneseq
    %v3218 = vshrl.u32 %v3217, 7
    %v3219 = vsub.s32 %v3216, %v3218
    %v3220 = vrot.slane %v3192, %v3219
    %v3221 = vcombine.low %v3199, %v3213
    %v3222 = vcombine.low %v3206, %v3220
    %v3225 = vadd.f32 %v2938, %v3221
    %v3226 = vadd.f32 %v2942, %v3222
    %v3227 = vxor.u32 %v3225, 2147483648
    %v3228 = vxor.u32 %v3226, 2147483648
    %v3229 = vmul.f32 %v3227, 1.442695
    %v3230 = vpow.pop %v3229
    %v3231 = vmul.f32 %v3228, 1.442695
    %v3232 = vpow.pop %v3231
    %v3233 = vadd.f32 %v3230, 1.0
    %v3234 = vadd.f32 %v3232, 1.0
    %v3235 = vrcp.pop %v3233
    %v3236 = vmul.f32 1.0, %v3235
    %v3237 = vrcp.pop %v3234
    %v3238 = vmul.f32 1.0, %v3237
    %v3241 = vrot.slane %v3225, 6
    %v3242 = vrot.slane %v3226, 6
    %v3245 = vtanh.pop %v3241
    %v3246 = vtanh.pop %v3242
    %v3249 = vrot.slane %v3236, 2
    %v3250 = vrot.slane %v3238, 2
    %v3253 = vmul.f32 %v3249, %v2593
    %v3254 = vmul.f32 %v3250, %v2594
    %v3255 = vmul.f32 %v3236, %v3245
    %v3256 = vmul.f32 %v3238, %v3246
    %v3257 = vadd.f32 %v3253, %v3255
    %v3258 = vadd.f32 %v3254, %v3256
    %v3259 = vtanh.pop %v3257
    %v3260 = vtanh.pop %v3258
    %v3261 = vrot.slane %v3236, 4
    %v3262 = vrot.slane %v3238, 4
    %v3265 = vmul.f32 %v3261, %v3259
    %v3266 = vmul.f32 %v3262, %v3260
    %s3267 = scalar_lea.vmem %s93, 5
    %v3268 = vld [vmem:[%s3267] ss:$8 sm:$0xf]
    %v3269 = vld [vmem:[%s3267] ss:$8 sm:$0xf0]
    %v3270 = vor.u32 %v3268, %v3269
    %s3271 = scalar_lea.vmem %s93, 69
    %v3272 = vld [vmem:[%s3271] ss:$8 sm:$0xf]
    %v3273 = vld [vmem:[%s3271] ss:$8 sm:$0xf0]
    %v3274 = vor.u32 %v3272, %v3273
    %v3277 = vlaneseq
    %v3278 = vshrl.u32 %v3277, 7
    %v3279 = vsub.s32 0, %v3278
    %v3280 = vrot.slane %v2933, %v3279
    %v3281 = vlaneseq
    %v3282 = vshrl.u32 %v3281, 7
    %v3283 = vsub.s32 1, %v3282
    %v3284 = vrot.slane %v2933, %v3283
    %v3285 = vlaneseq
    %v3286 = vshrl.u32 %v3285, 7
    %v3287 = vsub.s32 0, %v3286
    %v3288 = vrot.slane %v2934, %v3287
    %v3289 = vlaneseq
    %v3290 = vshrl.u32 %v3289, 7
    %v3291 = vsub.s32 1, %v3290
    %v3292 = vrot.slane %v2934, %v3291
    %v3297 = vpack.c.bf16 %v3280, %v3280
    %v3298 = vpack.c.bf16 %v3284, %v3284
    %v3299 = vpack.c.bf16 %v3288, %v3288
    %v3300 = vpack.c.bf16 %v3292, %v3292
    %v3305 = vunpack.c.l.b16 %v3297
    %v3306 = vunpack.c.l.b16 %v3298
    %v3307 = vunpack.c.l.b16 %v3299
    %v3308 = vunpack.c.l.b16 %v3300
    %v3309 = vrot.slane %v3307, 7
    %v3310 = vsel %vm2313, %v3309, %v3305
    %v3311 = vrot.slane %v3308, 7
    %v3312 = vsel %vm2313, %v3311, %v3306
    %v3313 = vpack.c.b16 %v3310, %v3310
    %v3314 = vpack.c.b16 %v3312, %v3312
    %3317 = vmatprep.subr.bf16.mxu0 %v1722
    %3318 = vmatpush1.bf16.msra.mxu0 %v1721
    %3319 = vmatprep.subr.bf16.mxu0 %v1730
    %3320 = vmatpush1.bf16.msra.mxu0 %v1729
    %3321 = vmatprep.subr.bf16.mxu0 %v1738
    %3322 = vmatpush1.bf16.msra.mxu0 %v1737
    %3323 = vmatprep.subr.bf16.mxu0 %v1746
    %3324 = vmatpush1.bf16.msra.mxu0 %v1745
    %3325 = vmatprep.subr.bf16.mxu0 %v1754
    %3326 = vmatpush1.bf16.msra.mxu0 %v1753
    %3327 = vmatprep.subr.bf16.mxu0 %v1762
    %3328 = vmatpush1.bf16.msra.mxu0 %v1761
    %3329 = vmatprep.subr.bf16.mxu0 %v1770
    %3330 = vmatpush1.bf16.msra.mxu0 %v1769
    %3331 = vmatprep.subr.bf16.mxu0 %v1778
    %3332 = vmatpush1.bf16.msra.mxu0 %v1777
    %3333 = vmatprep.subr.bf16.mxu0 %v1786
    %3334 = vmatpush1.bf16.msra.mxu0 %v1785
    %3335 = vmatprep.subr.bf16.mxu0 %v1794
    %3336 = vmatpush1.bf16.msra.mxu0 %v1793
    %3337 = vmatprep.subr.bf16.mxu0 %v1802
    %3338 = vmatpush1.bf16.msra.mxu0 %v1801
    %3339 = vmatprep.subr.bf16.mxu0 %v1810
    %3340 = vmatpush1.bf16.msra.mxu0 %v1809
    %3341 = vmatprep.subr.bf16.mxu0 %v1818
    %3342 = vmatpush1.bf16.msra.mxu0 %v1817
    %3343 = vmatprep.subr.bf16.mxu0 %v1826
    %3344 = vmatpush1.bf16.msra.mxu0 %v1825
    %3345 = vmatprep.subr.bf16.mxu0 %v1834
    %3346 = vmatpush1.bf16.msra.mxu0 %v1833
    %3347 = vmatprep.subr.bf16.mxu0 %v1842
    %3348 = vmatpush1.bf16.msra.mxu0 %v1841
    %3349 = vmatprep.mubr.bf16.mxu0 %v3314
    %3350 = vmatmul.mubr.bf16.gmra.mrb[0].mxu0 %v3313
    %v3351 = vpop.f32.mrb[0].mxu0
    %v3352 = vadd.f32 0.0, %v3351
    %v3353 = vpop.f32.mrb[0].mxu0
    %v3354 = vadd.f32 0.0, %v3353
    %v3355 = vpop.f32.mrb[0].mxu0
    %v3356 = vpop.f32.mrb[0].mxu0
    %3357 = vdwg.mxu0
    %3358 = vmatprep.subr.bf16.mxu0 %v1724
    %3359 = vmatpush1.bf16.msra.mxu0 %v1723
    %3360 = vmatprep.subr.bf16.mxu0 %v1732
    %3361 = vmatpush1.bf16.msra.mxu0 %v1731
    %3362 = vmatprep.subr.bf16.mxu0 %v1740
    %3363 = vmatpush1.bf16.msra.mxu0 %v1739
    %3364 = vmatprep.subr.bf16.mxu0 %v1748
    %3365 = vmatpush1.bf16.msra.mxu0 %v1747
    %3366 = vmatprep.subr.bf16.mxu0 %v1756
    %3367 = vmatpush1.bf16.msra.mxu0 %v1755
    %3368 = vmatprep.subr.bf16.mxu0 %v1764
    %3369 = vmatpush1.bf16.msra.mxu0 %v1763
    %3370 = vmatprep.subr.bf16.mxu0 %v1772
    %3371 = vmatpush1.bf16.msra.mxu0 %v1771
    %3372 = vmatprep.subr.bf16.mxu0 %v1780
    %3373 = vmatpush1.bf16.msra.mxu0 %v1779
    %3374 = vmatprep.subr.bf16.mxu0 %v1788
    %3375 = vmatpush1.bf16.msra.mxu0 %v1787
    %3376 = vmatprep.subr.bf16.mxu0 %v1796
    %3377 = vmatpush1.bf16.msra.mxu0 %v1795
    %3378 = vmatprep.subr.bf16.mxu0 %v1804
    %3379 = vmatpush1.bf16.msra.mxu0 %v1803
    %3380 = vmatprep.subr.bf16.mxu0 %v1812
    %3381 = vmatpush1.bf16.msra.mxu0 %v1811
    %3382 = vmatprep.subr.bf16.mxu0 %v1820
    %3383 = vmatpush1.bf16.msra.mxu0 %v1819
    %3384 = vmatprep.subr.bf16.mxu0 %v1828
    %3385 = vmatpush1.bf16.msra.mxu0 %v1827
    %3386 = vmatprep.subr.bf16.mxu0 %v1836
    %3387 = vmatpush1.bf16.msra.mxu0 %v1835
    %3388 = vmatprep.subr.bf16.mxu0 %v1844
    %3389 = vmatpush1.bf16.msra.mxu0 %v1843
    %3390 = vmatprep.mubr.bf16.mxu0 %v3314
    %3391 = vmatmul.mubr.bf16.gmra.mrb[0].mxu0 %v3313
    %v3392 = vpop.f32.mrb[0].mxu0
    %v3393 = vadd.f32 0.0, %v3392
    %v3394 = vpop.f32.mrb[0].mxu0
    %v3395 = vadd.f32 0.0, %v3394
    %v3396 = vpop.f32.mrb[0].mxu0
    %v3397 = vpop.f32.mrb[0].mxu0
    %3398 = vdwg.mxu0
    %3399 = vmatprep.subr.bf16.mxu0 %v1726
    %3400 = vmatpush1.bf16.msra.mxu0 %v1725
    %3401 = vmatprep.subr.bf16.mxu0 %v1734
    %3402 = vmatpush1.bf16.msra.mxu0 %v1733
    %3403 = vmatprep.subr.bf16.mxu0 %v1742
    %3404 = vmatpush1.bf16.msra.mxu0 %v1741
    %3405 = vmatprep.subr.bf16.mxu0 %v1750
    %3406 = vmatpush1.bf16.msra.mxu0 %v1749
    %3407 = vmatprep.subr.bf16.mxu0 %v1758
    %3408 = vmatpush1.bf16.msra.mxu0 %v1757
    %3409 = vmatprep.subr.bf16.mxu0 %v1766
    %3410 = vmatpush1.bf16.msra.mxu0 %v1765
    %3411 = vmatprep.subr.bf16.mxu0 %v1774
    %3412 = vmatpush1.bf16.msra.mxu0 %v1773
    %3413 = vmatprep.subr.bf16.mxu0 %v1782
    %3414 = vmatpush1.bf16.msra.mxu0 %v1781
    %3415 = vmatprep.subr.bf16.mxu0 %v1790
    %3416 = vmatpush1.bf16.msra.mxu0 %v1789
    %3417 = vmatprep.subr.bf16.mxu0 %v1798
    %3418 = vmatpush1.bf16.msra.mxu0 %v1797
    %3419 = vmatprep.subr.bf16.mxu0 %v1806
    %3420 = vmatpush1.bf16.msra.mxu0 %v1805
    %3421 = vmatprep.subr.bf16.mxu0 %v1814
    %3422 = vmatpush1.bf16.msra.mxu0 %v1813
    %3423 = vmatprep.subr.bf16.mxu0 %v1822
    %3424 = vmatpush1.bf16.msra.mxu0 %v1821
    %3425 = vmatprep.subr.bf16.mxu0 %v1830
    %3426 = vmatpush1.bf16.msra.mxu0 %v1829
    %3427 = vmatprep.subr.bf16.mxu0 %v1838
    %3428 = vmatpush1.bf16.msra.mxu0 %v1837
    %3429 = vmatprep.subr.bf16.mxu0 %v1846
    %3430 = vmatpush1.bf16.msra.mxu0 %v1845
    %3431 = vmatprep.mubr.bf16.mxu0 %v3314
    %3432 = vmatmul.mubr.bf16.gmra.mrb[0].mxu0 %v3313
    %v3433 = vpop.f32.mrb[0].mxu0
    %v3434 = vadd.f32 0.0, %v3433
    %v3435 = vpop.f32.mrb[0].mxu0
    %v3436 = vadd.f32 0.0, %v3435
    %v3437 = vpop.f32.mrb[0].mxu0
    %v3438 = vpop.f32.mrb[0].mxu0
    %3439 = vdwg.mxu0
    %3440 = vmatprep.subr.bf16.mxu0 %v1728
    %3441 = vmatpush1.bf16.msra.mxu0 %v1727
    %3442 = vmatprep.subr.bf16.mxu0 %v1736
    %3443 = vmatpush1.bf16.msra.mxu0 %v1735
    %3444 = vmatprep.subr.bf16.mxu0 %v1744
    %3445 = vmatpush1.bf16.msra.mxu0 %v1743
    %3446 = vmatprep.subr.bf16.mxu0 %v1752
    %3447 = vmatpush1.bf16.msra.mxu0 %v1751
    %3448 = vmatprep.subr.bf16.mxu0 %v1760
    %3449 = vmatpush1.bf16.msra.mxu0 %v1759
    %3450 = vmatprep.subr.bf16.mxu0 %v1768
    %3451 = vmatpush1.bf16.msra.mxu0 %v1767
    %3452 = vmatprep.subr.bf16.mxu0 %v1776
    %3453 = vmatpush1.bf16.msra.mxu0 %v1775
    %3454 = vmatprep.subr.bf16.mxu0 %v1784
    %3455 = vmatpush1.bf16.msra.mxu0 %v1783
    %3456 = vmatprep.subr.bf16.mxu0 %v1792
    %3457 = vmatpush1.bf16.msra.mxu0 %v1791
    %3458 = vmatprep.subr.bf16.mxu0 %v1800
    %3459 = vmatpush1.bf16.msra.mxu0 %v1799
    %3460 = vmatprep.subr.bf16.mxu0 %v1808
    %3461 = vmatpush1.bf16.msra.mxu0 %v1807
    %3462 = vmatprep.subr.bf16.mxu0 %v1816
    %3463 = vmatpush1.bf16.msra.mxu0 %v1815
    %3464 = vmatprep.subr.bf16.mxu0 %v1824
    %3465 = vmatpush1.bf16.msra.mxu0 %v1823
    %3466 = vmatprep.subr.bf16.mxu0 %v1832
    %3467 = vmatpush1.bf16.msra.mxu0 %v1831
    %3468 = vmatprep.subr.bf16.mxu0 %v1840
    %3469 = vmatpush1.bf16.msra.mxu0 %v1839
    %3470 = vmatprep.subr.bf16.mxu0 %v1848
    %3471 = vmatpush1.bf16.msra.mxu0 %v1847
    %3472 = vmatprep.mubr.bf16.mxu0 %v3314
    %3473 = vmatmul.mubr.bf16.gmra.mrb[0].mxu0 %v3313
    %v3474 = vpop.f32.mrb[0].mxu0
    %v3475 = vadd.f32 0.0, %v3474
    %v3476 = vpop.f32.mrb[0].mxu0
    %v3477 = vadd.f32 0.0, %v3476
    %v3478 = vpop.f32.mrb[0].mxu0
    %v3479 = vpop.f32.mrb[0].mxu0
    %3480 = vdwg.mxu0
    %v3489 = vcombine.low %v3352, %v3354
    %v3490 = vcombine.low %v3393, %v3395
    %v3491 = vcombine.low %v3434, %v3436
    %v3492 = vcombine.low %v3475, %v3477
    %v3494 = vunpack.c.l.s4 1966171168
    %v3495 = vunpack.c.0.s8 %v3494
    %v3496 = vlaneseq
    %v3497 = vshrl.u32 %v3496, 7
    %v3498 = vsub.s32 %v3495, %v3497
    %v3499 = vrot.slane %v3489, %v3498
    %v3501 = vunpack.c.l.s4 1966171168
    %v3502 = vunpack.c.0.s8 %v3501
    %v3503 = vlaneseq
    %v3504 = vshrl.u32 %v3503, 7
    %v3505 = vsub.s32 %v3502, %v3504
    %v3506 = vrot.slane %v3490, %v3505
    %v3508 = vunpack.c.l.s4 1966171168
    %v3509 = vunpack.c.0.s8 %v3508
    %v3510 = vlaneseq
    %v3511 = vshrl.u32 %v3510, 7
    %v3512 = vsub.s32 %v3509, %v3511
    %v3513 = vrot.slane %v3491, %v3512
    %v3515 = vunpack.c.l.s4 1966171168
    %v3516 = vunpack.c.0.s8 %v3515
    %v3517 = vlaneseq
    %v3518 = vshrl.u32 %v3517, 7
    %v3519 = vsub.s32 %v3516, %v3518
    %v3520 = vrot.slane %v3492, %v3519
    %v3521 = vcombine.low %v3499, %v3506
    %v3522 = vcombine.high %v3499, %v3506
    %v3523 = vcombine.low %v3513, %v3520
    %v3524 = vcombine.high %v3513, %v3520
    %v3526 = vunpack.c.l.s4 1966171168
    %v3527 = vunpack.c.0.s8 %v3526
    %v3528 = vlaneseq
    %v3529 = vshrl.u32 %v3528, 7
    %v3530 = vsub.s32 %v3527, %v3529
    %v3531 = vrot.slane %v3521, %v3530
    %v3533 = vunpack.c.l.s4 1966171168
    %v3534 = vunpack.c.0.s8 %v3533
    %v3535 = vlaneseq
    %v3536 = vshrl.u32 %v3535, 7
    %v3537 = vsub.s32 %v3534, %v3536
    %v3538 = vrot.slane %v3522, %v3537
    %v3540 = vunpack.c.l.s4 1966171168
    %v3541 = vunpack.c.0.s8 %v3540
    %v3542 = vlaneseq
    %v3543 = vshrl.u32 %v3542, 7
    %v3544 = vsub.s32 %v3541, %v3543
    %v3545 = vrot.slane %v3523, %v3544
    %v3547 = vunpack.c.l.s4 1966171168
    %v3548 = vunpack.c.0.s8 %v3547
    %v3549 = vlaneseq
    %v3550 = vshrl.u32 %v3549, 7
    %v3551 = vsub.s32 %v3548, %v3550
    %v3552 = vrot.slane %v3524, %v3551
    %v3553 = vcombine.low %v3531, %v3545
    %v3554 = vcombine.low %v3538, %v3552
    %v3557 = vadd.f32 %v3270, %v3553
    %v3558 = vadd.f32 %v3274, %v3554
    %v3559 = vxor.u32 %v3557, 2147483648
    %v3560 = vxor.u32 %v3558, 2147483648
    %v3561 = vmul.f32 %v3559, 1.442695
    %v3562 = vpow.pop %v3561
    %v3563 = vmul.f32 %v3560, 1.442695
    %v3564 = vpow.pop %v3563
    %v3565 = vadd.f32 %v3562, 1.0
    %v3566 = vadd.f32 %v3564, 1.0
    %v3567 = vrcp.pop %v3565
    %v3568 = vmul.f32 1.0, %v3567
    %v3569 = vrcp.pop %v3566
    %v3570 = vmul.f32 1.0, %v3569
    %v3573 = vrot.slane %v3557, 6
    %v3574 = vrot.slane %v3558, 6
    %v3577 = vtanh.pop %v3573
    %v3578 = vtanh.pop %v3574
    %v3581 = vrot.slane %v3568, 2
    %v3582 = vrot.slane %v3570, 2
    %v3585 = vmul.f32 %v3581, %v2925
    %v3586 = vmul.f32 %v3582, %v2926
    %v3587 = vmul.f32 %v3568, %v3577
    %v3588 = vmul.f32 %v3570, %v3578
    %v3589 = vadd.f32 %v3585, %v3587
    %v3590 = vadd.f32 %v3586, %v3588
    %v3591 = vtanh.pop %v3589
    %v3592 = vtanh.pop %v3590
    %v3593 = vrot.slane %v3568, 4
    %v3594 = vrot.slane %v3570, 4
    %v3597 = vmul.f32 %v3593, %v3591
    %v3598 = vmul.f32 %v3594, %v3592
    %s3599 = scalar_lea.vmem %s0, 3
    %v3600 = vld [vmem:[%s3599] ss:$8 sm:$0xf]
    %v3601 = vld [vmem:[%s3599] ss:$8 sm:$0xf0]
    %v3602 = vor.u32 %v3600, %v3601
    %s3603 = scalar_lea.vmem %s0, 67
    %v3604 = vld [vmem:[%s3603] ss:$8 sm:$0xf]
    %v3605 = vld [vmem:[%s3603] ss:$8 sm:$0xf0]
    %v3606 = vor.u32 %v3604, %v3605
    %v3609 = vlaneseq
    %v3610 = vshrl.u32 %v3609, 7
    %v3611 = vsub.s32 0, %v3610
    %v3612 = vrot.slane %v3265, %v3611
    %v3613 = vlaneseq
    %v3614 = vshrl.u32 %v3613, 7
    %v3615 = vsub.s32 1, %v3614
    %v3616 = vrot.slane %v3265, %v3615
    %v3617 = vlaneseq
    %v3618 = vshrl.u32 %v3617, 7
    %v3619 = vsub.s32 0, %v3618
    %v3620 = vrot.slane %v3266, %v3619
    %v3621 = vlaneseq
    %v3622 = vshrl.u32 %v3621, 7
    %v3623 = vsub.s32 1, %v3622
    %v3624 = vrot.slane %v3266, %v3623
    %v3629 = vpack.c.bf16 %v3612, %v3612
    %v3630 = vpack.c.bf16 %v3616, %v3616
    %v3631 = vpack.c.bf16 %v3620, %v3620
    %v3632 = vpack.c.bf16 %v3624, %v3624
    %v3637 = vunpack.c.l.b16 %v3629
    %v3638 = vunpack.c.l.b16 %v3630
    %v3639 = vunpack.c.l.b16 %v3631
    %v3640 = vunpack.c.l.b16 %v3632
    %v3641 = vrot.slane %v3639, 7
    %v3642 = vsel %vm2313, %v3641, %v3637
    %v3643 = vrot.slane %v3640, 7
    %v3644 = vsel %vm2313, %v3643, %v3638
    %v3645 = vpack.c.b16 %v3642, %v3642
    %v3646 = vpack.c.b16 %v3644, %v3644
    %3649 = vmatprep.subr.bf16.mxu0 %v768
    %3650 = vmatpush1.bf16.msra.mxu0 %v767
    %3651 = vmatprep.subr.bf16.mxu0 %v776
    %3652 = vmatpush1.bf16.msra.mxu0 %v775
    %3653 = vmatprep.subr.bf16.mxu0 %v784
    %3654 = vmatpush1.bf16.msra.mxu0 %v783
    %3655 = vmatprep.subr.bf16.mxu0 %v792
    %3656 = vmatpush1.bf16.msra.mxu0 %v791
    %3657 = vmatprep.subr.bf16.mxu0 %v800
    %3658 = vmatpush1.bf16.msra.mxu0 %v799
    %3659 = vmatprep.subr.bf16.mxu0 %v808
    %3660 = vmatpush1.bf16.msra.mxu0 %v807
    %3661 = vmatprep.subr.bf16.mxu0 %v816
    %3662 = vmatpush1.bf16.msra.mxu0 %v815
    %3663 = vmatprep.subr.bf16.mxu0 %v824
    %3664 = vmatpush1.bf16.msra.mxu0 %v823
    %3665 = vmatprep.subr.bf16.mxu0 %v832
    %3666 = vmatpush1.bf16.msra.mxu0 %v831
    %3667 = vmatprep.subr.bf16.mxu0 %v840
    %3668 = vmatpush1.bf16.msra.mxu0 %v839
    %3669 = vmatprep.subr.bf16.mxu0 %v848
    %3670 = vmatpush1.bf16.msra.mxu0 %v847
    %3671 = vmatprep.subr.bf16.mxu0 %v856
    %3672 = vmatpush1.bf16.msra.mxu0 %v855
    %3673 = vmatprep.subr.bf16.mxu0 %v864
    %3674 = vmatpush1.bf16.msra.mxu0 %v863
    %3675 = vmatprep.subr.bf16.mxu0 %v872
    %3676 = vmatpush1.bf16.msra.mxu0 %v871
    %3677 = vmatprep.subr.bf16.mxu0 %v880
    %3678 = vmatpush1.bf16.msra.mxu0 %v879
    %3679 = vmatprep.subr.bf16.mxu0 %v888
    %3680 = vmatpush1.bf16.msra.mxu0 %v887
    %3681 = vmatprep.mubr.bf16.mxu0 %v3646
    %3682 = vmatmul.mubr.bf16.gmra.mrb[0].mxu0 %v3645
    %v3683 = vpop.f32.mrb[0].mxu0
    %v3684 = vadd.f32 0.0, %v3683
    %v3685 = vpop.f32.mrb[0].mxu0
    %v3686 = vadd.f32 0.0, %v3685
    %v3687 = vpop.f32.mrb[0].mxu0
    %v3688 = vpop.f32.mrb[0].mxu0
    %3689 = vdwg.mxu0
    %3690 = vmatprep.subr.bf16.mxu0 %v770
    %3691 = vmatpush1.bf16.msra.mxu0 %v769
    %3692 = vmatprep.subr.bf16.mxu0 %v778
    %3693 = vmatpush1.bf16.msra.mxu0 %v777
    %3694 = vmatprep.subr.bf16.mxu0 %v786
    %3695 = vmatpush1.bf16.msra.mxu0 %v785
    %3696 = vmatprep.subr.bf16.mxu0 %v794
    %3697 = vmatpush1.bf16.msra.mxu0 %v793
    %3698 = vmatprep.subr.bf16.mxu0 %v802
    %3699 = vmatpush1.bf16.msra.mxu0 %v801
    %3700 = vmatprep.subr.bf16.mxu0 %v810
    %3701 = vmatpush1.bf16.msra.mxu0 %v809
    %3702 = vmatprep.subr.bf16.mxu0 %v818
    %3703 = vmatpush1.bf16.msra.mxu0 %v817
    %3704 = vmatprep.subr.bf16.mxu0 %v826
    %3705 = vmatpush1.bf16.msra.mxu0 %v825
    %3706 = vmatprep.subr.bf16.mxu0 %v834
    %3707 = vmatpush1.bf16.msra.mxu0 %v833
    %3708 = vmatprep.subr.bf16.mxu0 %v842
    %3709 = vmatpush1.bf16.msra.mxu0 %v841
    %3710 = vmatprep.subr.bf16.mxu0 %v850
    %3711 = vmatpush1.bf16.msra.mxu0 %v849
    %3712 = vmatprep.subr.bf16.mxu0 %v858
    %3713 = vmatpush1.bf16.msra.mxu0 %v857
    %3714 = vmatprep.subr.bf16.mxu0 %v866
    %3715 = vmatpush1.bf16.msra.mxu0 %v865
    %3716 = vmatprep.subr.bf16.mxu0 %v874
    %3717 = vmatpush1.bf16.msra.mxu0 %v873
    %3718 = vmatprep.subr.bf16.mxu0 %v882
    %3719 = vmatpush1.bf16.msra.mxu0 %v881
    %3720 = vmatprep.subr.bf16.mxu0 %v890
    %3721 = vmatpush1.bf16.msra.mxu0 %v889
    %3722 = vmatprep.mubr.bf16.mxu0 %v3646
    %3723 = vmatmul.mubr.bf16.gmra.mrb[0].mxu0 %v3645
    %v3724 = vpop.f32.mrb[0].mxu0
    %v3725 = vadd.f32 0.0, %v3724
    %v3726 = vpop.f32.mrb[0].mxu0
    %v3727 = vadd.f32 0.0, %v3726
    %v3728 = vpop.f32.mrb[0].mxu0
    %v3729 = vpop.f32.mrb[0].mxu0
    %3730 = vdwg.mxu0
    %3731 = vmatprep.subr.bf16.mxu0 %v772
    %3732 = vmatpush1.bf16.msra.mxu0 %v771
    %3733 = vmatprep.subr.bf16.mxu0 %v780
    %3734 = vmatpush1.bf16.msra.mxu0 %v779
    %3735 = vmatprep.subr.bf16.mxu0 %v788
    %3736 = vmatpush1.bf16.msra.mxu0 %v787
    %3737 = vmatprep.subr.bf16.mxu0 %v796
    %3738 = vmatpush1.bf16.msra.mxu0 %v795
    %3739 = vmatprep.subr.bf16.mxu0 %v804
    %3740 = vmatpush1.bf16.msra.mxu0 %v803
    %3741 = vmatprep.subr.bf16.mxu0 %v812
    %3742 = vmatpush1.bf16.msra.mxu0 %v811
    %3743 = vmatprep.subr.bf16.mxu0 %v820
    %3744 = vmatpush1.bf16.msra.mxu0 %v819
    %3745 = vmatprep.subr.bf16.mxu0 %v828
    %3746 = vmatpush1.bf16.msra.mxu0 %v827
    %3747 = vmatprep.subr.bf16.mxu0 %v836
    %3748 = vmatpush1.bf16.msra.mxu0 %v835
    %3749 = vmatprep.subr.bf16.mxu0 %v844
    %3750 = vmatpush1.bf16.msra.mxu0 %v843
    %3751 = vmatprep.subr.bf16.mxu0 %v852
    %3752 = vmatpush1.bf16.msra.mxu0 %v851
    %3753 = vmatprep.subr.bf16.mxu0 %v860
    %3754 = vmatpush1.bf16.msra.mxu0 %v859
    %3755 = vmatprep.subr.bf16.mxu0 %v868
    %3756 = vmatpush1.bf16.msra.mxu0 %v867
    %3757 = vmatprep.subr.bf16.mxu0 %v876
    %3758 = vmatpush1.bf16.msra.mxu0 %v875
    %3759 = vmatprep.subr.bf16.mxu0 %v884
    %3760 = vmatpush1.bf16.msra.mxu0 %v883
    %3761 = vmatprep.subr.bf16.mxu0 %v892
    %3762 = vmatpush1.bf16.msra.mxu0 %v891
    %3763 = vmatprep.mubr.bf16.mxu0 %v3646
    %3764 = vmatmul.mubr.bf16.gmra.mrb[0].mxu0 %v3645
    %v3765 = vpop.f32.mrb[0].mxu0
    %v3766 = vadd.f32 0.0, %v3765
    %v3767 = vpop.f32.mrb[0].mxu0
    %v3768 = vadd.f32 0.0, %v3767
    %v3769 = vpop.f32.mrb[0].mxu0
    %v3770 = vpop.f32.mrb[0].mxu0
    %3771 = vdwg.mxu0
    %3772 = vmatprep.subr.bf16.mxu0 %v774
    %3773 = vmatpush1.bf16.msra.mxu0 %v773
    %3774 = vmatprep.subr.bf16.mxu0 %v782
    %3775 = vmatpush1.bf16.msra.mxu0 %v781
    %3776 = vmatprep.subr.bf16.mxu0 %v790
    %3777 = vmatpush1.bf16.msra.mxu0 %v789
    %3778 = vmatprep.subr.bf16.mxu0 %v798
    %3779 = vmatpush1.bf16.msra.mxu0 %v797
    %3780 = vmatprep.subr.bf16.mxu0 %v806
    %3781 = vmatpush1.bf16.msra.mxu0 %v805
    %3782 = vmatprep.subr.bf16.mxu0 %v814
    %3783 = vmatpush1.bf16.msra.mxu0 %v813
    %3784 = vmatprep.subr.bf16.mxu0 %v822
    %3785 = vmatpush1.bf16.msra.mxu0 %v821
    %3786 = vmatprep.subr.bf16.mxu0 %v830
    %3787 = vmatpush1.bf16.msra.mxu0 %v829
    %3788 = vmatprep.subr.bf16.mxu0 %v838
    %3789 = vmatpush1.bf16.msra.mxu0 %v837
    %3790 = vmatprep.subr.bf16.mxu0 %v846
    %3791 = vmatpush1.bf16.msra.mxu0 %v845
    %3792 = vmatprep.subr.bf16.mxu0 %v854
    %3793 = vmatpush1.bf16.msra.mxu0 %v853
    %3794 = vmatprep.subr.bf16.mxu0 %v862
    %3795 = vmatpush1.bf16.msra.mxu0 %v861
    %3796 = vmatprep.subr.bf16.mxu0 %v870
    %3797 = vmatpush1.bf16.msra.mxu0 %v869
    %3798 = vmatprep.subr.bf16.mxu0 %v878
    %3799 = vmatpush1.bf16.msra.mxu0 %v877
    %3800 = vmatprep.subr.bf16.mxu0 %v886
    %3801 = vmatpush1.bf16.msra.mxu0 %v885
    %3802 = vmatprep.subr.bf16.mxu0 %v894
    %3803 = vmatpush1.bf16.msra.mxu0 %v893
    %3804 = vmatprep.mubr.bf16.mxu0 %v3646
    %3805 = vmatmul.mubr.bf16.gmra.mrb[0].mxu0 %v3645
    %v3806 = vpop.f32.mrb[0].mxu0
    %v3807 = vadd.f32 0.0, %v3806
    %v3808 = vpop.f32.mrb[0].mxu0
    %v3809 = vadd.f32 0.0, %v3808
    %v3810 = vpop.f32.mrb[0].mxu0
    %v3811 = vpop.f32.mrb[0].mxu0
    %3812 = vdwg.mxu0
    %v3821 = vcombine.low %v3684, %v3686
    %v3822 = vcombine.low %v3725, %v3727
    %v3823 = vcombine.low %v3766, %v3768
    %v3824 = vcombine.low %v3807, %v3809
    %v3826 = vunpack.c.l.s4 1966171168
    %v3827 = vunpack.c.0.s8 %v3826
    %v3828 = vlaneseq
    %v3829 = vshrl.u32 %v3828, 7
    %v3830 = vsub.s32 %v3827, %v3829
    %v3831 = vrot.slane %v3821, %v3830
    %v3833 = vunpack.c.l.s4 1966171168
    %v3834 = vunpack.c.0.s8 %v3833
    %v3835 = vlaneseq
    %v3836 = vshrl.u32 %v3835, 7
    %v3837 = vsub.s32 %v3834, %v3836
    %v3838 = vrot.slane %v3822, %v3837
    %v3840 = vunpack.c.l.s4 1966171168
    %v3841 = vunpack.c.0.s8 %v3840
    %v3842 = vlaneseq
    %v3843 = vshrl.u32 %v3842, 7
    %v3844 = vsub.s32 %v3841, %v3843
    %v3845 = vrot.slane %v3823, %v3844
    %v3847 = vunpack.c.l.s4 1966171168
    %v3848 = vunpack.c.0.s8 %v3847
    %v3849 = vlaneseq
    %v3850 = vshrl.u32 %v3849, 7
    %v3851 = vsub.s32 %v3848, %v3850
    %v3852 = vrot.slane %v3824, %v3851
    %v3853 = vcombine.low %v3831, %v3838
    %v3854 = vcombine.high %v3831, %v3838
    %v3855 = vcombine.low %v3845, %v3852
    %v3856 = vcombine.high %v3845, %v3852
    %v3858 = vunpack.c.l.s4 1966171168
    %v3859 = vunpack.c.0.s8 %v3858
    %v3860 = vlaneseq
    %v3861 = vshrl.u32 %v3860, 7
    %v3862 = vsub.s32 %v3859, %v3861
    %v3863 = vrot.slane %v3853, %v3862
    %v3865 = vunpack.c.l.s4 1966171168
    %v3866 = vunpack.c.0.s8 %v3865
    %v3867 = vlaneseq
    %v3868 = vshrl.u32 %v3867, 7
    %v3869 = vsub.s32 %v3866, %v3868
    %v3870 = vrot.slane %v3854, %v3869
    %v3872 = vunpack.c.l.s4 1966171168
    %v3873 = vunpack.c.0.s8 %v3872
    %v3874 = vlaneseq
    %v3875 = vshrl.u32 %v3874, 7
    %v3876 = vsub.s32 %v3873, %v3875
    %v3877 = vrot.slane %v3855, %v3876
    %v3879 = vunpack.c.l.s4 1966171168
    %v3880 = vunpack.c.0.s8 %v3879
    %v3881 = vlaneseq
    %v3882 = vshrl.u32 %v3881, 7
    %v3883 = vsub.s32 %v3880, %v3882
    %v3884 = vrot.slane %v3856, %v3883
    %v3885 = vcombine.low %v3863, %v3877
    %v3886 = vcombine.low %v3870, %v3884
    %v3889 = vadd.f32 %v3602, %v3885
    %v3890 = vadd.f32 %v3606, %v3886
    %v3891 = vxor.u32 %v3889, 2147483648
    %v3892 = vxor.u32 %v3890, 2147483648
    %v3893 = vmul.f32 %v3891, 1.442695
    %v3894 = vpow.pop %v3893
    %v3895 = vmul.f32 %v3892, 1.442695
    %v3896 = vpow.pop %v3895
    %v3897 = vadd.f32 %v3894, 1.0
    %v3898 = vadd.f32 %v3896, 1.0
    %v3899 = vrcp.pop %v3897
    %v3900 = vmul.f32 1.0, %v3899
    %v3901 = vrcp.pop %v3898
    %v3902 = vmul.f32 1.0, %v3901
    %v3905 = vrot.slane %v3889, 6
    %v3906 = vrot.slane %v3890, 6
    %v3909 = vtanh.pop %v3905
    %v3910 = vtanh.pop %v3906
    %v3913 = vrot.slane %v3900, 2
    %v3914 = vrot.slane %v3902, 2
    %v3917 = vmul.f32 %v3913, %v3257
    %v3918 = vmul.f32 %v3914, %v3258
    %v3919 = vmul.f32 %v3900, %v3909
    %v3920 = vmul.f32 %v3902, %v3910
    %v3921 = vadd.f32 %v3917, %v3919
    %v3922 = vadd.f32 %v3918, %v3920
    %v3923 = vtanh.pop %v3921
    %v3924 = vtanh.pop %v3922
    %v3925 = vrot.slane %v3900, 4
    %v3926 = vrot.slane %v3902, 4
    %v3929 = vmul.f32 %v3925, %v3923
    %v3930 = vmul.f32 %v3926, %v3924
    %s3931 = scalar_lea.vmem %s93, 4
    %v3932 = vld [vmem:[%s3931] ss:$8 sm:$0xf]
    %v3933 = vld [vmem:[%s3931] ss:$8 sm:$0xf0]
    %v3934 = vor.u32 %v3932, %v3933
    %s3935 = scalar_lea.vmem %s93, 68
    %v3936 = vld [vmem:[%s3935] ss:$8 sm:$0xf]
    %v3937 = vld [vmem:[%s3935] ss:$8 sm:$0xf0]
    %v3938 = vor.u32 %v3936, %v3937
    %v3941 = vlaneseq
    %v3942 = vshrl.u32 %v3941, 7
    %v3943 = vsub.s32 0, %v3942
    %v3944 = vrot.slane %v3597, %v3943
    %v3945 = vlaneseq
    %v3946 = vshrl.u32 %v3945, 7
    %v3947 = vsub.s32 1, %v3946
    %v3948 = vrot.slane %v3597, %v3947
    %v3949 = vlaneseq
    %v3950 = vshrl.u32 %v3949, 7
    %v3951 = vsub.s32 0, %v3950
    %v3952 = vrot.slane %v3598, %v3951
    %v3953 = vlaneseq
    %v3954 = vshrl.u32 %v3953, 7
    %v3955 = vsub.s32 1, %v3954
    %v3956 = vrot.slane %v3598, %v3955
    %v3961 = vpack.c.bf16 %v3944, %v3944
    %v3962 = vpack.c.bf16 %v3948, %v3948
    %v3963 = vpack.c.bf16 %v3952, %v3952
    %v3964 = vpack.c.bf16 %v3956, %v3956
    %v3969 = vunpack.c.l.b16 %v3961
    %v3970 = vunpack.c.l.b16 %v3962
    %v3971 = vunpack.c.l.b16 %v3963
    %v3972 = vunpack.c.l.b16 %v3964
    %v3973 = vrot.slane %v3971, 7
    %v3974 = vsel %vm2313, %v3973, %v3969
    %v3975 = vrot.slane %v3972, 7
    %v3976 = vsel %vm2313, %v3975, %v3970
    %v3977 = vpack.c.b16 %v3974, %v3974
    %v3978 = vpack.c.b16 %v3976, %v3976
    %3981 = vmatprep.subr.bf16.mxu0 %v1722
    %3982 = vmatpush1.bf16.msra.mxu0 %v1721
    %3983 = vmatprep.subr.bf16.mxu0 %v1730
    %3984 = vmatpush1.bf16.msra.mxu0 %v1729
    %3985 = vmatprep.subr.bf16.mxu0 %v1738
    %3986 = vmatpush1.bf16.msra.mxu0 %v1737
    %3987 = vmatprep.subr.bf16.mxu0 %v1746
    %3988 = vmatpush1.bf16.msra.mxu0 %v1745
    %3989 = vmatprep.subr.bf16.mxu0 %v1754
    %3990 = vmatpush1.bf16.msra.mxu0 %v1753
    %3991 = vmatprep.subr.bf16.mxu0 %v1762
    %3992 = vmatpush1.bf16.msra.mxu0 %v1761
    %3993 = vmatprep.subr.bf16.mxu0 %v1770
    %3994 = vmatpush1.bf16.msra.mxu0 %v1769
    %3995 = vmatprep.subr.bf16.mxu0 %v1778
    %3996 = vmatpush1.bf16.msra.mxu0 %v1777
    %3997 = vmatprep.subr.bf16.mxu0 %v1786
    %3998 = vmatpush1.bf16.msra.mxu0 %v1785
    %3999 = vmatprep.subr.bf16.mxu0 %v1794
    %4000 = vmatpush1.bf16.msra.mxu0 %v1793
    %4001 = vmatprep.subr.bf16.mxu0 %v1802
    %4002 = vmatpush1.bf16.msra.mxu0 %v1801
    %4003 = vmatprep.subr.bf16.mxu0 %v1810
    %4004 = vmatpush1.bf16.msra.mxu0 %v1809
    %4005 = vmatprep.subr.bf16.mxu0 %v1818
    %4006 = vmatpush1.bf16.msra.mxu0 %v1817
    %4007 = vmatprep.subr.bf16.mxu0 %v1826
    %4008 = vmatpush1.bf16.msra.mxu0 %v1825
    %4009 = vmatprep.subr.bf16.mxu0 %v1834
    %4010 = vmatpush1.bf16.msra.mxu0 %v1833
    %4011 = vmatprep.subr.bf16.mxu0 %v1842
    %4012 = vmatpush1.bf16.msra.mxu0 %v1841
    %4013 = vmatprep.mubr.bf16.mxu0 %v3978
    %4014 = vmatmul.mubr.bf16.gmra.mrb[0].mxu0 %v3977
    %v4015 = vpop.f32.mrb[0].mxu0
    %v4016 = vadd.f32 0.0, %v4015
    %v4017 = vpop.f32.mrb[0].mxu0
    %v4018 = vadd.f32 0.0, %v4017
    %v4019 = vpop.f32.mrb[0].mxu0
    %v4020 = vpop.f32.mrb[0].mxu0
    %4021 = vdwg.mxu0
    %4022 = vmatprep.subr.bf16.mxu0 %v1724
    %4023 = vmatpush1.bf16.msra.mxu0 %v1723
    %4024 = vmatprep.subr.bf16.mxu0 %v1732
    %4025 = vmatpush1.bf16.msra.mxu0 %v1731
    %4026 = vmatprep.subr.bf16.mxu0 %v1740
    %4027 = vmatpush1.bf16.msra.mxu0 %v1739
    %4028 = vmatprep.subr.bf16.mxu0 %v1748
    %4029 = vmatpush1.bf16.msra.mxu0 %v1747
    %4030 = vmatprep.subr.bf16.mxu0 %v1756
    %4031 = vmatpush1.bf16.msra.mxu0 %v1755
    %4032 = vmatprep.subr.bf16.mxu0 %v1764
    %4033 = vmatpush1.bf16.msra.mxu0 %v1763
    %4034 = vmatprep.subr.bf16.mxu0 %v1772
    %4035 = vmatpush1.bf16.msra.mxu0 %v1771
    %4036 = vmatprep.subr.bf16.mxu0 %v1780
    %4037 = vmatpush1.bf16.msra.mxu0 %v1779
    %4038 = vmatprep.subr.bf16.mxu0 %v1788
    %4039 = vmatpush1.bf16.msra.mxu0 %v1787
    %4040 = vmatprep.subr.bf16.mxu0 %v1796
    %4041 = vmatpush1.bf16.msra.mxu0 %v1795
    %4042 = vmatprep.subr.bf16.mxu0 %v1804
    %4043 = vmatpush1.bf16.msra.mxu0 %v1803
    %4044 = vmatprep.subr.bf16.mxu0 %v1812
    %4045 = vmatpush1.bf16.msra.mxu0 %v1811
    %4046 = vmatprep.subr.bf16.mxu0 %v1820
    %4047 = vmatpush1.bf16.msra.mxu0 %v1819
    %4048 = vmatprep.subr.bf16.mxu0 %v1828
    %4049 = vmatpush1.bf16.msra.mxu0 %v1827
    %4050 = vmatprep.subr.bf16.mxu0 %v1836
    %4051 = vmatpush1.bf16.msra.mxu0 %v1835
    %4052 = vmatprep.subr.bf16.mxu0 %v1844
    %4053 = vmatpush1.bf16.msra.mxu0 %v1843
    %4054 = vmatprep.mubr.bf16.mxu0 %v3978
    %4055 = vmatmul.mubr.bf16.gmra.mrb[0].mxu0 %v3977
    %v4056 = vpop.f32.mrb[0].mxu0
    %v4057 = vadd.f32 0.0, %v4056
    %v4058 = vpop.f32.mrb[0].mxu0
    %v4059 = vadd.f32 0.0, %v4058
    %v4060 = vpop.f32.mrb[0].mxu0
    %v4061 = vpop.f32.mrb[0].mxu0
    %4062 = vdwg.mxu0
    %4063 = vmatprep.subr.bf16.mxu0 %v1726
    %4064 = vmatpush1.bf16.msra.mxu0 %v1725
    %4065 = vmatprep.subr.bf16.mxu0 %v1734
    %4066 = vmatpush1.bf16.msra.mxu0 %v1733
    %4067 = vmatprep.subr.bf16.mxu0 %v1742
    %4068 = vmatpush1.bf16.msra.mxu0 %v1741
    %4069 = vmatprep.subr.bf16.mxu0 %v1750
    %4070 = vmatpush1.bf16.msra.mxu0 %v1749
    %4071 = vmatprep.subr.bf16.mxu0 %v1758
    %4072 = vmatpush1.bf16.msra.mxu0 %v1757
    %4073 = vmatprep.subr.bf16.mxu0 %v1766
    %4074 = vmatpush1.bf16.msra.mxu0 %v1765
    %4075 = vmatprep.subr.bf16.mxu0 %v1774
    %4076 = vmatpush1.bf16.msra.mxu0 %v1773
    %4077 = vmatprep.subr.bf16.mxu0 %v1782
    %4078 = vmatpush1.bf16.msra.mxu0 %v1781
    %4079 = vmatprep.subr.bf16.mxu0 %v1790
    %4080 = vmatpush1.bf16.msra.mxu0 %v1789
    %4081 = vmatprep.subr.bf16.mxu0 %v1798
    %4082 = vmatpush1.bf16.msra.mxu0 %v1797
    %4083 = vmatprep.subr.bf16.mxu0 %v1806
    %4084 = vmatpush1.bf16.msra.mxu0 %v1805
    %4085 = vmatprep.subr.bf16.mxu0 %v1814
    %4086 = vmatpush1.bf16.msra.mxu0 %v1813
    %4087 = vmatprep.subr.bf16.mxu0 %v1822
    %4088 = vmatpush1.bf16.msra.mxu0 %v1821
    %4089 = vmatprep.subr.bf16.mxu0 %v1830
    %4090 = vmatpush1.bf16.msra.mxu0 %v1829
    %4091 = vmatprep.subr.bf16.mxu0 %v1838
    %4092 = vmatpush1.bf16.msra.mxu0 %v1837
    %4093 = vmatprep.subr.bf16.mxu0 %v1846
    %4094 = vmatpush1.bf16.msra.mxu0 %v1845
    %4095 = vmatprep.mubr.bf16.mxu0 %v3978
    %4096 = vmatmul.mubr.bf16.gmra.mrb[0].mxu0 %v3977
    %v4097 = vpop.f32.mrb[0].mxu0
    %v4098 = vadd.f32 0.0, %v4097
    %v4099 = vpop.f32.mrb[0].mxu0
    %v4100 = vadd.f32 0.0, %v4099
    %v4101 = vpop.f32.mrb[0].mxu0
    %v4102 = vpop.f32.mrb[0].mxu0
    %4103 = vdwg.mxu0
    %4104 = vmatprep.subr.bf16.mxu0 %v1728
    %4105 = vmatpush1.bf16.msra.mxu0 %v1727
    %4106 = vmatprep.subr.bf16.mxu0 %v1736
    %4107 = vmatpush1.bf16.msra.mxu0 %v1735
    %4108 = vmatprep.subr.bf16.mxu0 %v1744
    %4109 = vmatpush1.bf16.msra.mxu0 %v1743
    %4110 = vmatprep.subr.bf16.mxu0 %v1752
    %4111 = vmatpush1.bf16.msra.mxu0 %v1751
    %4112 = vmatprep.subr.bf16.mxu0 %v1760
    %4113 = vmatpush1.bf16.msra.mxu0 %v1759
    %4114 = vmatprep.subr.bf16.mxu0 %v1768
    %4115 = vmatpush1.bf16.msra.mxu0 %v1767
    %4116 = vmatprep.subr.bf16.mxu0 %v1776
    %4117 = vmatpush1.bf16.msra.mxu0 %v1775
    %4118 = vmatprep.subr.bf16.mxu0 %v1784
    %4119 = vmatpush1.bf16.msra.mxu0 %v1783
    %4120 = vmatprep.subr.bf16.mxu0 %v1792
    %4121 = vmatpush1.bf16.msra.mxu0 %v1791
    %4122 = vmatprep.subr.bf16.mxu0 %v1800
    %4123 = vmatpush1.bf16.msra.mxu0 %v1799
    %4124 = vmatprep.subr.bf16.mxu0 %v1808
    %4125 = vmatpush1.bf16.msra.mxu0 %v1807
    %4126 = vmatprep.subr.bf16.mxu0 %v1816
    %4127 = vmatpush1.bf16.msra.mxu0 %v1815
    %4128 = vmatprep.subr.bf16.mxu0 %v1824
    %4129 = vmatpush1.bf16.msra.mxu0 %v1823
    %4130 = vmatprep.subr.bf16.mxu0 %v1832
    %4131 = vmatpush1.bf16.msra.mxu0 %v1831
    %4132 = vmatprep.subr.bf16.mxu0 %v1840
    %4133 = vmatpush1.bf16.msra.mxu0 %v1839
    %4134 = vmatprep.subr.bf16.mxu0 %v1848
    %4135 = vmatpush1.bf16.msra.mxu0 %v1847
    %4136 = vmatprep.mubr.bf16.mxu0 %v3978
    %4137 = vmatmul.mubr.bf16.gmra.mrb[0].mxu0 %v3977
    %v4138 = vpop.f32.mrb[0].mxu0
    %v4139 = vadd.f32 0.0, %v4138
    %v4140 = vpop.f32.mrb[0].mxu0
    %v4141 = vadd.f32 0.0, %v4140
    %v4142 = vpop.f32.mrb[0].mxu0
    %v4143 = vpop.f32.mrb[0].mxu0
    %4144 = vdwg.mxu0
    %v4153 = vcombine.low %v4016, %v4018
    %v4154 = vcombine.low %v4057, %v4059
    %v4155 = vcombine.low %v4098, %v4100
    %v4156 = vcombine.low %v4139, %v4141
    %v4158 = vunpack.c.l.s4 1966171168
    %v4159 = vunpack.c.0.s8 %v4158
    %v4160 = vlaneseq
    %v4161 = vshrl.u32 %v4160, 7
    %v4162 = vsub.s32 %v4159, %v4161
    %v4163 = vrot.slane %v4153, %v4162
    %v4165 = vunpack.c.l.s4 1966171168
    %v4166 = vunpack.c.0.s8 %v4165
    %v4167 = vlaneseq
    %v4168 = vshrl.u32 %v4167, 7
    %v4169 = vsub.s32 %v4166, %v4168
    %v4170 = vrot.slane %v4154, %v4169
    %v4172 = vunpack.c.l.s4 1966171168
    %v4173 = vunpack.c.0.s8 %v4172
    %v4174 = vlaneseq
    %v4175 = vshrl.u32 %v4174, 7
    %v4176 = vsub.s32 %v4173, %v4175
    %v4177 = vrot.slane %v4155, %v4176
    %v4179 = vunpack.c.l.s4 1966171168
    %v4180 = vunpack.c.0.s8 %v4179
    %v4181 = vlaneseq
    %v4182 = vshrl.u32 %v4181, 7
    %v4183 = vsub.s32 %v4180, %v4182
    %v4184 = vrot.slane %v4156, %v4183
    %v4185 = vcombine.low %v4163, %v4170
    %v4186 = vcombine.high %v4163, %v4170
    %v4187 = vcombine.low %v4177, %v4184
    %v4188 = vcombine.high %v4177, %v4184
    %v4190 = vunpack.c.l.s4 1966171168
    %v4191 = vunpack.c.0.s8 %v4190
    %v4192 = vlaneseq
    %v4193 = vshrl.u32 %v4192, 7
    %v4194 = vsub.s32 %v4191, %v4193
    %v4195 = vrot.slane %v4185, %v4194
    %v4197 = vunpack.c.l.s4 1966171168
    %v4198 = vunpack.c.0.s8 %v4197
    %v4199 = vlaneseq
    %v4200 = vshrl.u32 %v4199, 7
    %v4201 = vsub.s32 %v4198, %v4200
    %v4202 = vrot.slane %v4186, %v4201
    %v4204 = vunpack.c.l.s4 1966171168
    %v4205 = vunpack.c.0.s8 %v4204
    %v4206 = vlaneseq
    %v4207 = vshrl.u32 %v4206, 7
    %v4208 = vsub.s32 %v4205, %v4207
    %v4209 = vrot.slane %v4187, %v4208
    %v4211 = vunpack.c.l.s4 1966171168
    %v4212 = vunpack.c.0.s8 %v4211
    %v4213 = vlaneseq
    %v4214 = vshrl.u32 %v4213, 7
    %v4215 = vsub.s32 %v4212, %v4214
    %v4216 = vrot.slane %v4188, %v4215
    %v4217 = vcombine.low %v4195, %v4209
    %v4218 = vcombine.low %v4202, %v4216
    %v4221 = vadd.f32 %v3934, %v4217
    %v4222 = vadd.f32 %v3938, %v4218
    %v4223 = vxor.u32 %v4221, 2147483648
    %v4224 = vxor.u32 %v4222, 2147483648
    %v4225 = vmul.f32 %v4223, 1.442695
    %v4226 = vpow.pop %v4225
    %v4227 = vmul.f32 %v4224, 1.442695
    %v4228 = vpow.pop %v4227
    %v4229 = vadd.f32 %v4226, 1.0
    %v4230 = vadd.f32 %v4228, 1.0
    %v4231 = vrcp.pop %v4229
    %v4232 = vmul.f32 1.0, %v4231
    %v4233 = vrcp.pop %v4230
    %v4234 = vmul.f32 1.0, %v4233
    %v4237 = vrot.slane %v4221, 6
    %v4238 = vrot.slane %v4222, 6
    %v4241 = vtanh.pop %v4237
    %v4242 = vtanh.pop %v4238
    %v4245 = vrot.slane %v4232, 2
    %v4246 = vrot.slane %v4234, 2
    %v4249 = vmul.f32 %v4245, %v3589
    %v4250 = vmul.f32 %v4246, %v3590
    %v4251 = vmul.f32 %v4232, %v4241
    %v4252 = vmul.f32 %v4234, %v4242
    %v4253 = vadd.f32 %v4249, %v4251
    %v4254 = vadd.f32 %v4250, %v4252
    %v4255 = vtanh.pop %v4253
    %v4256 = vtanh.pop %v4254
    %v4257 = vrot.slane %v4232, 4
    %v4258 = vrot.slane %v4234, 4
    %v4261 = vmul.f32 %v4257, %v4255
    %v4262 = vmul.f32 %v4258, %v4256
    %s4263 = scalar_lea.vmem %s0, 4
    %v4264 = vld [vmem:[%s4263] ss:$8 sm:$0xf]
    %v4265 = vld [vmem:[%s4263] ss:$8 sm:$0xf0]
    %v4266 = vor.u32 %v4264, %v4265
    %s4267 = scalar_lea.vmem %s0, 68
    %v4268 = vld [vmem:[%s4267] ss:$8 sm:$0xf]
    %v4269 = vld [vmem:[%s4267] ss:$8 sm:$0xf0]
    %v4270 = vor.u32 %v4268, %v4269
    %v4273 = vlaneseq
    %v4274 = vshrl.u32 %v4273, 7
    %v4275 = vsub.s32 0, %v4274
    %v4276 = vrot.slane %v3929, %v4275
    %v4277 = vlaneseq
    %v4278 = vshrl.u32 %v4277, 7
    %v4279 = vsub.s32 1, %v4278
    %v4280 = vrot.slane %v3929, %v4279
    %v4281 = vlaneseq
    %v4282 = vshrl.u32 %v4281, 7
    %v4283 = vsub.s32 0, %v4282
    %v4284 = vrot.slane %v3930, %v4283
    %v4285 = vlaneseq
    %v4286 = vshrl.u32 %v4285, 7
    %v4287 = vsub.s32 1, %v4286
    %v4288 = vrot.slane %v3930, %v4287
    %v4293 = vpack.c.bf16 %v4276, %v4276
    %v4294 = vpack.c.bf16 %v4280, %v4280
    %v4295 = vpack.c.bf16 %v4284, %v4284
    %v4296 = vpack.c.bf16 %v4288, %v4288
    %v4301 = vunpack.c.l.b16 %v4293
    %v4302 = vunpack.c.l.b16 %v4294
    %v4303 = vunpack.c.l.b16 %v4295
    %v4304 = vunpack.c.l.b16 %v4296
    %v4305 = vrot.slane %v4303, 7
    %v4306 = vsel %vm2313, %v4305, %v4301
    %v4307 = vrot.slane %v4304, 7
    %v4308 = vsel %vm2313, %v4307, %v4302
    %v4309 = vpack.c.b16 %v4306, %v4306
    %v4310 = vpack.c.b16 %v4308, %v4308
    %4313 = vmatprep.subr.bf16.mxu0 %v768
    %4314 = vmatpush1.bf16.msra.mxu0 %v767
    %4315 = vmatprep.subr.bf16.mxu0 %v776
    %4316 = vmatpush1.bf16.msra.mxu0 %v775
    %4317 = vmatprep.subr.bf16.mxu0 %v784
    %4318 = vmatpush1.bf16.msra.mxu0 %v783
    %4319 = vmatprep.subr.bf16.mxu0 %v792
    %4320 = vmatpush1.bf16.msra.mxu0 %v791
    %4321 = vmatprep.subr.bf16.mxu0 %v800
    %4322 = vmatpush1.bf16.msra.mxu0 %v799
    %4323 = vmatprep.subr.bf16.mxu0 %v808
    %4324 = vmatpush1.bf16.msra.mxu0 %v807
    %4325 = vmatprep.subr.bf16.mxu0 %v816
    %4326 = vmatpush1.bf16.msra.mxu0 %v815
    %4327 = vmatprep.subr.bf16.mxu0 %v824
    %4328 = vmatpush1.bf16.msra.mxu0 %v823
    %4329 = vmatprep.subr.bf16.mxu0 %v832
    %4330 = vmatpush1.bf16.msra.mxu0 %v831
    %4331 = vmatprep.subr.bf16.mxu0 %v840
    %4332 = vmatpush1.bf16.msra.mxu0 %v839
    %4333 = vmatprep.subr.bf16.mxu0 %v848
    %4334 = vmatpush1.bf16.msra.mxu0 %v847
    %4335 = vmatprep.subr.bf16.mxu0 %v856
    %4336 = vmatpush1.bf16.msra.mxu0 %v855
    %4337 = vmatprep.subr.bf16.mxu0 %v864
    %4338 = vmatpush1.bf16.msra.mxu0 %v863
    %4339 = vmatprep.subr.bf16.mxu0 %v872
    %4340 = vmatpush1.bf16.msra.mxu0 %v871
    %4341 = vmatprep.subr.bf16.mxu0 %v880
    %4342 = vmatpush1.bf16.msra.mxu0 %v879
    %4343 = vmatprep.subr.bf16.mxu0 %v888
    %4344 = vmatpush1.bf16.msra.mxu0 %v887
    %4345 = vmatprep.mubr.bf16.mxu0 %v4310
    %4346 = vmatmul.mubr.bf16.gmra.mrb[0].mxu0 %v4309
    %v4347 = vpop.f32.mrb[0].mxu0
    %v4348 = vadd.f32 0.0, %v4347
    %v4349 = vpop.f32.mrb[0].mxu0
    %v4350 = vadd.f32 0.0, %v4349
    %v4351 = vpop.f32.mrb[0].mxu0
    %v4352 = vpop.f32.mrb[0].mxu0
    %4353 = vdwg.mxu0
    %4354 = vmatprep.subr.bf16.mxu0 %v770
    %4355 = vmatpush1.bf16.msra.mxu0 %v769
    %4356 = vmatprep.subr.bf16.mxu0 %v778
    %4357 = vmatpush1.bf16.msra.mxu0 %v777
    %4358 = vmatprep.subr.bf16.mxu0 %v786
    %4359 = vmatpush1.bf16.msra.mxu0 %v785
    %4360 = vmatprep.subr.bf16.mxu0 %v794
    %4361 = vmatpush1.bf16.msra.mxu0 %v793
    %4362 = vmatprep.subr.bf16.mxu0 %v802
    %4363 = vmatpush1.bf16.msra.mxu0 %v801
    %4364 = vmatprep.subr.bf16.mxu0 %v810
    %4365 = vmatpush1.bf16.msra.mxu0 %v809
    %4366 = vmatprep.subr.bf16.mxu0 %v818
    %4367 = vmatpush1.bf16.msra.mxu0 %v817
    %4368 = vmatprep.subr.bf16.mxu0 %v826
    %4369 = vmatpush1.bf16.msra.mxu0 %v825
    %4370 = vmatprep.subr.bf16.mxu0 %v834
    %4371 = vmatpush1.bf16.msra.mxu0 %v833
    %4372 = vmatprep.subr.bf16.mxu0 %v842
    %4373 = vmatpush1.bf16.msra.mxu0 %v841
    %4374 = vmatprep.subr.bf16.mxu0 %v850
    %4375 = vmatpush1.bf16.msra.mxu0 %v849
    %4376 = vmatprep.subr.bf16.mxu0 %v858
    %4377 = vmatpush1.bf16.msra.mxu0 %v857
    %4378 = vmatprep.subr.bf16.mxu0 %v866
    %4379 = vmatpush1.bf16.msra.mxu0 %v865
    %4380 = vmatprep.subr.bf16.mxu0 %v874
    %4381 = vmatpush1.bf16.msra.mxu0 %v873
    %4382 = vmatprep.subr.bf16.mxu0 %v882
    %4383 = vmatpush1.bf16.msra.mxu0 %v881
    %4384 = vmatprep.subr.bf16.mxu0 %v890
    %4385 = vmatpush1.bf16.msra.mxu0 %v889
    %4386 = vmatprep.mubr.bf16.mxu0 %v4310
    %4387 = vmatmul.mubr.bf16.gmra.mrb[0].mxu0 %v4309
    %v4388 = vpop.f32.mrb[0].mxu0
    %v4389 = vadd.f32 0.0, %v4388
    %v4390 = vpop.f32.mrb[0].mxu0
    %v4391 = vadd.f32 0.0, %v4390
    %v4392 = vpop.f32.mrb[0].mxu0
    %v4393 = vpop.f32.mrb[0].mxu0
    %4394 = vdwg.mxu0
    %4395 = vmatprep.subr.bf16.mxu0 %v772
    %4396 = vmatpush1.bf16.msra.mxu0 %v771
    %4397 = vmatprep.subr.bf16.mxu0 %v780
    %4398 = vmatpush1.bf16.msra.mxu0 %v779
    %4399 = vmatprep.subr.bf16.mxu0 %v788
    %4400 = vmatpush1.bf16.msra.mxu0 %v787
    %4401 = vmatprep.subr.bf16.mxu0 %v796
    %4402 = vmatpush1.bf16.msra.mxu0 %v795
    %4403 = vmatprep.subr.bf16.mxu0 %v804
    %4404 = vmatpush1.bf16.msra.mxu0 %v803
    %4405 = vmatprep.subr.bf16.mxu0 %v812
    %4406 = vmatpush1.bf16.msra.mxu0 %v811
    %4407 = vmatprep.subr.bf16.mxu0 %v820
    %4408 = vmatpush1.bf16.msra.mxu0 %v819
    %4409 = vmatprep.subr.bf16.mxu0 %v828
    %4410 = vmatpush1.bf16.msra.mxu0 %v827
    %4411 = vmatprep.subr.bf16.mxu0 %v836
    %4412 = vmatpush1.bf16.msra.mxu0 %v835
    %4413 = vmatprep.subr.bf16.mxu0 %v844
    %4414 = vmatpush1.bf16.msra.mxu0 %v843
    %4415 = vmatprep.subr.bf16.mxu0 %v852
    %4416 = vmatpush1.bf16.msra.mxu0 %v851
    %4417 = vmatprep.subr.bf16.mxu0 %v860
    %4418 = vmatpush1.bf16.msra.mxu0 %v859
    %4419 = vmatprep.subr.bf16.mxu0 %v868
    %4420 = vmatpush1.bf16.msra.mxu0 %v867
    %4421 = vmatprep.subr.bf16.mxu0 %v876
    %4422 = vmatpush1.bf16.msra.mxu0 %v875
    %4423 = vmatprep.subr.bf16.mxu0 %v884
    %4424 = vmatpush1.bf16.msra.mxu0 %v883
    %4425 = vmatprep.subr.bf16.mxu0 %v892
    %4426 = vmatpush1.bf16.msra.mxu0 %v891
    %4427 = vmatprep.mubr.bf16.mxu0 %v4310
    %4428 = vmatmul.mubr.bf16.gmra.mrb[0].mxu0 %v4309
    %v4429 = vpop.f32.mrb[0].mxu0
    %v4430 = vadd.f32 0.0, %v4429
    %v4431 = vpop.f32.mrb[0].mxu0
    %v4432 = vadd.f32 0.0, %v4431
    %v4433 = vpop.f32.mrb[0].mxu0
    %v4434 = vpop.f32.mrb[0].mxu0
    %4435 = vdwg.mxu0
    %4436 = vmatprep.subr.bf16.mxu0 %v774
    %4437 = vmatpush1.bf16.msra.mxu0 %v773
    %4438 = vmatprep.subr.bf16.mxu0 %v782
    %4439 = vmatpush1.bf16.msra.mxu0 %v781
    %4440 = vmatprep.subr.bf16.mxu0 %v790
    %4441 = vmatpush1.bf16.msra.mxu0 %v789
    %4442 = vmatprep.subr.bf16.mxu0 %v798
    %4443 = vmatpush1.bf16.msra.mxu0 %v797
    %4444 = vmatprep.subr.bf16.mxu0 %v806
    %4445 = vmatpush1.bf16.msra.mxu0 %v805
    %4446 = vmatprep.subr.bf16.mxu0 %v814
    %4447 = vmatpush1.bf16.msra.mxu0 %v813
    %4448 = vmatprep.subr.bf16.mxu0 %v822
    %4449 = vmatpush1.bf16.msra.mxu0 %v821
    %4450 = vmatprep.subr.bf16.mxu0 %v830
    %4451 = vmatpush1.bf16.msra.mxu0 %v829
    %4452 = vmatprep.subr.bf16.mxu0 %v838
    %4453 = vmatpush1.bf16.msra.mxu0 %v837
    %4454 = vmatprep.subr.bf16.mxu0 %v846
    %4455 = vmatpush1.bf16.msra.mxu0 %v845
    %4456 = vmatprep.subr.bf16.mxu0 %v854
    %4457 = vmatpush1.bf16.msra.mxu0 %v853
    %4458 = vmatprep.subr.bf16.mxu0 %v862
    %4459 = vmatpush1.bf16.msra.mxu0 %v861
    %4460 = vmatprep.subr.bf16.mxu0 %v870
    %4461 = vmatpush1.bf16.msra.mxu0 %v869
    %4462 = vmatprep.subr.bf16.mxu0 %v878
    %4463 = vmatpush1.bf16.msra.mxu0 %v877
    %4464 = vmatprep.subr.bf16.mxu0 %v886
    %4465 = vmatpush1.bf16.msra.mxu0 %v885
    %4466 = vmatprep.subr.bf16.mxu0 %v894
    %4467 = vmatpush1.bf16.msra.mxu0 %v893
    %4468 = vmatprep.mubr.bf16.mxu0 %v4310
    %4469 = vmatmul.mubr.bf16.gmra.mrb[0].mxu0 %v4309
    %v4470 = vpop.f32.mrb[0].mxu0
    %v4471 = vadd.f32 0.0, %v4470
    %v4472 = vpop.f32.mrb[0].mxu0
    %v4473 = vadd.f32 0.0, %v4472
    %v4474 = vpop.f32.mrb[0].mxu0
    %v4475 = vpop.f32.mrb[0].mxu0
    %4476 = vdwg.mxu0
    %v4485 = vcombine.low %v4348, %v4350
    %v4486 = vcombine.low %v4389, %v4391
    %v4487 = vcombine.low %v4430, %v4432
    %v4488 = vcombine.low %v4471, %v4473
    %v4490 = vunpack.c.l.s4 1966171168
    %v4491 = vunpack.c.0.s8 %v4490
    %v4492 = vlaneseq
    %v4493 = vshrl.u32 %v4492, 7
    %v4494 = vsub.s32 %v4491, %v4493
    %v4495 = vrot.slane %v4485, %v4494
    %v4497 = vunpack.c.l.s4 1966171168
    %v4498 = vunpack.c.0.s8 %v4497
    %v4499 = vlaneseq
    %v4500 = vshrl.u32 %v4499, 7
    %v4501 = vsub.s32 %v4498, %v4500
    %v4502 = vrot.slane %v4486, %v4501
    %v4504 = vunpack.c.l.s4 1966171168
    %v4505 = vunpack.c.0.s8 %v4504
    %v4506 = vlaneseq
    %v4507 = vshrl.u32 %v4506, 7
    %v4508 = vsub.s32 %v4505, %v4507
    %v4509 = vrot.slane %v4487, %v4508
    %v4511 = vunpack.c.l.s4 1966171168
    %v4512 = vunpack.c.0.s8 %v4511
    %v4513 = vlaneseq
    %v4514 = vshrl.u32 %v4513, 7
    %v4515 = vsub.s32 %v4512, %v4514
    %v4516 = vrot.slane %v4488, %v4515
    %v4517 = vcombine.low %v4495, %v4502
    %v4518 = vcombine.high %v4495, %v4502
    %v4519 = vcombine.low %v4509, %v4516
    %v4520 = vcombine.high %v4509, %v4516
    %v4522 = vunpack.c.l.s4 1966171168
    %v4523 = vunpack.c.0.s8 %v4522
    %v4524 = vlaneseq
    %v4525 = vshrl.u32 %v4524, 7
    %v4526 = vsub.s32 %v4523, %v4525
    %v4527 = vrot.slane %v4517, %v4526
    %v4529 = vunpack.c.l.s4 1966171168
    %v4530 = vunpack.c.0.s8 %v4529
    %v4531 = vlaneseq
    %v4532 = vshrl.u32 %v4531, 7
    %v4533 = vsub.s32 %v4530, %v4532
    %v4534 = vrot.slane %v4518, %v4533
    %v4536 = vunpack.c.l.s4 1966171168
    %v4537 = vunpack.c.0.s8 %v4536
    %v4538 = vlaneseq
    %v4539 = vshrl.u32 %v4538, 7
    %v4540 = vsub.s32 %v4537, %v4539
    %v4541 = vrot.slane %v4519, %v4540
    %v4543 = vunpack.c.l.s4 1966171168
    %v4544 = vunpack.c.0.s8 %v4543
    %v4545 = vlaneseq
    %v4546 = vshrl.u32 %v4545, 7
    %v4547 = vsub.s32 %v4544, %v4546
    %v4548 = vrot.slane %v4520, %v4547
    %v4549 = vcombine.low %v4527, %v4541
    %v4550 = vcombine.low %v4534, %v4548
    %v4553 = vadd.f32 %v4266, %v4549
    %v4554 = vadd.f32 %v4270, %v4550
    %v4555 = vxor.u32 %v4553, 2147483648
    %v4556 = vxor.u32 %v4554, 2147483648
    %v4557 = vmul.f32 %v4555, 1.442695
    %v4558 = vpow.pop %v4557
    %v4559 = vmul.f32 %v4556, 1.442695
    %v4560 = vpow.pop %v4559
    %v4561 = vadd.f32 %v4558, 1.0
    %v4562 = vadd.f32 %v4560, 1.0
    %v4563 = vrcp.pop %v4561
    %v4564 = vmul.f32 1.0, %v4563
    %v4565 = vrcp.pop %v4562
    %v4566 = vmul.f32 1.0, %v4565
    %v4569 = vrot.slane %v4553, 6
    %v4570 = vrot.slane %v4554, 6
    %v4573 = vtanh.pop %v4569
    %v4574 = vtanh.pop %v4570
    %v4577 = vrot.slane %v4564, 2
    %v4578 = vrot.slane %v4566, 2
    %v4581 = vmul.f32 %v4577, %v3921
    %v4582 = vmul.f32 %v4578, %v3922
    %v4583 = vmul.f32 %v4564, %v4573
    %v4584 = vmul.f32 %v4566, %v4574
    %v4585 = vadd.f32 %v4581, %v4583
    %v4586 = vadd.f32 %v4582, %v4584
    %v4587 = vtanh.pop %v4585
    %v4588 = vtanh.pop %v4586
    %v4589 = vrot.slane %v4564, 4
    %v4590 = vrot.slane %v4566, 4
    %v4593 = vmul.f32 %v4589, %v4587
    %v4594 = vmul.f32 %v4590, %v4588
    %s4595 = scalar_lea.vmem %s93, 3
    %v4596 = vld [vmem:[%s4595] ss:$8 sm:$0xf]
    %v4597 = vld [vmem:[%s4595] ss:$8 sm:$0xf0]
    %v4598 = vor.u32 %v4596, %v4597
    %s4599 = scalar_lea.vmem %s93, 67
    %v4600 = vld [vmem:[%s4599] ss:$8 sm:$0xf]
    %v4601 = vld [vmem:[%s4599] ss:$8 sm:$0xf0]
    %v4602 = vor.u32 %v4600, %v4601
    %v4605 = vlaneseq
    %v4606 = vshrl.u32 %v4605, 7
    %v4607 = vsub.s32 0, %v4606
    %v4608 = vrot.slane %v4261, %v4607
    %v4609 = vlaneseq
    %v4610 = vshrl.u32 %v4609, 7
    %v4611 = vsub.s32 1, %v4610
    %v4612 = vrot.slane %v4261, %v4611
    %v4613 = vlaneseq
    %v4614 = vshrl.u32 %v4613, 7
    %v4615 = vsub.s32 0, %v4614
    %v4616 = vrot.slane %v4262, %v4615
    %v4617 = vlaneseq
    %v4618 = vshrl.u32 %v4617, 7
    %v4619 = vsub.s32 1, %v4618
    %v4620 = vrot.slane %v4262, %v4619
    %v4625 = vpack.c.bf16 %v4608, %v4608
    %v4626 = vpack.c.bf16 %v4612, %v4612
    %v4627 = vpack.c.bf16 %v4616, %v4616
    %v4628 = vpack.c.bf16 %v4620, %v4620
    %v4633 = vunpack.c.l.b16 %v4625
    %v4634 = vunpack.c.l.b16 %v4626
    %v4635 = vunpack.c.l.b16 %v4627
    %v4636 = vunpack.c.l.b16 %v4628
    %v4637 = vrot.slane %v4635, 7
    %v4638 = vsel %vm2313, %v4637, %v4633
    %v4639 = vrot.slane %v4636, 7
    %v4640 = vsel %vm2313, %v4639, %v4634
    %v4641 = vpack.c.b16 %v4638, %v4638
    %v4642 = vpack.c.b16 %v4640, %v4640
    %4645 = vmatprep.subr.bf16.mxu0 %v1722
    %4646 = vmatpush1.bf16.msra.mxu0 %v1721
    %4647 = vmatprep.subr.bf16.mxu0 %v1730
    %4648 = vmatpush1.bf16.msra.mxu0 %v1729
    %4649 = vmatprep.subr.bf16.mxu0 %v1738
    %4650 = vmatpush1.bf16.msra.mxu0 %v1737
    %4651 = vmatprep.subr.bf16.mxu0 %v1746
    %4652 = vmatpush1.bf16.msra.mxu0 %v1745
    %4653 = vmatprep.subr.bf16.mxu0 %v1754
    %4654 = vmatpush1.bf16.msra.mxu0 %v1753
    %4655 = vmatprep.subr.bf16.mxu0 %v1762
    %4656 = vmatpush1.bf16.msra.mxu0 %v1761
    %4657 = vmatprep.subr.bf16.mxu0 %v1770
    %4658 = vmatpush1.bf16.msra.mxu0 %v1769
    %4659 = vmatprep.subr.bf16.mxu0 %v1778
    %4660 = vmatpush1.bf16.msra.mxu0 %v1777
    %4661 = vmatprep.subr.bf16.mxu0 %v1786
    %4662 = vmatpush1.bf16.msra.mxu0 %v1785
    %4663 = vmatprep.subr.bf16.mxu0 %v1794
    %4664 = vmatpush1.bf16.msra.mxu0 %v1793
    %4665 = vmatprep.subr.bf16.mxu0 %v1802
    %4666 = vmatpush1.bf16.msra.mxu0 %v1801
    %4667 = vmatprep.subr.bf16.mxu0 %v1810
    %4668 = vmatpush1.bf16.msra.mxu0 %v1809
    %4669 = vmatprep.subr.bf16.mxu0 %v1818
    %4670 = vmatpush1.bf16.msra.mxu0 %v1817
    %4671 = vmatprep.subr.bf16.mxu0 %v1826
    %4672 = vmatpush1.bf16.msra.mxu0 %v1825
    %4673 = vmatprep.subr.bf16.mxu0 %v1834
    %4674 = vmatpush1.bf16.msra.mxu0 %v1833
    %4675 = vmatprep.subr.bf16.mxu0 %v1842
    %4676 = vmatpush1.bf16.msra.mxu0 %v1841
    %4677 = vmatprep.mubr.bf16.mxu0 %v4642
    %4678 = vmatmul.mubr.bf16.gmra.mrb[0].mxu0 %v4641
    %v4679 = vpop.f32.mrb[0].mxu0
    %v4680 = vadd.f32 0.0, %v4679
    %v4681 = vpop.f32.mrb[0].mxu0
    %v4682 = vadd.f32 0.0, %v4681
    %v4683 = vpop.f32.mrb[0].mxu0
    %v4684 = vpop.f32.mrb[0].mxu0
    %4685 = vdwg.mxu0
    %4686 = vmatprep.subr.bf16.mxu0 %v1724
    %4687 = vmatpush1.bf16.msra.mxu0 %v1723
    %4688 = vmatprep.subr.bf16.mxu0 %v1732
    %4689 = vmatpush1.bf16.msra.mxu0 %v1731
    %4690 = vmatprep.subr.bf16.mxu0 %v1740
    %4691 = vmatpush1.bf16.msra.mxu0 %v1739
    %4692 = vmatprep.subr.bf16.mxu0 %v1748
    %4693 = vmatpush1.bf16.msra.mxu0 %v1747
    %4694 = vmatprep.subr.bf16.mxu0 %v1756
    %4695 = vmatpush1.bf16.msra.mxu0 %v1755
    %4696 = vmatprep.subr.bf16.mxu0 %v1764
    %4697 = vmatpush1.bf16.msra.mxu0 %v1763
    %4698 = vmatprep.subr.bf16.mxu0 %v1772
    %4699 = vmatpush1.bf16.msra.mxu0 %v1771
    %4700 = vmatprep.subr.bf16.mxu0 %v1780
    %4701 = vmatpush1.bf16.msra.mxu0 %v1779
    %4702 = vmatprep.subr.bf16.mxu0 %v1788
    %4703 = vmatpush1.bf16.msra.mxu0 %v1787
    %4704 = vmatprep.subr.bf16.mxu0 %v1796
    %4705 = vmatpush1.bf16.msra.mxu0 %v1795
    %4706 = vmatprep.subr.bf16.mxu0 %v1804
    %4707 = vmatpush1.bf16.msra.mxu0 %v1803
    %4708 = vmatprep.subr.bf16.mxu0 %v1812
    %4709 = vmatpush1.bf16.msra.mxu0 %v1811
    %4710 = vmatprep.subr.bf16.mxu0 %v1820
    %4711 = vmatpush1.bf16.msra.mxu0 %v1819
    %4712 = vmatprep.subr.bf16.mxu0 %v1828
    %4713 = vmatpush1.bf16.msra.mxu0 %v1827
    %4714 = vmatprep.subr.bf16.mxu0 %v1836
    %4715 = vmatpush1.bf16.msra.mxu0 %v1835
    %4716 = vmatprep.subr.bf16.mxu0 %v1844
    %4717 = vmatpush1.bf16.msra.mxu0 %v1843
    %4718 = vmatprep.mubr.bf16.mxu0 %v4642
    %4719 = vmatmul.mubr.bf16.gmra.mrb[0].mxu0 %v4641
    %v4720 = vpop.f32.mrb[0].mxu0
    %v4721 = vadd.f32 0.0, %v4720
    %v4722 = vpop.f32.mrb[0].mxu0
    %v4723 = vadd.f32 0.0, %v4722
    %v4724 = vpop.f32.mrb[0].mxu0
    %v4725 = vpop.f32.mrb[0].mxu0
    %4726 = vdwg.mxu0
    %4727 = vmatprep.subr.bf16.mxu0 %v1726
    %4728 = vmatpush1.bf16.msra.mxu0 %v1725
    %4729 = vmatprep.subr.bf16.mxu0 %v1734
    %4730 = vmatpush1.bf16.msra.mxu0 %v1733
    %4731 = vmatprep.subr.bf16.mxu0 %v1742
    %4732 = vmatpush1.bf16.msra.mxu0 %v1741
    %4733 = vmatprep.subr.bf16.mxu0 %v1750
    %4734 = vmatpush1.bf16.msra.mxu0 %v1749
    %4735 = vmatprep.subr.bf16.mxu0 %v1758
    %4736 = vmatpush1.bf16.msra.mxu0 %v1757
    %4737 = vmatprep.subr.bf16.mxu0 %v1766
    %4738 = vmatpush1.bf16.msra.mxu0 %v1765
    %4739 = vmatprep.subr.bf16.mxu0 %v1774
    %4740 = vmatpush1.bf16.msra.mxu0 %v1773
    %4741 = vmatprep.subr.bf16.mxu0 %v1782
    %4742 = vmatpush1.bf16.msra.mxu0 %v1781
    %4743 = vmatprep.subr.bf16.mxu0 %v1790
    %4744 = vmatpush1.bf16.msra.mxu0 %v1789
    %4745 = vmatprep.subr.bf16.mxu0 %v1798
    %4746 = vmatpush1.bf16.msra.mxu0 %v1797
    %4747 = vmatprep.subr.bf16.mxu0 %v1806
    %4748 = vmatpush1.bf16.msra.mxu0 %v1805
    %4749 = vmatprep.subr.bf16.mxu0 %v1814
    %4750 = vmatpush1.bf16.msra.mxu0 %v1813
    %4751 = vmatprep.subr.bf16.mxu0 %v1822
    %4752 = vmatpush1.bf16.msra.mxu0 %v1821
    %4753 = vmatprep.subr.bf16.mxu0 %v1830
    %4754 = vmatpush1.bf16.msra.mxu0 %v1829
    %4755 = vmatprep.subr.bf16.mxu0 %v1838
    %4756 = vmatpush1.bf16.msra.mxu0 %v1837
    %4757 = vmatprep.subr.bf16.mxu0 %v1846
    %4758 = vmatpush1.bf16.msra.mxu0 %v1845
    %4759 = vmatprep.mubr.bf16.mxu0 %v4642
    %4760 = vmatmul.mubr.bf16.gmra.mrb[0].mxu0 %v4641
    %v4761 = vpop.f32.mrb[0].mxu0
    %v4762 = vadd.f32 0.0, %v4761
    %v4763 = vpop.f32.mrb[0].mxu0
    %v4764 = vadd.f32 0.0, %v4763
    %v4765 = vpop.f32.mrb[0].mxu0
    %v4766 = vpop.f32.mrb[0].mxu0
    %4767 = vdwg.mxu0
    %4768 = vmatprep.subr.bf16.mxu0 %v1728
    %4769 = vmatpush1.bf16.msra.mxu0 %v1727
    %4770 = vmatprep.subr.bf16.mxu0 %v1736
    %4771 = vmatpush1.bf16.msra.mxu0 %v1735
    %4772 = vmatprep.subr.bf16.mxu0 %v1744
    %4773 = vmatpush1.bf16.msra.mxu0 %v1743
    %4774 = vmatprep.subr.bf16.mxu0 %v1752
    %4775 = vmatpush1.bf16.msra.mxu0 %v1751
    %4776 = vmatprep.subr.bf16.mxu0 %v1760
    %4777 = vmatpush1.bf16.msra.mxu0 %v1759
    %4778 = vmatprep.subr.bf16.mxu0 %v1768
    %4779 = vmatpush1.bf16.msra.mxu0 %v1767
    %4780 = vmatprep.subr.bf16.mxu0 %v1776
    %4781 = vmatpush1.bf16.msra.mxu0 %v1775
    %4782 = vmatprep.subr.bf16.mxu0 %v1784
    %4783 = vmatpush1.bf16.msra.mxu0 %v1783
    %4784 = vmatprep.subr.bf16.mxu0 %v1792
    %4785 = vmatpush1.bf16.msra.mxu0 %v1791
    %4786 = vmatprep.subr.bf16.mxu0 %v1800
    %4787 = vmatpush1.bf16.msra.mxu0 %v1799
    %4788 = vmatprep.subr.bf16.mxu0 %v1808
    %4789 = vmatpush1.bf16.msra.mxu0 %v1807
    %4790 = vmatprep.subr.bf16.mxu0 %v1816
    %4791 = vmatpush1.bf16.msra.mxu0 %v1815
    %4792 = vmatprep.subr.bf16.mxu0 %v1824
    %4793 = vmatpush1.bf16.msra.mxu0 %v1823
    %4794 = vmatprep.subr.bf16.mxu0 %v1832
    %4795 = vmatpush1.bf16.msra.mxu0 %v1831
    %4796 = vmatprep.subr.bf16.mxu0 %v1840
    %4797 = vmatpush1.bf16.msra.mxu0 %v1839
    %4798 = vmatprep.subr.bf16.mxu0 %v1848
    %4799 = vmatpush1.bf16.msra.mxu0 %v1847
    %4800 = vmatprep.mubr.bf16.mxu0 %v4642
    %4801 = vmatmul.mubr.bf16.gmra.mrb[0].mxu0 %v4641
    %v4802 = vpop.f32.mrb[0].mxu0
    %v4803 = vadd.f32 0.0, %v4802
    %v4804 = vpop.f32.mrb[0].mxu0
    %v4805 = vadd.f32 0.0, %v4804
    %v4806 = vpop.f32.mrb[0].mxu0
    %v4807 = vpop.f32.mrb[0].mxu0
    %4808 = vdwg.mxu0
    %v4817 = vcombine.low %v4680, %v4682
    %v4818 = vcombine.low %v4721, %v4723
    %v4819 = vcombine.low %v4762, %v4764
    %v4820 = vcombine.low %v4803, %v4805
    %v4822 = vunpack.c.l.s4 1966171168
    %v4823 = vunpack.c.0.s8 %v4822
    %v4824 = vlaneseq
    %v4825 = vshrl.u32 %v4824, 7
    %v4826 = vsub.s32 %v4823, %v4825
    %v4827 = vrot.slane %v4817, %v4826
    %v4829 = vunpack.c.l.s4 1966171168
    %v4830 = vunpack.c.0.s8 %v4829
    %v4831 = vlaneseq
    %v4832 = vshrl.u32 %v4831, 7
    %v4833 = vsub.s32 %v4830, %v4832
    %v4834 = vrot.slane %v4818, %v4833
    %v4836 = vunpack.c.l.s4 1966171168
    %v4837 = vunpack.c.0.s8 %v4836
    %v4838 = vlaneseq
    %v4839 = vshrl.u32 %v4838, 7
    %v4840 = vsub.s32 %v4837, %v4839
    %v4841 = vrot.slane %v4819, %v4840
    %v4843 = vunpack.c.l.s4 1966171168
    %v4844 = vunpack.c.0.s8 %v4843
    %v4845 = vlaneseq
    %v4846 = vshrl.u32 %v4845, 7
    %v4847 = vsub.s32 %v4844, %v4846
    %v4848 = vrot.slane %v4820, %v4847
    %v4849 = vcombine.low %v4827, %v4834
    %v4850 = vcombine.high %v4827, %v4834
    %v4851 = vcombine.low %v4841, %v4848
    %v4852 = vcombine.high %v4841, %v4848
    %v4854 = vunpack.c.l.s4 1966171168
    %v4855 = vunpack.c.0.s8 %v4854
    %v4856 = vlaneseq
    %v4857 = vshrl.u32 %v4856, 7
    %v4858 = vsub.s32 %v4855, %v4857
    %v4859 = vrot.slane %v4849, %v4858
    %v4861 = vunpack.c.l.s4 1966171168
    %v4862 = vunpack.c.0.s8 %v4861
    %v4863 = vlaneseq
    %v4864 = vshrl.u32 %v4863, 7
    %v4865 = vsub.s32 %v4862, %v4864
    %v4866 = vrot.slane %v4850, %v4865
    %v4868 = vunpack.c.l.s4 1966171168
    %v4869 = vunpack.c.0.s8 %v4868
    %v4870 = vlaneseq
    %v4871 = vshrl.u32 %v4870, 7
    %v4872 = vsub.s32 %v4869, %v4871
    %v4873 = vrot.slane %v4851, %v4872
    %v4875 = vunpack.c.l.s4 1966171168
    %v4876 = vunpack.c.0.s8 %v4875
    %v4877 = vlaneseq
    %v4878 = vshrl.u32 %v4877, 7
    %v4879 = vsub.s32 %v4876, %v4878
    %v4880 = vrot.slane %v4852, %v4879
    %v4881 = vcombine.low %v4859, %v4873
    %v4882 = vcombine.low %v4866, %v4880
    %v4885 = vadd.f32 %v4598, %v4881
    %v4886 = vadd.f32 %v4602, %v4882
    %v4887 = vxor.u32 %v4885, 2147483648
    %v4888 = vxor.u32 %v4886, 2147483648
    %v4889 = vmul.f32 %v4887, 1.442695
    %v4890 = vpow.pop %v4889
    %v4891 = vmul.f32 %v4888, 1.442695
    %v4892 = vpow.pop %v4891
    %v4893 = vadd.f32 %v4890, 1.0
    %v4894 = vadd.f32 %v4892, 1.0
    %v4895 = vrcp.pop %v4893
    %v4896 = vmul.f32 1.0, %v4895
    %v4897 = vrcp.pop %v4894
    %v4898 = vmul.f32 1.0, %v4897
    %v4901 = vrot.slane %v4885, 6
    %v4902 = vrot.slane %v4886, 6
    %v4905 = vtanh.pop %v4901
    %v4906 = vtanh.pop %v4902
    %v4909 = vrot.slane %v4896, 2
    %v4910 = vrot.slane %v4898, 2
    %v4913 = vmul.f32 %v4909, %v4253
    %v4914 = vmul.f32 %v4910, %v4254
    %v4915 = vmul.f32 %v4896, %v4905
    %v4916 = vmul.f32 %v4898, %v4906
    %v4917 = vadd.f32 %v4913, %v4915
    %v4918 = vadd.f32 %v4914, %v4916
    %v4919 = vtanh.pop %v4917
    %v4920 = vtanh.pop %v4918
    %v4921 = vrot.slane %v4896, 4
    %v4922 = vrot.slane %v4898, 4
    %v4925 = vmul.f32 %v4921, %v4919
    %v4926 = vmul.f32 %v4922, %v4920
    %s4927 = scalar_lea.vmem %s0, 5
    %v4928 = vld [vmem:[%s4927] ss:$8 sm:$0xf]
    %v4929 = vld [vmem:[%s4927] ss:$8 sm:$0xf0]
    %v4930 = vor.u32 %v4928, %v4929
    %s4931 = scalar_lea.vmem %s0, 69
    %v4932 = vld [vmem:[%s4931] ss:$8 sm:$0xf]
    %v4933 = vld [vmem:[%s4931] ss:$8 sm:$0xf0]
    %v4934 = vor.u32 %v4932, %v4933
    %v4937 = vlaneseq
    %v4938 = vshrl.u32 %v4937, 7
    %v4939 = vsub.s32 0, %v4938
    %v4940 = vrot.slane %v4593, %v4939
    %v4941 = vlaneseq
    %v4942 = vshrl.u32 %v4941, 7
    %v4943 = vsub.s32 1, %v4942
    %v4944 = vrot.slane %v4593, %v4943
    %v4945 = vlaneseq
    %v4946 = vshrl.u32 %v4945, 7
    %v4947 = vsub.s32 0, %v4946
    %v4948 = vrot.slane %v4594, %v4947
    %v4949 = vlaneseq
    %v4950 = vshrl.u32 %v4949, 7
    %v4951 = vsub.s32 1, %v4950
    %v4952 = vrot.slane %v4594, %v4951
    %v4957 = vpack.c.bf16 %v4940, %v4940
    %v4958 = vpack.c.bf16 %v4944, %v4944
    %v4959 = vpack.c.bf16 %v4948, %v4948
    %v4960 = vpack.c.bf16 %v4952, %v4952
    %v4965 = vunpack.c.l.b16 %v4957
    %v4966 = vunpack.c.l.b16 %v4958
    %v4967 = vunpack.c.l.b16 %v4959
    %v4968 = vunpack.c.l.b16 %v4960
    %v4969 = vrot.slane %v4967, 7
    %v4970 = vsel %vm2313, %v4969, %v4965
    %v4971 = vrot.slane %v4968, 7
    %v4972 = vsel %vm2313, %v4971, %v4966
    %v4973 = vpack.c.b16 %v4970, %v4970
    %v4974 = vpack.c.b16 %v4972, %v4972
    %4977 = vmatprep.subr.bf16.mxu0 %v768
    %4978 = vmatpush1.bf16.msra.mxu0 %v767
    %4979 = vmatprep.subr.bf16.mxu0 %v776
    %4980 = vmatpush1.bf16.msra.mxu0 %v775
    %4981 = vmatprep.subr.bf16.mxu0 %v784
    %4982 = vmatpush1.bf16.msra.mxu0 %v783
    %4983 = vmatprep.subr.bf16.mxu0 %v792
    %4984 = vmatpush1.bf16.msra.mxu0 %v791
    %4985 = vmatprep.subr.bf16.mxu0 %v800
    %4986 = vmatpush1.bf16.msra.mxu0 %v799
    %4987 = vmatprep.subr.bf16.mxu0 %v808
    %4988 = vmatpush1.bf16.msra.mxu0 %v807
    %4989 = vmatprep.subr.bf16.mxu0 %v816
    %4990 = vmatpush1.bf16.msra.mxu0 %v815
    %4991 = vmatprep.subr.bf16.mxu0 %v824
    %4992 = vmatpush1.bf16.msra.mxu0 %v823
    %4993 = vmatprep.subr.bf16.mxu0 %v832
    %4994 = vmatpush1.bf16.msra.mxu0 %v831
    %4995 = vmatprep.subr.bf16.mxu0 %v840
    %4996 = vmatpush1.bf16.msra.mxu0 %v839
    %4997 = vmatprep.subr.bf16.mxu0 %v848
    %4998 = vmatpush1.bf16.msra.mxu0 %v847
    %4999 = vmatprep.subr.bf16.mxu0 %v856
    %5000 = vmatpush1.bf16.msra.mxu0 %v855
    %5001 = vmatprep.subr.bf16.mxu0 %v864
    %5002 = vmatpush1.bf16.msra.mxu0 %v863
    %5003 = vmatprep.subr.bf16.mxu0 %v872
    %5004 = vmatpush1.bf16.msra.mxu0 %v871
    %5005 = vmatprep.subr.bf16.mxu0 %v880
    %5006 = vmatpush1.bf16.msra.mxu0 %v879
    %5007 = vmatprep.subr.bf16.mxu0 %v888
    %5008 = vmatpush1.bf16.msra.mxu0 %v887
    %5009 = vmatprep.mubr.bf16.mxu0 %v4974
    %5010 = vmatmul.mubr.bf16.gmra.mrb[0].mxu0 %v4973
    %v5011 = vpop.f32.mrb[0].mxu0
    %v5012 = vadd.f32 0.0, %v5011
    %v5013 = vpop.f32.mrb[0].mxu0
    %v5014 = vadd.f32 0.0, %v5013
    %v5015 = vpop.f32.mrb[0].mxu0
    %v5016 = vpop.f32.mrb[0].mxu0
    %5017 = vdwg.mxu0
    %5018 = vmatprep.subr.bf16.mxu0 %v770
    %5019 = vmatpush1.bf16.msra.mxu0 %v769
    %5020 = vmatprep.subr.bf16.mxu0 %v778
    %5021 = vmatpush1.bf16.msra.mxu0 %v777
    %5022 = vmatprep.subr.bf16.mxu0 %v786
    %5023 = vmatpush1.bf16.msra.mxu0 %v785
    %5024 = vmatprep.subr.bf16.mxu0 %v794
    %5025 = vmatpush1.bf16.msra.mxu0 %v793
    %5026 = vmatprep.subr.bf16.mxu0 %v802
    %5027 = vmatpush1.bf16.msra.mxu0 %v801
    %5028 = vmatprep.subr.bf16.mxu0 %v810
    %5029 = vmatpush1.bf16.msra.mxu0 %v809
    %5030 = vmatprep.subr.bf16.mxu0 %v818
    %5031 = vmatpush1.bf16.msra.mxu0 %v817
    %5032 = vmatprep.subr.bf16.mxu0 %v826
    %5033 = vmatpush1.bf16.msra.mxu0 %v825
    %5034 = vmatprep.subr.bf16.mxu0 %v834
    %5035 = vmatpush1.bf16.msra.mxu0 %v833
    %5036 = vmatprep.subr.bf16.mxu0 %v842
    %5037 = vmatpush1.bf16.msra.mxu0 %v841
    %5038 = vmatprep.subr.bf16.mxu0 %v850
    %5039 = vmatpush1.bf16.msra.mxu0 %v849
    %5040 = vmatprep.subr.bf16.mxu0 %v858
    %5041 = vmatpush1.bf16.msra.mxu0 %v857
    %5042 = vmatprep.subr.bf16.mxu0 %v866
    %5043 = vmatpush1.bf16.msra.mxu0 %v865
    %5044 = vmatprep.subr.bf16.mxu0 %v874
    %5045 = vmatpush1.bf16.msra.mxu0 %v873
    %5046 = vmatprep.subr.bf16.mxu0 %v882
    %5047 = vmatpush1.bf16.msra.mxu0 %v881
    %5048 = vmatprep.subr.bf16.mxu0 %v890
    %5049 = vmatpush1.bf16.msra.mxu0 %v889
    %5050 = vmatprep.mubr.bf16.mxu0 %v4974
    %5051 = vmatmul.mubr.bf16.gmra.mrb[0].mxu0 %v4973
    %v5052 = vpop.f32.mrb[0].mxu0
    %v5053 = vadd.f32 0.0, %v5052
    %v5054 = vpop.f32.mrb[0].mxu0
    %v5055 = vadd.f32 0.0, %v5054
    %v5056 = vpop.f32.mrb[0].mxu0
    %v5057 = vpop.f32.mrb[0].mxu0
    %5058 = vdwg.mxu0
    %5059 = vmatprep.subr.bf16.mxu0 %v772
    %5060 = vmatpush1.bf16.msra.mxu0 %v771
    %5061 = vmatprep.subr.bf16.mxu0 %v780
    %5062 = vmatpush1.bf16.msra.mxu0 %v779
    %5063 = vmatprep.subr.bf16.mxu0 %v788
    %5064 = vmatpush1.bf16.msra.mxu0 %v787
    %5065 = vmatprep.subr.bf16.mxu0 %v796
    %5066 = vmatpush1.bf16.msra.mxu0 %v795
    %5067 = vmatprep.subr.bf16.mxu0 %v804
    %5068 = vmatpush1.bf16.msra.mxu0 %v803
    %5069 = vmatprep.subr.bf16.mxu0 %v812
    %5070 = vmatpush1.bf16.msra.mxu0 %v811
    %5071 = vmatprep.subr.bf16.mxu0 %v820
    %5072 = vmatpush1.bf16.msra.mxu0 %v819
    %5073 = vmatprep.subr.bf16.mxu0 %v828
    %5074 = vmatpush1.bf16.msra.mxu0 %v827
    %5075 = vmatprep.subr.bf16.mxu0 %v836
    %5076 = vmatpush1.bf16.msra.mxu0 %v835
    %5077 = vmatprep.subr.bf16.mxu0 %v844
    %5078 = vmatpush1.bf16.msra.mxu0 %v843
    %5079 = vmatprep.subr.bf16.mxu0 %v852
    %5080 = vmatpush1.bf16.msra.mxu0 %v851
    %5081 = vmatprep.subr.bf16.mxu0 %v860
    %5082 = vmatpush1.bf16.msra.mxu0 %v859
    %5083 = vmatprep.subr.bf16.mxu0 %v868
    %5084 = vmatpush1.bf16.msra.mxu0 %v867
    %5085 = vmatprep.subr.bf16.mxu0 %v876
    %5086 = vmatpush1.bf16.msra.mxu0 %v875
    %5087 = vmatprep.subr.bf16.mxu0 %v884
    %5088 = vmatpush1.bf16.msra.mxu0 %v883
    %5089 = vmatprep.subr.bf16.mxu0 %v892
    %5090 = vmatpush1.bf16.msra.mxu0 %v891
    %5091 = vmatprep.mubr.bf16.mxu0 %v4974
    %5092 = vmatmul.mubr.bf16.gmra.mrb[0].mxu0 %v4973
    %v5093 = vpop.f32.mrb[0].mxu0
    %v5094 = vadd.f32 0.0, %v5093
    %v5095 = vpop.f32.mrb[0].mxu0
    %v5096 = vadd.f32 0.0, %v5095
    %v5097 = vpop.f32.mrb[0].mxu0
    %v5098 = vpop.f32.mrb[0].mxu0
    %5099 = vdwg.mxu0
    %5100 = vmatprep.subr.bf16.mxu0 %v774
    %5101 = vmatpush1.bf16.msra.mxu0 %v773
    %5102 = vmatprep.subr.bf16.mxu0 %v782
    %5103 = vmatpush1.bf16.msra.mxu0 %v781
    %5104 = vmatprep.subr.bf16.mxu0 %v790
    %5105 = vmatpush1.bf16.msra.mxu0 %v789
    %5106 = vmatprep.subr.bf16.mxu0 %v798
    %5107 = vmatpush1.bf16.msra.mxu0 %v797
    %5108 = vmatprep.subr.bf16.mxu0 %v806
    %5109 = vmatpush1.bf16.msra.mxu0 %v805
    %5110 = vmatprep.subr.bf16.mxu0 %v814
    %5111 = vmatpush1.bf16.msra.mxu0 %v813
    %5112 = vmatprep.subr.bf16.mxu0 %v822
    %5113 = vmatpush1.bf16.msra.mxu0 %v821
    %5114 = vmatprep.subr.bf16.mxu0 %v830
    %5115 = vmatpush1.bf16.msra.mxu0 %v829
    %5116 = vmatprep.subr.bf16.mxu0 %v838
    %5117 = vmatpush1.bf16.msra.mxu0 %v837
    %5118 = vmatprep.subr.bf16.mxu0 %v846
    %5119 = vmatpush1.bf16.msra.mxu0 %v845
    %5120 = vmatprep.subr.bf16.mxu0 %v854
    %5121 = vmatpush1.bf16.msra.mxu0 %v853
    %5122 = vmatprep.subr.bf16.mxu0 %v862
    %5123 = vmatpush1.bf16.msra.mxu0 %v861
    %5124 = vmatprep.subr.bf16.mxu0 %v870
    %5125 = vmatpush1.bf16.msra.mxu0 %v869
    %5126 = vmatprep.subr.bf16.mxu0 %v878
    %5127 = vmatpush1.bf16.msra.mxu0 %v877
    %5128 = vmatprep.subr.bf16.mxu0 %v886
    %5129 = vmatpush1.bf16.msra.mxu0 %v885
    %5130 = vmatprep.subr.bf16.mxu0 %v894
    %5131 = vmatpush1.bf16.msra.mxu0 %v893
    %5132 = vmatprep.mubr.bf16.mxu0 %v4974
    %5133 = vmatmul.mubr.bf16.gmra.mrb[0].mxu0 %v4973
    %v5134 = vpop.f32.mrb[0].mxu0
    %v5135 = vadd.f32 0.0, %v5134
    %v5136 = vpop.f32.mrb[0].mxu0
    %v5137 = vadd.f32 0.0, %v5136
    %v5138 = vpop.f32.mrb[0].mxu0
    %v5139 = vpop.f32.mrb[0].mxu0
    %5140 = vdwg.mxu0
    %v5149 = vcombine.low %v5012, %v5014
    %v5150 = vcombine.low %v5053, %v5055
    %v5151 = vcombine.low %v5094, %v5096
    %v5152 = vcombine.low %v5135, %v5137
    %v5154 = vunpack.c.l.s4 1966171168
    %v5155 = vunpack.c.0.s8 %v5154
    %v5156 = vlaneseq
    %v5157 = vshrl.u32 %v5156, 7
    %v5158 = vsub.s32 %v5155, %v5157
    %v5159 = vrot.slane %v5149, %v5158
    %v5161 = vunpack.c.l.s4 1966171168
    %v5162 = vunpack.c.0.s8 %v5161
    %v5163 = vlaneseq
    %v5164 = vshrl.u32 %v5163, 7
    %v5165 = vsub.s32 %v5162, %v5164
    %v5166 = vrot.slane %v5150, %v5165
    %v5168 = vunpack.c.l.s4 1966171168
    %v5169 = vunpack.c.0.s8 %v5168
    %v5170 = vlaneseq
    %v5171 = vshrl.u32 %v5170, 7
    %v5172 = vsub.s32 %v5169, %v5171
    %v5173 = vrot.slane %v5151, %v5172
    %v5175 = vunpack.c.l.s4 1966171168
    %v5176 = vunpack.c.0.s8 %v5175
    %v5177 = vlaneseq
    %v5178 = vshrl.u32 %v5177, 7
    %v5179 = vsub.s32 %v5176, %v5178
    %v5180 = vrot.slane %v5152, %v5179
    %v5181 = vcombine.low %v5159, %v5166
    %v5182 = vcombine.high %v5159, %v5166
    %v5183 = vcombine.low %v5173, %v5180
    %v5184 = vcombine.high %v5173, %v5180
    %v5186 = vunpack.c.l.s4 1966171168
    %v5187 = vunpack.c.0.s8 %v5186
    %v5188 = vlaneseq
    %v5189 = vshrl.u32 %v5188, 7
    %v5190 = vsub.s32 %v5187, %v5189
    %v5191 = vrot.slane %v5181, %v5190
    %v5193 = vunpack.c.l.s4 1966171168
    %v5194 = vunpack.c.0.s8 %v5193
    %v5195 = vlaneseq
    %v5196 = vshrl.u32 %v5195, 7
    %v5197 = vsub.s32 %v5194, %v5196
    %v5198 = vrot.slane %v5182, %v5197
    %v5200 = vunpack.c.l.s4 1966171168
    %v5201 = vunpack.c.0.s8 %v5200
    %v5202 = vlaneseq
    %v5203 = vshrl.u32 %v5202, 7
    %v5204 = vsub.s32 %v5201, %v5203
    %v5205 = vrot.slane %v5183, %v5204
    %v5207 = vunpack.c.l.s4 1966171168
    %v5208 = vunpack.c.0.s8 %v5207
    %v5209 = vlaneseq
    %v5210 = vshrl.u32 %v5209, 7
    %v5211 = vsub.s32 %v5208, %v5210
    %v5212 = vrot.slane %v5184, %v5211
    %v5213 = vcombine.low %v5191, %v5205
    %v5214 = vcombine.low %v5198, %v5212
    %v5217 = vadd.f32 %v4930, %v5213
    %v5218 = vadd.f32 %v4934, %v5214
    %v5219 = vxor.u32 %v5217, 2147483648
    %v5220 = vxor.u32 %v5218, 2147483648
    %v5221 = vmul.f32 %v5219, 1.442695
    %v5222 = vpow.pop %v5221
    %v5223 = vmul.f32 %v5220, 1.442695
    %v5224 = vpow.pop %v5223
    %v5225 = vadd.f32 %v5222, 1.0
    %v5226 = vadd.f32 %v5224, 1.0
    %v5227 = vrcp.pop %v5225
    %v5228 = vmul.f32 1.0, %v5227
    %v5229 = vrcp.pop %v5226
    %v5230 = vmul.f32 1.0, %v5229
    %v5233 = vrot.slane %v5217, 6
    %v5234 = vrot.slane %v5218, 6
    %v5237 = vtanh.pop %v5233
    %v5238 = vtanh.pop %v5234
    %v5241 = vrot.slane %v5228, 2
    %v5242 = vrot.slane %v5230, 2
    %v5245 = vmul.f32 %v5241, %v4585
    %v5246 = vmul.f32 %v5242, %v4586
    %v5247 = vmul.f32 %v5228, %v5237
    %v5248 = vmul.f32 %v5230, %v5238
    %v5249 = vadd.f32 %v5245, %v5247
    %v5250 = vadd.f32 %v5246, %v5248
    %v5251 = vtanh.pop %v5249
    %v5252 = vtanh.pop %v5250
    %v5253 = vrot.slane %v5228, 4
    %v5254 = vrot.slane %v5230, 4
    %v5257 = vmul.f32 %v5253, %v5251
    %v5258 = vmul.f32 %v5254, %v5252
    %s5259 = scalar_lea.vmem %s93, 2
    %v5260 = vld [vmem:[%s5259] ss:$8 sm:$0xf]
    %v5261 = vld [vmem:[%s5259] ss:$8 sm:$0xf0]
    %v5262 = vor.u32 %v5260, %v5261
    %s5263 = scalar_lea.vmem %s93, 66
    %v5264 = vld [vmem:[%s5263] ss:$8 sm:$0xf]
    %v5265 = vld [vmem:[%s5263] ss:$8 sm:$0xf0]
    %v5266 = vor.u32 %v5264, %v5265
    %v5269 = vlaneseq
    %v5270 = vshrl.u32 %v5269, 7
    %v5271 = vsub.s32 0, %v5270
    %v5272 = vrot.slane %v4925, %v5271
    %v5273 = vlaneseq
    %v5274 = vshrl.u32 %v5273, 7
    %v5275 = vsub.s32 1, %v5274
    %v5276 = vrot.slane %v4925, %v5275
    %v5277 = vlaneseq
    %v5278 = vshrl.u32 %v5277, 7
    %v5279 = vsub.s32 0, %v5278
    %v5280 = vrot.slane %v4926, %v5279
    %v5281 = vlaneseq
    %v5282 = vshrl.u32 %v5281, 7
    %v5283 = vsub.s32 1, %v5282
    %v5284 = vrot.slane %v4926, %v5283
    %v5289 = vpack.c.bf16 %v5272, %v5272
    %v5290 = vpack.c.bf16 %v5276, %v5276
    %v5291 = vpack.c.bf16 %v5280, %v5280
    %v5292 = vpack.c.bf16 %v5284, %v5284
    %v5297 = vunpack.c.l.b16 %v5289
    %v5298 = vunpack.c.l.b16 %v5290
    %v5299 = vunpack.c.l.b16 %v5291
    %v5300 = vunpack.c.l.b16 %v5292
    %v5301 = vrot.slane %v5299, 7
    %v5302 = vsel %vm2313, %v5301, %v5297
    %v5303 = vrot.slane %v5300, 7
    %v5304 = vsel %vm2313, %v5303, %v5298
    %v5305 = vpack.c.b16 %v5302, %v5302
    %v5306 = vpack.c.b16 %v5304, %v5304
    %5309 = vmatprep.subr.bf16.mxu0 %v1722
    %5310 = vmatpush1.bf16.msra.mxu0 %v1721
    %5311 = vmatprep.subr.bf16.mxu0 %v1730
    %5312 = vmatpush1.bf16.msra.mxu0 %v1729
    %5313 = vmatprep.subr.bf16.mxu0 %v1738
    %5314 = vmatpush1.bf16.msra.mxu0 %v1737
    %5315 = vmatprep.subr.bf16.mxu0 %v1746
    %5316 = vmatpush1.bf16.msra.mxu0 %v1745
    %5317 = vmatprep.subr.bf16.mxu0 %v1754
    %5318 = vmatpush1.bf16.msra.mxu0 %v1753
    %5319 = vmatprep.subr.bf16.mxu0 %v1762
    %5320 = vmatpush1.bf16.msra.mxu0 %v1761
    %5321 = vmatprep.subr.bf16.mxu0 %v1770
    %5322 = vmatpush1.bf16.msra.mxu0 %v1769
    %5323 = vmatprep.subr.bf16.mxu0 %v1778
    %5324 = vmatpush1.bf16.msra.mxu0 %v1777
    %5325 = vmatprep.subr.bf16.mxu0 %v1786
    %5326 = vmatpush1.bf16.msra.mxu0 %v1785
    %5327 = vmatprep.subr.bf16.mxu0 %v1794
    %5328 = vmatpush1.bf16.msra.mxu0 %v1793
    %5329 = vmatprep.subr.bf16.mxu0 %v1802
    %5330 = vmatpush1.bf16.msra.mxu0 %v1801
    %5331 = vmatprep.subr.bf16.mxu0 %v1810
    %5332 = vmatpush1.bf16.msra.mxu0 %v1809
    %5333 = vmatprep.subr.bf16.mxu0 %v1818
    %5334 = vmatpush1.bf16.msra.mxu0 %v1817
    %5335 = vmatprep.subr.bf16.mxu0 %v1826
    %5336 = vmatpush1.bf16.msra.mxu0 %v1825
    %5337 = vmatprep.subr.bf16.mxu0 %v1834
    %5338 = vmatpush1.bf16.msra.mxu0 %v1833
    %5339 = vmatprep.subr.bf16.mxu0 %v1842
    %5340 = vmatpush1.bf16.msra.mxu0 %v1841
    %5341 = vmatprep.mubr.bf16.mxu0 %v5306
    %5342 = vmatmul.mubr.bf16.gmra.mrb[0].mxu0 %v5305
    %v5343 = vpop.f32.mrb[0].mxu0
    %v5344 = vadd.f32 0.0, %v5343
    %v5345 = vpop.f32.mrb[0].mxu0
    %v5346 = vadd.f32 0.0, %v5345
    %v5347 = vpop.f32.mrb[0].mxu0
    %v5348 = vpop.f32.mrb[0].mxu0
    %5349 = vdwg.mxu0
    %5350 = vmatprep.subr.bf16.mxu0 %v1724
    %5351 = vmatpush1.bf16.msra.mxu0 %v1723
    %5352 = vmatprep.subr.bf16.mxu0 %v1732
    %5353 = vmatpush1.bf16.msra.mxu0 %v1731
    %5354 = vmatprep.subr.bf16.mxu0 %v1740
    %5355 = vmatpush1.bf16.msra.mxu0 %v1739
    %5356 = vmatprep.subr.bf16.mxu0 %v1748
    %5357 = vmatpush1.bf16.msra.mxu0 %v1747
    %5358 = vmatprep.subr.bf16.mxu0 %v1756
    %5359 = vmatpush1.bf16.msra.mxu0 %v1755
    %5360 = vmatprep.subr.bf16.mxu0 %v1764
    %5361 = vmatpush1.bf16.msra.mxu0 %v1763
    %5362 = vmatprep.subr.bf16.mxu0 %v1772
    %5363 = vmatpush1.bf16.msra.mxu0 %v1771
    %5364 = vmatprep.subr.bf16.mxu0 %v1780
    %5365 = vmatpush1.bf16.msra.mxu0 %v1779
    %5366 = vmatprep.subr.bf16.mxu0 %v1788
    %5367 = vmatpush1.bf16.msra.mxu0 %v1787
    %5368 = vmatprep.subr.bf16.mxu0 %v1796
    %5369 = vmatpush1.bf16.msra.mxu0 %v1795
    %5370 = vmatprep.subr.bf16.mxu0 %v1804
    %5371 = vmatpush1.bf16.msra.mxu0 %v1803
    %5372 = vmatprep.subr.bf16.mxu0 %v1812
    %5373 = vmatpush1.bf16.msra.mxu0 %v1811
    %5374 = vmatprep.subr.bf16.mxu0 %v1820
    %5375 = vmatpush1.bf16.msra.mxu0 %v1819
    %5376 = vmatprep.subr.bf16.mxu0 %v1828
    %5377 = vmatpush1.bf16.msra.mxu0 %v1827
    %5378 = vmatprep.subr.bf16.mxu0 %v1836
    %5379 = vmatpush1.bf16.msra.mxu0 %v1835
    %5380 = vmatprep.subr.bf16.mxu0 %v1844
    %5381 = vmatpush1.bf16.msra.mxu0 %v1843
    %5382 = vmatprep.mubr.bf16.mxu0 %v5306
    %5383 = vmatmul.mubr.bf16.gmra.mrb[0].mxu0 %v5305
    %v5384 = vpop.f32.mrb[0].mxu0
    %v5385 = vadd.f32 0.0, %v5384
    %v5386 = vpop.f32.mrb[0].mxu0
    %v5387 = vadd.f32 0.0, %v5386
    %v5388 = vpop.f32.mrb[0].mxu0
    %v5389 = vpop.f32.mrb[0].mxu0
    %5390 = vdwg.mxu0
    %5391 = vmatprep.subr.bf16.mxu0 %v1726
    %5392 = vmatpush1.bf16.msra.mxu0 %v1725
    %5393 = vmatprep.subr.bf16.mxu0 %v1734
    %5394 = vmatpush1.bf16.msra.mxu0 %v1733
    %5395 = vmatprep.subr.bf16.mxu0 %v1742
    %5396 = vmatpush1.bf16.msra.mxu0 %v1741
    %5397 = vmatprep.subr.bf16.mxu0 %v1750
    %5398 = vmatpush1.bf16.msra.mxu0 %v1749
    %5399 = vmatprep.subr.bf16.mxu0 %v1758
    %5400 = vmatpush1.bf16.msra.mxu0 %v1757
    %5401 = vmatprep.subr.bf16.mxu0 %v1766
    %5402 = vmatpush1.bf16.msra.mxu0 %v1765
    %5403 = vmatprep.subr.bf16.mxu0 %v1774
    %5404 = vmatpush1.bf16.msra.mxu0 %v1773
    %5405 = vmatprep.subr.bf16.mxu0 %v1782
    %5406 = vmatpush1.bf16.msra.mxu0 %v1781
    %5407 = vmatprep.subr.bf16.mxu0 %v1790
    %5408 = vmatpush1.bf16.msra.mxu0 %v1789
    %5409 = vmatprep.subr.bf16.mxu0 %v1798
    %5410 = vmatpush1.bf16.msra.mxu0 %v1797
    %5411 = vmatprep.subr.bf16.mxu0 %v1806
    %5412 = vmatpush1.bf16.msra.mxu0 %v1805
    %5413 = vmatprep.subr.bf16.mxu0 %v1814
    %5414 = vmatpush1.bf16.msra.mxu0 %v1813
    %5415 = vmatprep.subr.bf16.mxu0 %v1822
    %5416 = vmatpush1.bf16.msra.mxu0 %v1821
    %5417 = vmatprep.subr.bf16.mxu0 %v1830
    %5418 = vmatpush1.bf16.msra.mxu0 %v1829
    %5419 = vmatprep.subr.bf16.mxu0 %v1838
    %5420 = vmatpush1.bf16.msra.mxu0 %v1837
    %5421 = vmatprep.subr.bf16.mxu0 %v1846
    %5422 = vmatpush1.bf16.msra.mxu0 %v1845
    %5423 = vmatprep.mubr.bf16.mxu0 %v5306
    %5424 = vmatmul.mubr.bf16.gmra.mrb[0].mxu0 %v5305
    %v5425 = vpop.f32.mrb[0].mxu0
    %v5426 = vadd.f32 0.0, %v5425
    %v5427 = vpop.f32.mrb[0].mxu0
    %v5428 = vadd.f32 0.0, %v5427
    %v5429 = vpop.f32.mrb[0].mxu0
    %v5430 = vpop.f32.mrb[0].mxu0
    %5431 = vdwg.mxu0
    %5432 = vmatprep.subr.bf16.mxu0 %v1728
    %5433 = vmatpush1.bf16.msra.mxu0 %v1727
    %5434 = vmatprep.subr.bf16.mxu0 %v1736
    %5435 = vmatpush1.bf16.msra.mxu0 %v1735
    %5436 = vmatprep.subr.bf16.mxu0 %v1744
    %5437 = vmatpush1.bf16.msra.mxu0 %v1743
    %5438 = vmatprep.subr.bf16.mxu0 %v1752
    %5439 = vmatpush1.bf16.msra.mxu0 %v1751
    %5440 = vmatprep.subr.bf16.mxu0 %v1760
    %5441 = vmatpush1.bf16.msra.mxu0 %v1759
    %5442 = vmatprep.subr.bf16.mxu0 %v1768
    %5443 = vmatpush1.bf16.msra.mxu0 %v1767
    %5444 = vmatprep.subr.bf16.mxu0 %v1776
    %5445 = vmatpush1.bf16.msra.mxu0 %v1775
    %5446 = vmatprep.subr.bf16.mxu0 %v1784
    %5447 = vmatpush1.bf16.msra.mxu0 %v1783
    %5448 = vmatprep.subr.bf16.mxu0 %v1792
    %5449 = vmatpush1.bf16.msra.mxu0 %v1791
    %5450 = vmatprep.subr.bf16.mxu0 %v1800
    %5451 = vmatpush1.bf16.msra.mxu0 %v1799
    %5452 = vmatprep.subr.bf16.mxu0 %v1808
    %5453 = vmatpush1.bf16.msra.mxu0 %v1807
    %5454 = vmatprep.subr.bf16.mxu0 %v1816
    %5455 = vmatpush1.bf16.msra.mxu0 %v1815
    %5456 = vmatprep.subr.bf16.mxu0 %v1824
    %5457 = vmatpush1.bf16.msra.mxu0 %v1823
    %5458 = vmatprep.subr.bf16.mxu0 %v1832
    %5459 = vmatpush1.bf16.msra.mxu0 %v1831
    %5460 = vmatprep.subr.bf16.mxu0 %v1840
    %5461 = vmatpush1.bf16.msra.mxu0 %v1839
    %5462 = vmatprep.subr.bf16.mxu0 %v1848
    %5463 = vmatpush1.bf16.msra.mxu0 %v1847
    %5464 = vmatprep.mubr.bf16.mxu0 %v5306
    %5465 = vmatmul.mubr.bf16.gmra.mrb[0].mxu0 %v5305
    %v5466 = vpop.f32.mrb[0].mxu0
    %v5467 = vadd.f32 0.0, %v5466
    %v5468 = vpop.f32.mrb[0].mxu0
    %v5469 = vadd.f32 0.0, %v5468
    %v5470 = vpop.f32.mrb[0].mxu0
    %v5471 = vpop.f32.mrb[0].mxu0
    %5472 = vdwg.mxu0
    %v5481 = vcombine.low %v5344, %v5346
    %v5482 = vcombine.low %v5385, %v5387
    %v5483 = vcombine.low %v5426, %v5428
    %v5484 = vcombine.low %v5467, %v5469
    %v5486 = vunpack.c.l.s4 1966171168
    %v5487 = vunpack.c.0.s8 %v5486
    %v5488 = vlaneseq
    %v5489 = vshrl.u32 %v5488, 7
    %v5490 = vsub.s32 %v5487, %v5489
    %v5491 = vrot.slane %v5481, %v5490
    %v5493 = vunpack.c.l.s4 1966171168
    %v5494 = vunpack.c.0.s8 %v5493
    %v5495 = vlaneseq
    %v5496 = vshrl.u32 %v5495, 7
    %v5497 = vsub.s32 %v5494, %v5496
    %v5498 = vrot.slane %v5482, %v5497
    %v5500 = vunpack.c.l.s4 1966171168
    %v5501 = vunpack.c.0.s8 %v5500
    %v5502 = vlaneseq
    %v5503 = vshrl.u32 %v5502, 7
    %v5504 = vsub.s32 %v5501, %v5503
    %v5505 = vrot.slane %v5483, %v5504
    %v5507 = vunpack.c.l.s4 1966171168
    %v5508 = vunpack.c.0.s8 %v5507
    %v5509 = vlaneseq
    %v5510 = vshrl.u32 %v5509, 7
    %v5511 = vsub.s32 %v5508, %v5510
    %v5512 = vrot.slane %v5484, %v5511
    %v5513 = vcombine.low %v5491, %v5498
    %v5514 = vcombine.high %v5491, %v5498
    %v5515 = vcombine.low %v5505, %v5512
    %v5516 = vcombine.high %v5505, %v5512
    %v5518 = vunpack.c.l.s4 1966171168
    %v5519 = vunpack.c.0.s8 %v5518
    %v5520 = vlaneseq
    %v5521 = vshrl.u32 %v5520, 7
    %v5522 = vsub.s32 %v5519, %v5521
    %v5523 = vrot.slane %v5513, %v5522
    %v5525 = vunpack.c.l.s4 1966171168
    %v5526 = vunpack.c.0.s8 %v5525
    %v5527 = vlaneseq
    %v5528 = vshrl.u32 %v5527, 7
    %v5529 = vsub.s32 %v5526, %v5528
    %v5530 = vrot.slane %v5514, %v5529
    %v5532 = vunpack.c.l.s4 1966171168
    %v5533 = vunpack.c.0.s8 %v5532
    %v5534 = vlaneseq
    %v5535 = vshrl.u32 %v5534, 7
    %v5536 = vsub.s32 %v5533, %v5535
    %v5537 = vrot.slane %v5515, %v5536
    %v5539 = vunpack.c.l.s4 1966171168
    %v5540 = vunpack.c.0.s8 %v5539
    %v5541 = vlaneseq
    %v5542 = vshrl.u32 %v5541, 7
    %v5543 = vsub.s32 %v5540, %v5542
    %v5544 = vrot.slane %v5516, %v5543
    %v5545 = vcombine.low %v5523, %v5537
    %v5546 = vcombine.low %v5530, %v5544
    %v5549 = vadd.f32 %v5262, %v5545
    %v5550 = vadd.f32 %v5266, %v5546
    %v5551 = vxor.u32 %v5549, 2147483648
    %v5552 = vxor.u32 %v5550, 2147483648
    %v5553 = vmul.f32 %v5551, 1.442695
    %v5554 = vpow.pop %v5553
    %v5555 = vmul.f32 %v5552, 1.442695
    %v5556 = vpow.pop %v5555
    %v5557 = vadd.f32 %v5554, 1.0
    %v5558 = vadd.f32 %v5556, 1.0
    %v5559 = vrcp.pop %v5557
    %v5560 = vmul.f32 1.0, %v5559
    %v5561 = vrcp.pop %v5558
    %v5562 = vmul.f32 1.0, %v5561
    %v5565 = vrot.slane %v5549, 6
    %v5566 = vrot.slane %v5550, 6
    %v5569 = vtanh.pop %v5565
    %v5570 = vtanh.pop %v5566
    %v5573 = vrot.slane %v5560, 2
    %v5574 = vrot.slane %v5562, 2
    %v5577 = vmul.f32 %v5573, %v4917
    %v5578 = vmul.f32 %v5574, %v4918
    %v5579 = vmul.f32 %v5560, %v5569
    %v5580 = vmul.f32 %v5562, %v5570
    %v5581 = vadd.f32 %v5577, %v5579
    %v5582 = vadd.f32 %v5578, %v5580
    %v5583 = vtanh.pop %v5581
    %v5584 = vtanh.pop %v5582
    %v5585 = vrot.slane %v5560, 4
    %v5586 = vrot.slane %v5562, 4
    %v5589 = vmul.f32 %v5585, %v5583
    %v5590 = vmul.f32 %v5586, %v5584
    %s5591 = scalar_lea.vmem %s0, 6
    %v5592 = vld [vmem:[%s5591] ss:$8 sm:$0xf]
    %v5593 = vld [vmem:[%s5591] ss:$8 sm:$0xf0]
    %v5594 = vor.u32 %v5592, %v5593
    %s5595 = scalar_lea.vmem %s0, 70
    %v5596 = vld [vmem:[%s5595] ss:$8 sm:$0xf]
    %v5597 = vld [vmem:[%s5595] ss:$8 sm:$0xf0]
    %v5598 = vor.u32 %v5596, %v5597
    %v5601 = vlaneseq
    %v5602 = vshrl.u32 %v5601, 7
    %v5603 = vsub.s32 0, %v5602
    %v5604 = vrot.slane %v5257, %v5603
    %v5605 = vlaneseq
    %v5606 = vshrl.u32 %v5605, 7
    %v5607 = vsub.s32 1, %v5606
    %v5608 = vrot.slane %v5257, %v5607
    %v5609 = vlaneseq
    %v5610 = vshrl.u32 %v5609, 7
    %v5611 = vsub.s32 0, %v5610
    %v5612 = vrot.slane %v5258, %v5611
    %v5613 = vlaneseq
    %v5614 = vshrl.u32 %v5613, 7
    %v5615 = vsub.s32 1, %v5614
    %v5616 = vrot.slane %v5258, %v5615
    %v5621 = vpack.c.bf16 %v5604, %v5604
    %v5622 = vpack.c.bf16 %v5608, %v5608
    %v5623 = vpack.c.bf16 %v5612, %v5612
    %v5624 = vpack.c.bf16 %v5616, %v5616
    %v5629 = vunpack.c.l.b16 %v5621
    %v5630 = vunpack.c.l.b16 %v5622
    %v5631 = vunpack.c.l.b16 %v5623
    %v5632 = vunpack.c.l.b16 %v5624
    %v5633 = vrot.slane %v5631, 7
    %v5634 = vsel %vm2313, %v5633, %v5629
    %v5635 = vrot.slane %v5632, 7
    %v5636 = vsel %vm2313, %v5635, %v5630
    %v5637 = vpack.c.b16 %v5634, %v5634
    %v5638 = vpack.c.b16 %v5636, %v5636
    %5641 = vmatprep.subr.bf16.mxu0 %v768
    %5642 = vmatpush1.bf16.msra.mxu0 %v767
    %5643 = vmatprep.subr.bf16.mxu0 %v776
    %5644 = vmatpush1.bf16.msra.mxu0 %v775
    %5645 = vmatprep.subr.bf16.mxu0 %v784
    %5646 = vmatpush1.bf16.msra.mxu0 %v783
    %5647 = vmatprep.subr.bf16.mxu0 %v792
    %5648 = vmatpush1.bf16.msra.mxu0 %v791
    %5649 = vmatprep.subr.bf16.mxu0 %v800
    %5650 = vmatpush1.bf16.msra.mxu0 %v799
    %5651 = vmatprep.subr.bf16.mxu0 %v808
    %5652 = vmatpush1.bf16.msra.mxu0 %v807
    %5653 = vmatprep.subr.bf16.mxu0 %v816
    %5654 = vmatpush1.bf16.msra.mxu0 %v815
    %5655 = vmatprep.subr.bf16.mxu0 %v824
    %5656 = vmatpush1.bf16.msra.mxu0 %v823
    %5657 = vmatprep.subr.bf16.mxu0 %v832
    %5658 = vmatpush1.bf16.msra.mxu0 %v831
    %5659 = vmatprep.subr.bf16.mxu0 %v840
    %5660 = vmatpush1.bf16.msra.mxu0 %v839
    %5661 = vmatprep.subr.bf16.mxu0 %v848
    %5662 = vmatpush1.bf16.msra.mxu0 %v847
    %5663 = vmatprep.subr.bf16.mxu0 %v856
    %5664 = vmatpush1.bf16.msra.mxu0 %v855
    %5665 = vmatprep.subr.bf16.mxu0 %v864
    %5666 = vmatpush1.bf16.msra.mxu0 %v863
    %5667 = vmatprep.subr.bf16.mxu0 %v872
    %5668 = vmatpush1.bf16.msra.mxu0 %v871
    %5669 = vmatprep.subr.bf16.mxu0 %v880
    %5670 = vmatpush1.bf16.msra.mxu0 %v879
    %5671 = vmatprep.subr.bf16.mxu0 %v888
    %5672 = vmatpush1.bf16.msra.mxu0 %v887
    %5673 = vmatprep.mubr.bf16.mxu0 %v5638
    %5674 = vmatmul.mubr.bf16.gmra.mrb[0].mxu0 %v5637
    %v5675 = vpop.f32.mrb[0].mxu0
    %v5676 = vadd.f32 0.0, %v5675
    %v5677 = vpop.f32.mrb[0].mxu0
    %v5678 = vadd.f32 0.0, %v5677
    %v5679 = vpop.f32.mrb[0].mxu0
    %v5680 = vpop.f32.mrb[0].mxu0
    %5681 = vdwg.mxu0
    %5682 = vmatprep.subr.bf16.mxu0 %v770
    %5683 = vmatpush1.bf16.msra.mxu0 %v769
    %5684 = vmatprep.subr.bf16.mxu0 %v778
    %5685 = vmatpush1.bf16.msra.mxu0 %v777
    %5686 = vmatprep.subr.bf16.mxu0 %v786
    %5687 = vmatpush1.bf16.msra.mxu0 %v785
    %5688 = vmatprep.subr.bf16.mxu0 %v794
    %5689 = vmatpush1.bf16.msra.mxu0 %v793
    %5690 = vmatprep.subr.bf16.mxu0 %v802
    %5691 = vmatpush1.bf16.msra.mxu0 %v801
    %5692 = vmatprep.subr.bf16.mxu0 %v810
    %5693 = vmatpush1.bf16.msra.mxu0 %v809
    %5694 = vmatprep.subr.bf16.mxu0 %v818
    %5695 = vmatpush1.bf16.msra.mxu0 %v817
    %5696 = vmatprep.subr.bf16.mxu0 %v826
    %5697 = vmatpush1.bf16.msra.mxu0 %v825
    %5698 = vmatprep.subr.bf16.mxu0 %v834
    %5699 = vmatpush1.bf16.msra.mxu0 %v833
    %5700 = vmatprep.subr.bf16.mxu0 %v842
    %5701 = vmatpush1.bf16.msra.mxu0 %v841
    %5702 = vmatprep.subr.bf16.mxu0 %v850
    %5703 = vmatpush1.bf16.msra.mxu0 %v849
    %5704 = vmatprep.subr.bf16.mxu0 %v858
    %5705 = vmatpush1.bf16.msra.mxu0 %v857
    %5706 = vmatprep.subr.bf16.mxu0 %v866
    %5707 = vmatpush1.bf16.msra.mxu0 %v865
    %5708 = vmatprep.subr.bf16.mxu0 %v874
    %5709 = vmatpush1.bf16.msra.mxu0 %v873
    %5710 = vmatprep.subr.bf16.mxu0 %v882
    %5711 = vmatpush1.bf16.msra.mxu0 %v881
    %5712 = vmatprep.subr.bf16.mxu0 %v890
    %5713 = vmatpush1.bf16.msra.mxu0 %v889
    %5714 = vmatprep.mubr.bf16.mxu0 %v5638
    %5715 = vmatmul.mubr.bf16.gmra.mrb[0].mxu0 %v5637
    %v5716 = vpop.f32.mrb[0].mxu0
    %v5717 = vadd.f32 0.0, %v5716
    %v5718 = vpop.f32.mrb[0].mxu0
    %v5719 = vadd.f32 0.0, %v5718
    %v5720 = vpop.f32.mrb[0].mxu0
    %v5721 = vpop.f32.mrb[0].mxu0
    %5722 = vdwg.mxu0
    %5723 = vmatprep.subr.bf16.mxu0 %v772
    %5724 = vmatpush1.bf16.msra.mxu0 %v771
    %5725 = vmatprep.subr.bf16.mxu0 %v780
    %5726 = vmatpush1.bf16.msra.mxu0 %v779
    %5727 = vmatprep.subr.bf16.mxu0 %v788
    %5728 = vmatpush1.bf16.msra.mxu0 %v787
    %5729 = vmatprep.subr.bf16.mxu0 %v796
    %5730 = vmatpush1.bf16.msra.mxu0 %v795
    %5731 = vmatprep.subr.bf16.mxu0 %v804
    %5732 = vmatpush1.bf16.msra.mxu0 %v803
    %5733 = vmatprep.subr.bf16.mxu0 %v812
    %5734 = vmatpush1.bf16.msra.mxu0 %v811
    %5735 = vmatprep.subr.bf16.mxu0 %v820
    %5736 = vmatpush1.bf16.msra.mxu0 %v819
    %5737 = vmatprep.subr.bf16.mxu0 %v828
    %5738 = vmatpush1.bf16.msra.mxu0 %v827
    %5739 = vmatprep.subr.bf16.mxu0 %v836
    %5740 = vmatpush1.bf16.msra.mxu0 %v835
    %5741 = vmatprep.subr.bf16.mxu0 %v844
    %5742 = vmatpush1.bf16.msra.mxu0 %v843
    %5743 = vmatprep.subr.bf16.mxu0 %v852
    %5744 = vmatpush1.bf16.msra.mxu0 %v851
    %5745 = vmatprep.subr.bf16.mxu0 %v860
    %5746 = vmatpush1.bf16.msra.mxu0 %v859
    %5747 = vmatprep.subr.bf16.mxu0 %v868
    %5748 = vmatpush1.bf16.msra.mxu0 %v867
    %5749 = vmatprep.subr.bf16.mxu0 %v876
    %5750 = vmatpush1.bf16.msra.mxu0 %v875
    %5751 = vmatprep.subr.bf16.mxu0 %v884
    %5752 = vmatpush1.bf16.msra.mxu0 %v883
    %5753 = vmatprep.subr.bf16.mxu0 %v892
    %5754 = vmatpush1.bf16.msra.mxu0 %v891
    %5755 = vmatprep.mubr.bf16.mxu0 %v5638
    %5756 = vmatmul.mubr.bf16.gmra.mrb[0].mxu0 %v5637
    %v5757 = vpop.f32.mrb[0].mxu0
    %v5758 = vadd.f32 0.0, %v5757
    %v5759 = vpop.f32.mrb[0].mxu0
    %v5760 = vadd.f32 0.0, %v5759
    %v5761 = vpop.f32.mrb[0].mxu0
    %v5762 = vpop.f32.mrb[0].mxu0
    %5763 = vdwg.mxu0
    %5764 = vmatprep.subr.bf16.mxu0 %v774
    %5765 = vmatpush1.bf16.msra.mxu0 %v773
    %5766 = vmatprep.subr.bf16.mxu0 %v782
    %5767 = vmatpush1.bf16.msra.mxu0 %v781
    %5768 = vmatprep.subr.bf16.mxu0 %v790
    %5769 = vmatpush1.bf16.msra.mxu0 %v789
    %5770 = vmatprep.subr.bf16.mxu0 %v798
    %5771 = vmatpush1.bf16.msra.mxu0 %v797
    %5772 = vmatprep.subr.bf16.mxu0 %v806
    %5773 = vmatpush1.bf16.msra.mxu0 %v805
    %5774 = vmatprep.subr.bf16.mxu0 %v814
    %5775 = vmatpush1.bf16.msra.mxu0 %v813
    %5776 = vmatprep.subr.bf16.mxu0 %v822
    %5777 = vmatpush1.bf16.msra.mxu0 %v821
    %5778 = vmatprep.subr.bf16.mxu0 %v830
    %5779 = vmatpush1.bf16.msra.mxu0 %v829
    %5780 = vmatprep.subr.bf16.mxu0 %v838
    %5781 = vmatpush1.bf16.msra.mxu0 %v837
    %5782 = vmatprep.subr.bf16.mxu0 %v846
    %5783 = vmatpush1.bf16.msra.mxu0 %v845
    %5784 = vmatprep.subr.bf16.mxu0 %v854
    %5785 = vmatpush1.bf16.msra.mxu0 %v853
    %5786 = vmatprep.subr.bf16.mxu0 %v862
    %5787 = vmatpush1.bf16.msra.mxu0 %v861
    %5788 = vmatprep.subr.bf16.mxu0 %v870
    %5789 = vmatpush1.bf16.msra.mxu0 %v869
    %5790 = vmatprep.subr.bf16.mxu0 %v878
    %5791 = vmatpush1.bf16.msra.mxu0 %v877
    %5792 = vmatprep.subr.bf16.mxu0 %v886
    %5793 = vmatpush1.bf16.msra.mxu0 %v885
    %5794 = vmatprep.subr.bf16.mxu0 %v894
    %5795 = vmatpush1.bf16.msra.mxu0 %v893
    %5796 = vmatprep.mubr.bf16.mxu0 %v5638
    %5797 = vmatmul.mubr.bf16.gmra.mrb[0].mxu0 %v5637
    %v5798 = vpop.f32.mrb[0].mxu0
    %v5799 = vadd.f32 0.0, %v5798
    %v5800 = vpop.f32.mrb[0].mxu0
    %v5801 = vadd.f32 0.0, %v5800
    %v5802 = vpop.f32.mrb[0].mxu0
    %v5803 = vpop.f32.mrb[0].mxu0
    %5804 = vdwg.mxu0
    %v5813 = vcombine.low %v5676, %v5678
    %v5814 = vcombine.low %v5717, %v5719
    %v5815 = vcombine.low %v5758, %v5760
    %v5816 = vcombine.low %v5799, %v5801
    %v5818 = vunpack.c.l.s4 1966171168
    %v5819 = vunpack.c.0.s8 %v5818
    %v5820 = vlaneseq
    %v5821 = vshrl.u32 %v5820, 7
    %v5822 = vsub.s32 %v5819, %v5821
    %v5823 = vrot.slane %v5813, %v5822
    %v5825 = vunpack.c.l.s4 1966171168
    %v5826 = vunpack.c.0.s8 %v5825
    %v5827 = vlaneseq
    %v5828 = vshrl.u32 %v5827, 7
    %v5829 = vsub.s32 %v5826, %v5828
    %v5830 = vrot.slane %v5814, %v5829
    %v5832 = vunpack.c.l.s4 1966171168
    %v5833 = vunpack.c.0.s8 %v5832
    %v5834 = vlaneseq
    %v5835 = vshrl.u32 %v5834, 7
    %v5836 = vsub.s32 %v5833, %v5835
    %v5837 = vrot.slane %v5815, %v5836
    %v5839 = vunpack.c.l.s4 1966171168
    %v5840 = vunpack.c.0.s8 %v5839
    %v5841 = vlaneseq
    %v5842 = vshrl.u32 %v5841, 7
    %v5843 = vsub.s32 %v5840, %v5842
    %v5844 = vrot.slane %v5816, %v5843
    %v5845 = vcombine.low %v5823, %v5830
    %v5846 = vcombine.high %v5823, %v5830
    %v5847 = vcombine.low %v5837, %v5844
    %v5848 = vcombine.high %v5837, %v5844
    %v5850 = vunpack.c.l.s4 1966171168
    %v5851 = vunpack.c.0.s8 %v5850
    %v5852 = vlaneseq
    %v5853 = vshrl.u32 %v5852, 7
    %v5854 = vsub.s32 %v5851, %v5853
    %v5855 = vrot.slane %v5845, %v5854
    %v5857 = vunpack.c.l.s4 1966171168
    %v5858 = vunpack.c.0.s8 %v5857
    %v5859 = vlaneseq
    %v5860 = vshrl.u32 %v5859, 7
    %v5861 = vsub.s32 %v5858, %v5860
    %v5862 = vrot.slane %v5846, %v5861
    %v5864 = vunpack.c.l.s4 1966171168
    %v5865 = vunpack.c.0.s8 %v5864
    %v5866 = vlaneseq
    %v5867 = vshrl.u32 %v5866, 7
    %v5868 = vsub.s32 %v5865, %v5867
    %v5869 = vrot.slane %v5847, %v5868
    %v5871 = vunpack.c.l.s4 1966171168
    %v5872 = vunpack.c.0.s8 %v5871
    %v5873 = vlaneseq
    %v5874 = vshrl.u32 %v5873, 7
    %v5875 = vsub.s32 %v5872, %v5874
    %v5876 = vrot.slane %v5848, %v5875
    %v5877 = vcombine.low %v5855, %v5869
    %v5878 = vcombine.low %v5862, %v5876
    %v5881 = vadd.f32 %v5594, %v5877
    %v5882 = vadd.f32 %v5598, %v5878
    %v5883 = vxor.u32 %v5881, 2147483648
    %v5884 = vxor.u32 %v5882, 2147483648
    %v5885 = vmul.f32 %v5883, 1.442695
    %v5886 = vpow.pop %v5885
    %v5887 = vmul.f32 %v5884, 1.442695
    %v5888 = vpow.pop %v5887
    %v5889 = vadd.f32 %v5886, 1.0
    %v5890 = vadd.f32 %v5888, 1.0
    %v5891 = vrcp.pop %v5889
    %v5892 = vmul.f32 1.0, %v5891
    %v5893 = vrcp.pop %v5890
    %v5894 = vmul.f32 1.0, %v5893
    %v5897 = vrot.slane %v5881, 6
    %v5898 = vrot.slane %v5882, 6
    %v5901 = vtanh.pop %v5897
    %v5902 = vtanh.pop %v5898
    %v5905 = vrot.slane %v5892, 2
    %v5906 = vrot.slane %v5894, 2
    %v5909 = vmul.f32 %v5905, %v5249
    %v5910 = vmul.f32 %v5906, %v5250
    %v5911 = vmul.f32 %v5892, %v5901
    %v5912 = vmul.f32 %v5894, %v5902
    %v5913 = vadd.f32 %v5909, %v5911
    %v5914 = vadd.f32 %v5910, %v5912
    %v5915 = vtanh.pop %v5913
    %v5916 = vtanh.pop %v5914
    %v5917 = vrot.slane %v5892, 4
    %v5918 = vrot.slane %v5894, 4
    %v5921 = vmul.f32 %v5917, %v5915
    %v5922 = vmul.f32 %v5918, %v5916
    %s5923 = scalar_lea.vmem %s93, 1
    %v5924 = vld [vmem:[%s5923] ss:$8 sm:$0xf]
    %v5925 = vld [vmem:[%s5923] ss:$8 sm:$0xf0]
    %v5926 = vor.u32 %v5924, %v5925
    %s5927 = scalar_lea.vmem %s93, 65
    %v5928 = vld [vmem:[%s5927] ss:$8 sm:$0xf]
    %v5929 = vld [vmem:[%s5927] ss:$8 sm:$0xf0]
    %v5930 = vor.u32 %v5928, %v5929
    %v5933 = vlaneseq
    %v5934 = vshrl.u32 %v5933, 7
    %v5935 = vsub.s32 0, %v5934
    %v5936 = vrot.slane %v5589, %v5935
    %v5937 = vlaneseq
    %v5938 = vshrl.u32 %v5937, 7
    %v5939 = vsub.s32 1, %v5938
    %v5940 = vrot.slane %v5589, %v5939
    %v5941 = vlaneseq
    %v5942 = vshrl.u32 %v5941, 7
    %v5943 = vsub.s32 0, %v5942
    %v5944 = vrot.slane %v5590, %v5943
    %v5945 = vlaneseq
    %v5946 = vshrl.u32 %v5945, 7
    %v5947 = vsub.s32 1, %v5946
    %v5948 = vrot.slane %v5590, %v5947
    %v5953 = vpack.c.bf16 %v5936, %v5936
    %v5954 = vpack.c.bf16 %v5940, %v5940
    %v5955 = vpack.c.bf16 %v5944, %v5944
    %v5956 = vpack.c.bf16 %v5948, %v5948
    %v5961 = vunpack.c.l.b16 %v5953
    %v5962 = vunpack.c.l.b16 %v5954
    %v5963 = vunpack.c.l.b16 %v5955
    %v5964 = vunpack.c.l.b16 %v5956
    %v5965 = vrot.slane %v5963, 7
    %v5966 = vsel %vm2313, %v5965, %v5961
    %v5967 = vrot.slane %v5964, 7
    %v5968 = vsel %vm2313, %v5967, %v5962
    %v5969 = vpack.c.b16 %v5966, %v5966
    %v5970 = vpack.c.b16 %v5968, %v5968
    %5973 = vmatprep.subr.bf16.mxu0 %v1722
    %5974 = vmatpush1.bf16.msra.mxu0 %v1721
    %5975 = vmatprep.subr.bf16.mxu0 %v1730
    %5976 = vmatpush1.bf16.msra.mxu0 %v1729
    %5977 = vmatprep.subr.bf16.mxu0 %v1738
    %5978 = vmatpush1.bf16.msra.mxu0 %v1737
    %5979 = vmatprep.subr.bf16.mxu0 %v1746
    %5980 = vmatpush1.bf16.msra.mxu0 %v1745
    %5981 = vmatprep.subr.bf16.mxu0 %v1754
    %5982 = vmatpush1.bf16.msra.mxu0 %v1753
    %5983 = vmatprep.subr.bf16.mxu0 %v1762
    %5984 = vmatpush1.bf16.msra.mxu0 %v1761
    %5985 = vmatprep.subr.bf16.mxu0 %v1770
    %5986 = vmatpush1.bf16.msra.mxu0 %v1769
    %5987 = vmatprep.subr.bf16.mxu0 %v1778
    %5988 = vmatpush1.bf16.msra.mxu0 %v1777
    %5989 = vmatprep.subr.bf16.mxu0 %v1786
    %5990 = vmatpush1.bf16.msra.mxu0 %v1785
    %5991 = vmatprep.subr.bf16.mxu0 %v1794
    %5992 = vmatpush1.bf16.msra.mxu0 %v1793
    %5993 = vmatprep.subr.bf16.mxu0 %v1802
    %5994 = vmatpush1.bf16.msra.mxu0 %v1801
    %5995 = vmatprep.subr.bf16.mxu0 %v1810
    %5996 = vmatpush1.bf16.msra.mxu0 %v1809
    %5997 = vmatprep.subr.bf16.mxu0 %v1818
    %5998 = vmatpush1.bf16.msra.mxu0 %v1817
    %5999 = vmatprep.subr.bf16.mxu0 %v1826
    %6000 = vmatpush1.bf16.msra.mxu0 %v1825
    %6001 = vmatprep.subr.bf16.mxu0 %v1834
    %6002 = vmatpush1.bf16.msra.mxu0 %v1833
    %6003 = vmatprep.subr.bf16.mxu0 %v1842
    %6004 = vmatpush1.bf16.msra.mxu0 %v1841
    %6005 = vmatprep.mubr.bf16.mxu0 %v5970
    %6006 = vmatmul.mubr.bf16.gmra.mrb[0].mxu0 %v5969
    %v6007 = vpop.f32.mrb[0].mxu0
    %v6008 = vadd.f32 0.0, %v6007
    %v6009 = vpop.f32.mrb[0].mxu0
    %v6010 = vadd.f32 0.0, %v6009
    %v6011 = vpop.f32.mrb[0].mxu0
    %v6012 = vpop.f32.mrb[0].mxu0
    %6013 = vdwg.mxu0
    %6014 = vmatprep.subr.bf16.mxu0 %v1724
    %6015 = vmatpush1.bf16.msra.mxu0 %v1723
    %6016 = vmatprep.subr.bf16.mxu0 %v1732
    %6017 = vmatpush1.bf16.msra.mxu0 %v1731
    %6018 = vmatprep.subr.bf16.mxu0 %v1740
    %6019 = vmatpush1.bf16.msra.mxu0 %v1739
    %6020 = vmatprep.subr.bf16.mxu0 %v1748
    %6021 = vmatpush1.bf16.msra.mxu0 %v1747
    %6022 = vmatprep.subr.bf16.mxu0 %v1756
    %6023 = vmatpush1.bf16.msra.mxu0 %v1755
    %6024 = vmatprep.subr.bf16.mxu0 %v1764
    %6025 = vmatpush1.bf16.msra.mxu0 %v1763
    %6026 = vmatprep.subr.bf16.mxu0 %v1772
    %6027 = vmatpush1.bf16.msra.mxu0 %v1771
    %6028 = vmatprep.subr.bf16.mxu0 %v1780
    %6029 = vmatpush1.bf16.msra.mxu0 %v1779
    %6030 = vmatprep.subr.bf16.mxu0 %v1788
    %6031 = vmatpush1.bf16.msra.mxu0 %v1787
    %6032 = vmatprep.subr.bf16.mxu0 %v1796
    %6033 = vmatpush1.bf16.msra.mxu0 %v1795
    %6034 = vmatprep.subr.bf16.mxu0 %v1804
    %6035 = vmatpush1.bf16.msra.mxu0 %v1803
    %6036 = vmatprep.subr.bf16.mxu0 %v1812
    %6037 = vmatpush1.bf16.msra.mxu0 %v1811
    %6038 = vmatprep.subr.bf16.mxu0 %v1820
    %6039 = vmatpush1.bf16.msra.mxu0 %v1819
    %6040 = vmatprep.subr.bf16.mxu0 %v1828
    %6041 = vmatpush1.bf16.msra.mxu0 %v1827
    %6042 = vmatprep.subr.bf16.mxu0 %v1836
    %6043 = vmatpush1.bf16.msra.mxu0 %v1835
    %6044 = vmatprep.subr.bf16.mxu0 %v1844
    %6045 = vmatpush1.bf16.msra.mxu0 %v1843
    %6046 = vmatprep.mubr.bf16.mxu0 %v5970
    %6047 = vmatmul.mubr.bf16.gmra.mrb[0].mxu0 %v5969
    %v6048 = vpop.f32.mrb[0].mxu0
    %v6049 = vadd.f32 0.0, %v6048
    %v6050 = vpop.f32.mrb[0].mxu0
    %v6051 = vadd.f32 0.0, %v6050
    %v6052 = vpop.f32.mrb[0].mxu0
    %v6053 = vpop.f32.mrb[0].mxu0
    %6054 = vdwg.mxu0
    %6055 = vmatprep.subr.bf16.mxu0 %v1726
    %6056 = vmatpush1.bf16.msra.mxu0 %v1725
    %6057 = vmatprep.subr.bf16.mxu0 %v1734
    %6058 = vmatpush1.bf16.msra.mxu0 %v1733
    %6059 = vmatprep.subr.bf16.mxu0 %v1742
    %6060 = vmatpush1.bf16.msra.mxu0 %v1741
    %6061 = vmatprep.subr.bf16.mxu0 %v1750
    %6062 = vmatpush1.bf16.msra.mxu0 %v1749
    %6063 = vmatprep.subr.bf16.mxu0 %v1758
    %6064 = vmatpush1.bf16.msra.mxu0 %v1757
    %6065 = vmatprep.subr.bf16.mxu0 %v1766
    %6066 = vmatpush1.bf16.msra.mxu0 %v1765
    %6067 = vmatprep.subr.bf16.mxu0 %v1774
    %6068 = vmatpush1.bf16.msra.mxu0 %v1773
    %6069 = vmatprep.subr.bf16.mxu0 %v1782
    %6070 = vmatpush1.bf16.msra.mxu0 %v1781
    %6071 = vmatprep.subr.bf16.mxu0 %v1790
    %6072 = vmatpush1.bf16.msra.mxu0 %v1789
    %6073 = vmatprep.subr.bf16.mxu0 %v1798
    %6074 = vmatpush1.bf16.msra.mxu0 %v1797
    %6075 = vmatprep.subr.bf16.mxu0 %v1806
    %6076 = vmatpush1.bf16.msra.mxu0 %v1805
    %6077 = vmatprep.subr.bf16.mxu0 %v1814
    %6078 = vmatpush1.bf16.msra.mxu0 %v1813
    %6079 = vmatprep.subr.bf16.mxu0 %v1822
    %6080 = vmatpush1.bf16.msra.mxu0 %v1821
    %6081 = vmatprep.subr.bf16.mxu0 %v1830
    %6082 = vmatpush1.bf16.msra.mxu0 %v1829
    %6083 = vmatprep.subr.bf16.mxu0 %v1838
    %6084 = vmatpush1.bf16.msra.mxu0 %v1837
    %6085 = vmatprep.subr.bf16.mxu0 %v1846
    %6086 = vmatpush1.bf16.msra.mxu0 %v1845
    %6087 = vmatprep.mubr.bf16.mxu0 %v5970
    %6088 = vmatmul.mubr.bf16.gmra.mrb[0].mxu0 %v5969
    %v6089 = vpop.f32.mrb[0].mxu0
    %v6090 = vadd.f32 0.0, %v6089
    %v6091 = vpop.f32.mrb[0].mxu0
    %v6092 = vadd.f32 0.0, %v6091
    %v6093 = vpop.f32.mrb[0].mxu0
    %v6094 = vpop.f32.mrb[0].mxu0
    %6095 = vdwg.mxu0
    %6096 = vmatprep.subr.bf16.mxu0 %v1728
    %6097 = vmatpush1.bf16.msra.mxu0 %v1727
    %6098 = vmatprep.subr.bf16.mxu0 %v1736
    %6099 = vmatpush1.bf16.msra.mxu0 %v1735
    %6100 = vmatprep.subr.bf16.mxu0 %v1744
    %6101 = vmatpush1.bf16.msra.mxu0 %v1743
    %6102 = vmatprep.subr.bf16.mxu0 %v1752
    %6103 = vmatpush1.bf16.msra.mxu0 %v1751
    %6104 = vmatprep.subr.bf16.mxu0 %v1760
    %6105 = vmatpush1.bf16.msra.mxu0 %v1759
    %6106 = vmatprep.subr.bf16.mxu0 %v1768
    %6107 = vmatpush1.bf16.msra.mxu0 %v1767
    %6108 = vmatprep.subr.bf16.mxu0 %v1776
    %6109 = vmatpush1.bf16.msra.mxu0 %v1775
    %6110 = vmatprep.subr.bf16.mxu0 %v1784
    %6111 = vmatpush1.bf16.msra.mxu0 %v1783
    %6112 = vmatprep.subr.bf16.mxu0 %v1792
    %6113 = vmatpush1.bf16.msra.mxu0 %v1791
    %6114 = vmatprep.subr.bf16.mxu0 %v1800
    %6115 = vmatpush1.bf16.msra.mxu0 %v1799
    %6116 = vmatprep.subr.bf16.mxu0 %v1808
    %6117 = vmatpush1.bf16.msra.mxu0 %v1807
    %6118 = vmatprep.subr.bf16.mxu0 %v1816
    %6119 = vmatpush1.bf16.msra.mxu0 %v1815
    %6120 = vmatprep.subr.bf16.mxu0 %v1824
    %6121 = vmatpush1.bf16.msra.mxu0 %v1823
    %6122 = vmatprep.subr.bf16.mxu0 %v1832
    %6123 = vmatpush1.bf16.msra.mxu0 %v1831
    %6124 = vmatprep.subr.bf16.mxu0 %v1840
    %6125 = vmatpush1.bf16.msra.mxu0 %v1839
    %6126 = vmatprep.subr.bf16.mxu0 %v1848
    %6127 = vmatpush1.bf16.msra.mxu0 %v1847
    %6128 = vmatprep.mubr.bf16.mxu0 %v5970
    %6129 = vmatmul.mubr.bf16.gmra.mrb[0].mxu0 %v5969
    %v6130 = vpop.f32.mrb[0].mxu0
    %v6131 = vadd.f32 0.0, %v6130
    %v6132 = vpop.f32.mrb[0].mxu0
    %v6133 = vadd.f32 0.0, %v6132
    %v6134 = vpop.f32.mrb[0].mxu0
    %v6135 = vpop.f32.mrb[0].mxu0
    %6136 = vdwg.mxu0
    %v6145 = vcombine.low %v6008, %v6010
    %v6146 = vcombine.low %v6049, %v6051
    %v6147 = vcombine.low %v6090, %v6092
    %v6148 = vcombine.low %v6131, %v6133
    %v6150 = vunpack.c.l.s4 1966171168
    %v6151 = vunpack.c.0.s8 %v6150
    %v6152 = vlaneseq
    %v6153 = vshrl.u32 %v6152, 7
    %v6154 = vsub.s32 %v6151, %v6153
    %v6155 = vrot.slane %v6145, %v6154
    %v6157 = vunpack.c.l.s4 1966171168
    %v6158 = vunpack.c.0.s8 %v6157
    %v6159 = vlaneseq
    %v6160 = vshrl.u32 %v6159, 7
    %v6161 = vsub.s32 %v6158, %v6160
    %v6162 = vrot.slane %v6146, %v6161
    %v6164 = vunpack.c.l.s4 1966171168
    %v6165 = vunpack.c.0.s8 %v6164
    %v6166 = vlaneseq
    %v6167 = vshrl.u32 %v6166, 7
    %v6168 = vsub.s32 %v6165, %v6167
    %v6169 = vrot.slane %v6147, %v6168
    %v6171 = vunpack.c.l.s4 1966171168
    %v6172 = vunpack.c.0.s8 %v6171
    %v6173 = vlaneseq
    %v6174 = vshrl.u32 %v6173, 7
    %v6175 = vsub.s32 %v6172, %v6174
    %v6176 = vrot.slane %v6148, %v6175
    %v6177 = vcombine.low %v6155, %v6162
    %v6178 = vcombine.high %v6155, %v6162
    %v6179 = vcombine.low %v6169, %v6176
    %v6180 = vcombine.high %v6169, %v6176
    %v6182 = vunpack.c.l.s4 1966171168
    %v6183 = vunpack.c.0.s8 %v6182
    %v6184 = vlaneseq
    %v6185 = vshrl.u32 %v6184, 7
    %v6186 = vsub.s32 %v6183, %v6185
    %v6187 = vrot.slane %v6177, %v6186
    %v6189 = vunpack.c.l.s4 1966171168
    %v6190 = vunpack.c.0.s8 %v6189
    %v6191 = vlaneseq
    %v6192 = vshrl.u32 %v6191, 7
    %v6193 = vsub.s32 %v6190, %v6192
    %v6194 = vrot.slane %v6178, %v6193
    %v6196 = vunpack.c.l.s4 1966171168
    %v6197 = vunpack.c.0.s8 %v6196
    %v6198 = vlaneseq
    %v6199 = vshrl.u32 %v6198, 7
    %v6200 = vsub.s32 %v6197, %v6199
    %v6201 = vrot.slane %v6179, %v6200
    %v6203 = vunpack.c.l.s4 1966171168
    %v6204 = vunpack.c.0.s8 %v6203
    %v6205 = vlaneseq
    %v6206 = vshrl.u32 %v6205, 7
    %v6207 = vsub.s32 %v6204, %v6206
    %v6208 = vrot.slane %v6180, %v6207
    %v6209 = vcombine.low %v6187, %v6201
    %v6210 = vcombine.low %v6194, %v6208
    %v6213 = vadd.f32 %v5926, %v6209
    %v6214 = vadd.f32 %v5930, %v6210
    %v6215 = vxor.u32 %v6213, 2147483648
    %v6216 = vxor.u32 %v6214, 2147483648
    %v6217 = vmul.f32 %v6215, 1.442695
    %v6218 = vpow.pop %v6217
    %v6219 = vmul.f32 %v6216, 1.442695
    %v6220 = vpow.pop %v6219
    %v6221 = vadd.f32 %v6218, 1.0
    %v6222 = vadd.f32 %v6220, 1.0
    %v6223 = vrcp.pop %v6221
    %v6224 = vmul.f32 1.0, %v6223
    %v6225 = vrcp.pop %v6222
    %v6226 = vmul.f32 1.0, %v6225
    %v6229 = vrot.slane %v6213, 6
    %v6230 = vrot.slane %v6214, 6
    %v6233 = vtanh.pop %v6229
    %v6234 = vtanh.pop %v6230
    %v6237 = vrot.slane %v6224, 2
    %v6238 = vrot.slane %v6226, 2
    %v6241 = vmul.f32 %v6237, %v5581
    %v6242 = vmul.f32 %v6238, %v5582
    %v6243 = vmul.f32 %v6224, %v6233
    %v6244 = vmul.f32 %v6226, %v6234
    %v6245 = vadd.f32 %v6241, %v6243
    %v6246 = vadd.f32 %v6242, %v6244
    %v6247 = vtanh.pop %v6245
    %v6248 = vtanh.pop %v6246
    %v6249 = vrot.slane %v6224, 4
    %v6250 = vrot.slane %v6226, 4
    %v6253 = vmul.f32 %v6249, %v6247
    %v6254 = vmul.f32 %v6250, %v6248
    %s6255 = scalar_lea.vmem %s0, 7
    %v6256 = vld [vmem:[%s6255] ss:$8 sm:$0xf]
    %v6257 = vld [vmem:[%s6255] ss:$8 sm:$0xf0]
    %v6258 = vor.u32 %v6256, %v6257
    %s6259 = scalar_lea.vmem %s0, 71
    %v6260 = vld [vmem:[%s6259] ss:$8 sm:$0xf]
    %v6261 = vld [vmem:[%s6259] ss:$8 sm:$0xf0]
    %v6262 = vor.u32 %v6260, %v6261
    %v6265 = vlaneseq
    %v6266 = vshrl.u32 %v6265, 7
    %v6267 = vsub.s32 0, %v6266
    %v6268 = vrot.slane %v5921, %v6267
    %v6269 = vlaneseq
    %v6270 = vshrl.u32 %v6269, 7
    %v6271 = vsub.s32 1, %v6270
    %v6272 = vrot.slane %v5921, %v6271
    %v6273 = vlaneseq
    %v6274 = vshrl.u32 %v6273, 7
    %v6275 = vsub.s32 0, %v6274
    %v6276 = vrot.slane %v5922, %v6275
    %v6277 = vlaneseq
    %v6278 = vshrl.u32 %v6277, 7
    %v6279 = vsub.s32 1, %v6278
    %v6280 = vrot.slane %v5922, %v6279
    %v6285 = vpack.c.bf16 %v6268, %v6268
    %v6286 = vpack.c.bf16 %v6272, %v6272
    %v6287 = vpack.c.bf16 %v6276, %v6276
    %v6288 = vpack.c.bf16 %v6280, %v6280
    %v6293 = vunpack.c.l.b16 %v6285
    %v6294 = vunpack.c.l.b16 %v6286
    %v6295 = vunpack.c.l.b16 %v6287
    %v6296 = vunpack.c.l.b16 %v6288
    %v6297 = vrot.slane %v6295, 7
    %v6298 = vsel %vm2313, %v6297, %v6293
    %v6299 = vrot.slane %v6296, 7
    %v6300 = vsel %vm2313, %v6299, %v6294
    %v6301 = vpack.c.b16 %v6298, %v6298
    %v6302 = vpack.c.b16 %v6300, %v6300
    %6305 = vmatprep.subr.bf16.mxu0 %v768
    %6306 = vmatpush1.bf16.msra.mxu0 %v767
    %6307 = vmatprep.subr.bf16.mxu0 %v776
    %6308 = vmatpush1.bf16.msra.mxu0 %v775
    %6309 = vmatprep.subr.bf16.mxu0 %v784
    %6310 = vmatpush1.bf16.msra.mxu0 %v783
    %6311 = vmatprep.subr.bf16.mxu0 %v792
    %6312 = vmatpush1.bf16.msra.mxu0 %v791
    %6313 = vmatprep.subr.bf16.mxu0 %v800
    %6314 = vmatpush1.bf16.msra.mxu0 %v799
    %6315 = vmatprep.subr.bf16.mxu0 %v808
    %6316 = vmatpush1.bf16.msra.mxu0 %v807
    %6317 = vmatprep.subr.bf16.mxu0 %v816
    %6318 = vmatpush1.bf16.msra.mxu0 %v815
    %6319 = vmatprep.subr.bf16.mxu0 %v824
    %6320 = vmatpush1.bf16.msra.mxu0 %v823
    %6321 = vmatprep.subr.bf16.mxu0 %v832
    %6322 = vmatpush1.bf16.msra.mxu0 %v831
    %6323 = vmatprep.subr.bf16.mxu0 %v840
    %6324 = vmatpush1.bf16.msra.mxu0 %v839
    %6325 = vmatprep.subr.bf16.mxu0 %v848
    %6326 = vmatpush1.bf16.msra.mxu0 %v847
    %6327 = vmatprep.subr.bf16.mxu0 %v856
    %6328 = vmatpush1.bf16.msra.mxu0 %v855
    %6329 = vmatprep.subr.bf16.mxu0 %v864
    %6330 = vmatpush1.bf16.msra.mxu0 %v863
    %6331 = vmatprep.subr.bf16.mxu0 %v872
    %6332 = vmatpush1.bf16.msra.mxu0 %v871
    %6333 = vmatprep.subr.bf16.mxu0 %v880
    %6334 = vmatpush1.bf16.msra.mxu0 %v879
    %6335 = vmatprep.subr.bf16.mxu0 %v888
    %6336 = vmatpush1.bf16.msra.mxu0 %v887
    %6337 = vmatprep.mubr.bf16.mxu0 %v6302
    %6338 = vmatmul.mubr.bf16.gmra.mrb[0].mxu0 %v6301
    %v6339 = vpop.f32.mrb[0].mxu0
    %v6340 = vadd.f32 0.0, %v6339
    %v6341 = vpop.f32.mrb[0].mxu0
    %v6342 = vadd.f32 0.0, %v6341
    %v6343 = vpop.f32.mrb[0].mxu0
    %v6344 = vpop.f32.mrb[0].mxu0
    %6345 = vdwg.mxu0
    %6346 = vmatprep.subr.bf16.mxu0 %v770
    %6347 = vmatpush1.bf16.msra.mxu0 %v769
    %6348 = vmatprep.subr.bf16.mxu0 %v778
    %6349 = vmatpush1.bf16.msra.mxu0 %v777
    %6350 = vmatprep.subr.bf16.mxu0 %v786
    %6351 = vmatpush1.bf16.msra.mxu0 %v785
    %6352 = vmatprep.subr.bf16.mxu0 %v794
    %6353 = vmatpush1.bf16.msra.mxu0 %v793
    %6354 = vmatprep.subr.bf16.mxu0 %v802
    %6355 = vmatpush1.bf16.msra.mxu0 %v801
    %6356 = vmatprep.subr.bf16.mxu0 %v810
    %6357 = vmatpush1.bf16.msra.mxu0 %v809
    %6358 = vmatprep.subr.bf16.mxu0 %v818
    %6359 = vmatpush1.bf16.msra.mxu0 %v817
    %6360 = vmatprep.subr.bf16.mxu0 %v826
    %6361 = vmatpush1.bf16.msra.mxu0 %v825
    %6362 = vmatprep.subr.bf16.mxu0 %v834
    %6363 = vmatpush1.bf16.msra.mxu0 %v833
    %6364 = vmatprep.subr.bf16.mxu0 %v842
    %6365 = vmatpush1.bf16.msra.mxu0 %v841
    %6366 = vmatprep.subr.bf16.mxu0 %v850
    %6367 = vmatpush1.bf16.msra.mxu0 %v849
    %6368 = vmatprep.subr.bf16.mxu0 %v858
    %6369 = vmatpush1.bf16.msra.mxu0 %v857
    %6370 = vmatprep.subr.bf16.mxu0 %v866
    %6371 = vmatpush1.bf16.msra.mxu0 %v865
    %6372 = vmatprep.subr.bf16.mxu0 %v874
    %6373 = vmatpush1.bf16.msra.mxu0 %v873
    %6374 = vmatprep.subr.bf16.mxu0 %v882
    %6375 = vmatpush1.bf16.msra.mxu0 %v881
    %6376 = vmatprep.subr.bf16.mxu0 %v890
    %6377 = vmatpush1.bf16.msra.mxu0 %v889
    %6378 = vmatprep.mubr.bf16.mxu0 %v6302
    %6379 = vmatmul.mubr.bf16.gmra.mrb[0].mxu0 %v6301
    %v6380 = vpop.f32.mrb[0].mxu0
    %v6381 = vadd.f32 0.0, %v6380
    %v6382 = vpop.f32.mrb[0].mxu0
    %v6383 = vadd.f32 0.0, %v6382
    %v6384 = vpop.f32.mrb[0].mxu0
    %v6385 = vpop.f32.mrb[0].mxu0
    %6386 = vdwg.mxu0
    %6387 = vmatprep.subr.bf16.mxu0 %v772
    %6388 = vmatpush1.bf16.msra.mxu0 %v771
    %6389 = vmatprep.subr.bf16.mxu0 %v780
    %6390 = vmatpush1.bf16.msra.mxu0 %v779
    %6391 = vmatprep.subr.bf16.mxu0 %v788
    %6392 = vmatpush1.bf16.msra.mxu0 %v787
    %6393 = vmatprep.subr.bf16.mxu0 %v796
    %6394 = vmatpush1.bf16.msra.mxu0 %v795
    %6395 = vmatprep.subr.bf16.mxu0 %v804
    %6396 = vmatpush1.bf16.msra.mxu0 %v803
    %6397 = vmatprep.subr.bf16.mxu0 %v812
    %6398 = vmatpush1.bf16.msra.mxu0 %v811
    %6399 = vmatprep.subr.bf16.mxu0 %v820
    %6400 = vmatpush1.bf16.msra.mxu0 %v819
    %6401 = vmatprep.subr.bf16.mxu0 %v828
    %6402 = vmatpush1.bf16.msra.mxu0 %v827
    %6403 = vmatprep.subr.bf16.mxu0 %v836
    %6404 = vmatpush1.bf16.msra.mxu0 %v835
    %6405 = vmatprep.subr.bf16.mxu0 %v844
    %6406 = vmatpush1.bf16.msra.mxu0 %v843
    %6407 = vmatprep.subr.bf16.mxu0 %v852
    %6408 = vmatpush1.bf16.msra.mxu0 %v851
    %6409 = vmatprep.subr.bf16.mxu0 %v860
    %6410 = vmatpush1.bf16.msra.mxu0 %v859
    %6411 = vmatprep.subr.bf16.mxu0 %v868
    %6412 = vmatpush1.bf16.msra.mxu0 %v867
    %6413 = vmatprep.subr.bf16.mxu0 %v876
    %6414 = vmatpush1.bf16.msra.mxu0 %v875
    %6415 = vmatprep.subr.bf16.mxu0 %v884
    %6416 = vmatpush1.bf16.msra.mxu0 %v883
    %6417 = vmatprep.subr.bf16.mxu0 %v892
    %6418 = vmatpush1.bf16.msra.mxu0 %v891
    %6419 = vmatprep.mubr.bf16.mxu0 %v6302
    %6420 = vmatmul.mubr.bf16.gmra.mrb[0].mxu0 %v6301
    %v6421 = vpop.f32.mrb[0].mxu0
    %v6422 = vadd.f32 0.0, %v6421
    %v6423 = vpop.f32.mrb[0].mxu0
    %v6424 = vadd.f32 0.0, %v6423
    %v6425 = vpop.f32.mrb[0].mxu0
    %v6426 = vpop.f32.mrb[0].mxu0
    %6427 = vdwg.mxu0
    %6428 = vmatprep.subr.bf16.mxu0 %v774
    %6429 = vmatpush1.bf16.msra.mxu0 %v773
    %6430 = vmatprep.subr.bf16.mxu0 %v782
    %6431 = vmatpush1.bf16.msra.mxu0 %v781
    %6432 = vmatprep.subr.bf16.mxu0 %v790
    %6433 = vmatpush1.bf16.msra.mxu0 %v789
    %6434 = vmatprep.subr.bf16.mxu0 %v798
    %6435 = vmatpush1.bf16.msra.mxu0 %v797
    %6436 = vmatprep.subr.bf16.mxu0 %v806
    %6437 = vmatpush1.bf16.msra.mxu0 %v805
    %6438 = vmatprep.subr.bf16.mxu0 %v814
    %6439 = vmatpush1.bf16.msra.mxu0 %v813
    %6440 = vmatprep.subr.bf16.mxu0 %v822
    %6441 = vmatpush1.bf16.msra.mxu0 %v821
    %6442 = vmatprep.subr.bf16.mxu0 %v830
    %6443 = vmatpush1.bf16.msra.mxu0 %v829
    %6444 = vmatprep.subr.bf16.mxu0 %v838
    %6445 = vmatpush1.bf16.msra.mxu0 %v837
    %6446 = vmatprep.subr.bf16.mxu0 %v846
    %6447 = vmatpush1.bf16.msra.mxu0 %v845
    %6448 = vmatprep.subr.bf16.mxu0 %v854
    %6449 = vmatpush1.bf16.msra.mxu0 %v853
    %6450 = vmatprep.subr.bf16.mxu0 %v862
    %6451 = vmatpush1.bf16.msra.mxu0 %v861
    %6452 = vmatprep.subr.bf16.mxu0 %v870
    %6453 = vmatpush1.bf16.msra.mxu0 %v869
    %6454 = vmatprep.subr.bf16.mxu0 %v878
    %6455 = vmatpush1.bf16.msra.mxu0 %v877
    %6456 = vmatprep.subr.bf16.mxu0 %v886
    %6457 = vmatpush1.bf16.msra.mxu0 %v885
    %6458 = vmatprep.subr.bf16.mxu0 %v894
    %6459 = vmatpush1.bf16.msra.mxu0 %v893
    %6460 = vmatprep.mubr.bf16.mxu0 %v6302
    %6461 = vmatmul.mubr.bf16.gmra.mrb[0].mxu0 %v6301
    %v6462 = vpop.f32.mrb[0].mxu0
    %v6463 = vadd.f32 0.0, %v6462
    %v6464 = vpop.f32.mrb[0].mxu0
    %v6465 = vadd.f32 0.0, %v6464
    %v6466 = vpop.f32.mrb[0].mxu0
    %v6467 = vpop.f32.mrb[0].mxu0
    %6468 = vdwg.mxu0
    %v6477 = vcombine.low %v6340, %v6342
    %v6478 = vcombine.low %v6381, %v6383
    %v6479 = vcombine.low %v6422, %v6424
    %v6480 = vcombine.low %v6463, %v6465
    %v6482 = vunpack.c.l.s4 1966171168
    %v6483 = vunpack.c.0.s8 %v6482
    %v6484 = vlaneseq
    %v6485 = vshrl.u32 %v6484, 7
    %v6486 = vsub.s32 %v6483, %v6485
    %v6487 = vrot.slane %v6477, %v6486
    %v6489 = vunpack.c.l.s4 1966171168
    %v6490 = vunpack.c.0.s8 %v6489
    %v6491 = vlaneseq
    %v6492 = vshrl.u32 %v6491, 7
    %v6493 = vsub.s32 %v6490, %v6492
    %v6494 = vrot.slane %v6478, %v6493
    %v6496 = vunpack.c.l.s4 1966171168
    %v6497 = vunpack.c.0.s8 %v6496
    %v6498 = vlaneseq
    %v6499 = vshrl.u32 %v6498, 7
    %v6500 = vsub.s32 %v6497, %v6499
    %v6501 = vrot.slane %v6479, %v6500
    %v6503 = vunpack.c.l.s4 1966171168
    %v6504 = vunpack.c.0.s8 %v6503
    %v6505 = vlaneseq
    %v6506 = vshrl.u32 %v6505, 7
    %v6507 = vsub.s32 %v6504, %v6506
    %v6508 = vrot.slane %v6480, %v6507
    %v6509 = vcombine.low %v6487, %v6494
    %v6510 = vcombine.high %v6487, %v6494
    %v6511 = vcombine.low %v6501, %v6508
    %v6512 = vcombine.high %v6501, %v6508
    %v6514 = vunpack.c.l.s4 1966171168
    %v6515 = vunpack.c.0.s8 %v6514
    %v6516 = vlaneseq
    %v6517 = vshrl.u32 %v6516, 7
    %v6518 = vsub.s32 %v6515, %v6517
    %v6519 = vrot.slane %v6509, %v6518
    %v6521 = vunpack.c.l.s4 1966171168
    %v6522 = vunpack.c.0.s8 %v6521
    %v6523 = vlaneseq
    %v6524 = vshrl.u32 %v6523, 7
    %v6525 = vsub.s32 %v6522, %v6524
    %v6526 = vrot.slane %v6510, %v6525
    %v6528 = vunpack.c.l.s4 1966171168
    %v6529 = vunpack.c.0.s8 %v6528
    %v6530 = vlaneseq
    %v6531 = vshrl.u32 %v6530, 7
    %v6532 = vsub.s32 %v6529, %v6531
    %v6533 = vrot.slane %v6511, %v6532
    %v6535 = vunpack.c.l.s4 1966171168
    %v6536 = vunpack.c.0.s8 %v6535
    %v6537 = vlaneseq
    %v6538 = vshrl.u32 %v6537, 7
    %v6539 = vsub.s32 %v6536, %v6538
    %v6540 = vrot.slane %v6512, %v6539
    %v6541 = vcombine.low %v6519, %v6533
    %v6542 = vcombine.low %v6526, %v6540
    %v6545 = vadd.f32 %v6258, %v6541
    %v6546 = vadd.f32 %v6262, %v6542
    %v6547 = vxor.u32 %v6545, 2147483648
    %v6548 = vxor.u32 %v6546, 2147483648
    %v6549 = vmul.f32 %v6547, 1.442695
    %v6550 = vpow.pop %v6549
    %v6551 = vmul.f32 %v6548, 1.442695
    %v6552 = vpow.pop %v6551
    %v6553 = vadd.f32 %v6550, 1.0
    %v6554 = vadd.f32 %v6552, 1.0
    %v6555 = vrcp.pop %v6553
    %v6556 = vmul.f32 1.0, %v6555
    %v6557 = vrcp.pop %v6554
    %v6558 = vmul.f32 1.0, %v6557
    %v6561 = vrot.slane %v6545, 6
    %v6562 = vrot.slane %v6546, 6
    %v6565 = vtanh.pop %v6561
    %v6566 = vtanh.pop %v6562
    %v6569 = vrot.slane %v6556, 2
    %v6570 = vrot.slane %v6558, 2
    %v6573 = vmul.f32 %v6569, %v5913
    %v6574 = vmul.f32 %v6570, %v5914
    %v6575 = vmul.f32 %v6556, %v6565
    %v6576 = vmul.f32 %v6558, %v6566
    %v6577 = vadd.f32 %v6573, %v6575
    %v6578 = vadd.f32 %v6574, %v6576
    %v6579 = vtanh.pop %v6577
    %v6580 = vtanh.pop %v6578
    %v6581 = vrot.slane %v6556, 4
    %v6582 = vrot.slane %v6558, 4
    %v6585 = vmul.f32 %v6581, %v6579
    %v6586 = vmul.f32 %v6582, %v6580
    %v6587 = vld [vmem:[%s93] ss:$8 sm:$0xf]
    %v6588 = vld [vmem:[%s93] ss:$8 sm:$0xf0]
    %v6589 = vor.u32 %v6587, %v6588
    %s6590 = scalar_lea.vmem %s93, 64
    %v6591 = vld [vmem:[%s6590] ss:$8 sm:$0xf]
    %v6592 = vld [vmem:[%s6590] ss:$8 sm:$0xf0]
    %v6593 = vor.u32 %v6591, %v6592
    %v6596 = vlaneseq
    %v6597 = vshrl.u32 %v6596, 7
    %v6598 = vsub.s32 0, %v6597
    %v6599 = vrot.slane %v6253, %v6598
    %v6600 = vlaneseq
    %v6601 = vshrl.u32 %v6600, 7
    %v6602 = vsub.s32 1, %v6601
    %v6603 = vrot.slane %v6253, %v6602
    %v6604 = vlaneseq
    %v6605 = vshrl.u32 %v6604, 7
    %v6606 = vsub.s32 0, %v6605
    %v6607 = vrot.slane %v6254, %v6606
    %v6608 = vlaneseq
    %v6609 = vshrl.u32 %v6608, 7
    %v6610 = vsub.s32 1, %v6609
    %v6611 = vrot.slane %v6254, %v6610
    %v6616 = vpack.c.bf16 %v6599, %v6599
    %v6617 = vpack.c.bf16 %v6603, %v6603
    %v6618 = vpack.c.bf16 %v6607, %v6607
    %v6619 = vpack.c.bf16 %v6611, %v6611
    %v6624 = vunpack.c.l.b16 %v6616
    %v6625 = vunpack.c.l.b16 %v6617
    %v6626 = vunpack.c.l.b16 %v6618
    %v6627 = vunpack.c.l.b16 %v6619
    %v6628 = vrot.slane %v6626, 7
    %v6629 = vsel %vm2313, %v6628, %v6624
    %v6630 = vrot.slane %v6627, 7
    %v6631 = vsel %vm2313, %v6630, %v6625
    %v6632 = vpack.c.b16 %v6629, %v6629
    %v6633 = vpack.c.b16 %v6631, %v6631
    %6636 = vmatprep.subr.bf16.mxu0 %v1722
    %6637 = vmatpush1.bf16.msra.mxu0 %v1721
    %6638 = vmatprep.subr.bf16.mxu0 %v1730
    %6639 = vmatpush1.bf16.msra.mxu0 %v1729
    %6640 = vmatprep.subr.bf16.mxu0 %v1738
    %6641 = vmatpush1.bf16.msra.mxu0 %v1737
    %6642 = vmatprep.subr.bf16.mxu0 %v1746
    %6643 = vmatpush1.bf16.msra.mxu0 %v1745
    %6644 = vmatprep.subr.bf16.mxu0 %v1754
    %6645 = vmatpush1.bf16.msra.mxu0 %v1753
    %6646 = vmatprep.subr.bf16.mxu0 %v1762
    %6647 = vmatpush1.bf16.msra.mxu0 %v1761
    %6648 = vmatprep.subr.bf16.mxu0 %v1770
    %6649 = vmatpush1.bf16.msra.mxu0 %v1769
    %6650 = vmatprep.subr.bf16.mxu0 %v1778
    %6651 = vmatpush1.bf16.msra.mxu0 %v1777
    %6652 = vmatprep.subr.bf16.mxu0 %v1786
    %6653 = vmatpush1.bf16.msra.mxu0 %v1785
    %6654 = vmatprep.subr.bf16.mxu0 %v1794
    %6655 = vmatpush1.bf16.msra.mxu0 %v1793
    %6656 = vmatprep.subr.bf16.mxu0 %v1802
    %6657 = vmatpush1.bf16.msra.mxu0 %v1801
    %6658 = vmatprep.subr.bf16.mxu0 %v1810
    %6659 = vmatpush1.bf16.msra.mxu0 %v1809
    %6660 = vmatprep.subr.bf16.mxu0 %v1818
    %6661 = vmatpush1.bf16.msra.mxu0 %v1817
    %6662 = vmatprep.subr.bf16.mxu0 %v1826
    %6663 = vmatpush1.bf16.msra.mxu0 %v1825
    %6664 = vmatprep.subr.bf16.mxu0 %v1834
    %6665 = vmatpush1.bf16.msra.mxu0 %v1833
    %6666 = vmatprep.subr.bf16.mxu0 %v1842
    %6667 = vmatpush1.bf16.msra.mxu0 %v1841
    %6668 = vmatprep.mubr.bf16.mxu0 %v6633
    %6669 = vmatmul.mubr.bf16.gmra.mrb[0].mxu0 %v6632
    %v6670 = vpop.f32.mrb[0].mxu0
    %v6671 = vadd.f32 0.0, %v6670
    %v6672 = vpop.f32.mrb[0].mxu0
    %v6673 = vadd.f32 0.0, %v6672
    %v6674 = vpop.f32.mrb[0].mxu0
    %v6675 = vpop.f32.mrb[0].mxu0
    %6676 = vdwg.mxu0
    %6677 = vmatprep.subr.bf16.mxu0 %v1724
    %6678 = vmatpush1.bf16.msra.mxu0 %v1723
    %6679 = vmatprep.subr.bf16.mxu0 %v1732
    %6680 = vmatpush1.bf16.msra.mxu0 %v1731
    %6681 = vmatprep.subr.bf16.mxu0 %v1740
    %6682 = vmatpush1.bf16.msra.mxu0 %v1739
    %6683 = vmatprep.subr.bf16.mxu0 %v1748
    %6684 = vmatpush1.bf16.msra.mxu0 %v1747
    %6685 = vmatprep.subr.bf16.mxu0 %v1756
    %6686 = vmatpush1.bf16.msra.mxu0 %v1755
    %6687 = vmatprep.subr.bf16.mxu0 %v1764
    %6688 = vmatpush1.bf16.msra.mxu0 %v1763
    %6689 = vmatprep.subr.bf16.mxu0 %v1772
    %6690 = vmatpush1.bf16.msra.mxu0 %v1771
    %6691 = vmatprep.subr.bf16.mxu0 %v1780
    %6692 = vmatpush1.bf16.msra.mxu0 %v1779
    %6693 = vmatprep.subr.bf16.mxu0 %v1788
    %6694 = vmatpush1.bf16.msra.mxu0 %v1787
    %6695 = vmatprep.subr.bf16.mxu0 %v1796
    %6696 = vmatpush1.bf16.msra.mxu0 %v1795
    %6697 = vmatprep.subr.bf16.mxu0 %v1804
    %6698 = vmatpush1.bf16.msra.mxu0 %v1803
    %6699 = vmatprep.subr.bf16.mxu0 %v1812
    %6700 = vmatpush1.bf16.msra.mxu0 %v1811
    %6701 = vmatprep.subr.bf16.mxu0 %v1820
    %6702 = vmatpush1.bf16.msra.mxu0 %v1819
    %6703 = vmatprep.subr.bf16.mxu0 %v1828
    %6704 = vmatpush1.bf16.msra.mxu0 %v1827
    %6705 = vmatprep.subr.bf16.mxu0 %v1836
    %6706 = vmatpush1.bf16.msra.mxu0 %v1835
    %6707 = vmatprep.subr.bf16.mxu0 %v1844
    %6708 = vmatpush1.bf16.msra.mxu0 %v1843
    %6709 = vmatprep.mubr.bf16.mxu0 %v6633
    %6710 = vmatmul.mubr.bf16.gmra.mrb[0].mxu0 %v6632
    %v6711 = vpop.f32.mrb[0].mxu0
    %v6712 = vadd.f32 0.0, %v6711
    %v6713 = vpop.f32.mrb[0].mxu0
    %v6714 = vadd.f32 0.0, %v6713
    %v6715 = vpop.f32.mrb[0].mxu0
    %v6716 = vpop.f32.mrb[0].mxu0
    %6717 = vdwg.mxu0
    %6718 = vmatprep.subr.bf16.mxu0 %v1726
    %6719 = vmatpush1.bf16.msra.mxu0 %v1725
    %6720 = vmatprep.subr.bf16.mxu0 %v1734
    %6721 = vmatpush1.bf16.msra.mxu0 %v1733
    %6722 = vmatprep.subr.bf16.mxu0 %v1742
    %6723 = vmatpush1.bf16.msra.mxu0 %v1741
    %6724 = vmatprep.subr.bf16.mxu0 %v1750
    %6725 = vmatpush1.bf16.msra.mxu0 %v1749
    %6726 = vmatprep.subr.bf16.mxu0 %v1758
    %6727 = vmatpush1.bf16.msra.mxu0 %v1757
    %6728 = vmatprep.subr.bf16.mxu0 %v1766
    %6729 = vmatpush1.bf16.msra.mxu0 %v1765
    %6730 = vmatprep.subr.bf16.mxu0 %v1774
    %6731 = vmatpush1.bf16.msra.mxu0 %v1773
    %6732 = vmatprep.subr.bf16.mxu0 %v1782
    %6733 = vmatpush1.bf16.msra.mxu0 %v1781
    %6734 = vmatprep.subr.bf16.mxu0 %v1790
    %6735 = vmatpush1.bf16.msra.mxu0 %v1789
    %6736 = vmatprep.subr.bf16.mxu0 %v1798
    %6737 = vmatpush1.bf16.msra.mxu0 %v1797
    %6738 = vmatprep.subr.bf16.mxu0 %v1806
    %6739 = vmatpush1.bf16.msra.mxu0 %v1805
    %6740 = vmatprep.subr.bf16.mxu0 %v1814
    %6741 = vmatpush1.bf16.msra.mxu0 %v1813
    %6742 = vmatprep.subr.bf16.mxu0 %v1822
    %6743 = vmatpush1.bf16.msra.mxu0 %v1821
    %6744 = vmatprep.subr.bf16.mxu0 %v1830
    %6745 = vmatpush1.bf16.msra.mxu0 %v1829
    %6746 = vmatprep.subr.bf16.mxu0 %v1838
    %6747 = vmatpush1.bf16.msra.mxu0 %v1837
    %6748 = vmatprep.subr.bf16.mxu0 %v1846
    %6749 = vmatpush1.bf16.msra.mxu0 %v1845
    %6750 = vmatprep.mubr.bf16.mxu0 %v6633
    %6751 = vmatmul.mubr.bf16.gmra.mrb[0].mxu0 %v6632
    %v6752 = vpop.f32.mrb[0].mxu0
    %v6753 = vadd.f32 0.0, %v6752
    %v6754 = vpop.f32.mrb[0].mxu0
    %v6755 = vadd.f32 0.0, %v6754
    %v6756 = vpop.f32.mrb[0].mxu0
    %v6757 = vpop.f32.mrb[0].mxu0
    %6758 = vdwg.mxu0
    %6759 = vmatprep.subr.bf16.mxu0 %v1728
    %6760 = vmatpush1.bf16.msra.mxu0 %v1727
    %6761 = vmatprep.subr.bf16.mxu0 %v1736
    %6762 = vmatpush1.bf16.msra.mxu0 %v1735
    %6763 = vmatprep.subr.bf16.mxu0 %v1744
    %6764 = vmatpush1.bf16.msra.mxu0 %v1743
    %6765 = vmatprep.subr.bf16.mxu0 %v1752
    %6766 = vmatpush1.bf16.msra.mxu0 %v1751
    %6767 = vmatprep.subr.bf16.mxu0 %v1760
    %6768 = vmatpush1.bf16.msra.mxu0 %v1759
    %6769 = vmatprep.subr.bf16.mxu0 %v1768
    %6770 = vmatpush1.bf16.msra.mxu0 %v1767
    %6771 = vmatprep.subr.bf16.mxu0 %v1776
    %6772 = vmatpush1.bf16.msra.mxu0 %v1775
    %6773 = vmatprep.subr.bf16.mxu0 %v1784
    %6774 = vmatpush1.bf16.msra.mxu0 %v1783
    %6775 = vmatprep.subr.bf16.mxu0 %v1792
    %6776 = vmatpush1.bf16.msra.mxu0 %v1791
    %6777 = vmatprep.subr.bf16.mxu0 %v1800
    %6778 = vmatpush1.bf16.msra.mxu0 %v1799
    %6779 = vmatprep.subr.bf16.mxu0 %v1808
    %6780 = vmatpush1.bf16.msra.mxu0 %v1807
    %6781 = vmatprep.subr.bf16.mxu0 %v1816
    %6782 = vmatpush1.bf16.msra.mxu0 %v1815
    %6783 = vmatprep.subr.bf16.mxu0 %v1824
    %6784 = vmatpush1.bf16.msra.mxu0 %v1823
    %6785 = vmatprep.subr.bf16.mxu0 %v1832
    %6786 = vmatpush1.bf16.msra.mxu0 %v1831
    %6787 = vmatprep.subr.bf16.mxu0 %v1840
    %6788 = vmatpush1.bf16.msra.mxu0 %v1839
    %6789 = vmatprep.subr.bf16.mxu0 %v1848
    %6790 = vmatpush1.bf16.msra.mxu0 %v1847
    %6791 = vmatprep.mubr.bf16.mxu0 %v6633
    %6792 = vmatmul.mubr.bf16.gmra.mrb[0].mxu0 %v6632
    %v6793 = vpop.f32.mrb[0].mxu0
    %v6794 = vadd.f32 0.0, %v6793
    %v6795 = vpop.f32.mrb[0].mxu0
    %v6796 = vadd.f32 0.0, %v6795
    %v6797 = vpop.f32.mrb[0].mxu0
    %v6798 = vpop.f32.mrb[0].mxu0
    %6799 = vdwg.mxu0
    %v6808 = vcombine.low %v6671, %v6673
    %v6809 = vcombine.low %v6712, %v6714
    %v6810 = vcombine.low %v6753, %v6755
    %v6811 = vcombine.low %v6794, %v6796
    %v6813 = vunpack.c.l.s4 1966171168
    %v6814 = vunpack.c.0.s8 %v6813
    %v6815 = vlaneseq
    %v6816 = vshrl.u32 %v6815, 7
    %v6817 = vsub.s32 %v6814, %v6816
    %v6818 = vrot.slane %v6808, %v6817
    %v6820 = vunpack.c.l.s4 1966171168
    %v6821 = vunpack.c.0.s8 %v6820
    %v6822 = vlaneseq
    %v6823 = vshrl.u32 %v6822, 7
    %v6824 = vsub.s32 %v6821, %v6823
    %v6825 = vrot.slane %v6809, %v6824
    %v6827 = vunpack.c.l.s4 1966171168
    %v6828 = vunpack.c.0.s8 %v6827
    %v6829 = vlaneseq
    %v6830 = vshrl.u32 %v6829, 7
    %v6831 = vsub.s32 %v6828, %v6830
    %v6832 = vrot.slane %v6810, %v6831
    %v6834 = vunpack.c.l.s4 1966171168
    %v6835 = vunpack.c.0.s8 %v6834
    %v6836 = vlaneseq
    %v6837 = vshrl.u32 %v6836, 7
    %v6838 = vsub.s32 %v6835, %v6837
    %v6839 = vrot.slane %v6811, %v6838
    %v6840 = vcombine.low %v6818, %v6825
    %v6841 = vcombine.high %v6818, %v6825
    %v6842 = vcombine.low %v6832, %v6839
    %v6843 = vcombine.high %v6832, %v6839
    %v6845 = vunpack.c.l.s4 1966171168
    %v6846 = vunpack.c.0.s8 %v6845
    %v6847 = vlaneseq
    %v6848 = vshrl.u32 %v6847, 7
    %v6849 = vsub.s32 %v6846, %v6848
    %v6850 = vrot.slane %v6840, %v6849
    %v6852 = vunpack.c.l.s4 1966171168
    %v6853 = vunpack.c.0.s8 %v6852
    %v6854 = vlaneseq
    %v6855 = vshrl.u32 %v6854, 7
    %v6856 = vsub.s32 %v6853, %v6855
    %v6857 = vrot.slane %v6841, %v6856
    %v6859 = vunpack.c.l.s4 1966171168
    %v6860 = vunpack.c.0.s8 %v6859
    %v6861 = vlaneseq
    %v6862 = vshrl.u32 %v6861, 7
    %v6863 = vsub.s32 %v6860, %v6862
    %v6864 = vrot.slane %v6842, %v6863
    %v6866 = vunpack.c.l.s4 1966171168
    %v6867 = vunpack.c.0.s8 %v6866
    %v6868 = vlaneseq
    %v6869 = vshrl.u32 %v6868, 7
    %v6870 = vsub.s32 %v6867, %v6869
    %v6871 = vrot.slane %v6843, %v6870
    %v6872 = vcombine.low %v6850, %v6864
    %v6873 = vcombine.low %v6857, %v6871
    %v6876 = vadd.f32 %v6589, %v6872
    %v6877 = vadd.f32 %v6593, %v6873
    %v6878 = vxor.u32 %v6876, 2147483648
    %v6879 = vxor.u32 %v6877, 2147483648
    %v6880 = vmul.f32 %v6878, 1.442695
    %v6881 = vpow.pop %v6880
    %v6882 = vmul.f32 %v6879, 1.442695
    %v6883 = vpow.pop %v6882
    %v6884 = vadd.f32 %v6881, 1.0
    %v6885 = vadd.f32 %v6883, 1.0
    %v6886 = vrcp.pop %v6884
    %v6887 = vmul.f32 1.0, %v6886
    %v6888 = vrcp.pop %v6885
    %v6889 = vmul.f32 1.0, %v6888
    %v6892 = vrot.slane %v6876, 6
    %v6893 = vrot.slane %v6877, 6
    %v6896 = vtanh.pop %v6892
    %v6897 = vtanh.pop %v6893
    %v6900 = vrot.slane %v6887, 2
    %v6901 = vrot.slane %v6889, 2
    %v6904 = vmul.f32 %v6900, %v6245
    %v6905 = vmul.f32 %v6901, %v6246
    %v6906 = vmul.f32 %v6887, %v6896
    %v6907 = vmul.f32 %v6889, %v6897
    %v6908 = vadd.f32 %v6904, %v6906
    %v6909 = vadd.f32 %v6905, %v6907
    %v6910 = vtanh.pop %v6908
    %v6911 = vtanh.pop %v6909
    %v6912 = vrot.slane %v6887, 4
    %v6913 = vrot.slane %v6889, 4
    %v6916 = vmul.f32 %v6912, %v6910
    %v6917 = vmul.f32 %v6913, %v6911
    %v6920 = vcombine.low %v6585, %v6586
    %v6922 = vunpack.c.l.s4 1935823168
    %v6923 = vunpack.c.0.s8 %v6922
    %v6924 = vlaneseq
    %v6925 = vshrl.u32 %v6924, 7
    %v6926 = vsub.s32 %v6923, %v6925
    %v6927 = vrot.slane %v6920, %v6926
    %6929 = vst [vmem:[#allocation2] sm:$0xf] %v6927
    %v6932 = vcombine.low %v6577, %v6578
    %v6934 = vunpack.c.l.s4 1935823168
    %v6935 = vunpack.c.0.s8 %v6934
    %v6936 = vlaneseq
    %v6937 = vshrl.u32 %v6936, 7
    %v6938 = vsub.s32 %v6935, %v6937
    %v6939 = vrot.slane %v6932, %v6938
    %6941 = vst [vmem:[#allocation3] sm:$0xf] %v6939
    %v6944 = vcombine.low %v6916, %v6917
    %v6946 = vunpack.c.l.s4 1935823168
    %v6947 = vunpack.c.0.s8 %v6946
    %v6948 = vlaneseq
    %v6949 = vshrl.u32 %v6948, 7
    %v6950 = vsub.s32 %v6947, %v6949
    %v6951 = vrot.slane %v6944, %v6950
    %6953 = vst [vmem:[#allocation4] sm:$0xf] %v6951
    %v6956 = vcombine.low %v6908, %v6909
    %v6958 = vunpack.c.l.s4 1935823168
    %v6959 = vunpack.c.0.s8 %v6958
    %v6960 = vlaneseq
    %v6961 = vshrl.u32 %v6960, 7
    %v6962 = vsub.s32 %v6959, %v6961
    %v6963 = vrot.slane %v6956, %v6962
    %6965 = vst [vmem:[#allocation5] sm:$0xf] %v6963
    // Predicated region
    $region54: #{lstm_mlp_classifier.3} parent=1 // pred_check
      %p6966 = pneg %p95
    $region55: #{lstm_mlp_classifier.3} parent=1 // pred_check_branch
      %6968 = sbr.rel (%p6966) target = $region57
    $region56: #{lstm_mlp_classifier.3} parent=1 // pred_region
      %v6969 = vld [vmem:[%s4] sm:$0xff]
      %v6970 = vld [vmem:[%s4 + $0x8] sm:$0xff]
      %v6971 = vld [vmem:[%s4 + $0x10] sm:$0xff]
      %v6972 = vld [vmem:[%s4 + $0x18] sm:$0xff]
      %v6973 = vld [vmem:[%s4 + $0x20] sm:$0xff]
      %v6974 = vld [vmem:[%s4 + $0x28] sm:$0xff]
      %v6975 = vld [vmem:[%s4 + $0x30] sm:$0xff]
      %v6976 = vld [vmem:[%s4 + $0x38] sm:$0xff]
      %v6977 = vld [vmem:[%s4 + $0x40] sm:$0xff]
      %v6978 = vld [vmem:[%s4 + $0x48] sm:$0xff]
      %v6979 = vld [vmem:[%s4 + $0x50] sm:$0xff]
      %v6980 = vld [vmem:[%s4 + $0x58] sm:$0xff]
      %v6981 = vld [vmem:[%s4 + $0x60] sm:$0xff]
      %v6982 = vld [vmem:[%s4 + $0x68] sm:$0xff]
      %v6983 = vld [vmem:[%s4 + $0x70] sm:$0xff]
      %v6984 = vld [vmem:[%s4 + $0x78] sm:$0xff]
      %v6985 = vld [vmem:[%s4 + $0x80] sm:$0xff]
      %v6986 = vld [vmem:[%s4 + $0x88] sm:$0xff]
      %v6987 = vld [vmem:[%s4 + $0x90] sm:$0xff]
      %v6988 = vld [vmem:[%s4 + $0x98] sm:$0xff]
      %v6989 = vld [vmem:[%s4 + $0xa0] sm:$0xff]
      %v6990 = vld [vmem:[%s4 + $0xa8] sm:$0xff]
      %v6991 = vld [vmem:[%s4 + $0xb0] sm:$0xff]
      %v6992 = vld [vmem:[%s4 + $0xb8] sm:$0xff]
      %v6993 = vld [vmem:[%s4 + $0xc0] sm:$0xff]
      %v6994 = vld [vmem:[%s4 + $0xc8] sm:$0xff]
      %v6995 = vld [vmem:[%s4 + $0xd0] sm:$0xff]
      %v6996 = vld [vmem:[%s4 + $0xd8] sm:$0xff]
      %v6997 = vld [vmem:[%s4 + $0xe0] sm:$0xff]
      %v6998 = vld [vmem:[%s4 + $0xe8] sm:$0xff]
      %v6999 = vld [vmem:[%s4 + $0xf0] sm:$0xff]
      %v7000 = vld [vmem:[%s4 + $0xf8] sm:$0xff]
      %v7001 = vld [vmem:[%s4 + $0x100] sm:$0xff]
      %v7002 = vld [vmem:[%s4 + $0x108] sm:$0xff]
      %v7003 = vld [vmem:[%s4 + $0x110] sm:$0xff]
      %v7004 = vld [vmem:[%s4 + $0x118] sm:$0xff]
      %v7005 = vld [vmem:[%s4 + $0x120] sm:$0xff]
      %v7006 = vld [vmem:[%s4 + $0x128] sm:$0xff]
      %v7007 = vld [vmem:[%s4 + $0x130] sm:$0xff]
      %v7008 = vld [vmem:[%s4 + $0x138] sm:$0xff]
      %v7009 = vld [vmem:[%s4 + $0x140] sm:$0xff]
      %v7010 = vld [vmem:[%s4 + $0x148] sm:$0xff]
      %v7011 = vld [vmem:[%s4 + $0x150] sm:$0xff]
      %v7012 = vld [vmem:[%s4 + $0x158] sm:$0xff]
      %v7013 = vld [vmem:[%s4 + $0x160] sm:$0xff]
      %v7014 = vld [vmem:[%s4 + $0x168] sm:$0xff]
      %v7015 = vld [vmem:[%s4 + $0x170] sm:$0xff]
      %v7016 = vld [vmem:[%s4 + $0x178] sm:$0xff]
      %v7017 = vld [vmem:[%s4 + $0x180] sm:$0xff]
      %v7018 = vld [vmem:[%s4 + $0x188] sm:$0xff]
      %v7019 = vld [vmem:[%s4 + $0x190] sm:$0xff]
      %v7020 = vld [vmem:[%s4 + $0x198] sm:$0xff]
      %v7021 = vld [vmem:[%s4 + $0x1a0] sm:$0xff]
      %v7022 = vld [vmem:[%s4 + $0x1a8] sm:$0xff]
      %v7023 = vld [vmem:[%s4 + $0x1b0] sm:$0xff]
      %v7024 = vld [vmem:[%s4 + $0x1b8] sm:$0xff]
      %v7025 = vld [vmem:[%s4 + $0x1c0] sm:$0xff]
      %v7026 = vld [vmem:[%s4 + $0x1c8] sm:$0xff]
      %v7027 = vld [vmem:[%s4 + $0x1d0] sm:$0xff]
      %v7028 = vld [vmem:[%s4 + $0x1d8] sm:$0xff]
      %v7029 = vld [vmem:[%s4 + $0x1e0] sm:$0xff]
      %v7030 = vld [vmem:[%s4 + $0x1e8] sm:$0xff]
      %v7031 = vld [vmem:[%s4 + $0x1f0] sm:$0xff]
      %v7032 = vld [vmem:[%s4 + $0x1f8] sm:$0xff]
      %v7033 = vld [vmem:[#allocation11] sm:$0xff]
      %v7034 = vld [vmem:[#allocation11 + $0x8] sm:$0xff]
      %v7035 = vld [vmem:[#allocation11 + $0x10] sm:$0xff]
      %v7036 = vld [vmem:[#allocation11 + $0x18] sm:$0xff]
      %v7037 = vld [vmem:[#allocation11 + $0x20] sm:$0xff]
      %v7038 = vld [vmem:[#allocation11 + $0x28] sm:$0xff]
      %v7039 = vld [vmem:[#allocation11 + $0x30] sm:$0xff]
      %v7040 = vld [vmem:[#allocation11 + $0x38] sm:$0xff]
      %v7041 = vld [vmem:[#allocation11 + $0x40] sm:$0xff]
      %v7042 = vld [vmem:[#allocation11 + $0x48] sm:$0xff]
      %v7043 = vld [vmem:[#allocation11 + $0x50] sm:$0xff]
      %v7044 = vld [vmem:[#allocation11 + $0x58] sm:$0xff]
      %v7045 = vld [vmem:[#allocation11 + $0x60] sm:$0xff]
      %v7046 = vld [vmem:[#allocation11 + $0x68] sm:$0xff]
      %v7047 = vld [vmem:[#allocation11 + $0x70] sm:$0xff]
      %v7048 = vld [vmem:[#allocation11 + $0x78] sm:$0xff]
      %v7049 = vld [vmem:[#allocation11 + $0x80] sm:$0xff]
      %v7050 = vld [vmem:[#allocation11 + $0x88] sm:$0xff]
      %v7051 = vld [vmem:[#allocation11 + $0x90] sm:$0xff]
      %v7052 = vld [vmem:[#allocation11 + $0x98] sm:$0xff]
      %v7053 = vld [vmem:[#allocation11 + $0xa0] sm:$0xff]
      %v7054 = vld [vmem:[#allocation11 + $0xa8] sm:$0xff]
      %v7055 = vld [vmem:[#allocation11 + $0xb0] sm:$0xff]
      %v7056 = vld [vmem:[#allocation11 + $0xb8] sm:$0xff]
      %v7057 = vld [vmem:[#allocation11 + $0xc0] sm:$0xff]
      %v7058 = vld [vmem:[#allocation11 + $0xc8] sm:$0xff]
      %v7059 = vld [vmem:[#allocation11 + $0xd0] sm:$0xff]
      %v7060 = vld [vmem:[#allocation11 + $0xd8] sm:$0xff]
      %v7061 = vld [vmem:[#allocation11 + $0xe0] sm:$0xff]
      %v7062 = vld [vmem:[#allocation11 + $0xe8] sm:$0xff]
      %v7063 = vld [vmem:[#allocation11 + $0xf0] sm:$0xff]
      %v7064 = vld [vmem:[#allocation11 + $0xf8] sm:$0xff]
      %v7065 = vld [vmem:[#allocation11 + $0x100] sm:$0xff]
      %v7066 = vld [vmem:[#allocation11 + $0x108] sm:$0xff]
      %v7067 = vld [vmem:[#allocation11 + $0x110] sm:$0xff]
      %v7068 = vld [vmem:[#allocation11 + $0x118] sm:$0xff]
      %v7069 = vld [vmem:[#allocation11 + $0x120] sm:$0xff]
      %v7070 = vld [vmem:[#allocation11 + $0x128] sm:$0xff]
      %v7071 = vld [vmem:[#allocation11 + $0x130] sm:$0xff]
      %v7072 = vld [vmem:[#allocation11 + $0x138] sm:$0xff]
      %v7073 = vld [vmem:[#allocation11 + $0x140] sm:$0xff]
      %v7074 = vld [vmem:[#allocation11 + $0x148] sm:$0xff]
      %v7075 = vld [vmem:[#allocation11 + $0x150] sm:$0xff]
      %v7076 = vld [vmem:[#allocation11 + $0x158] sm:$0xff]
      %v7077 = vld [vmem:[#allocation11 + $0x160] sm:$0xff]
      %v7078 = vld [vmem:[#allocation11 + $0x168] sm:$0xff]
      %v7079 = vld [vmem:[#allocation11 + $0x170] sm:$0xff]
      %v7080 = vld [vmem:[#allocation11 + $0x178] sm:$0xff]
      %v7081 = vld [vmem:[#allocation11 + $0x180] sm:$0xff]
      %v7082 = vld [vmem:[#allocation11 + $0x188] sm:$0xff]
      %v7083 = vld [vmem:[#allocation11 + $0x190] sm:$0xff]
      %v7084 = vld [vmem:[#allocation11 + $0x198] sm:$0xff]
      %v7085 = vld [vmem:[#allocation11 + $0x1a0] sm:$0xff]
      %v7086 = vld [vmem:[#allocation11 + $0x1a8] sm:$0xff]
      %v7087 = vld [vmem:[#allocation11 + $0x1b0] sm:$0xff]
      %v7088 = vld [vmem:[#allocation11 + $0x1b8] sm:$0xff]
      %v7089 = vld [vmem:[#allocation11 + $0x1c0] sm:$0xff]
      %v7090 = vld [vmem:[#allocation11 + $0x1c8] sm:$0xff]
      %v7091 = vld [vmem:[#allocation11 + $0x1d0] sm:$0xff]
      %v7092 = vld [vmem:[#allocation11 + $0x1d8] sm:$0xff]
      %v7093 = vld [vmem:[#allocation11 + $0x1e0] sm:$0xff]
      %v7094 = vld [vmem:[#allocation11 + $0x1e8] sm:$0xff]
      %v7095 = vld [vmem:[#allocation11 + $0x1f0] sm:$0xff]
      %v7096 = vld [vmem:[#allocation11 + $0x1f8] sm:$0xff]
      %v7098 = vunpack.c.l.s4 1966171168
      %v7099 = vunpack.c.0.s8 %v7098
      %v7100 = vlaneseq
      %v7101 = vshrl.u32 %v7100, 7
      %v7102 = vsub.s32 %v7099, %v7101
      %v7103 = vrot.slane %v6944, %v7102
      %v7104 = vcombine.high %v7103, %v7103
      %v7106 = vunpack.c.l.s4 1966171168
      %v7107 = vunpack.c.0.s8 %v7106
      %v7108 = vlaneseq
      %v7109 = vshrl.u32 %v7108, 7
      %v7110 = vsub.s32 %v7107, %v7109
      %v7111 = vrot.slane %v7103, %v7110
      %v7113 = vunpack.c.l.s4 1966171168
      %v7114 = vunpack.c.0.s8 %v7113
      %v7115 = vlaneseq
      %v7116 = vshrl.u32 %v7115, 7
      %v7117 = vsub.s32 %v7114, %v7116
      %v7118 = vrot.slane %v7104, %v7117
      %7121 = vmatprep.subr.mxu0 %v7034
      %7122 = vmatpush1.msra.mxu0 %v7033
      %7123 = vmatprep.subr.mxu0 %v7036
      %7124 = vmatpush1.msra.mxu0 %v7035
      %7125 = vmatprep.subr.mxu0 %v7038
      %7126 = vmatpush1.msra.mxu0 %v7037
      %7127 = vmatprep.subr.mxu0 %v7040
      %7128 = vmatpush1.msra.mxu0 %v7039
      %7129 = vmatprep.subr.mxu0 %v7042
      %7130 = vmatpush1.msra.mxu0 %v7041
      %7131 = vmatprep.subr.mxu0 %v7044
      %7132 = vmatpush1.msra.mxu0 %v7043
      %7133 = vmatprep.subr.mxu0 %v7046
      %7134 = vmatpush1.msra.mxu0 %v7045
      %7135 = vmatprep.subr.mxu0 %v7048
      %7136 = vmatpush1.msra.mxu0 %v7047
      %7137 = vmatprep.subr.mxu0 %v7050
      %7138 = vmatpush1.msra.mxu0 %v7049
      %7139 = vmatprep.subr.mxu0 %v7052
      %7140 = vmatpush1.msra.mxu0 %v7051
      %7141 = vmatprep.subr.mxu0 %v7054
      %7142 = vmatpush1.msra.mxu0 %v7053
      %7143 = vmatprep.subr.mxu0 %v7056
      %7144 = vmatpush1.msra.mxu0 %v7055
      %7145 = vmatprep.subr.mxu0 %v7058
      %7146 = vmatpush1.msra.mxu0 %v7057
      %7147 = vmatprep.subr.mxu0 %v7060
      %7148 = vmatpush1.msra.mxu0 %v7059
      %7149 = vmatprep.subr.mxu0 %v7062
      %7150 = vmatpush1.msra.mxu0 %v7061
      %7151 = vmatprep.subr.mxu0 %v7064
      %7152 = vmatpush1.msra.mxu0 %v7063
      %7153 = vmatprep.subr.mxu0 %v7066
      %7154 = vmatpush1.msra.mxu0 %v7065
      %7155 = vmatprep.subr.mxu0 %v7068
      %7156 = vmatpush1.msra.mxu0 %v7067
      %7157 = vmatprep.subr.mxu0 %v7070
      %7158 = vmatpush1.msra.mxu0 %v7069
      %7159 = vmatprep.subr.mxu0 %v7072
      %7160 = vmatpush1.msra.mxu0 %v7071
      %7161 = vmatprep.subr.mxu0 %v7074
      %7162 = vmatpush1.msra.mxu0 %v7073
      %7163 = vmatprep.subr.mxu0 %v7076
      %7164 = vmatpush1.msra.mxu0 %v7075
      %7165 = vmatprep.subr.mxu0 %v7078
      %7166 = vmatpush1.msra.mxu0 %v7077
      %7167 = vmatprep.subr.mxu0 %v7080
      %7168 = vmatpush1.msra.mxu0 %v7079
      %7169 = vmatprep.subr.mxu0 %v7082
      %7170 = vmatpush1.msra.mxu0 %v7081
      %7171 = vmatprep.subr.mxu0 %v7084
      %7172 = vmatpush1.msra.mxu0 %v7083
      %7173 = vmatprep.subr.mxu0 %v7086
      %7174 = vmatpush1.msra.mxu0 %v7085
      %7175 = vmatprep.subr.mxu0 %v7088
      %7176 = vmatpush1.msra.mxu0 %v7087
      %7177 = vmatprep.subr.mxu0 %v7090
      %7178 = vmatpush1.msra.mxu0 %v7089
      %7179 = vmatprep.subr.mxu0 %v7092
      %7180 = vmatpush1.msra.mxu0 %v7091
      %7181 = vmatprep.subr.mxu0 %v7094
      %7182 = vmatpush1.msra.mxu0 %v7093
      %7183 = vmatprep.subr.mxu0 %v7096
      %7184 = vmatpush1.msra.mxu0 %v7095
      %7185 = vmatprep.mubr.f32.mxu0 %v7118
      %7186 = vmatmul.mubr.f32.gmra.mrb[0].mxu0 %v7111
      %v7187 = vpop.f32.mrb[0].mxu0
      %v7188 = vadd.f32 0.0, %v7187
      %v7189 = vpop.f32.mrb[0].mxu0
      %v7190 = vadd.f32 0.0, %v7189
      %7191 = vdwg.mxu0
      %v7193 = vunpack.c.l.s4 1966171168
      %v7194 = vunpack.c.0.s8 %v7193
      %v7195 = vlaneseq
      %v7196 = vshrl.u32 %v7195, 7
      %v7197 = vsub.s32 %v7194, %v7196
      %v7198 = vrot.slane %v6920, %v7197
      %v7199 = vcombine.high %v7198, %v7198
      %v7201 = vunpack.c.l.s4 1966171168
      %v7202 = vunpack.c.0.s8 %v7201
      %v7203 = vlaneseq
      %v7204 = vshrl.u32 %v7203, 7
      %v7205 = vsub.s32 %v7202, %v7204
      %v7206 = vrot.slane %v7198, %v7205
      %v7208 = vunpack.c.l.s4 1966171168
      %v7209 = vunpack.c.0.s8 %v7208
      %v7210 = vlaneseq
      %v7211 = vshrl.u32 %v7210, 7
      %v7212 = vsub.s32 %v7209, %v7211
      %v7213 = vrot.slane %v7199, %v7212
      %7216 = vmatprep.subr.mxu0 %v6970
      %7217 = vmatpush1.msra.mxu0 %v6969
      %7218 = vmatprep.subr.mxu0 %v6972
      %7219 = vmatpush1.msra.mxu0 %v6971
      %7220 = vmatprep.subr.mxu0 %v6974
      %7221 = vmatpush1.msra.mxu0 %v6973
      %7222 = vmatprep.subr.mxu0 %v6976
      %7223 = vmatpush1.msra.mxu0 %v6975
      %7224 = vmatprep.subr.mxu0 %v6978
      %7225 = vmatpush1.msra.mxu0 %v6977
      %7226 = vmatprep.subr.mxu0 %v6980
      %7227 = vmatpush1.msra.mxu0 %v6979
      %7228 = vmatprep.subr.mxu0 %v6982
      %7229 = vmatpush1.msra.mxu0 %v6981
      %7230 = vmatprep.subr.mxu0 %v6984
      %7231 = vmatpush1.msra.mxu0 %v6983
      %7232 = vmatprep.subr.mxu0 %v6986
      %7233 = vmatpush1.msra.mxu0 %v6985
      %7234 = vmatprep.subr.mxu0 %v6988
      %7235 = vmatpush1.msra.mxu0 %v6987
      %7236 = vmatprep.subr.mxu0 %v6990
      %7237 = vmatpush1.msra.mxu0 %v6989
      %7238 = vmatprep.subr.mxu0 %v6992
      %7239 = vmatpush1.msra.mxu0 %v6991
      %7240 = vmatprep.subr.mxu0 %v6994
      %7241 = vmatpush1.msra.mxu0 %v6993
      %7242 = vmatprep.subr.mxu0 %v6996
      %7243 = vmatpush1.msra.mxu0 %v6995
      %7244 = vmatprep.subr.mxu0 %v6998
      %7245 = vmatpush1.msra.mxu0 %v6997
      %7246 = vmatprep.subr.mxu0 %v7000
      %7247 = vmatpush1.msra.mxu0 %v6999
      %7248 = vmatprep.subr.mxu0 %v7002
      %7249 = vmatpush1.msra.mxu0 %v7001
      %7250 = vmatprep.subr.mxu0 %v7004
      %7251 = vmatpush1.msra.mxu0 %v7003
      %7252 = vmatprep.subr.mxu0 %v7006
      %7253 = vmatpush1.msra.mxu0 %v7005
      %7254 = vmatprep.subr.mxu0 %v7008
      %7255 = vmatpush1.msra.mxu0 %v7007
      %7256 = vmatprep.subr.mxu0 %v7010
      %7257 = vmatpush1.msra.mxu0 %v7009
      %7258 = vmatprep.subr.mxu0 %v7012
      %7259 = vmatpush1.msra.mxu0 %v7011
      %7260 = vmatprep.subr.mxu0 %v7014
      %7261 = vmatpush1.msra.mxu0 %v7013
      %7262 = vmatprep.subr.mxu0 %v7016
      %7263 = vmatpush1.msra.mxu0 %v7015
      %7264 = vmatprep.subr.mxu0 %v7018
      %7265 = vmatpush1.msra.mxu0 %v7017
      %7266 = vmatprep.subr.mxu0 %v7020
      %7267 = vmatpush1.msra.mxu0 %v7019
      %7268 = vmatprep.subr.mxu0 %v7022
      %7269 = vmatpush1.msra.mxu0 %v7021
      %7270 = vmatprep.subr.mxu0 %v7024
      %7271 = vmatpush1.msra.mxu0 %v7023
      %7272 = vmatprep.subr.mxu0 %v7026
      %7273 = vmatpush1.msra.mxu0 %v7025
      %7274 = vmatprep.subr.mxu0 %v7028
      %7275 = vmatpush1.msra.mxu0 %v7027
      %7276 = vmatprep.subr.mxu0 %v7030
      %7277 = vmatpush1.msra.mxu0 %v7029
      %7278 = vmatprep.subr.mxu0 %v7032
      %7279 = vmatpush1.msra.mxu0 %v7031
      %7280 = vmatprep.mubr.f32.mxu0 %v7213
      %7281 = vmatmul.mubr.f32.gmra.mrb[0].mxu0 %v7206
      %v7282 = vpop.f32.mrb[0].mxu0
      %v7283 = vadd.f32 %v7188, %v7282
      %v7284 = vpop.f32.mrb[0].mxu0
      %v7285 = vadd.f32 %v7190, %v7284
      %7286 = vdwg.mxu0
      %v7287 = vld [vmem:[%s6] sm:$0x3]
      %v7289 = vlaneseq
      %v7290 = vshrl.u32 %v7289, 7
      %v7291 = vsub.s32 0, %v7290
      %v7292 = vrot.slane %v7287, %v7291
      %v7293 = vlaneseq
      %v7294 = vshrl.u32 %v7293, 7
      %v7295 = vsub.s32 1, %v7294
      %v7296 = vrot.slane %v7287, %v7295
      %v7299 = vadd.f32 %v7283, %v7292
      %v7300 = vadd.f32 %v7285, %v7296
      %v7301 = vmax.f32 %v7299, 0.0
      %v7302 = vmax.f32 %v7300, 0.0
      %v7303 = vld [vmem:[%s7] sm:$0xff]
      %v7304 = vld [vmem:[%s7 + $0x8] sm:$0xff]
      %v7305 = vld [vmem:[%s7 + $0x10] sm:$0xff]
      %v7306 = vld [vmem:[%s7 + $0x18] sm:$0xff]
      %v7307 = vld [vmem:[%s7 + $0x20] sm:$0xff]
      %v7308 = vld [vmem:[%s7 + $0x28] sm:$0xff]
      %v7309 = vld [vmem:[%s7 + $0x30] sm:$0xff]
      %v7310 = vld [vmem:[%s7 + $0x38] sm:$0xff]
      %v7311 = vld [vmem:[%s7 + $0x40] sm:$0xff]
      %v7312 = vld [vmem:[%s7 + $0x48] sm:$0xff]
      %v7313 = vld [vmem:[%s7 + $0x50] sm:$0xff]
      %v7314 = vld [vmem:[%s7 + $0x58] sm:$0xff]
      %v7315 = vld [vmem:[%s7 + $0x60] sm:$0xff]
      %v7316 = vld [vmem:[%s7 + $0x68] sm:$0xff]
      %v7317 = vld [vmem:[%s7 + $0x70] sm:$0xff]
      %v7318 = vld [vmem:[%s7 + $0x78] sm:$0xff]
      %v7319 = vld [vmem:[%s7 + $0x80] sm:$0xff]
      %v7320 = vld [vmem:[%s7 + $0x88] sm:$0xff]
      %v7321 = vld [vmem:[%s7 + $0x90] sm:$0xff]
      %v7322 = vld [vmem:[%s7 + $0x98] sm:$0xff]
      %v7323 = vld [vmem:[%s7 + $0xa0] sm:$0xff]
      %v7324 = vld [vmem:[%s7 + $0xa8] sm:$0xff]
      %v7325 = vld [vmem:[%s7 + $0xb0] sm:$0xff]
      %v7326 = vld [vmem:[%s7 + $0xb8] sm:$0xff]
      %v7327 = vld [vmem:[%s7 + $0xc0] sm:$0xff]
      %v7328 = vld [vmem:[%s7 + $0xc8] sm:$0xff]
      %v7329 = vld [vmem:[%s7 + $0xd0] sm:$0xff]
      %v7330 = vld [vmem:[%s7 + $0xd8] sm:$0xff]
      %v7331 = vld [vmem:[%s7 + $0xe0] sm:$0xff]
      %v7332 = vld [vmem:[%s7 + $0xe8] sm:$0xff]
      %v7333 = vld [vmem:[%s7 + $0xf0] sm:$0xff]
      %v7334 = vld [vmem:[%s7 + $0xf8] sm:$0xff]
      %v7335 = vld [vmem:[#allocation6] sm:$0x1]
      %v7337 = vlaneseq
      %v7338 = vshrl.u32 %v7337, 7
      %v7339 = vsub.s32 0, %v7338
      %v7340 = vrot.slane %v7335, %v7339
      %7342 = vmatprep.subr.mxu0 0.0
      %7343 = vmatpush1.msra.mxu0 %v7303
      %7344 = vmatprep.subr.mxu0 0.0
      %7345 = vmatpush1.msra.mxu0 %v7304
      %7346 = vmatprep.subr.mxu0 0.0
      %7347 = vmatpush1.msra.mxu0 %v7305
      %7348 = vmatprep.subr.mxu0 0.0
      %7349 = vmatpush1.msra.mxu0 %v7306
      %7350 = vmatprep.subr.mxu0 0.0
      %7351 = vmatpush1.msra.mxu0 %v7307
      %7352 = vmatprep.subr.mxu0 0.0
      %7353 = vmatpush1.msra.mxu0 %v7308
      %7354 = vmatprep.subr.mxu0 0.0
      %7355 = vmatpush1.msra.mxu0 %v7309
      %7356 = vmatprep.subr.mxu0 0.0
      %7357 = vmatpush1.msra.mxu0 %v7310
      %7358 = vmatprep.subr.mxu0 0.0
      %7359 = vmatpush1.msra.mxu0 %v7311
      %7360 = vmatprep.subr.mxu0 0.0
      %7361 = vmatpush1.msra.mxu0 %v7312
      %7362 = vmatprep.subr.mxu0 0.0
      %7363 = vmatpush1.msra.mxu0 %v7313
      %7364 = vmatprep.subr.mxu0 0.0
      %7365 = vmatpush1.msra.mxu0 %v7314
      %7366 = vmatprep.subr.mxu0 0.0
      %7367 = vmatpush1.msra.mxu0 %v7315
      %7368 = vmatprep.subr.mxu0 0.0
      %7369 = vmatpush1.msra.mxu0 %v7316
      %7370 = vmatprep.subr.mxu0 0.0
      %7371 = vmatpush1.msra.mxu0 %v7317
      %7372 = vmatprep.subr.mxu0 0.0
      %7373 = vmatpush1.msra.mxu0 %v7318
      %7374 = vmatprep.subr.mxu0 0.0
      %7375 = vmatpush1.msra.mxu0 %v7319
      %7376 = vmatprep.subr.mxu0 0.0
      %7377 = vmatpush1.msra.mxu0 %v7320
      %7378 = vmatprep.subr.mxu0 0.0
      %7379 = vmatpush1.msra.mxu0 %v7321
      %7380 = vmatprep.subr.mxu0 0.0
      %7381 = vmatpush1.msra.mxu0 %v7322
      %7382 = vmatprep.subr.mxu0 0.0
      %7383 = vmatpush1.msra.mxu0 %v7323
      %7384 = vmatprep.subr.mxu0 0.0
      %7385 = vmatpush1.msra.mxu0 %v7324
      %7386 = vmatprep.subr.mxu0 0.0
      %7387 = vmatpush1.msra.mxu0 %v7325
      %7388 = vmatprep.subr.mxu0 0.0
      %7389 = vmatpush1.msra.mxu0 %v7326
      %7390 = vmatprep.subr.mxu0 0.0
      %7391 = vmatpush1.msra.mxu0 %v7327
      %7392 = vmatprep.subr.mxu0 0.0
      %7393 = vmatpush1.msra.mxu0 %v7328
      %7394 = vmatprep.subr.mxu0 0.0
      %7395 = vmatpush1.msra.mxu0 %v7329
      %7396 = vmatprep.subr.mxu0 0.0
      %7397 = vmatpush1.msra.mxu0 %v7330
      %7398 = vmatprep.subr.mxu0 0.0
      %7399 = vmatpush1.msra.mxu0 %v7331
      %7400 = vmatprep.subr.mxu0 0.0
      %7401 = vmatpush1.msra.mxu0 %v7332
      %7402 = vmatprep.subr.mxu0 0.0
      %7403 = vmatpush1.msra.mxu0 %v7333
      %7404 = vmatprep.subr.mxu0 0.0
      %7405 = vmatpush1.msra.mxu0 %v7334
      %7406 = vmatprep.mubr.f32.mxu0 %v7302
      %7407 = vmatmul.mubr.f32.gmra.mrb[0].mxu0 %v7301
      %v7408 = vpop.f32.mrb[0].mxu0
      %v7409 = vadd.f32 %v7340, %v7408
      %v7410 = vpop.f32.mrb[0].mxu0
      %7411 = vdwg.mxu0
      %vm7412 = vcmask 1024
      %7413 = vst.msk [vmem:[%s9] sm:$0x3] %vm7412, %v7409
    $region57: #{lstm_mlp_classifier.3} parent=1 // pred_fallthru
      _
    // Predicated region
    $region58: #{lstm_mlp_classifier.3} parent=1 // pred_check
      _
    $region59: #{lstm_mlp_classifier.3} parent=1 // pred_check_branch
      %7415 = sbr.rel (0) target = $region61
    $region60: #{lstm_mlp_classifier.3} parent=1 // pred_region
      _
    $region61: #{lstm_mlp_classifier.3} parent=1 // pred_fallthru
      _
    // Predicated region
    $region62: #{lstm_mlp_classifier.3} parent=1 // pred_check
      _
    $region63: #{lstm_mlp_classifier.3} parent=1 // pred_check_branch
      %7417 = sbr.rel (0) target = $region65
    $region64: #{lstm_mlp_classifier.3} parent=1 // pred_region
      _
    $region65: #{lstm_mlp_classifier.3} parent=1 // pred_fallthru
      _
    %7418 = vsyncpa [#allocation8], 1
    %7419 = vsyncpa [#allocation10], 1

</llo_original>
